<compile_context>
chip_gen: v6e
topology: v6e:2x2x1
jax: 0.10.0
libtpu: 0.0.40
codegen_flags: <defaults>
</compile_context>

<pallas_src>
import functools
import math

import numpy as np
import jax
import jax.numpy as jnp
from jax import lax
from jax.experimental import pallas as pl
from jax.experimental.pallas import tpu as pltpu


# ---------------------------------------------------------------------------
# Fused kernel: one grid step = W_TILE windows.
#   x_ref    : (W_TILE*n, C)         window tokens (channels-last), compute dtype
#   wqkv_ref : (C, 3*inner)          QKV weight (no bias), compute dtype
#   wout_ref : (inner, C_out)        out-proj weight, compute dtype
#   bout_ref : (1, C_out)            out-proj bias, f32
#   bias_ref : (n, n)                relative-position bias, f32
#   y_ref    : (W_TILE*n, C_out)     output tokens
#   attn_ref : (W_TILE, heads, n, n) attention probabilities (f32)
#   qkv_scr  : (W_TILE*n, 3*inner)   VMEM scratch, compute dtype
#   o_scr    : (W_TILE*n, inner)     VMEM scratch, compute dtype
# ---------------------------------------------------------------------------
def _window_attn_kernel(x_ref, wqkv_ref, wout_ref, bout_ref, bias_ref,
                        y_ref, attn_ref, qkv_scr, o_scr, *,
                        heads, dim_head, w_tile, window_size, n1, n2,
                        scale, shifted):
    p = window_size
    n = p * p
    d = p // 2
    inner = heads * dim_head
    NEG = jnp.float32(-1e30)          # finite "-inf": exp underflows to exactly 0

    # (1) QKV projection for all W_TILE windows at once (M = W_TILE*n).
    qkv = jnp.dot(x_ref[...], wqkv_ref[...],
                  preferred_element_type=jnp.float32)
    qkv_scr[...] = qkv.astype(qkv_scr.dtype)

    bias = bias_ref[...]                                           # (n, n) f32

    if shifted:
        row = lax.broadcasted_iota(jnp.int32, (n, n), 0)
        col = lax.broadcasted_iota(jnp.int32, (n, n), 1)
        dp = d * p
        ul_cond = (row >= n - dp) != (col >= n - dp)
        lr_cond = ((row % p) >= (p - d)) != ((col % p) >= (p - d))
        ul_add = jnp.where(ul_cond, NEG, 0.0)
        lr_add = jnp.where(lr_cond, NEG, 0.0)
        nwin_img = n1 * n2
        # torch: mask[-n2:] += upper_lower ; mask[-n1-1::n1] += left_right
        lr_start = max(nwin_img - n1 - 1, 0)

    tile_base = pl.program_id(0) * w_tile

    # (2) Per-window attention (tokens only attend within their own window).
    for w in range(w_tile):                       # static unroll (w_tile small)
        if shifted:
            idx = (tile_base + w) % (n1 * n2)     # window index within image
            ul_on = idx >= (n1 * n2 - n2)
            lr_on = jnp.logical_and(idx >= lr_start,
                                    ((idx - lr_start) % n1) == 0)
            mask_w = (bias
                      + jnp.where(ul_on, ul_add, 0.0)
                      + jnp.where(lr_on, lr_add, 0.0))
        else:
            mask_w = bias

        r0 = w * n
        for h in range(heads):                    # static unroll over heads
            c0 = h * dim_head
            q = qkv_scr[r0:r0 + n, c0:c0 + dim_head]
            k = qkv_scr[r0:r0 + n, inner + c0:inner + c0 + dim_head]
            v = qkv_scr[r0:r0 + n, 2 * inner + c0:2 * inner + c0 + dim_head]

            # dots = (q . k^T) * scale + mask   (f32 accumulation + f32 softmax)
            dots = lax.dot_general(q, k, (((1,), (1,)), ((), ())),
                                   preferred_element_type=jnp.float32)
            dots = dots * scale + mask_w

            m = jnp.max(dots, axis=-1, keepdims=True)
            e = jnp.exp(dots - m)
            s = jnp.sum(e, axis=-1, keepdims=True)
            attn = e * pl.reciprocal(s, approx=True)
            attn_ref[w, h] = attn.astype(attn_ref.dtype)

            o_h = jnp.dot(attn.astype(v.dtype), v,
                          preferred_element_type=jnp.float32)
            o_scr[r0:r0 + n, c0:c0 + dim_head] = o_h.astype(o_scr.dtype)

    # (3) Single out-projection GEMM with K = inner over all W_TILE windows.
    y = jnp.dot(o_scr[...], wout_ref[...], preferred_element_type=jnp.float32)
    y = y + bout_ref[...]
    y_ref[...] = y.astype(y_ref.dtype)


# ---------------------------------------------------------------------------
# WindowAttention forward (shifted or not).
# ---------------------------------------------------------------------------
def window_attention_forward(x, w_qkv, w_out, b_out, pos_embedding, *,
                             window_size, heads, dim_head, shifted,
                             w_tile=8, compute_dtype=jnp.bfloat16):
    B, C, H, W = x.shape
    p = window_size
    assert H % p == 0 and W % p == 0, \
        "window-aligned inputs required (no interpolate path)"
    n1, n2 = H // p, W // p
    d = p // 2
    n = p * p
    inner = heads * dim_head
    c_out = w_out.shape[1]
    scale = float(dim_head) ** (-0.5)
    nw = B * n1 * n2

    # Relative-position bias (static gather indices, evaluated once at trace).
    coords = np.array([[i, j] for i in range(p) for j in range(p)])
    rel = coords[None, :, :] - coords[:, None, :] + p - 1            # (n, n, 2)
    bias = pos_embedding[rel[:, :, 0], rel[:, :, 1]].astype(jnp.float32)

    # NCHW -> channels-last, fold cyclic shift, window-partition, flatten tokens.
    xt = jnp.transpose(x, (0, 2, 3, 1))                              # (B,H,W,C)
    if shifted:
        xt = jnp.roll(xt, shift=(-d, -d), axis=(1, 2))               # CyclicShift(-d)
    xw = xt.reshape(B, n1, p, n2, p, C).transpose(0, 1, 3, 2, 4, 5)
    xw = xw.reshape(nw * n, C).astype(compute_dtype)                 # (nw*n, C)

    # Window-tile size: W_TILE*n must be sublane (8) aligned.
    f = 8 // math.gcd(8, n)
    w_tile = max(f, (w_tile // f) * f)
    nw_pad = ((nw + w_tile - 1) // w_tile) * w_tile
    if nw_pad != nw:
        xw = jnp.concatenate(
            [xw, jnp.zeros(((nw_pad - nw) * n, C), xw.dtype)], axis=0)
    num_tiles = nw_pad // w_tile

    kernel = functools.partial(
        _window_attn_kernel, heads=heads, dim_head=dim_head, w_tile=w_tile,
        window_size=p, n1=n1, n2=n2, scale=scale, shifted=shifted)

    in_itemsize = jnp.dtype(compute_dtype).itemsize
    x_itemsize = jnp.dtype(x.dtype).itemsize

    flops = int(2 * nw * n * C * 3 * inner            # qkv projection
                + 4 * nw * heads * n * n * dim_head   # q.k^T and attn.v
                + 2 * nw * n * inner * c_out)         # out projection
    transcendentals = int(nw * heads * n * (n + 1))   # exp + reciprocal
    bytes_accessed = int(nw * n * C * in_itemsize
                         + (C * 3 * inner + inner * c_out) * in_itemsize
                         + (n * n + c_out) * 4
                         + nw * n * c_out * x_itemsize
                         + nw * heads * n * n * 4)
    cost = pl.CostEstimate(flops=flops, transcendentals=transcendentals,
                           bytes_accessed=bytes_accessed)

    resident = (C * 3 * inner + inner * c_out) * in_itemsize + (n * n + c_out) * 4
    per_step = (w_tile * n * C * in_itemsize
                + w_tile * n * c_out * x_itemsize
                + w_tile * heads * n * n * 4)
    scratch_b = w_tile * n * 4 * inner * in_itemsize
    vmem_limit = int(min(max(resident + 2 * per_step + scratch_b + (4 << 20),
                             32 << 20), 64 << 20))

    y_flat, attn = pl.pallas_call(
        kernel,
        out_shape=(
            jax.ShapeDtypeStruct((nw_pad * n, c_out), x.dtype),
            jax.ShapeDtypeStruct((nw_pad, heads, n, n), jnp.float32),
        ),
        grid_spec=pltpu.PrefetchScalarGridSpec(
            num_scalar_prefetch=0,
            grid=(num_tiles,),
            in_specs=[
                pl.BlockSpec((w_tile * n, C), lambda t: (t, 0)),
                pl.BlockSpec((C, 3 * inner), lambda t: (0, 0)),
                pl.BlockSpec((inner, c_out), lambda t: (0, 0)),
                pl.BlockSpec((1, c_out), lambda t: (0, 0)),
                pl.BlockSpec((n, n), lambda t: (0, 0)),
            ],
            out_specs=(
                pl.BlockSpec((w_tile * n, c_out), lambda t: (t, 0)),
                pl.BlockSpec((w_tile, heads, n, n), lambda t: (t, 0, 0, 0)),
            ),
            scratch_shapes=[
                pltpu.VMEM((w_tile * n, 3 * inner), compute_dtype),
                pltpu.VMEM((w_tile * n, inner), compute_dtype),
            ],
        ),
        compiler_params=pltpu.CompilerParams(
            dimension_semantics=("parallel",),
            vmem_limit_bytes=vmem_limit),
        cost_estimate=cost,
    )(xw, w_qkv.astype(compute_dtype), w_out.astype(compute_dtype),
      b_out.reshape(1, -1).astype(jnp.float32), bias)

    # Un-partition, back-shift, back to NCHW (pure layout, fused by XLA).
    y_flat = y_flat[:nw * n]
    attn = attn[:nw]
    y = y_flat.reshape(B, n1, n2, p, p, c_out).transpose(0, 1, 3, 2, 4, 5)
    y = y.reshape(B, H, W, c_out)
    if shifted:
        y = jnp.roll(y, shift=(d, d), axis=(1, 2))                   # CyclicShift(+d)
    y = jnp.transpose(y, (0, 3, 1, 2))                               # (B, C_out, H, W)
    return y, attn


# ---------------------------------------------------------------------------
# Mask builder + pure-JAX reference mirroring the PyTorch forward exactly
# (used only for correctness checking).
# ---------------------------------------------------------------------------
def _build_mask(pos_embedding, p, n1, n2, d, shifted):
    coords = np.array([[i, j] for i in range(p) for j in range(p)])
    rel = coords[None, :, :] - coords[:, None, :] + p - 1
    bias = pos_embedding[rel[:, :, 0], rel[:, :, 1]]
    mask = jnp.broadcast_to(bias, (n1 * n2, p * p, p * p)).astype(jnp.float32)

    if shifted:
        ninf = float("-inf")
        ul = np.zeros((p * p, p * p), np.float32)
        ul[-d * p:, :-d * p] = ninf
        ul[:-d * p, -d * p:] = ninf
        lr = np.zeros((p, p, p, p), np.float32)
        lr[:, -d:, :, :-d] = ninf
        lr[:, :-d, :, -d:] = ninf
        lr = lr.reshape(p * p, p * p)

        add = np.zeros((n1 * n2, p * p, p * p), np.float32)
        for w in list(range(n1 * n2))[-n2:]:
            add[w] += ul
        for w in list(range(n1 * n2))[-n1 - 1::n1]:
            add[w] += lr
        mask = mask + jnp.asarray(add)
    return mask


def _reference_forward(x, w_qkv, w_out, b_out, pos_embedding, *,
                       window_size, heads, dim_head, shifted):
    B, C, H, W = x.shape
    p = window_size
    d = p // 2
    n1, n2 = H // p, W // p
    inner = heads * dim_head
    scale = dim_head ** (-0.5)

    mask = _build_mask(pos_embedding, p, n1, n2, d, shifted)
    mask = jnp.tile(mask[:, None], (B, 1, 1, 1))

    xs = jnp.roll(x, shift=(-d, -d), axis=(2, 3)) if shifted else x
    xw = xs.reshape(B, C, n1, p, n2, p).transpose(0, 2, 4, 3, 5, 1)
    xw = xw.reshape(B * n1 * n2, p * p, C)

    with jax.default_matmul_precision("highest"):
        qkv = xw @ w_qkv
        q, k, v = jnp.split(qkv, 3, axis=-1)
        sh = lambda t: t.reshape(B * n1 * n2, p * p, heads, dim_head).transpose(0, 2, 1, 3)
        q, k, v = sh(q), sh(k), sh(v)
        dots = jnp.einsum('bhid,bhjd->bhij', q, k) * scale + mask
        attn = jax.nn.softmax(dots, axis=-1)
        out = jnp.einsum('bhij,bhjd->bhid', attn, v)
        out = out.transpose(0, 2, 1, 3).reshape(B * n1 * n2, p * p, inner)
        y = out @ w_out + b_out

    y = y.reshape(B, n1, n2, p, p, -1).transpose(0, 5, 1, 3, 2, 4).reshape(B, -1, H, W)
    if shifted:
        y = jnp.roll(y, shift=(d, d), axis=(2, 3))
    return y, attn


if __name__ == "__main__":
    # Small shapes consistent with the module: window_size=7 => spatial 28x28,
    # giving a 4x4 window grid (32 windows total, 4 grid steps at W_TILE=8).
    B, C, H, W = 2, 16, 28, 28
    p, heads, dim_head = 7, 2, 8
    inner = heads * dim_head
    dim_out = C

    key = jax.random.PRNGKey(0)
    k1, k2, k3, k4, k5 = jax.random.split(key, 5)
    x = jax.random.normal(k1, (B, C, H, W), jnp.float32)
    w_qkv = jax.random.normal(k2, (C, 3 * inner), jnp.float32) * 0.1
    w_out = jax.random.normal(k3, (inner, dim_out), jnp.float32) * 0.1
    b_out = jax.random.normal(k4, (dim_out,), jnp.float32) * 0.1
    pos_embedding = jax.random.normal(k5, (2 * p - 1, 2 * p - 1), jnp.float32) * 0.02

    n_windows = (H // p) * (W // p)

    for shifted in (False, True):
        y_ref, attn_ref = _reference_forward(
            x, w_qkv, w_out, b_out, pos_embedding,
            window_size=p, heads=heads, dim_head=dim_head, shifted=shifted)

        for cdt, tol in ((jnp.float32, 5e-3), (jnp.bfloat16, 3e-2)):
            fwd = jax.jit(functools.partial(
                window_attention_forward, window_size=p, heads=heads,
                dim_head=dim_head, shifted=shifted, compute_dtype=cdt))
            y, attn = jax.block_until_ready(
                fwd(x, w_qkv, w_out, b_out, pos_embedding))

            assert y.shape == (B, dim_out, H, W) and y.dtype == x.dtype
            assert attn.shape == (B * n_windows, heads, p * p, p * p)
            assert jnp.allclose(y, y_ref, atol=tol, rtol=tol), \
                f"output mismatch (shifted={shifted}, dtype={cdt.__name__})"
            assert jnp.allclose(attn, attn_ref, atol=tol, rtol=tol), \
                f"attn mismatch (shifted={shifted}, dtype={cdt.__name__})"

    print("KERNEL_OK")
</pallas_src>

<mosaic_0001>
module attributes {stable_mosaic.version = 11 : i64} {
  func.func @_window_attn_kernel(%arg0: i32, %arg1: memref<392x16xf32, #tpu.memory_space<vmem>>, %arg2: memref<16x48xf32, #tpu.memory_space<vmem>>, %arg3: memref<16x16xf32, #tpu.memory_space<vmem>>, %arg4: memref<1x16xf32, #tpu.memory_space<vmem>>, %arg5: memref<49x49xf32, #tpu.memory_space<vmem>>, %arg6: memref<392x16xf32, #tpu.memory_space<vmem>>, %arg7: memref<8x2x49x49xf32, #tpu.memory_space<vmem>>, %arg8: memref<392x48xf32, #tpu.memory_space<vmem>>, %arg9: memref<392x16xf32, #tpu.memory_space<vmem>>) attributes {dimension_semantics = [#tpu.dimension_semantics<parallel>], iteration_bounds = array<i64: 4>, scalar_prefetch = 0 : i64, scratch_operands = 2 : i64, tpu.core_type = #tpu.core_type<tc>, window_params = [{transform_indices = @transform_0, window_bounds = array<i64: 392, 16>}, {pipeline_mode = #tpu.pipeline_mode<synchronous>, transform_indices = @transform_1, window_bounds = array<i64: 16, 48>}, {pipeline_mode = #tpu.pipeline_mode<synchronous>, transform_indices = @transform_2, window_bounds = array<i64: 16, 16>}, {pipeline_mode = #tpu.pipeline_mode<synchronous>, transform_indices = @transform_3, window_bounds = array<i64: 1, 16>}, {pipeline_mode = #tpu.pipeline_mode<synchronous>, transform_indices = @transform_4, window_bounds = array<i64: 49, 49>}, {transform_indices = @transform_5, window_bounds = array<i64: 392, 16>}, {transform_indices = @transform_6, window_bounds = array<i64: 8, 2, 49, 49>}]} {
    %c0 = arith.constant 0 : index
    %c0_0 = arith.constant 0 : index
    %0 = vector.load %arg1[%c0, %c0_0] : memref<392x16xf32, #tpu.memory_space<vmem>>, vector<392x16xf32>
    %c0_1 = arith.constant 0 : index
    %c0_2 = arith.constant 0 : index
    %1 = vector.load %arg2[%c0_1, %c0_2] : memref<16x48xf32, #tpu.memory_space<vmem>>, vector<16x48xf32>
    %cst = arith.constant dense<0.000000e+00> : vector<392x48xf32>
    %2 = tpu.matmul %0, %1, %cst {dimension_numbers = #tpu.dot_dimension_numbers<[1], [0], [0], [1], [0, 0, 1, 1], [], []>} : vector<392x16xf32>, vector<16x48xf32>, vector<392x48xf32> -> vector<392x48xf32>
    %c0_3 = arith.constant 0 : index
    %c0_4 = arith.constant 0 : index
    %3 = vector.load %arg8[%c0_3, %c0_4] : memref<392x48xf32, #tpu.memory_space<vmem>>, vector<392x48xf32>
    tpu.vector_store %arg8[%c0_3, %c0_4], %2 {strides = array<i32>} : memref<392x48xf32, #tpu.memory_space<vmem>>, vector<392x48xf32>,
    %c0_5 = arith.constant 0 : index
    %c0_6 = arith.constant 0 : index
    %4 = vector.load %arg5[%c0_5, %c0_6] : memref<49x49xf32, #tpu.memory_space<vmem>>, vector<49x49xf32>
    %c0_7 = arith.constant 0 : index
    %c0_8 = arith.constant 0 : index
    %5 = vector.load %arg8[%c0_7, %c0_8] : memref<392x48xf32, #tpu.memory_space<vmem>>, vector<49x8xf32>
    %c0_9 = arith.constant 0 : index
    %c16 = arith.constant 16 : index
    %6 = vector.load %arg8[%c0_9, %c16] : memref<392x48xf32, #tpu.memory_space<vmem>>, vector<49x8xf32>
    %c0_10 = arith.constant 0 : index
    %c32 = arith.constant 32 : index
    %7 = vector.load %arg8[%c0_10, %c32] : memref<392x48xf32, #tpu.memory_space<vmem>>, vector<49x8xf32>
    %cst_11 = arith.constant dense<0.000000e+00> : vector<49x49xf32>
    %8 = tpu.matmul %5, %6, %cst_11 {dimension_numbers = #tpu.dot_dimension_numbers<[1], [1], [0], [0], [0, 0, 1, 0], [], []>} : vector<49x8xf32>, vector<49x8xf32>, vector<49x49xf32> -> vector<49x49xf32>
    %cst_12 = arith.constant 0.353553385 : f32
    %9 = vector.broadcast %cst_12 : f32 to vector<49x49xf32>
    %10 = arith.mulf %8, %9 : vector<49x49xf32>
    %11 = arith.addf %10, %4 : vector<49x49xf32>
    %cst_13 = arith.constant dense<0xFF800000> : vector<49xf32>
    %12 = vector.multi_reduction <maximumf>, %11, %cst_13 [1] : vector<49x49xf32> to vector<49xf32>
    %13 = vector.shape_cast %12 : vector<49xf32> to vector<49x1xf32>
    %14 = vector.broadcast %13 : vector<49x1xf32> to vector<49x49xf32>
    %15 = arith.subf %11, %14 : vector<49x49xf32>
    %16 = math.exp %15 : vector<49x49xf32>
    %cst_14 = arith.constant dense<0.000000e+00> : vector<49xf32>
    %17 = vector.multi_reduction <add>, %16, %cst_14 [1] : vector<49x49xf32> to vector<49xf32>
    %18 = vector.shape_cast %17 : vector<49xf32> to vector<49x1xf32>
    %19 = tpu.reciprocal %18 {approx = true} : vector<49x1xf32> -> vector<49x1xf32>
    %20 = vector.broadcast %19 : vector<49x1xf32> to vector<49x49xf32>
    %21 = arith.mulf %16, %20 : vector<49x49xf32>
    %c0_15 = arith.constant 0 : index
    %c0_16 = arith.constant 0 : index
    %c0_17 = arith.constant 0 : index
    %c0_18 = arith.constant 0 : index
    %22 = vector.load %arg7[%c0_15, %c0_16, %c0_17, %c0_18] : memref<8x2x49x49xf32, #tpu.memory_space<vmem>>, vector<1x1x49x49xf32>
    %23 = vector.shape_cast %22 : vector<1x1x49x49xf32> to vector<49x49xf32>
    %24 = vector.shape_cast %21 : vector<49x49xf32> to vector<1x1x49x49xf32>
    tpu.vector_store %arg7[%c0_15, %c0_16, %c0_17, %c0_18], %24 {strides = array<i32>} : memref<8x2x49x49xf32, #tpu.memory_space<vmem>>, vector<1x1x49x49xf32>,
    %cst_19 = arith.constant dense<0.000000e+00> : vector<49x8xf32>
    %25 = tpu.matmul %21, %7, %cst_19 {dimension_numbers = #tpu.dot_dimension_numbers<[1], [0], [0], [1], [0, 0, 1, 1], [], []>} : vector<49x49xf32>, vector<49x8xf32>, vector<49x8xf32> -> vector<49x8xf32>
    %c0_20 = arith.constant 0 : index
    %c0_21 = arith.constant 0 : index
    %26 = vector.load %arg9[%c0_20, %c0_21] : memref<392x16xf32, #tpu.memory_space<vmem>>, vector<49x8xf32>
    tpu.vector_store %arg9[%c0_20, %c0_21], %25 {strides = array<i32>} : memref<392x16xf32, #tpu.memory_space<vmem>>, vector<49x8xf32>,
    %c0_22 = arith.constant 0 : index
    %c8 = arith.constant 8 : index
    %27 = vector.load %arg8[%c0_22, %c8] : memref<392x48xf32, #tpu.memory_space<vmem>>, vector<49x8xf32>
    %c0_23 = arith.constant 0 : index
    %c24 = arith.constant 24 : index
    %28 = vector.load %arg8[%c0_23, %c24] : memref<392x48xf32, #tpu.memory_space<vmem>>, vector<49x8xf32>
    %c0_24 = arith.constant 0 : index
    %c40 = arith.constant 40 : index
    %29 = vector.load %arg8[%c0_24, %c40] : memref<392x48xf32, #tpu.memory_space<vmem>>, vector<49x8xf32>
    %cst_25 = arith.constant dense<0.000000e+00> : vector<49x49xf32>
    %30 = tpu.matmul %27, %28, %cst_25 {dimension_numbers = #tpu.dot_dimension_numbers<[1], [1], [0], [0], [0, 0, 1, 0], [], []>} : vector<49x8xf32>, vector<49x8xf32>, vector<49x49xf32> -> vector<49x49xf32>
    %cst_26 = arith.constant 0.353553385 : f32
    %31 = vector.broadcast %cst_26 : f32 to vector<49x49xf32>
    %32 = arith.mulf %30, %31 : vector<49x49xf32>
    %33 = arith.addf %32, %4 : vector<49x49xf32>
    %cst_27 = arith.constant dense<0xFF800000> : vector<49xf32>
    %34 = vector.multi_reduction <maximumf>, %33, %cst_27 [1] : vector<49x49xf32> to vector<49xf32>
    %35 = vector.shape_cast %34 : vector<49xf32> to vector<49x1xf32>
    %36 = vector.broadcast %35 : vector<49x1xf32> to vector<49x49xf32>
    %37 = arith.subf %33, %36 : vector<49x49xf32>
    %38 = math.exp %37 : vector<49x49xf32>
    %cst_28 = arith.constant dense<0.000000e+00> : vector<49xf32>
    %39 = vector.multi_reduction <add>, %38, %cst_28 [1] : vector<49x49xf32> to vector<49xf32>
    %40 = vector.shape_cast %39 : vector<49xf32> to vector<49x1xf32>
    %41 = tpu.reciprocal %40 {approx = true} : vector<49x1xf32> -> vector<49x1xf32>
    %42 = vector.broadcast %41 : vector<49x1xf32> to vector<49x49xf32>
    %43 = arith.mulf %38, %42 : vector<49x49xf32>
    %c0_29 = arith.constant 0 : index
    %c1 = arith.constant 1 : index
    %c0_30 = arith.constant 0 : index
    %c0_31 = arith.constant 0 : index
    %44 = vector.load %arg7[%c0_29, %c1, %c0_30, %c0_31] : memref<8x2x49x49xf32, #tpu.memory_space<vmem>>, vector<1x1x49x49xf32>
    %45 = vector.shape_cast %44 : vector<1x1x49x49xf32> to vector<49x49xf32>
    %46 = vector.shape_cast %43 : vector<49x49xf32> to vector<1x1x49x49xf32>
    tpu.vector_store %arg7[%c0_29, %c1, %c0_30, %c0_31], %46 {strides = array<i32>} : memref<8x2x49x49xf32, #tpu.memory_space<vmem>>, vector<1x1x49x49xf32>,
    %cst_32 = arith.constant dense<0.000000e+00> : vector<49x8xf32>
    %47 = tpu.matmul %43, %29, %cst_32 {dimension_numbers = #tpu.dot_dimension_numbers<[1], [0], [0], [1], [0, 0, 1, 1], [], []>} : vector<49x49xf32>, vector<49x8xf32>, vector<49x8xf32> -> vector<49x8xf32>
    %c0_33 = arith.constant 0 : index
    %c8_34 = arith.constant 8 : index
    %48 = vector.load %arg9[%c0_33, %c8_34] : memref<392x16xf32, #tpu.memory_space<vmem>>, vector<49x8xf32>
    tpu.vector_store %arg9[%c0_33, %c8_34], %47 {strides = array<i32>} : memref<392x16xf32, #tpu.memory_space<vmem>>, vector<49x8xf32>,
    %c49 = arith.constant 49 : index
    %c0_35 = arith.constant 0 : index
    %49 = vector.load %arg8[%c49, %c0_35] : memref<392x48xf32, #tpu.memory_space<vmem>>, vector<49x8xf32>
    %c49_36 = arith.constant 49 : index
    %c16_37 = arith.constant 16 : index
    %50 = vector.load %arg8[%c49_36, %c16_37] : memref<392x48xf32, #tpu.memory_space<vmem>>, vector<49x8xf32>
    %c49_38 = arith.constant 49 : index
    %c32_39 = arith.constant 32 : index
    %51 = vector.load %arg8[%c49_38, %c32_39] : memref<392x48xf32, #tpu.memory_space<vmem>>, vector<49x8xf32>
    %cst_40 = arith.constant dense<0.000000e+00> : vector<49x49xf32>
    %52 = tpu.matmul %49, %50, %cst_40 {dimension_numbers = #tpu.dot_dimension_numbers<[1], [1], [0], [0], [0, 0, 1, 0], [], []>} : vector<49x8xf32>, vector<49x8xf32>, vector<49x49xf32> -> vector<49x49xf32>
    %cst_41 = arith.constant 0.353553385 : f32
    %53 = vector.broadcast %cst_41 : f32 to vector<49x49xf32>
    %54 = arith.mulf %52, %53 : vector<49x49xf32>
    %55 = arith.addf %54, %4 : vector<49x49xf32>
    %cst_42 = arith.constant dense<0xFF800000> : vector<49xf32>
    %56 = vector.multi_reduction <maximumf>, %55, %cst_42 [1] : vector<49x49xf32> to vector<49xf32>
    %57 = vector.shape_cast %56 : vector<49xf32> to vector<49x1xf32>
    %58 = vector.broadcast %57 : vector<49x1xf32> to vector<49x49xf32>
    %59 = arith.subf %55, %58 : vector<49x49xf32>
    %60 = math.exp %59 : vector<49x49xf32>
    %cst_43 = arith.constant dense<0.000000e+00> : vector<49xf32>
    %61 = vector.multi_reduction <add>, %60, %cst_43 [1] : vector<49x49xf32> to vector<49xf32>
    %62 = vector.shape_cast %61 : vector<49xf32> to vector<49x1xf32>
    %63 = tpu.reciprocal %62 {approx = true} : vector<49x1xf32> -> vector<49x1xf32>
    %64 = vector.broadcast %63 : vector<49x1xf32> to vector<49x49xf32>
    %65 = arith.mulf %60, %64 : vector<49x49xf32>
    %c1_44 = arith.constant 1 : index
    %c0_45 = arith.constant 0 : index
    %c0_46 = arith.constant 0 : index
    %c0_47 = arith.constant 0 : index
    %66 = vector.load %arg7[%c1_44, %c0_45, %c0_46, %c0_47] : memref<8x2x49x49xf32, #tpu.memory_space<vmem>>, vector<1x1x49x49xf32>
    %67 = vector.shape_cast %66 : vector<1x1x49x49xf32> to vector<49x49xf32>
    %68 = vector.shape_cast %65 : vector<49x49xf32> to vector<1x1x49x49xf32>
    tpu.vector_store %arg7[%c1_44, %c0_45, %c0_46, %c0_47], %68 {strides = array<i32>} : memref<8x2x49x49xf32, #tpu.memory_space<vmem>>, vector<1x1x49x49xf32>,
    %cst_48 = arith.constant dense<0.000000e+00> : vector<49x8xf32>
    %69 = tpu.matmul %65, %51, %cst_48 {dimension_numbers = #tpu.dot_dimension_numbers<[1], [0], [0], [1], [0, 0, 1, 1], [], []>} : vector<49x49xf32>, vector<49x8xf32>, vector<49x8xf32> -> vector<49x8xf32>
    %c49_49 = arith.constant 49 : index
    %c0_50 = arith.constant 0 : index
    %70 = vector.load %arg9[%c49_49, %c0_50] : memref<392x16xf32, #tpu.memory_space<vmem>>, vector<49x8xf32>
    tpu.vector_store %arg9[%c49_49, %c0_50], %69 {strides = array<i32>} : memref<392x16xf32, #tpu.memory_space<vmem>>, vector<49x8xf32>,
    %c49_51 = arith.constant 49 : index
    %c8_52 = arith.constant 8 : index
    %71 = vector.load %arg8[%c49_51, %c8_52] : memref<392x48xf32, #tpu.memory_space<vmem>>, vector<49x8xf32>
    %c49_53 = arith.constant 49 : index
    %c24_54 = arith.constant 24 : index
    %72 = vector.load %arg8[%c49_53, %c24_54] : memref<392x48xf32, #tpu.memory_space<vmem>>, vector<49x8xf32>
    %c49_55 = arith.constant 49 : index
    %c40_56 = arith.constant 40 : index
    %73 = vector.load %arg8[%c49_55, %c40_56] : memref<392x48xf32, #tpu.memory_space<vmem>>, vector<49x8xf32>
    %cst_57 = arith.constant dense<0.000000e+00> : vector<49x49xf32>
    %74 = tpu.matmul %71, %72, %cst_57 {dimension_numbers = #tpu.dot_dimension_numbers<[1], [1], [0], [0], [0, 0, 1, 0], [], []>} : vector<49x8xf32>, vector<49x8xf32>, vector<49x49xf32> -> vector<49x49xf32>
    %cst_58 = arith.constant 0.353553385 : f32
    %75 = vector.broadcast %cst_58 : f32 to vector<49x49xf32>
    %76 = arith.mulf %74, %75 : vector<49x49xf32>
    %77 = arith.addf %76, %4 : vector<49x49xf32>
    %cst_59 = arith.constant dense<0xFF800000> : vector<49xf32>
    %78 = vector.multi_reduction <maximumf>, %77, %cst_59 [1] : vector<49x49xf32> to vector<49xf32>
    %79 = vector.shape_cast %78 : vector<49xf32> to vector<49x1xf32>
    %80 = vector.broadcast %79 : vector<49x1xf32> to vector<49x49xf32>
    %81 = arith.subf %77, %80 : vector<49x49xf32>
    %82 = math.exp %81 : vector<49x49xf32>
    %cst_60 = arith.constant dense<0.000000e+00> : vector<49xf32>
    %83 = vector.multi_reduction <add>, %82, %cst_60 [1] : vector<49x49xf32> to vector<49xf32>
    %84 = vector.shape_cast %83 : vector<49xf32> to vector<49x1xf32>
    %85 = tpu.reciprocal %84 {approx = true} : vector<49x1xf32> -> vector<49x1xf32>
    %86 = vector.broadcast %85 : vector<49x1xf32> to vector<49x49xf32>
    %87 = arith.mulf %82, %86 : vector<49x49xf32>
    %c1_61 = arith.constant 1 : index
    %c1_62 = arith.constant 1 : index
    %c0_63 = arith.constant 0 : index
    %c0_64 = arith.constant 0 : index
    %88 = vector.load %arg7[%c1_61, %c1_62, %c0_63, %c0_64] : memref<8x2x49x49xf32, #tpu.memory_space<vmem>>, vector<1x1x49x49xf32>
    %89 = vector.shape_cast %88 : vector<1x1x49x49xf32> to vector<49x49xf32>
    %90 = vector.shape_cast %87 : vector<49x49xf32> to vector<1x1x49x49xf32>
    tpu.vector_store %arg7[%c1_61, %c1_62, %c0_63, %c0_64], %90 {strides = array<i32>} : memref<8x2x49x49xf32, #tpu.memory_space<vmem>>, vector<1x1x49x49xf32>,
    %cst_65 = arith.constant dense<0.000000e+00> : vector<49x8xf32>
    %91 = tpu.matmul %87, %73, %cst_65 {dimension_numbers = #tpu.dot_dimension_numbers<[1], [0], [0], [1], [0, 0, 1, 1], [], []>} : vector<49x49xf32>, vector<49x8xf32>, vector<49x8xf32> -> vector<49x8xf32>
    %c49_66 = arith.constant 49 : index
    %c8_67 = arith.constant 8 : index
    %92 = vector.load %arg9[%c49_66, %c8_67] : memref<392x16xf32, #tpu.memory_space<vmem>>, vector<49x8xf32>
    tpu.vector_store %arg9[%c49_66, %c8_67], %91 {strides = array<i32>} : memref<392x16xf32, #tpu.memory_space<vmem>>, vector<49x8xf32>,
    %c98 = arith.constant 98 : index
    %c0_68 = arith.constant 0 : index
    %93 = vector.load %arg8[%c98, %c0_68] : memref<392x48xf32, #tpu.memory_space<vmem>>, vector<49x8xf32>
    %c98_69 = arith.constant 98 : index
    %c16_70 = arith.constant 16 : index
    %94 = vector.load %arg8[%c98_69, %c16_70] : memref<392x48xf32, #tpu.memory_space<vmem>>, vector<49x8xf32>
    %c98_71 = arith.constant 98 : index
    %c32_72 = arith.constant 32 : index
    %95 = vector.load %arg8[%c98_71, %c32_72] : memref<392x48xf32, #tpu.memory_space<vmem>>, vector<49x8xf32>
    %cst_73 = arith.constant dense<0.000000e+00> : vector<49x49xf32>
    %96 = tpu.matmul %93, %94, %cst_73 {dimension_numbers = #tpu.dot_dimension_numbers<[1], [1], [0], [0], [0, 0, 1, 0], [], []>} : vector<49x8xf32>, vector<49x8xf32>, vector<49x49xf32> -> vector<49x49xf32>
    %cst_74 = arith.constant 0.353553385 : f32
    %97 = vector.broadcast %cst_74 : f32 to vector<49x49xf32>
    %98 = arith.mulf %96, %97 : vector<49x49xf32>
    %99 = arith.addf %98, %4 : vector<49x49xf32>
    %cst_75 = arith.constant dense<0xFF800000> : vector<49xf32>
    %100 = vector.multi_reduction <maximumf>, %99, %cst_75 [1] : vector<49x49xf32> to vector<49xf32>
    %101 = vector.shape_cast %100 : vector<49xf32> to vector<49x1xf32>
    %102 = vector.broadcast %101 : vector<49x1xf32> to vector<49x49xf32>
    %103 = arith.subf %99, %102 : vector<49x49xf32>
    %104 = math.exp %103 : vector<49x49xf32>
    %cst_76 = arith.constant dense<0.000000e+00> : vector<49xf32>
    %105 = vector.multi_reduction <add>, %104, %cst_76 [1] : vector<49x49xf32> to vector<49xf32>
    %106 = vector.shape_cast %105 : vector<49xf32> to vector<49x1xf32>
    %107 = tpu.reciprocal %106 {approx = true} : vector<49x1xf32> -> vector<49x1xf32>
    %108 = vector.broadcast %107 : vector<49x1xf32> to vector<49x49xf32>
    %109 = arith.mulf %104, %108 : vector<49x49xf32>
    %c2 = arith.constant 2 : index
    %c0_77 = arith.constant 0 : index
    %c0_78 = arith.constant 0 : index
    %c0_79 = arith.constant 0 : index
    %110 = vector.load %arg7[%c2, %c0_77, %c0_78, %c0_79] : memref<8x2x49x49xf32, #tpu.memory_space<vmem>>, vector<1x1x49x49xf32>
    %111 = vector.shape_cast %110 : vector<1x1x49x49xf32> to vector<49x49xf32>
    %112 = vector.shape_cast %109 : vector<49x49xf32> to vector<1x1x49x49xf32>
    tpu.vector_store %arg7[%c2, %c0_77, %c0_78, %c0_79], %112 {strides = array<i32>} : memref<8x2x49x49xf32, #tpu.memory_space<vmem>>, vector<1x1x49x49xf32>,
    %cst_80 = arith.constant dense<0.000000e+00> : vector<49x8xf32>
    %113 = tpu.matmul %109, %95, %cst_80 {dimension_numbers = #tpu.dot_dimension_numbers<[1], [0], [0], [1], [0, 0, 1, 1], [], []>} : vector<49x49xf32>, vector<49x8xf32>, vector<49x8xf32> -> vector<49x8xf32>
    %c98_81 = arith.constant 98 : index
    %c0_82 = arith.constant 0 : index
    %114 = vector.load %arg9[%c98_81, %c0_82] : memref<392x16xf32, #tpu.memory_space<vmem>>, vector<49x8xf32>
    tpu.vector_store %arg9[%c98_81, %c0_82], %113 {strides = array<i32>} : memref<392x16xf32, #tpu.memory_space<vmem>>, vector<49x8xf32>,
    %c98_83 = arith.constant 98 : index
    %c8_84 = arith.constant 8 : index
    %115 = vector.load %arg8[%c98_83, %c8_84] : memref<392x48xf32, #tpu.memory_space<vmem>>, vector<49x8xf32>
    %c98_85 = arith.constant 98 : index
    %c24_86 = arith.constant 24 : index
    %116 = vector.load %arg8[%c98_85, %c24_86] : memref<392x48xf32, #tpu.memory_space<vmem>>, vector<49x8xf32>
    %c98_87 = arith.constant 98 : index
    %c40_88 = arith.constant 40 : index
    %117 = vector.load %arg8[%c98_87, %c40_88] : memref<392x48xf32, #tpu.memory_space<vmem>>, vector<49x8xf32>
    %cst_89 = arith.constant dense<0.000000e+00> : vector<49x49xf32>
    %118 = tpu.matmul %115, %116, %cst_89 {dimension_numbers = #tpu.dot_dimension_numbers<[1], [1], [0], [0], [0, 0, 1, 0], [], []>} : vector<49x8xf32>, vector<49x8xf32>, vector<49x49xf32> -> vector<49x49xf32>
    %cst_90 = arith.constant 0.353553385 : f32
    %119 = vector.broadcast %cst_90 : f32 to vector<49x49xf32>
    %120 = arith.mulf %118, %119 : vector<49x49xf32>
    %121 = arith.addf %120, %4 : vector<49x49xf32>
    %cst_91 = arith.constant dense<0xFF800000> : vector<49xf32>
    %122 = vector.multi_reduction <maximumf>, %121, %cst_91 [1] : vector<49x49xf32> to vector<49xf32>
    %123 = vector.shape_cast %122 : vector<49xf32> to vector<49x1xf32>
    %124 = vector.broadcast %123 : vector<49x1xf32> to vector<49x49xf32>
    %125 = arith.subf %121, %124 : vector<49x49xf32>
    %126 = math.exp %125 : vector<49x49xf32>
    %cst_92 = arith.constant dense<0.000000e+00> : vector<49xf32>
    %127 = vector.multi_reduction <add>, %126, %cst_92 [1] : vector<49x49xf32> to vector<49xf32>
    %128 = vector.shape_cast %127 : vector<49xf32> to vector<49x1xf32>
    %129 = tpu.reciprocal %128 {approx = true} : vector<49x1xf32> -> vector<49x1xf32>
    %130 = vector.broadcast %129 : vector<49x1xf32> to vector<49x49xf32>
    %131 = arith.mulf %126, %130 : vector<49x49xf32>
    %c2_93 = arith.constant 2 : index
    %c1_94 = arith.constant 1 : index
    %c0_95 = arith.constant 0 : index
    %c0_96 = arith.constant 0 : index
    %132 = vector.load %arg7[%c2_93, %c1_94, %c0_95, %c0_96] : memref<8x2x49x49xf32, #tpu.memory_space<vmem>>, vector<1x1x49x49xf32>
    %133 = vector.shape_cast %132 : vector<1x1x49x49xf32> to vector<49x49xf32>
    %134 = vector.shape_cast %131 : vector<49x49xf32> to vector<1x1x49x49xf32>
    tpu.vector_store %arg7[%c2_93, %c1_94, %c0_95, %c0_96], %134 {strides = array<i32>} : memref<8x2x49x49xf32, #tpu.memory_space<vmem>>, vector<1x1x49x49xf32>,
    %cst_97 = arith.constant dense<0.000000e+00> : vector<49x8xf32>
    %135 = tpu.matmul %131, %117, %cst_97 {dimension_numbers = #tpu.dot_dimension_numbers<[1], [0], [0], [1], [0, 0, 1, 1], [], []>} : vector<49x49xf32>, vector<49x8xf32>, vector<49x8xf32> -> vector<49x8xf32>
    %c98_98 = arith.constant 98 : index
    %c8_99 = arith.constant 8 : index
    %136 = vector.load %arg9[%c98_98, %c8_99] : memref<392x16xf32, #tpu.memory_space<vmem>>, vector<49x8xf32>
    tpu.vector_store %arg9[%c98_98, %c8_99], %135 {strides = array<i32>} : memref<392x16xf32, #tpu.memory_space<vmem>>, vector<49x8xf32>,
    %c147 = arith.constant 147 : index
    %c0_100 = arith.constant 0 : index
    %137 = vector.load %arg8[%c147, %c0_100] : memref<392x48xf32, #tpu.memory_space<vmem>>, vector<49x8xf32>
    %c147_101 = arith.constant 147 : index
    %c16_102 = arith.constant 16 : index
    %138 = vector.load %arg8[%c147_101, %c16_102] : memref<392x48xf32, #tpu.memory_space<vmem>>, vector<49x8xf32>
    %c147_103 = arith.constant 147 : index
    %c32_104 = arith.constant 32 : index
    %139 = vector.load %arg8[%c147_103, %c32_104] : memref<392x48xf32, #tpu.memory_space<vmem>>, vector<49x8xf32>
    %cst_105 = arith.constant dense<0.000000e+00> : vector<49x49xf32>
    %140 = tpu.matmul %137, %138, %cst_105 {dimension_numbers = #tpu.dot_dimension_numbers<[1], [1], [0], [0], [0, 0, 1, 0], [], []>} : vector<49x8xf32>, vector<49x8xf32>, vector<49x49xf32> -> vector<49x49xf32>
    %cst_106 = arith.constant 0.353553385 : f32
    %141 = vector.broadcast %cst_106 : f32 to vector<49x49xf32>
    %142 = arith.mulf %140, %141 : vector<49x49xf32>
    %143 = arith.addf %142, %4 : vector<49x49xf32>
    %cst_107 = arith.constant dense<0xFF800000> : vector<49xf32>
    %144 = vector.multi_reduction <maximumf>, %143, %cst_107 [1] : vector<49x49xf32> to vector<49xf32>
    %145 = vector.shape_cast %144 : vector<49xf32> to vector<49x1xf32>
    %146 = vector.broadcast %145 : vector<49x1xf32> to vector<49x49xf32>
    %147 = arith.subf %143, %146 : vector<49x49xf32>
    %148 = math.exp %147 : vector<49x49xf32>
    %cst_108 = arith.constant dense<0.000000e+00> : vector<49xf32>
    %149 = vector.multi_reduction <add>, %148, %cst_108 [1] : vector<49x49xf32> to vector<49xf32>
    %150 = vector.shape_cast %149 : vector<49xf32> to vector<49x1xf32>
    %151 = tpu.reciprocal %150 {approx = true} : vector<49x1xf32> -> vector<49x1xf32>
    %152 = vector.broadcast %151 : vector<49x1xf32> to vector<49x49xf32>
    %153 = arith.mulf %148, %152 : vector<49x49xf32>
    %c3 = arith.constant 3 : index
    %c0_109 = arith.constant 0 : index
    %c0_110 = arith.constant 0 : index
    %c0_111 = arith.constant 0 : index
    %154 = vector.load %arg7[%c3, %c0_109, %c0_110, %c0_111] : memref<8x2x49x49xf32, #tpu.memory_space<vmem>>, vector<1x1x49x49xf32>
    %155 = vector.shape_cast %154 : vector<1x1x49x49xf32> to vector<49x49xf32>
    %156 = vector.shape_cast %153 : vector<49x49xf32> to vector<1x1x49x49xf32>
    tpu.vector_store %arg7[%c3, %c0_109, %c0_110, %c0_111], %156 {strides = array<i32>} : memref<8x2x49x49xf32, #tpu.memory_space<vmem>>, vector<1x1x49x49xf32>,
    %cst_112 = arith.constant dense<0.000000e+00> : vector<49x8xf32>
    %157 = tpu.matmul %153, %139, %cst_112 {dimension_numbers = #tpu.dot_dimension_numbers<[1], [0], [0], [1], [0, 0, 1, 1], [], []>} : vector<49x49xf32>, vector<49x8xf32>, vector<49x8xf32> -> vector<49x8xf32>
    %c147_113 = arith.constant 147 : index
    %c0_114 = arith.constant 0 : index
    %158 = vector.load %arg9[%c147_113, %c0_114] : memref<392x16xf32, #tpu.memory_space<vmem>>, vector<49x8xf32>
    tpu.vector_store %arg9[%c147_113, %c0_114], %157 {strides = array<i32>} : memref<392x16xf32, #tpu.memory_space<vmem>>, vector<49x8xf32>,
    %c147_115 = arith.constant 147 : index
    %c8_116 = arith.constant 8 : index
    %159 = vector.load %arg8[%c147_115, %c8_116] : memref<392x48xf32, #tpu.memory_space<vmem>>, vector<49x8xf32>
    %c147_117 = arith.constant 147 : index
    %c24_118 = arith.constant 24 : index
    %160 = vector.load %arg8[%c147_117, %c24_118] : memref<392x48xf32, #tpu.memory_space<vmem>>, vector<49x8xf32>
    %c147_119 = arith.constant 147 : index
    %c40_120 = arith.constant 40 : index
    %161 = vector.load %arg8[%c147_119, %c40_120] : memref<392x48xf32, #tpu.memory_space<vmem>>, vector<49x8xf32>
    %cst_121 = arith.constant dense<0.000000e+00> : vector<49x49xf32>
    %162 = tpu.matmul %159, %160, %cst_121 {dimension_numbers = #tpu.dot_dimension_numbers<[1], [1], [0], [0], [0, 0, 1, 0], [], []>} : vector<49x8xf32>, vector<49x8xf32>, vector<49x49xf32> -> vector<49x49xf32>
    %cst_122 = arith.constant 0.353553385 : f32
    %163 = vector.broadcast %cst_122 : f32 to vector<49x49xf32>
    %164 = arith.mulf %162, %163 : vector<49x49xf32>
    %165 = arith.addf %164, %4 : vector<49x49xf32>
    %cst_123 = arith.constant dense<0xFF800000> : vector<49xf32>
    %166 = vector.multi_reduction <maximumf>, %165, %cst_123 [1] : vector<49x49xf32> to vector<49xf32>
    %167 = vector.shape_cast %166 : vector<49xf32> to vector<49x1xf32>
    %168 = vector.broadcast %167 : vector<49x1xf32> to vector<49x49xf32>
    %169 = arith.subf %165, %168 : vector<49x49xf32>
    %170 = math.exp %169 : vector<49x49xf32>
    %cst_124 = arith.constant dense<0.000000e+00> : vector<49xf32>
    %171 = vector.multi_reduction <add>, %170, %cst_124 [1] : vector<49x49xf32> to vector<49xf32>
    %172 = vector.shape_cast %171 : vector<49xf32> to vector<49x1xf32>
    %173 = tpu.reciprocal %172 {approx = true} : vector<49x1xf32> -> vector<49x1xf32>
    %174 = vector.broadcast %173 : vector<49x1xf32> to vector<49x49xf32>
    %175 = arith.mulf %170, %174 : vector<49x49xf32>
    %c3_125 = arith.constant 3 : index
    %c1_126 = arith.constant 1 : index
    %c0_127 = arith.constant 0 : index
    %c0_128 = arith.constant 0 : index
    %176 = vector.load %arg7[%c3_125, %c1_126, %c0_127, %c0_128] : memref<8x2x49x49xf32, #tpu.memory_space<vmem>>, vector<1x1x49x49xf32>
    %177 = vector.shape_cast %176 : vector<1x1x49x49xf32> to vector<49x49xf32>
    %178 = vector.shape_cast %175 : vector<49x49xf32> to vector<1x1x49x49xf32>
    tpu.vector_store %arg7[%c3_125, %c1_126, %c0_127, %c0_128], %178 {strides = array<i32>} : memref<8x2x49x49xf32, #tpu.memory_space<vmem>>, vector<1x1x49x49xf32>,
    %cst_129 = arith.constant dense<0.000000e+00> : vector<49x8xf32>
    %179 = tpu.matmul %175, %161, %cst_129 {dimension_numbers = #tpu.dot_dimension_numbers<[1], [0], [0], [1], [0, 0, 1, 1], [], []>} : vector<49x49xf32>, vector<49x8xf32>, vector<49x8xf32> -> vector<49x8xf32>
    %c147_130 = arith.constant 147 : index
    %c8_131 = arith.constant 8 : index
    %180 = vector.load %arg9[%c147_130, %c8_131] : memref<392x16xf32, #tpu.memory_space<vmem>>, vector<49x8xf32>
    tpu.vector_store %arg9[%c147_130, %c8_131], %179 {strides = array<i32>} : memref<392x16xf32, #tpu.memory_space<vmem>>, vector<49x8xf32>,
    %c196 = arith.constant 196 : index
    %c0_132 = arith.constant 0 : index
    %181 = vector.load %arg8[%c196, %c0_132] : memref<392x48xf32, #tpu.memory_space<vmem>>, vector<49x8xf32>
    %c196_133 = arith.constant 196 : index
    %c16_134 = arith.constant 16 : index
    %182 = vector.load %arg8[%c196_133, %c16_134] : memref<392x48xf32, #tpu.memory_space<vmem>>, vector<49x8xf32>
    %c196_135 = arith.constant 196 : index
    %c32_136 = arith.constant 32 : index
    %183 = vector.load %arg8[%c196_135, %c32_136] : memref<392x48xf32, #tpu.memory_space<vmem>>, vector<49x8xf32>
    %cst_137 = arith.constant dense<0.000000e+00> : vector<49x49xf32>
    %184 = tpu.matmul %181, %182, %cst_137 {dimension_numbers = #tpu.dot_dimension_numbers<[1], [1], [0], [0], [0, 0, 1, 0], [], []>} : vector<49x8xf32>, vector<49x8xf32>, vector<49x49xf32> -> vector<49x49xf32>
    %cst_138 = arith.constant 0.353553385 : f32
    %185 = vector.broadcast %cst_138 : f32 to vector<49x49xf32>
    %186 = arith.mulf %184, %185 : vector<49x49xf32>
    %187 = arith.addf %186, %4 : vector<49x49xf32>
    %cst_139 = arith.constant dense<0xFF800000> : vector<49xf32>
    %188 = vector.multi_reduction <maximumf>, %187, %cst_139 [1] : vector<49x49xf32> to vector<49xf32>
    %189 = vector.shape_cast %188 : vector<49xf32> to vector<49x1xf32>
    %190 = vector.broadcast %189 : vector<49x1xf32> to vector<49x49xf32>
    %191 = arith.subf %187, %190 : vector<49x49xf32>
    %192 = math.exp %191 : vector<49x49xf32>
    %cst_140 = arith.constant dense<0.000000e+00> : vector<49xf32>
    %193 = vector.multi_reduction <add>, %192, %cst_140 [1] : vector<49x49xf32> to vector<49xf32>
    %194 = vector.shape_cast %193 : vector<49xf32> to vector<49x1xf32>
    %195 = tpu.reciprocal %194 {approx = true} : vector<49x1xf32> -> vector<49x1xf32>
    %196 = vector.broadcast %195 : vector<49x1xf32> to vector<49x49xf32>
    %197 = arith.mulf %192, %196 : vector<49x49xf32>
    %c4 = arith.constant 4 : index
    %c0_141 = arith.constant 0 : index
    %c0_142 = arith.constant 0 : index
    %c0_143 = arith.constant 0 : index
    %198 = vector.load %arg7[%c4, %c0_141, %c0_142, %c0_143] : memref<8x2x49x49xf32, #tpu.memory_space<vmem>>, vector<1x1x49x49xf32>
    %199 = vector.shape_cast %198 : vector<1x1x49x49xf32> to vector<49x49xf32>
    %200 = vector.shape_cast %197 : vector<49x49xf32> to vector<1x1x49x49xf32>
    tpu.vector_store %arg7[%c4, %c0_141, %c0_142, %c0_143], %200 {strides = array<i32>} : memref<8x2x49x49xf32, #tpu.memory_space<vmem>>, vector<1x1x49x49xf32>,
    %cst_144 = arith.constant dense<0.000000e+00> : vector<49x8xf32>
    %201 = tpu.matmul %197, %183, %cst_144 {dimension_numbers = #tpu.dot_dimension_numbers<[1], [0], [0], [1], [0, 0, 1, 1], [], []>} : vector<49x49xf32>, vector<49x8xf32>, vector<49x8xf32> -> vector<49x8xf32>
    %c196_145 = arith.constant 196 : index
    %c0_146 = arith.constant 0 : index
    %202 = vector.load %arg9[%c196_145, %c0_146] : memref<392x16xf32, #tpu.memory_space<vmem>>, vector<49x8xf32>
    tpu.vector_store %arg9[%c196_145, %c0_146], %201 {strides = array<i32>} : memref<392x16xf32, #tpu.memory_space<vmem>>, vector<49x8xf32>,
    %c196_147 = arith.constant 196 : index
    %c8_148 = arith.constant 8 : index
    %203 = vector.load %arg8[%c196_147, %c8_148] : memref<392x48xf32, #tpu.memory_space<vmem>>, vector<49x8xf32>
    %c196_149 = arith.constant 196 : index
    %c24_150 = arith.constant 24 : index
    %204 = vector.load %arg8[%c196_149, %c24_150] : memref<392x48xf32, #tpu.memory_space<vmem>>, vector<49x8xf32>
    %c196_151 = arith.constant 196 : index
    %c40_152 = arith.constant 40 : index
    %205 = vector.load %arg8[%c196_151, %c40_152] : memref<392x48xf32, #tpu.memory_space<vmem>>, vector<49x8xf32>
    %cst_153 = arith.constant dense<0.000000e+00> : vector<49x49xf32>
    %206 = tpu.matmul %203, %204, %cst_153 {dimension_numbers = #tpu.dot_dimension_numbers<[1], [1], [0], [0], [0, 0, 1, 0], [], []>} : vector<49x8xf32>, vector<49x8xf32>, vector<49x49xf32> -> vector<49x49xf32>
    %cst_154 = arith.constant 0.353553385 : f32
    %207 = vector.broadcast %cst_154 : f32 to vector<49x49xf32>
    %208 = arith.mulf %206, %207 : vector<49x49xf32>
    %209 = arith.addf %208, %4 : vector<49x49xf32>
    %cst_155 = arith.constant dense<0xFF800000> : vector<49xf32>
    %210 = vector.multi_reduction <maximumf>, %209, %cst_155 [1] : vector<49x49xf32> to vector<49xf32>
    %211 = vector.shape_cast %210 : vector<49xf32> to vector<49x1xf32>
    %212 = vector.broadcast %211 : vector<49x1xf32> to vector<49x49xf32>
    %213 = arith.subf %209, %212 : vector<49x49xf32>
    %214 = math.exp %213 : vector<49x49xf32>
    %cst_156 = arith.constant dense<0.000000e+00> : vector<49xf32>
    %215 = vector.multi_reduction <add>, %214, %cst_156 [1] : vector<49x49xf32> to vector<49xf32>
    %216 = vector.shape_cast %215 : vector<49xf32> to vector<49x1xf32>
    %217 = tpu.reciprocal %216 {approx = true} : vector<49x1xf32> -> vector<49x1xf32>
    %218 = vector.broadcast %217 : vector<49x1xf32> to vector<49x49xf32>
    %219 = arith.mulf %214, %218 : vector<49x49xf32>
    %c4_157 = arith.constant 4 : index
    %c1_158 = arith.constant 1 : index
    %c0_159 = arith.constant 0 : index
    %c0_160 = arith.constant 0 : index
    %220 = vector.load %arg7[%c4_157, %c1_158, %c0_159, %c0_160] : memref<8x2x49x49xf32, #tpu.memory_space<vmem>>, vector<1x1x49x49xf32>
    %221 = vector.shape_cast %220 : vector<1x1x49x49xf32> to vector<49x49xf32>
    %222 = vector.shape_cast %219 : vector<49x49xf32> to vector<1x1x49x49xf32>
    tpu.vector_store %arg7[%c4_157, %c1_158, %c0_159, %c0_160], %222 {strides = array<i32>} : memref<8x2x49x49xf32, #tpu.memory_space<vmem>>, vector<1x1x49x49xf32>,
    %cst_161 = arith.constant dense<0.000000e+00> : vector<49x8xf32>
    %223 = tpu.matmul %219, %205, %cst_161 {dimension_numbers = #tpu.dot_dimension_numbers<[1], [0], [0], [1], [0, 0, 1, 1], [], []>} : vector<49x49xf32>, vector<49x8xf32>, vector<49x8xf32> -> vector<49x8xf32>
    %c196_162 = arith.constant 196 : index
    %c8_163 = arith.constant 8 : index
    %224 = vector.load %arg9[%c196_162, %c8_163] : memref<392x16xf32, #tpu.memory_space<vmem>>, vector<49x8xf32>
    tpu.vector_store %arg9[%c196_162, %c8_163], %223 {strides = array<i32>} : memref<392x16xf32, #tpu.memory_space<vmem>>, vector<49x8xf32>,
    %c245 = arith.constant 245 : index
    %c0_164 = arith.constant 0 : index
    %225 = vector.load %arg8[%c245, %c0_164] : memref<392x48xf32, #tpu.memory_space<vmem>>, vector<49x8xf32>
    %c245_165 = arith.constant 245 : index
    %c16_166 = arith.constant 16 : index
    %226 = vector.load %arg8[%c245_165, %c16_166] : memref<392x48xf32, #tpu.memory_space<vmem>>, vector<49x8xf32>
    %c245_167 = arith.constant 245 : index
    %c32_168 = arith.constant 32 : index
    %227 = vector.load %arg8[%c245_167, %c32_168] : memref<392x48xf32, #tpu.memory_space<vmem>>, vector<49x8xf32>
    %cst_169 = arith.constant dense<0.000000e+00> : vector<49x49xf32>
    %228 = tpu.matmul %225, %226, %cst_169 {dimension_numbers = #tpu.dot_dimension_numbers<[1], [1], [0], [0], [0, 0, 1, 0], [], []>} : vector<49x8xf32>, vector<49x8xf32>, vector<49x49xf32> -> vector<49x49xf32>
    %cst_170 = arith.constant 0.353553385 : f32
    %229 = vector.broadcast %cst_170 : f32 to vector<49x49xf32>
    %230 = arith.mulf %228, %229 : vector<49x49xf32>
    %231 = arith.addf %230, %4 : vector<49x49xf32>
    %cst_171 = arith.constant dense<0xFF800000> : vector<49xf32>
    %232 = vector.multi_reduction <maximumf>, %231, %cst_171 [1] : vector<49x49xf32> to vector<49xf32>
    %233 = vector.shape_cast %232 : vector<49xf32> to vector<49x1xf32>
    %234 = vector.broadcast %233 : vector<49x1xf32> to vector<49x49xf32>
    %235 = arith.subf %231, %234 : vector<49x49xf32>
    %236 = math.exp %235 : vector<49x49xf32>
    %cst_172 = arith.constant dense<0.000000e+00> : vector<49xf32>
    %237 = vector.multi_reduction <add>, %236, %cst_172 [1] : vector<49x49xf32> to vector<49xf32>
    %238 = vector.shape_cast %237 : vector<49xf32> to vector<49x1xf32>
    %239 = tpu.reciprocal %238 {approx = true} : vector<49x1xf32> -> vector<49x1xf32>
    %240 = vector.broadcast %239 : vector<49x1xf32> to vector<49x49xf32>
    %241 = arith.mulf %236, %240 : vector<49x49xf32>
    %c5 = arith.constant 5 : index
    %c0_173 = arith.constant 0 : index
    %c0_174 = arith.constant 0 : index
    %c0_175 = arith.constant 0 : index
    %242 = vector.load %arg7[%c5, %c0_173, %c0_174, %c0_175] : memref<8x2x49x49xf32, #tpu.memory_space<vmem>>, vector<1x1x49x49xf32>
    %243 = vector.shape_cast %242 : vector<1x1x49x49xf32> to vector<49x49xf32>
    %244 = vector.shape_cast %241 : vector<49x49xf32> to vector<1x1x49x49xf32>
    tpu.vector_store %arg7[%c5, %c0_173, %c0_174, %c0_175], %244 {strides = array<i32>} : memref<8x2x49x49xf32, #tpu.memory_space<vmem>>, vector<1x1x49x49xf32>,
    %cst_176 = arith.constant dense<0.000000e+00> : vector<49x8xf32>
    %245 = tpu.matmul %241, %227, %cst_176 {dimension_numbers = #tpu.dot_dimension_numbers<[1], [0], [0], [1], [0, 0, 1, 1], [], []>} : vector<49x49xf32>, vector<49x8xf32>, vector<49x8xf32> -> vector<49x8xf32>
    %c245_177 = arith.constant 245 : index
    %c0_178 = arith.constant 0 : index
    %246 = vector.load %arg9[%c245_177, %c0_178] : memref<392x16xf32, #tpu.memory_space<vmem>>, vector<49x8xf32>
    tpu.vector_store %arg9[%c245_177, %c0_178], %245 {strides = array<i32>} : memref<392x16xf32, #tpu.memory_space<vmem>>, vector<49x8xf32>,
    %c245_179 = arith.constant 245 : index
    %c8_180 = arith.constant 8 : index
    %247 = vector.load %arg8[%c245_179, %c8_180] : memref<392x48xf32, #tpu.memory_space<vmem>>, vector<49x8xf32>
    %c245_181 = arith.constant 245 : index
    %c24_182 = arith.constant 24 : index
    %248 = vector.load %arg8[%c245_181, %c24_182] : memref<392x48xf32, #tpu.memory_space<vmem>>, vector<49x8xf32>
    %c245_183 = arith.constant 245 : index
    %c40_184 = arith.constant 40 : index
    %249 = vector.load %arg8[%c245_183, %c40_184] : memref<392x48xf32, #tpu.memory_space<vmem>>, vector<49x8xf32>
    %cst_185 = arith.constant dense<0.000000e+00> : vector<49x49xf32>
    %250 = tpu.matmul %247, %248, %cst_185 {dimension_numbers = #tpu.dot_dimension_numbers<[1], [1], [0], [0], [0, 0, 1, 0], [], []>} : vector<49x8xf32>, vector<49x8xf32>, vector<49x49xf32> -> vector<49x49xf32>
    %cst_186 = arith.constant 0.353553385 : f32
    %251 = vector.broadcast %cst_186 : f32 to vector<49x49xf32>
    %252 = arith.mulf %250, %251 : vector<49x49xf32>
    %253 = arith.addf %252, %4 : vector<49x49xf32>
    %cst_187 = arith.constant dense<0xFF800000> : vector<49xf32>
    %254 = vector.multi_reduction <maximumf>, %253, %cst_187 [1] : vector<49x49xf32> to vector<49xf32>
    %255 = vector.shape_cast %254 : vector<49xf32> to vector<49x1xf32>
    %256 = vector.broadcast %255 : vector<49x1xf32> to vector<49x49xf32>
    %257 = arith.subf %253, %256 : vector<49x49xf32>
    %258 = math.exp %257 : vector<49x49xf32>
    %cst_188 = arith.constant dense<0.000000e+00> : vector<49xf32>
    %259 = vector.multi_reduction <add>, %258, %cst_188 [1] : vector<49x49xf32> to vector<49xf32>
    %260 = vector.shape_cast %259 : vector<49xf32> to vector<49x1xf32>
    %261 = tpu.reciprocal %260 {approx = true} : vector<49x1xf32> -> vector<49x1xf32>
    %262 = vector.broadcast %261 : vector<49x1xf32> to vector<49x49xf32>
    %263 = arith.mulf %258, %262 : vector<49x49xf32>
    %c5_189 = arith.constant 5 : index
    %c1_190 = arith.constant 1 : index
    %c0_191 = arith.constant 0 : index
    %c0_192 = arith.constant 0 : index
    %264 = vector.load %arg7[%c5_189, %c1_190, %c0_191, %c0_192] : memref<8x2x49x49xf32, #tpu.memory_space<vmem>>, vector<1x1x49x49xf32>
    %265 = vector.shape_cast %264 : vector<1x1x49x49xf32> to vector<49x49xf32>
    %266 = vector.shape_cast %263 : vector<49x49xf32> to vector<1x1x49x49xf32>
    tpu.vector_store %arg7[%c5_189, %c1_190, %c0_191, %c0_192], %266 {strides = array<i32>} : memref<8x2x49x49xf32, #tpu.memory_space<vmem>>, vector<1x1x49x49xf32>,
    %cst_193 = arith.constant dense<0.000000e+00> : vector<49x8xf32>
    %267 = tpu.matmul %263, %249, %cst_193 {dimension_numbers = #tpu.dot_dimension_numbers<[1], [0], [0], [1], [0, 0, 1, 1], [], []>} : vector<49x49xf32>, vector<49x8xf32>, vector<49x8xf32> -> vector<49x8xf32>
    %c245_194 = arith.constant 245 : index
    %c8_195 = arith.constant 8 : index
    %268 = vector.load %arg9[%c245_194, %c8_195] : memref<392x16xf32, #tpu.memory_space<vmem>>, vector<49x8xf32>
    tpu.vector_store %arg9[%c245_194, %c8_195], %267 {strides = array<i32>} : memref<392x16xf32, #tpu.memory_space<vmem>>, vector<49x8xf32>,
    %c294 = arith.constant 294 : index
    %c0_196 = arith.constant 0 : index
    %269 = vector.load %arg8[%c294, %c0_196] : memref<392x48xf32, #tpu.memory_space<vmem>>, vector<49x8xf32>
    %c294_197 = arith.constant 294 : index
    %c16_198 = arith.constant 16 : index
    %270 = vector.load %arg8[%c294_197, %c16_198] : memref<392x48xf32, #tpu.memory_space<vmem>>, vector<49x8xf32>
    %c294_199 = arith.constant 294 : index
    %c32_200 = arith.constant 32 : index
    %271 = vector.load %arg8[%c294_199, %c32_200] : memref<392x48xf32, #tpu.memory_space<vmem>>, vector<49x8xf32>
    %cst_201 = arith.constant dense<0.000000e+00> : vector<49x49xf32>
    %272 = tpu.matmul %269, %270, %cst_201 {dimension_numbers = #tpu.dot_dimension_numbers<[1], [1], [0], [0], [0, 0, 1, 0], [], []>} : vector<49x8xf32>, vector<49x8xf32>, vector<49x49xf32> -> vector<49x49xf32>
    %cst_202 = arith.constant 0.353553385 : f32
    %273 = vector.broadcast %cst_202 : f32 to vector<49x49xf32>
    %274 = arith.mulf %272, %273 : vector<49x49xf32>
    %275 = arith.addf %274, %4 : vector<49x49xf32>
    %cst_203 = arith.constant dense<0xFF800000> : vector<49xf32>
    %276 = vector.multi_reduction <maximumf>, %275, %cst_203 [1] : vector<49x49xf32> to vector<49xf32>
    %277 = vector.shape_cast %276 : vector<49xf32> to vector<49x1xf32>
    %278 = vector.broadcast %277 : vector<49x1xf32> to vector<49x49xf32>
    %279 = arith.subf %275, %278 : vector<49x49xf32>
    %280 = math.exp %279 : vector<49x49xf32>
    %cst_204 = arith.constant dense<0.000000e+00> : vector<49xf32>
    %281 = vector.multi_reduction <add>, %280, %cst_204 [1] : vector<49x49xf32> to vector<49xf32>
    %282 = vector.shape_cast %281 : vector<49xf32> to vector<49x1xf32>
    %283 = tpu.reciprocal %282 {approx = true} : vector<49x1xf32> -> vector<49x1xf32>
    %284 = vector.broadcast %283 : vector<49x1xf32> to vector<49x49xf32>
    %285 = arith.mulf %280, %284 : vector<49x49xf32>
    %c6 = arith.constant 6 : index
    %c0_205 = arith.constant 0 : index
    %c0_206 = arith.constant 0 : index
    %c0_207 = arith.constant 0 : index
    %286 = vector.load %arg7[%c6, %c0_205, %c0_206, %c0_207] : memref<8x2x49x49xf32, #tpu.memory_space<vmem>>, vector<1x1x49x49xf32>
    %287 = vector.shape_cast %286 : vector<1x1x49x49xf32> to vector<49x49xf32>
    %288 = vector.shape_cast %285 : vector<49x49xf32> to vector<1x1x49x49xf32>
    tpu.vector_store %arg7[%c6, %c0_205, %c0_206, %c0_207], %288 {strides = array<i32>} : memref<8x2x49x49xf32, #tpu.memory_space<vmem>>, vector<1x1x49x49xf32>,
    %cst_208 = arith.constant dense<0.000000e+00> : vector<49x8xf32>
    %289 = tpu.matmul %285, %271, %cst_208 {dimension_numbers = #tpu.dot_dimension_numbers<[1], [0], [0], [1], [0, 0, 1, 1], [], []>} : vector<49x49xf32>, vector<49x8xf32>, vector<49x8xf32> -> vector<49x8xf32>
    %c294_209 = arith.constant 294 : index
    %c0_210 = arith.constant 0 : index
    %290 = vector.load %arg9[%c294_209, %c0_210] : memref<392x16xf32, #tpu.memory_space<vmem>>, vector<49x8xf32>
    tpu.vector_store %arg9[%c294_209, %c0_210], %289 {strides = array<i32>} : memref<392x16xf32, #tpu.memory_space<vmem>>, vector<49x8xf32>,
    %c294_211 = arith.constant 294 : index
    %c8_212 = arith.constant 8 : index
    %291 = vector.load %arg8[%c294_211, %c8_212] : memref<392x48xf32, #tpu.memory_space<vmem>>, vector<49x8xf32>
    %c294_213 = arith.constant 294 : index
    %c24_214 = arith.constant 24 : index
    %292 = vector.load %arg8[%c294_213, %c24_214] : memref<392x48xf32, #tpu.memory_space<vmem>>, vector<49x8xf32>
    %c294_215 = arith.constant 294 : index
    %c40_216 = arith.constant 40 : index
    %293 = vector.load %arg8[%c294_215, %c40_216] : memref<392x48xf32, #tpu.memory_space<vmem>>, vector<49x8xf32>
    %cst_217 = arith.constant dense<0.000000e+00> : vector<49x49xf32>
    %294 = tpu.matmul %291, %292, %cst_217 {dimension_numbers = #tpu.dot_dimension_numbers<[1], [1], [0], [0], [0, 0, 1, 0], [], []>} : vector<49x8xf32>, vector<49x8xf32>, vector<49x49xf32> -> vector<49x49xf32>
    %cst_218 = arith.constant 0.353553385 : f32
    %295 = vector.broadcast %cst_218 : f32 to vector<49x49xf32>
    %296 = arith.mulf %294, %295 : vector<49x49xf32>
    %297 = arith.addf %296, %4 : vector<49x49xf32>
    %cst_219 = arith.constant dense<0xFF800000> : vector<49xf32>
    %298 = vector.multi_reduction <maximumf>, %297, %cst_219 [1] : vector<49x49xf32> to vector<49xf32>
    %299 = vector.shape_cast %298 : vector<49xf32> to vector<49x1xf32>
    %300 = vector.broadcast %299 : vector<49x1xf32> to vector<49x49xf32>
    %301 = arith.subf %297, %300 : vector<49x49xf32>
    %302 = math.exp %301 : vector<49x49xf32>
    %cst_220 = arith.constant dense<0.000000e+00> : vector<49xf32>
    %303 = vector.multi_reduction <add>, %302, %cst_220 [1] : vector<49x49xf32> to vector<49xf32>
    %304 = vector.shape_cast %303 : vector<49xf32> to vector<49x1xf32>
    %305 = tpu.reciprocal %304 {approx = true} : vector<49x1xf32> -> vector<49x1xf32>
    %306 = vector.broadcast %305 : vector<49x1xf32> to vector<49x49xf32>
    %307 = arith.mulf %302, %306 : vector<49x49xf32>
    %c6_221 = arith.constant 6 : index
    %c1_222 = arith.constant 1 : index
    %c0_223 = arith.constant 0 : index
    %c0_224 = arith.constant 0 : index
    %308 = vector.load %arg7[%c6_221, %c1_222, %c0_223, %c0_224] : memref<8x2x49x49xf32, #tpu.memory_space<vmem>>, vector<1x1x49x49xf32>
    %309 = vector.shape_cast %308 : vector<1x1x49x49xf32> to vector<49x49xf32>
    %310 = vector.shape_cast %307 : vector<49x49xf32> to vector<1x1x49x49xf32>
    tpu.vector_store %arg7[%c6_221, %c1_222, %c0_223, %c0_224], %310 {strides = array<i32>} : memref<8x2x49x49xf32, #tpu.memory_space<vmem>>, vector<1x1x49x49xf32>,
    %cst_225 = arith.constant dense<0.000000e+00> : vector<49x8xf32>
    %311 = tpu.matmul %307, %293, %cst_225 {dimension_numbers = #tpu.dot_dimension_numbers<[1], [0], [0], [1], [0, 0, 1, 1], [], []>} : vector<49x49xf32>, vector<49x8xf32>, vector<49x8xf32> -> vector<49x8xf32>
    %c294_226 = arith.constant 294 : index
    %c8_227 = arith.constant 8 : index
    %312 = vector.load %arg9[%c294_226, %c8_227] : memref<392x16xf32, #tpu.memory_space<vmem>>, vector<49x8xf32>
    tpu.vector_store %arg9[%c294_226, %c8_227], %311 {strides = array<i32>} : memref<392x16xf32, #tpu.memory_space<vmem>>, vector<49x8xf32>,
    %c343 = arith.constant 343 : index
    %c0_228 = arith.constant 0 : index
    %313 = vector.load %arg8[%c343, %c0_228] : memref<392x48xf32, #tpu.memory_space<vmem>>, vector<49x8xf32>
    %c343_229 = arith.constant 343 : index
    %c16_230 = arith.constant 16 : index
    %314 = vector.load %arg8[%c343_229, %c16_230] : memref<392x48xf32, #tpu.memory_space<vmem>>, vector<49x8xf32>
    %c343_231 = arith.constant 343 : index
    %c32_232 = arith.constant 32 : index
    %315 = vector.load %arg8[%c343_231, %c32_232] : memref<392x48xf32, #tpu.memory_space<vmem>>, vector<49x8xf32>
    %cst_233 = arith.constant dense<0.000000e+00> : vector<49x49xf32>
    %316 = tpu.matmul %313, %314, %cst_233 {dimension_numbers = #tpu.dot_dimension_numbers<[1], [1], [0], [0], [0, 0, 1, 0], [], []>} : vector<49x8xf32>, vector<49x8xf32>, vector<49x49xf32> -> vector<49x49xf32>
    %cst_234 = arith.constant 0.353553385 : f32
    %317 = vector.broadcast %cst_234 : f32 to vector<49x49xf32>
    %318 = arith.mulf %316, %317 : vector<49x49xf32>
    %319 = arith.addf %318, %4 : vector<49x49xf32>
    %cst_235 = arith.constant dense<0xFF800000> : vector<49xf32>
    %320 = vector.multi_reduction <maximumf>, %319, %cst_235 [1] : vector<49x49xf32> to vector<49xf32>
    %321 = vector.shape_cast %320 : vector<49xf32> to vector<49x1xf32>
    %322 = vector.broadcast %321 : vector<49x1xf32> to vector<49x49xf32>
    %323 = arith.subf %319, %322 : vector<49x49xf32>
    %324 = math.exp %323 : vector<49x49xf32>
    %cst_236 = arith.constant dense<0.000000e+00> : vector<49xf32>
    %325 = vector.multi_reduction <add>, %324, %cst_236 [1] : vector<49x49xf32> to vector<49xf32>
    %326 = vector.shape_cast %325 : vector<49xf32> to vector<49x1xf32>
    %327 = tpu.reciprocal %326 {approx = true} : vector<49x1xf32> -> vector<49x1xf32>
    %328 = vector.broadcast %327 : vector<49x1xf32> to vector<49x49xf32>
    %329 = arith.mulf %324, %328 : vector<49x49xf32>
    %c7 = arith.constant 7 : index
    %c0_237 = arith.constant 0 : index
    %c0_238 = arith.constant 0 : index
    %c0_239 = arith.constant 0 : index
    %330 = vector.load %arg7[%c7, %c0_237, %c0_238, %c0_239] : memref<8x2x49x49xf32, #tpu.memory_space<vmem>>, vector<1x1x49x49xf32>
    %331 = vector.shape_cast %330 : vector<1x1x49x49xf32> to vector<49x49xf32>
    %332 = vector.shape_cast %329 : vector<49x49xf32> to vector<1x1x49x49xf32>
    tpu.vector_store %arg7[%c7, %c0_237, %c0_238, %c0_239], %332 {strides = array<i32>} : memref<8x2x49x49xf32, #tpu.memory_space<vmem>>, vector<1x1x49x49xf32>,
    %cst_240 = arith.constant dense<0.000000e+00> : vector<49x8xf32>
    %333 = tpu.matmul %329, %315, %cst_240 {dimension_numbers = #tpu.dot_dimension_numbers<[1], [0], [0], [1], [0, 0, 1, 1], [], []>} : vector<49x49xf32>, vector<49x8xf32>, vector<49x8xf32> -> vector<49x8xf32>
    %c343_241 = arith.constant 343 : index
    %c0_242 = arith.constant 0 : index
    %334 = vector.load %arg9[%c343_241, %c0_242] : memref<392x16xf32, #tpu.memory_space<vmem>>, vector<49x8xf32>
    tpu.vector_store %arg9[%c343_241, %c0_242], %333 {strides = array<i32>} : memref<392x16xf32, #tpu.memory_space<vmem>>, vector<49x8xf32>,
    %c343_243 = arith.constant 343 : index
    %c8_244 = arith.constant 8 : index
    %335 = vector.load %arg8[%c343_243, %c8_244] : memref<392x48xf32, #tpu.memory_space<vmem>>, vector<49x8xf32>
    %c343_245 = arith.constant 343 : index
    %c24_246 = arith.constant 24 : index
    %336 = vector.load %arg8[%c343_245, %c24_246] : memref<392x48xf32, #tpu.memory_space<vmem>>, vector<49x8xf32>
    %c343_247 = arith.constant 343 : index
    %c40_248 = arith.constant 40 : index
    %337 = vector.load %arg8[%c343_247, %c40_248] : memref<392x48xf32, #tpu.memory_space<vmem>>, vector<49x8xf32>
    %cst_249 = arith.constant dense<0.000000e+00> : vector<49x49xf32>
    %338 = tpu.matmul %335, %336, %cst_249 {dimension_numbers = #tpu.dot_dimension_numbers<[1], [1], [0], [0], [0, 0, 1, 0], [], []>} : vector<49x8xf32>, vector<49x8xf32>, vector<49x49xf32> -> vector<49x49xf32>
    %cst_250 = arith.constant 0.353553385 : f32
    %339 = vector.broadcast %cst_250 : f32 to vector<49x49xf32>
    %340 = arith.mulf %338, %339 : vector<49x49xf32>
    %341 = arith.addf %340, %4 : vector<49x49xf32>
    %cst_251 = arith.constant dense<0xFF800000> : vector<49xf32>
    %342 = vector.multi_reduction <maximumf>, %341, %cst_251 [1] : vector<49x49xf32> to vector<49xf32>
    %343 = vector.shape_cast %342 : vector<49xf32> to vector<49x1xf32>
    %344 = vector.broadcast %343 : vector<49x1xf32> to vector<49x49xf32>
    %345 = arith.subf %341, %344 : vector<49x49xf32>
    %346 = math.exp %345 : vector<49x49xf32>
    %cst_252 = arith.constant dense<0.000000e+00> : vector<49xf32>
    %347 = vector.multi_reduction <add>, %346, %cst_252 [1] : vector<49x49xf32> to vector<49xf32>
    %348 = vector.shape_cast %347 : vector<49xf32> to vector<49x1xf32>
    %349 = tpu.reciprocal %348 {approx = true} : vector<49x1xf32> -> vector<49x1xf32>
    %350 = vector.broadcast %349 : vector<49x1xf32> to vector<49x49xf32>
    %351 = arith.mulf %346, %350 : vector<49x49xf32>
    %c7_253 = arith.constant 7 : index
    %c1_254 = arith.constant 1 : index
    %c0_255 = arith.constant 0 : index
    %c0_256 = arith.constant 0 : index
    %352 = vector.load %arg7[%c7_253, %c1_254, %c0_255, %c0_256] : memref<8x2x49x49xf32, #tpu.memory_space<vmem>>, vector<1x1x49x49xf32>
    %353 = vector.shape_cast %352 : vector<1x1x49x49xf32> to vector<49x49xf32>
    %354 = vector.shape_cast %351 : vector<49x49xf32> to vector<1x1x49x49xf32>
    tpu.vector_store %arg7[%c7_253, %c1_254, %c0_255, %c0_256], %354 {strides = array<i32>} : memref<8x2x49x49xf32, #tpu.memory_space<vmem>>, vector<1x1x49x49xf32>,
    %cst_257 = arith.constant dense<0.000000e+00> : vector<49x8xf32>
    %355 = tpu.matmul %351, %337, %cst_257 {dimension_numbers = #tpu.dot_dimension_numbers<[1], [0], [0], [1], [0, 0, 1, 1], [], []>} : vector<49x49xf32>, vector<49x8xf32>, vector<49x8xf32> -> vector<49x8xf32>
    %c343_258 = arith.constant 343 : index
    %c8_259 = arith.constant 8 : index
    %356 = vector.load %arg9[%c343_258, %c8_259] : memref<392x16xf32, #tpu.memory_space<vmem>>, vector<49x8xf32>
    tpu.vector_store %arg9[%c343_258, %c8_259], %355 {strides = array<i32>} : memref<392x16xf32, #tpu.memory_space<vmem>>, vector<49x8xf32>,
    %c0_260 = arith.constant 0 : index
    %c0_261 = arith.constant 0 : index
    %357 = vector.load %arg9[%c0_260, %c0_261] : memref<392x16xf32, #tpu.memory_space<vmem>>, vector<392x16xf32>
    %c0_262 = arith.constant 0 : index
    %c0_263 = arith.constant 0 : index
    %358 = vector.load %arg3[%c0_262, %c0_263] : memref<16x16xf32, #tpu.memory_space<vmem>>, vector<16x16xf32>
    %cst_264 = arith.constant dense<0.000000e+00> : vector<392x16xf32>
    %359 = tpu.matmul %357, %358, %cst_264 {dimension_numbers = #tpu.dot_dimension_numbers<[1], [0], [0], [1], [0, 0, 1, 1], [], []>} : vector<392x16xf32>, vector<16x16xf32>, vector<392x16xf32> -> vector<392x16xf32>
    %c0_265 = arith.constant 0 : index
    %c0_266 = arith.constant 0 : index
    %360 = vector.load %arg4[%c0_265, %c0_266] : memref<1x16xf32, #tpu.memory_space<vmem>>, vector<1x16xf32>
    %361 = vector.broadcast %360 : vector<1x16xf32> to vector<392x16xf32>
    %362 = arith.addf %359, %361 : vector<392x16xf32>
    %c0_267 = arith.constant 0 : index
    %c0_268 = arith.constant 0 : index
    %363 = vector.load %arg6[%c0_267, %c0_268] : memref<392x16xf32, #tpu.memory_space<vmem>>, vector<392x16xf32>
    tpu.vector_store %arg6[%c0_267, %c0_268], %362 {strides = array<i32>} : memref<392x16xf32, #tpu.memory_space<vmem>>, vector<392x16xf32>,
    return
  }
  func.func @transform_0(%arg0: i32) -> (i32, i32) {
    %c0_i32 = arith.constant 0 : i32
    %c0_i32_0 = arith.constant 0 : i32
    return %arg0, %c0_i32 : i32, i32
  }
  func.func @transform_1(%arg0: i32) -> (i32, i32) {
    %c0_i32 = arith.constant 0 : i32
    %c0_i32_0 = arith.constant 0 : i32
    %c0_i32_1 = arith.constant 0 : i32
    return %c0_i32, %c0_i32_0 : i32, i32
  }
  func.func @transform_2(%arg0: i32) -> (i32, i32) {
    %c0_i32 = arith.constant 0 : i32
    %c0_i32_0 = arith.constant 0 : i32
    %c0_i32_1 = arith.constant 0 : i32
    return %c0_i32, %c0_i32_0 : i32, i32
  }
  func.func @transform_3(%arg0: i32) -> (i32, i32) {
    %c0_i32 = arith.constant 0 : i32
    %c0_i32_0 = arith.constant 0 : i32
    %c0_i32_1 = arith.constant 0 : i32
    return %c0_i32, %c0_i32_0 : i32, i32
  }
  func.func @transform_4(%arg0: i32) -> (i32, i32) {
    %c0_i32 = arith.constant 0 : i32
    %c0_i32_0 = arith.constant 0 : i32
    %c0_i32_1 = arith.constant 0 : i32
    return %c0_i32, %c0_i32_0 : i32, i32
  }
  func.func @transform_5(%arg0: i32) -> (i32, i32) {
    %c0_i32 = arith.constant 0 : i32
    %c0_i32_0 = arith.constant 0 : i32
    return %arg0, %c0_i32 : i32, i32
  }
  func.func @transform_6(%arg0: i32) -> (i32, i32, i32, i32) {
    %c0_i32 = arith.constant 0 : i32
    %c0_i32_0 = arith.constant 0 : i32
    %c0_i32_1 = arith.constant 0 : i32
    %c0_i32_2 = arith.constant 0 : i32
    return %arg0, %c0_i32, %c0_i32_0, %c0_i32_1 : i32, i32, i32, i32
  }
}

</mosaic_0001>

<llo_original>
// kernel: window_attention_forward.1
$region0: #{window_attention_forward.1}
  #allocation0 [shape = 'u32[]', space=smem, size = 0x4, offset = 0x4, fixed_abs, tag = 'smem constant byte address 0x4 - core index']
  #allocation1 [shape = 'u32[144,128]{1,0:T(1,128)}', space=vmem, size = 0x12000, scoped, tag = 'internal scratch']
  #allocation2 [shape = 'f32[392,48]{1,0:T(8,128)}', space=vmem, size = 0x31000, scoped, tag = 'scratch operand']
  #allocation3 [shape = 'f32[392,16]{1,0:T(8,128)}', space=vmem, size = 0x31000, scoped, tag = 'scratch operand']
  %s0 = inlined_call_operand.vmem [shape: f32[1568,16], index: 0, kind: input, shape index: {}]
  %s1 = inlined_call_operand.vmem [shape: f32[16,48], index: 1, kind: input, shape index: {}]
  %s2 = inlined_call_operand.vmem [shape: f32[16,16], index: 2, kind: input, shape index: {}]
  %s3 = inlined_call_operand.vmem [shape: f32[1,16], index: 3, kind: input, shape index: {}]
  %s4 = inlined_call_operand.vmem [shape: f32[49,49], index: 4, kind: input, shape index: {}]
  %s5 = inlined_call_operand.vmem [shape: f32[1568,16], index: 5, kind: output, shape index: {0}]
  %s6 = inlined_call_operand.vmem [shape: f32[32,2,49,49], index: 6, kind: output, shape index: {1}]
  %7 = xla_tuple %s5, %s6
  %s8 = sld [smem:[#allocation0]]
  $region61: #{window_attention_forward.1} parent=0
    _
  %s10 = ssub.s32 1, %s8
  %s11 = scalar_select 0, %s10, %s8
  loop: start=0, step=1, limit=6
  $region2: #{window_attention_forward.1} parent=0 // loop_pre_header
    _
  $region3: #{window_attention_forward.1} parent=0 // loop_header
    %s13 = sphi 0, %s17
    %p14 = scmp.ge.s32.totalorder %s13, 6
    %s23 = sphi 0, %s25
    %s26 = sphi 0, %s23
    %s27 = sphi 0, %s26
    %s43 = sphi 0, %s27
    %s47 = sphi 0, %s47
    %s49 = sphi 0, %s47
    %s50 = sphi 0, %s49
    %s64 = sphi 0, %s50
    %s68 = sphi 0, %s68
    %s70 = sphi 0, %s68
    %s71 = sphi 0, %s70
    %s85 = sphi 0, %s71
    %s89 = sphi 0, %s89
    %s91 = sphi 0, %s89
    %s92 = sphi 0, %s91
    %s106 = sphi 0, %s92
    %s110 = sphi 0, %s110
    %s112 = sphi 0, %s110
    %s113 = sphi 0, %s112
    %s127 = sphi 0, %s113
    %s133 = sphi 0, %s135
    %s136 = sphi 0, %s133
    %s137 = sphi 0, %s136
    %s153 = sphi 0, %s137
    %s159 = sphi 0, %s161
    %s162 = sphi 0, %s159
    %s163 = sphi 0, %s162
    %s179 = sphi 0, %s163
  $region4: #{window_attention_forward.1} parent=0 // loop_header_branch
    %16 = sbr.rel (%p14) target = $region8
  $region5: #{window_attention_forward.1} parent=0 // loop_body
    %s18 = ssub.s32 %s13, 1
    %s19 = ssub.s32 %s13, 2
    %s20 = sadd.s32 %s13, 1
    %s21 = ssub.s32 %s13, %s20
    %p22 = scmp.eq.s32.totalorder %s21, 0
    %s24 = sadd.s32 %s23, 1
    %s25 = scalar_select %p22, %s23, %s24
    %p28 = pneg %p22
    %p29 = scmp.eq.s32.totalorder %s13, 3
    %p30 = por %p28, %p29
    %p31 = scmp.ne.s32.totalorder %s23, %s26
    %p32 = scmp.eq.s32.totalorder %s13, 0
    %p33 = por %p31, %p32
    %p34 = scmp.ne.s32.totalorder %s23, %s26
    %p35 = scmp.eq.s32.totalorder %s18, 3
    %p36 = por %p34, %p35
    %p37 = scmp.ne.s32.totalorder %s26, %s27
    %p38 = scmp.eq.s32.totalorder %s18, 0
    %p39 = por %p37, %p38
    %p40 = scmp.ne.s32.totalorder %s26, %s27
    %p41 = scmp.eq.s32.totalorder %s19, 3
    %p42 = por %p40, %p41
    %p44 = scmp.ne.s32.totalorder %s27, %s43
    %p45 = scmp.eq.s32.totalorder %s19, 0
    %p46 = por %p44, %p45
    %s48 = sadd.s32 %s47, 1
    %p51 = scmp.eq.s32.totalorder %s13, 3
    %p52 = scmp.ne.s32.totalorder %s47, %s49
    %p53 = scmp.eq.s32.totalorder %s13, 0
    %p54 = por %p52, %p53
    %p55 = scmp.ne.s32.totalorder %s47, %s49
    %p56 = scmp.eq.s32.totalorder %s18, 3
    %p57 = por %p55, %p56
    %p58 = scmp.ne.s32.totalorder %s49, %s50
    %p59 = scmp.eq.s32.totalorder %s18, 0
    %p60 = por %p58, %p59
    %p61 = scmp.ne.s32.totalorder %s49, %s50
    %p62 = scmp.eq.s32.totalorder %s19, 3
    %p63 = por %p61, %p62
    %p65 = scmp.ne.s32.totalorder %s50, %s64
    %p66 = scmp.eq.s32.totalorder %s19, 0
    %p67 = por %p65, %p66
    %s69 = sadd.s32 %s68, 1
    %p72 = scmp.eq.s32.totalorder %s13, 3
    %p73 = scmp.ne.s32.totalorder %s68, %s70
    %p74 = scmp.eq.s32.totalorder %s13, 0
    %p75 = por %p73, %p74
    %p76 = scmp.ne.s32.totalorder %s68, %s70
    %p77 = scmp.eq.s32.totalorder %s18, 3
    %p78 = por %p76, %p77
    %p79 = scmp.ne.s32.totalorder %s70, %s71
    %p80 = scmp.eq.s32.totalorder %s18, 0
    %p81 = por %p79, %p80
    %p82 = scmp.ne.s32.totalorder %s70, %s71
    %p83 = scmp.eq.s32.totalorder %s19, 3
    %p84 = por %p82, %p83
    %p86 = scmp.ne.s32.totalorder %s71, %s85
    %p87 = scmp.eq.s32.totalorder %s19, 0
    %p88 = por %p86, %p87
    %s90 = sadd.s32 %s89, 1
    %p93 = scmp.eq.s32.totalorder %s13, 3
    %p94 = scmp.ne.s32.totalorder %s89, %s91
    %p95 = scmp.eq.s32.totalorder %s13, 0
    %p96 = por %p94, %p95
    %p97 = scmp.ne.s32.totalorder %s89, %s91
    %p98 = scmp.eq.s32.totalorder %s18, 3
    %p99 = por %p97, %p98
    %p100 = scmp.ne.s32.totalorder %s91, %s92
    %p101 = scmp.eq.s32.totalorder %s18, 0
    %p102 = por %p100, %p101
    %p103 = scmp.ne.s32.totalorder %s91, %s92
    %p104 = scmp.eq.s32.totalorder %s19, 3
    %p105 = por %p103, %p104
    %p107 = scmp.ne.s32.totalorder %s92, %s106
    %p108 = scmp.eq.s32.totalorder %s19, 0
    %p109 = por %p107, %p108
    %s111 = sadd.s32 %s110, 1
    %p114 = scmp.eq.s32.totalorder %s13, 3
    %p115 = scmp.ne.s32.totalorder %s110, %s112
    %p116 = scmp.eq.s32.totalorder %s13, 0
    %p117 = por %p115, %p116
    %p118 = scmp.ne.s32.totalorder %s110, %s112
    %p119 = scmp.eq.s32.totalorder %s18, 3
    %p120 = por %p118, %p119
    %p121 = scmp.ne.s32.totalorder %s112, %s113
    %p122 = scmp.eq.s32.totalorder %s18, 0
    %p123 = por %p121, %p122
    %p124 = scmp.ne.s32.totalorder %s112, %s113
    %p125 = scmp.eq.s32.totalorder %s19, 3
    %p126 = por %p124, %p125
    %p128 = scmp.ne.s32.totalorder %s113, %s127
    %p129 = scmp.eq.s32.totalorder %s19, 0
    %p130 = por %p128, %p129
    %s131 = ssub.s32 %s13, %s20
    %p132 = scmp.eq.s32.totalorder %s131, 0
    %s134 = sadd.s32 %s133, 1
    %s135 = scalar_select %p132, %s133, %s134
    %p138 = pneg %p132
    %p139 = scmp.eq.s32.totalorder %s13, 3
    %p140 = por %p138, %p139
    %p141 = scmp.ne.s32.totalorder %s133, %s136
    %p142 = scmp.eq.s32.totalorder %s13, 0
    %p143 = por %p141, %p142
    %p144 = scmp.ne.s32.totalorder %s133, %s136
    %p145 = scmp.eq.s32.totalorder %s18, 3
    %p146 = por %p144, %p145
    %p147 = scmp.ne.s32.totalorder %s136, %s137
    %p148 = scmp.eq.s32.totalorder %s18, 0
    %p149 = por %p147, %p148
    %p150 = scmp.ne.s32.totalorder %s136, %s137
    %p151 = scmp.eq.s32.totalorder %s19, 3
    %p152 = por %p150, %p151
    %p154 = scmp.ne.s32.totalorder %s137, %s153
    %p155 = scmp.eq.s32.totalorder %s19, 0
    %p156 = por %p154, %p155
    %s157 = ssub.s32 %s13, %s20
    %p158 = scmp.eq.s32.totalorder %s157, 0
    %s160 = sadd.s32 %s159, 1
    %s161 = scalar_select %p158, %s159, %s160
    %p164 = pneg %p158
    %p165 = scmp.eq.s32.totalorder %s13, 3
    %p166 = por %p164, %p165
    %p167 = scmp.ne.s32.totalorder %s159, %s162
    %p168 = scmp.eq.s32.totalorder %s13, 0
    %p169 = por %p167, %p168
    %p170 = scmp.ne.s32.totalorder %s159, %s162
    %p171 = scmp.eq.s32.totalorder %s18, 3
    %p172 = por %p170, %p171
    %p173 = scmp.ne.s32.totalorder %s162, %s163
    %p174 = scmp.eq.s32.totalorder %s18, 0
    %p175 = por %p173, %p174
    %p176 = scmp.ne.s32.totalorder %s162, %s163
    %p177 = scmp.eq.s32.totalorder %s19, 3
    %p178 = por %p176, %p177
    %p180 = scmp.ne.s32.totalorder %s163, %s179
    %p181 = scmp.eq.s32.totalorder %s19, 0
    %p182 = por %p180, %p181
    %p183 = scmp.le.s32.totalorder 1, %s13
    %p184 = scmp.lt.s32.totalorder %s13, 5
    %p185 = pnand %p183, %p184
    %p186 = pneg %p185
    // Predicated region
    $region9: #{window_attention_forward.1} parent=5 // pred_check
      _
    $region10: #{window_attention_forward.1} parent=5 // pred_check_branch
      %188 = sbr.rel (%p185) target = $region12
    $region11: #{window_attention_forward.1} parent=5 // pred_region
      %s189 = ssub.s32 %s13, 1
      // Predicated region
      $region13: #{window_attention_forward.1} parent=11 // pred_check
        %p190 = pneg %p60
      $region14: #{window_attention_forward.1} parent=11 // pred_check_branch
        %192 = sbr.rel (%p190) target = $region16
      $region15: #{window_attention_forward.1} parent=11 // pred_region
        _
      $region16: #{window_attention_forward.1} parent=11 // pred_fallthru
        _
      // Predicated region
      $region17: #{window_attention_forward.1} parent=11 // pred_check
        %p193 = pneg %p81
      $region18: #{window_attention_forward.1} parent=11 // pred_check_branch
        %195 = sbr.rel (%p193) target = $region20
      $region19: #{window_attention_forward.1} parent=11 // pred_region
        _
      $region20: #{window_attention_forward.1} parent=11 // pred_fallthru
        _
      // Predicated region
      $region21: #{window_attention_forward.1} parent=11 // pred_check
        %p196 = pneg %p102
      $region22: #{window_attention_forward.1} parent=11 // pred_check_branch
        %198 = sbr.rel (%p196) target = $region24
      $region23: #{window_attention_forward.1} parent=11 // pred_region
        _
      $region24: #{window_attention_forward.1} parent=11 // pred_fallthru
        _
      // Predicated region
      $region25: #{window_attention_forward.1} parent=11 // pred_check
        %p199 = pneg %p123
      $region26: #{window_attention_forward.1} parent=11 // pred_check_branch
        %201 = sbr.rel (%p199) target = $region28
      $region27: #{window_attention_forward.1} parent=11 // pred_region
        _
      $region28: #{window_attention_forward.1} parent=11 // pred_fallthru
        _
    $region12: #{window_attention_forward.1} parent=5 // pred_fallthru
      _
    %p202 = scmp.lt.s32.totalorder %s13, 4
    // Predicated region
    $region29: #{window_attention_forward.1} parent=5 // pred_check
      %p203 = pneg %p202
    $region30: #{window_attention_forward.1} parent=5 // pred_check_branch
      %205 = sbr.rel (%p203) target = $region32
    $region31: #{window_attention_forward.1} parent=5 // pred_region
      // Predicated region
      $region33: #{window_attention_forward.1} parent=31 // pred_check
        %p206 = pneg %p33
      $region34: #{window_attention_forward.1} parent=31 // pred_check_branch
        %208 = sbr.rel (%p206) target = $region36
      $region35: #{window_attention_forward.1} parent=31 // pred_region
        %s209 = smul.u32 49, %s13
        %p210 = scmp.lt.s32.totalorder %s209, 195
        %s211 = scalar_select %p210, %s209, 195
        %s212 = smul.addr %s211, 8
        %s213 = scalar_lea.vmem %s0, %s212
        %s214 = smul.u32 49, %s13
      $region36: #{window_attention_forward.1} parent=31 // pred_fallthru
        _
    $region32: #{window_attention_forward.1} parent=5 // pred_fallthru
      _
    %p215 = scmp.le.s32.totalorder 1, %s13
    %p216 = scmp.lt.s32.totalorder %s13, 5
    %p217 = pnand %p215, %p216
    %p218 = pneg %p217
    // Predicated region
    $region37: #{window_attention_forward.1} parent=5 // pred_check
      _
    $region38: #{window_attention_forward.1} parent=5 // pred_check_branch
      %220 = sbr.rel (%p217) target = $region40
    $region39: #{window_attention_forward.1} parent=5 // pred_region
      %s221 = ssub.s32 %s13, 1
      %s222 = smul.u32 49, %s18
      %p223 = scmp.lt.s32.totalorder %s222, 195
      %s224 = scalar_select %p223, %s222, 195
      %s225 = smul.addr %s224, 8
      %s226 = scalar_lea.vmem %s0, %s225
      %p227 = pneg %p39
      %p228 = pneg %p36
      %p229 = pneg %p60
      %p230 = pneg %p57
      %p231 = pneg %p81
      %p232 = pneg %p78
      %p233 = pneg %p102
      %p234 = pneg %p99
      %p235 = pneg %p123
      %p236 = pneg %p120
      %p237 = pneg %p149
      %p238 = pneg %p146
      %s239 = smul.u32 49, %s18
      %p240 = scmp.lt.s32.totalorder %s239, 195
      %s241 = scalar_select %p240, %s239, 195
      %s242 = smul.addr %s241, 8
      %s243 = scalar_lea.vmem %s5, %s242
      %p244 = pneg %p175
      %p245 = pneg %p172
      %s246 = smul.u32 8, %s18
      %p247 = scmp.lt.s32.totalorder %s246, 31
      %s248 = scalar_select %p247, %s246, 31
      %s249 = smul.addr %s248, 14
      %s250 = smul.addr %s249, 8
      %s251 = scalar_lea.vmem %s6, %s250
      %s252 = smul.u32 49, %s18
      %p253 = scmp.lt.s32.totalorder %s252, 195
      %s254 = scalar_select %p253, %s252, 195
      %s255 = smul.addr %s254, 8
      %s256 = scalar_lea.vmem %s0, %s255
      %s257 = smul.u32 49, %s18
      %s258 = smul.u32 49, %s18
      %p259 = scmp.lt.s32.totalorder %s258, 195
      %s260 = scalar_select %p259, %s258, 195
      %s261 = smul.addr %s260, 8
      %s262 = scalar_lea.vmem %s5, %s261
      %s263 = smul.u32 49, %s18
      %s264 = smul.u32 8, %s18
      %p265 = scmp.lt.s32.totalorder %s264, 31
      %s266 = scalar_select %p265, %s264, 31
      %s267 = smul.addr %s266, 14
      %s268 = smul.addr %s267, 8
      %s269 = scalar_lea.vmem %s6, %s268
      %s270 = smul.u32 8, %s18
      %v271 = vld [vmem:[%s256] sm:$0xff]
      %v272 = vld [vmem:[%s256 + $0x8] sm:$0xff]
      %v273 = vld [vmem:[%s256 + $0x10] sm:$0xff]
      %v274 = vld [vmem:[%s256 + $0x18] sm:$0xff]
      %v275 = vld [vmem:[%s256 + $0x20] sm:$0xff]
      %v276 = vld [vmem:[%s256 + $0x28] sm:$0xff]
      %v277 = vld [vmem:[%s256 + $0x30] sm:$0xff]
      %v278 = vld [vmem:[%s256 + $0x38] sm:$0xff]
      %v279 = vld [vmem:[%s256 + $0x40] sm:$0xff]
      %v280 = vld [vmem:[%s256 + $0x48] sm:$0xff]
      %v281 = vld [vmem:[%s256 + $0x50] sm:$0xff]
      %v282 = vld [vmem:[%s256 + $0x58] sm:$0xff]
      %v283 = vld [vmem:[%s256 + $0x60] sm:$0xff]
      %v284 = vld [vmem:[%s256 + $0x68] sm:$0xff]
      %v285 = vld [vmem:[%s256 + $0x70] sm:$0xff]
      %v286 = vld [vmem:[%s256 + $0x78] sm:$0xff]
      %v287 = vld [vmem:[%s256 + $0x80] sm:$0xff]
      %v288 = vld [vmem:[%s256 + $0x88] sm:$0xff]
      %v289 = vld [vmem:[%s256 + $0x90] sm:$0xff]
      %v290 = vld [vmem:[%s256 + $0x98] sm:$0xff]
      %v291 = vld [vmem:[%s256 + $0xa0] sm:$0xff]
      %v292 = vld [vmem:[%s256 + $0xa8] sm:$0xff]
      %v293 = vld [vmem:[%s256 + $0xb0] sm:$0xff]
      %v294 = vld [vmem:[%s256 + $0xb8] sm:$0xff]
      %v295 = vld [vmem:[%s256 + $0xc0] sm:$0xff]
      %v296 = vld [vmem:[%s256 + $0xc8] sm:$0xff]
      %v297 = vld [vmem:[%s256 + $0xd0] sm:$0xff]
      %v298 = vld [vmem:[%s256 + $0xd8] sm:$0xff]
      %v299 = vld [vmem:[%s256 + $0xe0] sm:$0xff]
      %v300 = vld [vmem:[%s256 + $0xe8] sm:$0xff]
      %v301 = vld [vmem:[%s256 + $0xf0] sm:$0xff]
      %v302 = vld [vmem:[%s256 + $0xf8] sm:$0xff]
      %v303 = vld [vmem:[%s256 + $0x100] sm:$0xff]
      %v304 = vld [vmem:[%s256 + $0x108] sm:$0xff]
      %v305 = vld [vmem:[%s256 + $0x110] sm:$0xff]
      %v306 = vld [vmem:[%s256 + $0x118] sm:$0xff]
      %v307 = vld [vmem:[%s256 + $0x120] sm:$0xff]
      %v308 = vld [vmem:[%s256 + $0x128] sm:$0xff]
      %v309 = vld [vmem:[%s256 + $0x130] sm:$0xff]
      %v310 = vld [vmem:[%s256 + $0x138] sm:$0xff]
      %v311 = vld [vmem:[%s256 + $0x140] sm:$0xff]
      %v312 = vld [vmem:[%s256 + $0x148] sm:$0xff]
      %v313 = vld [vmem:[%s256 + $0x150] sm:$0xff]
      %v314 = vld [vmem:[%s256 + $0x158] sm:$0xff]
      %v315 = vld [vmem:[%s256 + $0x160] sm:$0xff]
      %v316 = vld [vmem:[%s256 + $0x168] sm:$0xff]
      %v317 = vld [vmem:[%s256 + $0x170] sm:$0xff]
      %v318 = vld [vmem:[%s256 + $0x178] sm:$0xff]
      %v319 = vld [vmem:[%s256 + $0x180] sm:$0xff]
      %v320 = vld [vmem:[%s1] sm:$0xff]
      %v321 = vld [vmem:[%s1 + $0x8] sm:$0xff]
      %vm322 = vcmask 130048
      %v324 = vsel %vm322, %v271, 0
      %v327 = vsel %vm322, %v272, 0
      %v330 = vsel %vm322, %v273, 0
      %v333 = vsel %vm322, %v274, 0
      %v336 = vsel %vm322, %v275, 0
      %v339 = vsel %vm322, %v276, 0
      %v342 = vsel %vm322, %v277, 0
      %v345 = vsel %vm322, %v278, 0
      %v348 = vsel %vm322, %v279, 0
      %v351 = vsel %vm322, %v280, 0
      %v354 = vsel %vm322, %v281, 0
      %v357 = vsel %vm322, %v282, 0
      %v360 = vsel %vm322, %v283, 0
      %v363 = vsel %vm322, %v284, 0
      %v366 = vsel %vm322, %v285, 0
      %v369 = vsel %vm322, %v286, 0
      %v372 = vsel %vm322, %v287, 0
      %v375 = vsel %vm322, %v288, 0
      %v378 = vsel %vm322, %v289, 0
      %v381 = vsel %vm322, %v290, 0
      %v384 = vsel %vm322, %v291, 0
      %v387 = vsel %vm322, %v292, 0
      %v390 = vsel %vm322, %v293, 0
      %v393 = vsel %vm322, %v294, 0
      %v396 = vsel %vm322, %v295, 0
      %v399 = vsel %vm322, %v296, 0
      %v402 = vsel %vm322, %v297, 0
      %v405 = vsel %vm322, %v298, 0
      %v408 = vsel %vm322, %v299, 0
      %v411 = vsel %vm322, %v300, 0
      %v414 = vsel %vm322, %v301, 0
      %v417 = vsel %vm322, %v302, 0
      %v420 = vsel %vm322, %v303, 0
      %v423 = vsel %vm322, %v304, 0
      %v426 = vsel %vm322, %v305, 0
      %v429 = vsel %vm322, %v306, 0
      %v432 = vsel %vm322, %v307, 0
      %v435 = vsel %vm322, %v308, 0
      %v438 = vsel %vm322, %v309, 0
      %v441 = vsel %vm322, %v310, 0
      %v444 = vsel %vm322, %v311, 0
      %v447 = vsel %vm322, %v312, 0
      %v450 = vsel %vm322, %v313, 0
      %v453 = vsel %vm322, %v314, 0
      %v456 = vsel %vm322, %v315, 0
      %v459 = vsel %vm322, %v316, 0
      %v462 = vsel %vm322, %v317, 0
      %v465 = vsel %vm322, %v318, 0
      %v468 = vsel %vm322, %v319, 0
      %470 = vmatprep.subr.mxu0 0.0
      %471 = vmatpush1.msra.mxu0 0.0
      %472 = vmatprep.subr.mxu0 0.0
      %473 = vmatpush1.msra.mxu0 0.0
      %474 = vmatprep.subr.mxu0 0.0
      %475 = vmatpush1.msra.mxu0 0.0
      %476 = vmatprep.subr.mxu0 0.0
      %477 = vmatpush1.msra.mxu0 0.0
      %478 = vmatprep.subr.mxu0 0.0
      %479 = vmatpush1.msra.mxu0 0.0
      %480 = vmatprep.subr.mxu0 0.0
      %481 = vmatpush1.msra.mxu0 0.0
      %482 = vmatprep.subr.mxu0 0.0
      %483 = vmatpush1.msra.mxu0 0.0
      %484 = vmatprep.subr.mxu0 0.0
      %485 = vmatpush1.msra.mxu0 0.0
      %486 = vmatprep.subr.mxu0 0.0
      %487 = vmatpush1.msra.mxu0 0.0
      %488 = vmatprep.subr.mxu0 0.0
      %489 = vmatpush1.msra.mxu0 0.0
      %490 = vmatprep.subr.mxu0 0.0
      %491 = vmatpush1.msra.mxu0 0.0
      %492 = vmatprep.subr.mxu0 0.0
      %493 = vmatpush1.msra.mxu0 0.0
      %494 = vmatprep.subr.mxu0 0.0
      %495 = vmatpush1.msra.mxu0 0.0
      %496 = vmatprep.subr.mxu0 0.0
      %497 = vmatpush1.msra.mxu0 0.0
      %498 = vmatprep.subr.mxu0 0.0
      %499 = vmatpush1.msra.mxu0 %v321
      %500 = vmatprep.subr.mxu0 0.0
      %501 = vmatpush1.msra.mxu0 %v320
      %502 = vmatprep.subr.mxu0 0.0
      %503 = vmatpush2.msra.mxu0 0.0
      %504 = vmatprep.subr.mxu0 0.0
      %505 = vmatpush2.msra.mxu0 0.0
      %506 = vmatprep.subr.mxu0 0.0
      %507 = vmatpush2.msra.mxu0 0.0
      %508 = vmatprep.subr.mxu0 0.0
      %509 = vmatpush2.msra.mxu0 0.0
      %510 = vmatprep.subr.mxu0 0.0
      %511 = vmatpush2.msra.mxu0 0.0
      %512 = vmatprep.subr.mxu0 0.0
      %513 = vmatpush2.msra.mxu0 0.0
      %514 = vmatprep.subr.mxu0 0.0
      %515 = vmatpush2.msra.mxu0 0.0
      %516 = vmatprep.subr.mxu0 0.0
      %517 = vmatpush2.msra.mxu0 0.0
      %518 = vmatprep.subr.mxu0 0.0
      %519 = vmatpush2.msra.mxu0 0.0
      %520 = vmatprep.subr.mxu0 0.0
      %521 = vmatpush2.msra.mxu0 0.0
      %522 = vmatprep.subr.mxu0 0.0
      %523 = vmatpush2.msra.mxu0 0.0
      %524 = vmatprep.subr.mxu0 0.0
      %525 = vmatpush2.msra.mxu0 0.0
      %526 = vmatprep.subr.mxu0 0.0
      %527 = vmatpush2.msra.mxu0 0.0
      %528 = vmatprep.subr.mxu0 0.0
      %529 = vmatpush2.msra.mxu0 0.0
      %530 = vmatprep.subr.mxu0 0.0
      %531 = vmatpush2.msra.mxu0 0.0
      %532 = vmatprep.subr.mxu0 0.0
      %533 = vmatpush2.msra.mxu0 0.0
      %534 = vmatprep.mubr.f32.mxu0 0.0
      %535 = vmatmul.mubr.f32.gmra.mxu0 %v324
      %v536 = vpop.f32.mrf.mxu0
      %v537 = vadd.f32 0.0, %v536
      %v538 = vpop.f32.mrf.mxu0
      %539 = vmatprep.mubr.f32.mxu0 0.0
      %540 = vmatmul.mubr.f32.gmra.mxu0 %v327
      %v541 = vpop.f32.mrf.mxu0
      %v542 = vadd.f32 0.0, %v541
      %v543 = vpop.f32.mrf.mxu0
      %544 = vmatprep.mubr.f32.mxu0 0.0
      %545 = vmatmul.mubr.f32.gmra.mxu0 %v330
      %v546 = vpop.f32.mrf.mxu0
      %v547 = vadd.f32 0.0, %v546
      %v548 = vpop.f32.mrf.mxu0
      %549 = vmatprep.mubr.f32.mxu0 0.0
      %550 = vmatmul.mubr.f32.gmra.mxu0 %v333
      %v551 = vpop.f32.mrf.mxu0
      %v552 = vadd.f32 0.0, %v551
      %v553 = vpop.f32.mrf.mxu0
      %554 = vmatprep.mubr.f32.mxu0 0.0
      %555 = vmatmul.mubr.f32.gmra.mxu0 %v336
      %v556 = vpop.f32.mrf.mxu0
      %v557 = vadd.f32 0.0, %v556
      %v558 = vpop.f32.mrf.mxu0
      %559 = vmatprep.mubr.f32.mxu0 0.0
      %560 = vmatmul.mubr.f32.gmra.mxu0 %v339
      %v561 = vpop.f32.mrf.mxu0
      %v562 = vadd.f32 0.0, %v561
      %v563 = vpop.f32.mrf.mxu0
      %564 = vmatprep.mubr.f32.mxu0 0.0
      %565 = vmatmul.mubr.f32.gmra.mxu0 %v342
      %v566 = vpop.f32.mrf.mxu0
      %v567 = vadd.f32 0.0, %v566
      %v568 = vpop.f32.mrf.mxu0
      %569 = vmatprep.mubr.f32.mxu0 0.0
      %570 = vmatmul.mubr.f32.gmra.mxu0 %v345
      %v571 = vpop.f32.mrf.mxu0
      %v572 = vadd.f32 0.0, %v571
      %v573 = vpop.f32.mrf.mxu0
      %574 = vmatprep.mubr.f32.mxu0 0.0
      %575 = vmatmul.mubr.f32.gmra.mxu0 %v348
      %v576 = vpop.f32.mrf.mxu0
      %v577 = vadd.f32 0.0, %v576
      %v578 = vpop.f32.mrf.mxu0
      %579 = vmatprep.mubr.f32.mxu0 0.0
      %580 = vmatmul.mubr.f32.gmra.mxu0 %v351
      %v581 = vpop.f32.mrf.mxu0
      %v582 = vadd.f32 0.0, %v581
      %v583 = vpop.f32.mrf.mxu0
      %584 = vmatprep.mubr.f32.mxu0 0.0
      %585 = vmatmul.mubr.f32.gmra.mxu0 %v354
      %v586 = vpop.f32.mrf.mxu0
      %v587 = vadd.f32 0.0, %v586
      %v588 = vpop.f32.mrf.mxu0
      %589 = vmatprep.mubr.f32.mxu0 0.0
      %590 = vmatmul.mubr.f32.gmra.mxu0 %v357
      %v591 = vpop.f32.mrf.mxu0
      %v592 = vadd.f32 0.0, %v591
      %v593 = vpop.f32.mrf.mxu0
      %594 = vmatprep.mubr.f32.mxu0 0.0
      %595 = vmatmul.mubr.f32.gmra.mxu0 %v360
      %v596 = vpop.f32.mrf.mxu0
      %v597 = vadd.f32 0.0, %v596
      %v598 = vpop.f32.mrf.mxu0
      %599 = vmatprep.mubr.f32.mxu0 0.0
      %600 = vmatmul.mubr.f32.gmra.mxu0 %v363
      %v601 = vpop.f32.mrf.mxu0
      %v602 = vadd.f32 0.0, %v601
      %v603 = vpop.f32.mrf.mxu0
      %604 = vmatprep.mubr.f32.mxu0 0.0
      %605 = vmatmul.mubr.f32.gmra.mxu0 %v366
      %v606 = vpop.f32.mrf.mxu0
      %v607 = vadd.f32 0.0, %v606
      %v608 = vpop.f32.mrf.mxu0
      %609 = vmatprep.mubr.f32.mxu0 0.0
      %610 = vmatmul.mubr.f32.gmra.mxu0 %v369
      %v611 = vpop.f32.mrf.mxu0
      %v612 = vadd.f32 0.0, %v611
      %v613 = vpop.f32.mrf.mxu0
      %614 = vmatprep.mubr.f32.mxu0 0.0
      %615 = vmatmul.mubr.f32.gmra.mxu0 %v372
      %v616 = vpop.f32.mrf.mxu0
      %v617 = vadd.f32 0.0, %v616
      %v618 = vpop.f32.mrf.mxu0
      %619 = vmatprep.mubr.f32.mxu0 0.0
      %620 = vmatmul.mubr.f32.gmra.mxu0 %v375
      %v621 = vpop.f32.mrf.mxu0
      %v622 = vadd.f32 0.0, %v621
      %v623 = vpop.f32.mrf.mxu0
      %624 = vmatprep.mubr.f32.mxu0 0.0
      %625 = vmatmul.mubr.f32.gmra.mxu0 %v378
      %v626 = vpop.f32.mrf.mxu0
      %v627 = vadd.f32 0.0, %v626
      %v628 = vpop.f32.mrf.mxu0
      %629 = vmatprep.mubr.f32.mxu0 0.0
      %630 = vmatmul.mubr.f32.gmra.mxu0 %v381
      %v631 = vpop.f32.mrf.mxu0
      %v632 = vadd.f32 0.0, %v631
      %v633 = vpop.f32.mrf.mxu0
      %634 = vmatprep.mubr.f32.mxu0 0.0
      %635 = vmatmul.mubr.f32.gmra.mxu0 %v384
      %v636 = vpop.f32.mrf.mxu0
      %v637 = vadd.f32 0.0, %v636
      %v638 = vpop.f32.mrf.mxu0
      %639 = vmatprep.mubr.f32.mxu0 0.0
      %640 = vmatmul.mubr.f32.gmra.mxu0 %v387
      %v641 = vpop.f32.mrf.mxu0
      %v642 = vadd.f32 0.0, %v641
      %v643 = vpop.f32.mrf.mxu0
      %644 = vmatprep.mubr.f32.mxu0 0.0
      %645 = vmatmul.mubr.f32.gmra.mxu0 %v390
      %v646 = vpop.f32.mrf.mxu0
      %v647 = vadd.f32 0.0, %v646
      %v648 = vpop.f32.mrf.mxu0
      %649 = vmatprep.mubr.f32.mxu0 0.0
      %650 = vmatmul.mubr.f32.gmra.mxu0 %v393
      %v651 = vpop.f32.mrf.mxu0
      %v652 = vadd.f32 0.0, %v651
      %v653 = vpop.f32.mrf.mxu0
      %654 = vmatprep.mubr.f32.mxu0 0.0
      %655 = vmatmul.mubr.f32.gmra.mxu0 %v396
      %v656 = vpop.f32.mrf.mxu0
      %v657 = vadd.f32 0.0, %v656
      %v658 = vpop.f32.mrf.mxu0
      %659 = vmatprep.mubr.f32.mxu0 0.0
      %660 = vmatmul.mubr.f32.gmra.mxu0 %v399
      %v661 = vpop.f32.mrf.mxu0
      %v662 = vadd.f32 0.0, %v661
      %v663 = vpop.f32.mrf.mxu0
      %664 = vmatprep.mubr.f32.mxu0 0.0
      %665 = vmatmul.mubr.f32.gmra.mxu0 %v402
      %v666 = vpop.f32.mrf.mxu0
      %v667 = vadd.f32 0.0, %v666
      %v668 = vpop.f32.mrf.mxu0
      %669 = vmatprep.mubr.f32.mxu0 0.0
      %670 = vmatmul.mubr.f32.gmra.mxu0 %v405
      %v671 = vpop.f32.mrf.mxu0
      %v672 = vadd.f32 0.0, %v671
      %v673 = vpop.f32.mrf.mxu0
      %674 = vmatprep.mubr.f32.mxu0 0.0
      %675 = vmatmul.mubr.f32.gmra.mxu0 %v408
      %v676 = vpop.f32.mrf.mxu0
      %v677 = vadd.f32 0.0, %v676
      %v678 = vpop.f32.mrf.mxu0
      %679 = vmatprep.mubr.f32.mxu0 0.0
      %680 = vmatmul.mubr.f32.gmra.mxu0 %v411
      %v681 = vpop.f32.mrf.mxu0
      %v682 = vadd.f32 0.0, %v681
      %v683 = vpop.f32.mrf.mxu0
      %684 = vmatprep.mubr.f32.mxu0 0.0
      %685 = vmatmul.mubr.f32.gmra.mxu0 %v414
      %v686 = vpop.f32.mrf.mxu0
      %v687 = vadd.f32 0.0, %v686
      %v688 = vpop.f32.mrf.mxu0
      %689 = vmatprep.mubr.f32.mxu0 0.0
      %690 = vmatmul.mubr.f32.gmra.mxu0 %v417
      %v691 = vpop.f32.mrf.mxu0
      %v692 = vadd.f32 0.0, %v691
      %v693 = vpop.f32.mrf.mxu0
      %694 = vmatprep.mubr.f32.mxu0 0.0
      %695 = vmatmul.mubr.f32.gmra.mxu0 %v420
      %v696 = vpop.f32.mrf.mxu0
      %v697 = vadd.f32 0.0, %v696
      %v698 = vpop.f32.mrf.mxu0
      %699 = vmatprep.mubr.f32.mxu0 0.0
      %700 = vmatmul.mubr.f32.gmra.mxu0 %v423
      %v701 = vpop.f32.mrf.mxu0
      %v702 = vadd.f32 0.0, %v701
      %v703 = vpop.f32.mrf.mxu0
      %704 = vmatprep.mubr.f32.mxu0 0.0
      %705 = vmatmul.mubr.f32.gmra.mxu0 %v426
      %v706 = vpop.f32.mrf.mxu0
      %v707 = vadd.f32 0.0, %v706
      %v708 = vpop.f32.mrf.mxu0
      %709 = vmatprep.mubr.f32.mxu0 0.0
      %710 = vmatmul.mubr.f32.gmra.mxu0 %v429
      %v711 = vpop.f32.mrf.mxu0
      %v712 = vadd.f32 0.0, %v711
      %v713 = vpop.f32.mrf.mxu0
      %714 = vmatprep.mubr.f32.mxu0 0.0
      %715 = vmatmul.mubr.f32.gmra.mxu0 %v432
      %v716 = vpop.f32.mrf.mxu0
      %v717 = vadd.f32 0.0, %v716
      %v718 = vpop.f32.mrf.mxu0
      %719 = vmatprep.mubr.f32.mxu0 0.0
      %720 = vmatmul.mubr.f32.gmra.mxu0 %v435
      %v721 = vpop.f32.mrf.mxu0
      %v722 = vadd.f32 0.0, %v721
      %v723 = vpop.f32.mrf.mxu0
      %724 = vmatprep.mubr.f32.mxu0 0.0
      %725 = vmatmul.mubr.f32.gmra.mxu0 %v438
      %v726 = vpop.f32.mrf.mxu0
      %v727 = vadd.f32 0.0, %v726
      %v728 = vpop.f32.mrf.mxu0
      %729 = vmatprep.mubr.f32.mxu0 0.0
      %730 = vmatmul.mubr.f32.gmra.mxu0 %v441
      %v731 = vpop.f32.mrf.mxu0
      %v732 = vadd.f32 0.0, %v731
      %v733 = vpop.f32.mrf.mxu0
      %734 = vmatprep.mubr.f32.mxu0 0.0
      %735 = vmatmul.mubr.f32.gmra.mxu0 %v444
      %v736 = vpop.f32.mrf.mxu0
      %v737 = vadd.f32 0.0, %v736
      %v738 = vpop.f32.mrf.mxu0
      %739 = vmatprep.mubr.f32.mxu0 0.0
      %740 = vmatmul.mubr.f32.gmra.mxu0 %v447
      %v741 = vpop.f32.mrf.mxu0
      %v742 = vadd.f32 0.0, %v741
      %v743 = vpop.f32.mrf.mxu0
      %744 = vmatprep.mubr.f32.mxu0 0.0
      %745 = vmatmul.mubr.f32.gmra.mxu0 %v450
      %v746 = vpop.f32.mrf.mxu0
      %v747 = vadd.f32 0.0, %v746
      %v748 = vpop.f32.mrf.mxu0
      %749 = vmatprep.mubr.f32.mxu0 0.0
      %750 = vmatmul.mubr.f32.gmra.mxu0 %v453
      %v751 = vpop.f32.mrf.mxu0
      %v752 = vadd.f32 0.0, %v751
      %v753 = vpop.f32.mrf.mxu0
      %754 = vmatprep.mubr.f32.mxu0 0.0
      %755 = vmatmul.mubr.f32.gmra.mxu0 %v456
      %v756 = vpop.f32.mrf.mxu0
      %v757 = vadd.f32 0.0, %v756
      %v758 = vpop.f32.mrf.mxu0
      %759 = vmatprep.mubr.f32.mxu0 0.0
      %760 = vmatmul.mubr.f32.gmra.mxu0 %v459
      %v761 = vpop.f32.mrf.mxu0
      %v762 = vadd.f32 0.0, %v761
      %v763 = vpop.f32.mrf.mxu0
      %764 = vmatprep.mubr.f32.mxu0 0.0
      %765 = vmatmul.mubr.f32.gmra.mxu0 %v462
      %v766 = vpop.f32.mrf.mxu0
      %v767 = vadd.f32 0.0, %v766
      %v768 = vpop.f32.mrf.mxu0
      %769 = vmatprep.mubr.f32.mxu0 0.0
      %770 = vmatmul.mubr.f32.gmra.mxu0 %v465
      %v771 = vpop.f32.mrf.mxu0
      %v772 = vadd.f32 0.0, %v771
      %v773 = vpop.f32.mrf.mxu0
      %774 = vmatprep.mubr.f32.mxu0 0.0
      %775 = vmatmul.mubr.f32.gmra.mxu0 %v468
      %v776 = vpop.f32.mrf.mxu0
      %v777 = vadd.f32 0.0, %v776
      %v778 = vpop.f32.mrf.mxu0
      %779 = vdwg.mxu0
      %vm780 = vcmask 392192
      %781 = vst.msk [vmem:[#allocation2] sm:$0xff] %vm780, %v537
      %782 = vst.msk [vmem:[#allocation2 + $0x8] sm:$0xff] %vm780, %v542
      %783 = vst.msk [vmem:[#allocation2 + $0x10] sm:$0xff] %vm780, %v547
      %784 = vst.msk [vmem:[#allocation2 + $0x18] sm:$0xff] %vm780, %v552
      %785 = vst.msk [vmem:[#allocation2 + $0x20] sm:$0xff] %vm780, %v557
      %786 = vst.msk [vmem:[#allocation2 + $0x28] sm:$0xff] %vm780, %v562
      %787 = vst.msk [vmem:[#allocation2 + $0x30] sm:$0xff] %vm780, %v567
      %788 = vst.msk [vmem:[#allocation2 + $0x38] sm:$0xff] %vm780, %v572
      %789 = vst.msk [vmem:[#allocation2 + $0x40] sm:$0xff] %vm780, %v577
      %790 = vst.msk [vmem:[#allocation2 + $0x48] sm:$0xff] %vm780, %v582
      %791 = vst.msk [vmem:[#allocation2 + $0x50] sm:$0xff] %vm780, %v587
      %792 = vst.msk [vmem:[#allocation2 + $0x58] sm:$0xff] %vm780, %v592
      %793 = vst.msk [vmem:[#allocation2 + $0x60] sm:$0xff] %vm780, %v597
      %794 = vst.msk [vmem:[#allocation2 + $0x68] sm:$0xff] %vm780, %v602
      %795 = vst.msk [vmem:[#allocation2 + $0x70] sm:$0xff] %vm780, %v607
      %796 = vst.msk [vmem:[#allocation2 + $0x78] sm:$0xff] %vm780, %v612
      %797 = vst.msk [vmem:[#allocation2 + $0x80] sm:$0xff] %vm780, %v617
      %798 = vst.msk [vmem:[#allocation2 + $0x88] sm:$0xff] %vm780, %v622
      %799 = vst.msk [vmem:[#allocation2 + $0x90] sm:$0xff] %vm780, %v627
      %800 = vst.msk [vmem:[#allocation2 + $0x98] sm:$0xff] %vm780, %v632
      %801 = vst.msk [vmem:[#allocation2 + $0xa0] sm:$0xff] %vm780, %v637
      %802 = vst.msk [vmem:[#allocation2 + $0xa8] sm:$0xff] %vm780, %v642
      %803 = vst.msk [vmem:[#allocation2 + $0xb0] sm:$0xff] %vm780, %v647
      %804 = vst.msk [vmem:[#allocation2 + $0xb8] sm:$0xff] %vm780, %v652
      %805 = vst.msk [vmem:[#allocation2 + $0xc0] sm:$0xff] %vm780, %v657
      %806 = vst.msk [vmem:[#allocation2 + $0xc8] sm:$0xff] %vm780, %v662
      %807 = vst.msk [vmem:[#allocation2 + $0xd0] sm:$0xff] %vm780, %v667
      %808 = vst.msk [vmem:[#allocation2 + $0xd8] sm:$0xff] %vm780, %v672
      %809 = vst.msk [vmem:[#allocation2 + $0xe0] sm:$0xff] %vm780, %v677
      %810 = vst.msk [vmem:[#allocation2 + $0xe8] sm:$0xff] %vm780, %v682
      %811 = vst.msk [vmem:[#allocation2 + $0xf0] sm:$0xff] %vm780, %v687
      %812 = vst.msk [vmem:[#allocation2 + $0xf8] sm:$0xff] %vm780, %v692
      %813 = vst.msk [vmem:[#allocation2 + $0x100] sm:$0xff] %vm780, %v697
      %814 = vst.msk [vmem:[#allocation2 + $0x108] sm:$0xff] %vm780, %v702
      %815 = vst.msk [vmem:[#allocation2 + $0x110] sm:$0xff] %vm780, %v707
      %816 = vst.msk [vmem:[#allocation2 + $0x118] sm:$0xff] %vm780, %v712
      %817 = vst.msk [vmem:[#allocation2 + $0x120] sm:$0xff] %vm780, %v717
      %818 = vst.msk [vmem:[#allocation2 + $0x128] sm:$0xff] %vm780, %v722
      %819 = vst.msk [vmem:[#allocation2 + $0x130] sm:$0xff] %vm780, %v727
      %820 = vst.msk [vmem:[#allocation2 + $0x138] sm:$0xff] %vm780, %v732
      %821 = vst.msk [vmem:[#allocation2 + $0x140] sm:$0xff] %vm780, %v737
      %822 = vst.msk [vmem:[#allocation2 + $0x148] sm:$0xff] %vm780, %v742
      %823 = vst.msk [vmem:[#allocation2 + $0x150] sm:$0xff] %vm780, %v747
      %824 = vst.msk [vmem:[#allocation2 + $0x158] sm:$0xff] %vm780, %v752
      %825 = vst.msk [vmem:[#allocation2 + $0x160] sm:$0xff] %vm780, %v757
      %826 = vst.msk [vmem:[#allocation2 + $0x168] sm:$0xff] %vm780, %v762
      %827 = vst.msk [vmem:[#allocation2 + $0x170] sm:$0xff] %vm780, %v767
      %828 = vst.msk [vmem:[#allocation2 + $0x178] sm:$0xff] %vm780, %v772
      %829 = vst.msk [vmem:[#allocation2 + $0x180] sm:$0xff] %vm780, %v777
      %v830 = vld [vmem:[%s4] sm:$0xff]
      %v831 = vld [vmem:[%s4 + $0x8] sm:$0xff]
      %v832 = vld [vmem:[%s4 + $0x10] sm:$0xff]
      %v833 = vld [vmem:[%s4 + $0x18] sm:$0xff]
      %v834 = vld [vmem:[%s4 + $0x20] sm:$0xff]
      %v835 = vld [vmem:[%s4 + $0x28] sm:$0xff]
      %v836 = vld [vmem:[%s4 + $0x30] sm:$0x1]
      %v837 = vld [vmem:[#allocation2] sm:$0xff]
      %v838 = vld [vmem:[#allocation2 + $0x8] sm:$0xff]
      %v839 = vld [vmem:[#allocation2 + $0x10] sm:$0xff]
      %v840 = vld [vmem:[#allocation2 + $0x18] sm:$0xff]
      %v841 = vld [vmem:[#allocation2 + $0x20] sm:$0xff]
      %v842 = vld [vmem:[#allocation2 + $0x28] sm:$0xff]
      %v843 = vld [vmem:[#allocation2 + $0x30] sm:$0x1]
      %851 = vrot.lane.b32.xlu0 %v837, 112
      %v852 = vpop.permute.xlu0 %851
      %853 = vrot.lane.b32.xlu0 %v838, 112
      %v854 = vpop.permute.xlu0 %853
      %855 = vrot.lane.b32.xlu0 %v839, 112
      %v856 = vpop.permute.xlu0 %855
      %857 = vrot.lane.b32.xlu0 %v840, 112
      %v858 = vpop.permute.xlu0 %857
      %859 = vrot.lane.b32.xlu0 %v841, 112
      %v860 = vpop.permute.xlu0 %859
      %861 = vrot.lane.b32.xlu0 %v842, 112
      %v862 = vpop.permute.xlu0 %861
      %863 = vrot.lane.b32.xlu0 %v843, 112
      %v864 = vpop.permute.xlu0 %863
      %vm865 = vcmask 64512
      %v866 = vsel %vm865, %v837, 0
      %v868 = vsel %vm865, %v838, 0
      %v870 = vsel %vm865, %v839, 0
      %v872 = vsel %vm865, %v840, 0
      %v874 = vsel %vm865, %v841, 0
      %v876 = vsel %vm865, %v842, 0
      %v878 = vsel %vm865, %v843, 0
      %v880 = vsel %vm865, %v852, 0
      %v882 = vsel %vm865, %v854, 0
      %v884 = vsel %vm865, %v856, 0
      %v886 = vsel %vm865, %v858, 0
      %v888 = vsel %vm865, %v860, 0
      %v890 = vsel %vm865, %v862, 0
      %v892 = vsel %vm865, %v864, 0
      %894 = vmatprep.subr.mxu0 0.0
      %895 = vmatpush1.xpose.msra.mxu0 0.0
      %896 = vmatprep.subr.mxu0 0.0
      %897 = vmatpush1.xpose.msra.mxu0 0.0
      %898 = vmatprep.subr.mxu0 0.0
      %899 = vmatpush1.xpose.msra.mxu0 0.0
      %900 = vmatprep.subr.mxu0 0.0
      %901 = vmatpush1.xpose.msra.mxu0 0.0
      %902 = vmatprep.subr.mxu0 0.0
      %903 = vmatpush1.xpose.msra.mxu0 0.0
      %904 = vmatprep.subr.mxu0 0.0
      %905 = vmatpush1.xpose.msra.mxu0 0.0
      %906 = vmatprep.subr.mxu0 0.0
      %907 = vmatpush1.xpose.msra.mxu0 0.0
      %908 = vmatprep.subr.mxu0 0.0
      %909 = vmatpush1.xpose.msra.mxu0 0.0
      %910 = vmatprep.subr.mxu0 0.0
      %911 = vmatpush1.xpose.msra.mxu0 0.0
      %912 = vmatprep.subr.mxu0 0.0
      %913 = vmatpush1.xpose.msra.mxu0 %v892
      %914 = vmatprep.subr.mxu0 0.0
      %915 = vmatpush1.xpose.msra.mxu0 %v890
      %916 = vmatprep.subr.mxu0 0.0
      %917 = vmatpush1.xpose.msra.mxu0 %v888
      %918 = vmatprep.subr.mxu0 0.0
      %919 = vmatpush1.xpose.msra.mxu0 %v886
      %920 = vmatprep.subr.mxu0 0.0
      %921 = vmatpush1.xpose.msra.mxu0 %v884
      %922 = vmatprep.subr.mxu0 0.0
      %923 = vmatpush1.xpose.msra.mxu0 %v882
      %924 = vmatprep.subr.mxu0 0.0
      %925 = vmatpush1.xpose.msra.mxu0 %v880
      %926 = vmatprep.subr.mxu0 0.0
      %927 = vmatpush2.xpose.msra.mxu0 0.0
      %928 = vmatprep.subr.mxu0 0.0
      %929 = vmatpush2.xpose.msra.mxu0 0.0
      %930 = vmatprep.subr.mxu0 0.0
      %931 = vmatpush2.xpose.msra.mxu0 0.0
      %932 = vmatprep.subr.mxu0 0.0
      %933 = vmatpush2.xpose.msra.mxu0 0.0
      %934 = vmatprep.subr.mxu0 0.0
      %935 = vmatpush2.xpose.msra.mxu0 0.0
      %936 = vmatprep.subr.mxu0 0.0
      %937 = vmatpush2.xpose.msra.mxu0 0.0
      %938 = vmatprep.subr.mxu0 0.0
      %939 = vmatpush2.xpose.msra.mxu0 0.0
      %940 = vmatprep.subr.mxu0 0.0
      %941 = vmatpush2.xpose.msra.mxu0 0.0
      %942 = vmatprep.subr.mxu0 0.0
      %943 = vmatpush2.xpose.msra.mxu0 0.0
      %944 = vmatprep.subr.mxu0 0.0
      %945 = vmatpush2.xpose.msra.mxu0 0.0
      %946 = vmatprep.subr.mxu0 0.0
      %947 = vmatpush2.xpose.msra.mxu0 0.0
      %948 = vmatprep.subr.mxu0 0.0
      %949 = vmatpush2.xpose.msra.mxu0 0.0
      %950 = vmatprep.subr.mxu0 0.0
      %951 = vmatpush2.xpose.msra.mxu0 0.0
      %952 = vmatprep.subr.mxu0 0.0
      %953 = vmatpush2.xpose.msra.mxu0 0.0
      %954 = vmatprep.subr.mxu0 0.0
      %955 = vmatpush2.xpose.msra.mxu0 0.0
      %956 = vmatprep.subr.mxu0 0.0
      %957 = vmatpush2.xpose.msra.mxu0 0.0
      %958 = vmatprep.mubr.f32.mxu0 0.0
      %959 = vmatmul.mubr.f32.gmra.mxu0 %v866
      %v960 = vpop.f32.mrf.mxu0
      %v961 = vadd.f32 0.0, %v960
      %v962 = vpop.f32.mrf.mxu0
      %963 = vmatprep.mubr.f32.mxu0 0.0
      %964 = vmatmul.mubr.f32.gmra.mxu0 %v868
      %v965 = vpop.f32.mrf.mxu0
      %v966 = vadd.f32 0.0, %v965
      %v967 = vpop.f32.mrf.mxu0
      %968 = vmatprep.mubr.f32.mxu0 0.0
      %969 = vmatmul.mubr.f32.gmra.mxu0 %v870
      %v970 = vpop.f32.mrf.mxu0
      %v971 = vadd.f32 0.0, %v970
      %v972 = vpop.f32.mrf.mxu0
      %973 = vmatprep.mubr.f32.mxu0 0.0
      %974 = vmatmul.mubr.f32.gmra.mxu0 %v872
      %v975 = vpop.f32.mrf.mxu0
      %v976 = vadd.f32 0.0, %v975
      %v977 = vpop.f32.mrf.mxu0
      %978 = vmatprep.mubr.f32.mxu0 0.0
      %979 = vmatmul.mubr.f32.gmra.mxu0 %v874
      %v980 = vpop.f32.mrf.mxu0
      %v981 = vadd.f32 0.0, %v980
      %v982 = vpop.f32.mrf.mxu0
      %983 = vmatprep.mubr.f32.mxu0 0.0
      %984 = vmatmul.mubr.f32.gmra.mxu0 %v876
      %v985 = vpop.f32.mrf.mxu0
      %v986 = vadd.f32 0.0, %v985
      %v987 = vpop.f32.mrf.mxu0
      %988 = vmatprep.mubr.f32.mxu0 0.0
      %989 = vmatmul.mubr.f32.gmra.mxu0 %v878
      %v990 = vpop.f32.mrf.mxu0
      %v991 = vadd.f32 0.0, %v990
      %v992 = vpop.f32.mrf.mxu0
      %993 = vdwg.mxu0
      %v994 = vmul.f32 %v961, 0.35355338
      %v995 = vmul.f32 %v966, 0.35355338
      %v996 = vmul.f32 %v971, 0.35355338
      %v997 = vmul.f32 %v976, 0.35355338
      %v998 = vmul.f32 %v981, 0.35355338
      %v999 = vmul.f32 %v986, 0.35355338
      %v1000 = vmul.f32 %v991, 0.35355338
      %v1001 = vadd.f32 %v994, %v830
      %v1002 = vadd.f32 %v995, %v831
      %v1003 = vadd.f32 %v996, %v832
      %v1004 = vadd.f32 %v997, %v833
      %v1005 = vadd.f32 %v998, %v834
      %v1006 = vadd.f32 %v999, %v835
      %v1007 = vadd.f32 %v1000, %v836
      %vm1008 = vcmask 400384
      %v1009 = vsel %vm1008, %v1001, -inf
      %1010 = vmax.xlane.f32.xlu0 %v1009
      %v1011 = vpop.xlane.xlu0 %1010
      %v1012 = vsel %vm1008, %v1002, -inf
      %1013 = vmax.xlane.f32.xlu0 %v1012
      %v1014 = vpop.xlane.xlu0 %1013
      %v1015 = vsel %vm1008, %v1003, -inf
      %1016 = vmax.xlane.f32.xlu0 %v1015
      %v1017 = vpop.xlane.xlu0 %1016
      %v1018 = vsel %vm1008, %v1004, -inf
      %1019 = vmax.xlane.f32.xlu0 %v1018
      %v1020 = vpop.xlane.xlu0 %1019
      %v1021 = vsel %vm1008, %v1005, -inf
      %1022 = vmax.xlane.f32.xlu0 %v1021
      %v1023 = vpop.xlane.xlu0 %1022
      %v1024 = vsel %vm1008, %v1006, -inf
      %1025 = vmax.xlane.f32.xlu0 %v1024
      %v1026 = vpop.xlane.xlu0 %1025
      %vm1027 = vcmask 393216
      %v1028 = vsel %vm1027, %v1007, -inf
      %1029 = vmax.xlane.f32.xlu0 %v1028
      %v1030 = vpop.xlane.xlu0 %1029
      %v1031 = vsub.f32 %v1001, %v1011
      %v1032 = vsub.f32 %v1002, %v1014
      %v1033 = vsub.f32 %v1003, %v1017
      %v1034 = vsub.f32 %v1004, %v1020
      %v1035 = vsub.f32 %v1005, %v1023
      %v1036 = vsub.f32 %v1006, %v1026
      %v1037 = vsub.f32 %v1007, %v1030
      %v1038 = vmul.f32 %v1031, 1.442695
      %v1039 = vpow.pop %v1038
      %v1040 = vmul.f32 %v1032, 1.442695
      %v1041 = vpow.pop %v1040
      %v1042 = vmul.f32 %v1033, 1.442695
      %v1043 = vpow.pop %v1042
      %v1044 = vmul.f32 %v1034, 1.442695
      %v1045 = vpow.pop %v1044
      %v1046 = vmul.f32 %v1035, 1.442695
      %v1047 = vpow.pop %v1046
      %v1048 = vmul.f32 %v1036, 1.442695
      %v1049 = vpow.pop %v1048
      %v1050 = vmul.f32 %v1037, 1.442695
      %v1051 = vpow.pop %v1050
      %v1052 = vsel %vm1008, %v1039, 0.0
      %1053 = vadd.xlane.f32.xlu0 %v1052
      %v1054 = vpop.xlane.xlu0 %1053
      %v1055 = vsel %vm1008, %v1041, 0.0
      %1056 = vadd.xlane.f32.xlu0 %v1055
      %v1057 = vpop.xlane.xlu0 %1056
      %v1058 = vsel %vm1008, %v1043, 0.0
      %1059 = vadd.xlane.f32.xlu0 %v1058
      %v1060 = vpop.xlane.xlu0 %1059
      %v1061 = vsel %vm1008, %v1045, 0.0
      %1062 = vadd.xlane.f32.xlu0 %v1061
      %v1063 = vpop.xlane.xlu0 %1062
      %v1064 = vsel %vm1008, %v1047, 0.0
      %1065 = vadd.xlane.f32.xlu0 %v1064
      %v1066 = vpop.xlane.xlu0 %1065
      %v1067 = vsel %vm1008, %v1049, 0.0
      %1068 = vadd.xlane.f32.xlu0 %v1067
      %v1069 = vpop.xlane.xlu0 %1068
      %v1070 = vsel %vm1027, %v1051, 0.0
      %1071 = vadd.xlane.f32.xlu0 %v1070
      %v1072 = vpop.xlane.xlu0 %1071
      %v1073 = vrcp.pop %v1054
      %v1074 = vrcp.pop %v1057
      %v1075 = vrcp.pop %v1060
      %v1076 = vrcp.pop %v1063
      %v1077 = vrcp.pop %v1066
      %v1078 = vrcp.pop %v1069
      %v1079 = vrcp.pop %v1072
      %v1080 = vmul.f32 %v1039, %v1073
      %v1081 = vmul.f32 %v1041, %v1074
      %v1082 = vmul.f32 %v1043, %v1075
      %v1083 = vmul.f32 %v1045, %v1076
      %v1084 = vmul.f32 %v1047, %v1077
      %v1085 = vmul.f32 %v1049, %v1078
      %v1086 = vmul.f32 %v1051, %v1079
      %1087 = vst.msk [vmem:[%s269] sm:$0xff] %vm1008, %v1080
      %1088 = vst.msk [vmem:[%s269 + $0x8] sm:$0xff] %vm1008, %v1081
      %1089 = vst.msk [vmem:[%s269 + $0x10] sm:$0xff] %vm1008, %v1082
      %1090 = vst.msk [vmem:[%s269 + $0x18] sm:$0xff] %vm1008, %v1083
      %1091 = vst.msk [vmem:[%s269 + $0x20] sm:$0xff] %vm1008, %v1084
      %1092 = vst.msk [vmem:[%s269 + $0x28] sm:$0xff] %vm1008, %v1085
      %1093 = vst.msk [vmem:[%s269 + $0x30] sm:$0x1] %vm1027, %v1086
      %1094 = vrot.lane.b32.xlu0 %v837, 96
      %v1095 = vpop.permute.xlu0 %1094
      %1096 = vrot.lane.b32.xlu0 %v838, 96
      %v1097 = vpop.permute.xlu0 %1096
      %1098 = vrot.lane.b32.xlu0 %v839, 96
      %v1099 = vpop.permute.xlu0 %1098
      %1100 = vrot.lane.b32.xlu0 %v840, 96
      %v1101 = vpop.permute.xlu0 %1100
      %1102 = vrot.lane.b32.xlu0 %v841, 96
      %v1103 = vpop.permute.xlu0 %1102
      %1104 = vrot.lane.b32.xlu0 %v842, 96
      %v1105 = vpop.permute.xlu0 %1104
      %1106 = vrot.lane.b32.xlu0 %v843, 96
      %v1107 = vpop.permute.xlu0 %1106
      %v1115 = vsel %vm1008, %v1080, 0
      %v1118 = vsel %vm1008, %v1081, 0
      %v1121 = vsel %vm1008, %v1082, 0
      %v1124 = vsel %vm1008, %v1083, 0
      %v1127 = vsel %vm1008, %v1084, 0
      %v1130 = vsel %vm1008, %v1085, 0
      %v1133 = vsel %vm1008, %v1086, 0
      %vm1135 = vcmask 1040384
      %v1136 = vsel %vm1135, %v1107, 0
      %1138 = vmatprep.subr.mxu0 0.0
      %1139 = vmatpush1.msra.mxu0 0.0
      %1140 = vmatprep.subr.mxu0 0.0
      %1141 = vmatpush1.msra.mxu0 0.0
      %1142 = vmatprep.subr.mxu0 0.0
      %1143 = vmatpush1.msra.mxu0 0.0
      %1144 = vmatprep.subr.mxu0 0.0
      %1145 = vmatpush1.msra.mxu0 0.0
      %1146 = vmatprep.subr.mxu0 0.0
      %1147 = vmatpush1.msra.mxu0 0.0
      %1148 = vmatprep.subr.mxu0 0.0
      %1149 = vmatpush1.msra.mxu0 0.0
      %1150 = vmatprep.subr.mxu0 0.0
      %1151 = vmatpush1.msra.mxu0 0.0
      %1152 = vmatprep.subr.mxu0 0.0
      %1153 = vmatpush1.msra.mxu0 0.0
      %1154 = vmatprep.subr.mxu0 0.0
      %1155 = vmatpush1.msra.mxu0 0.0
      %1156 = vmatprep.subr.mxu0 0.0
      %1157 = vmatpush1.msra.mxu0 %v1136
      %1158 = vmatprep.subr.mxu0 0.0
      %1159 = vmatpush1.msra.mxu0 %v1105
      %1160 = vmatprep.subr.mxu0 0.0
      %1161 = vmatpush1.msra.mxu0 %v1103
      %1162 = vmatprep.subr.mxu0 0.0
      %1163 = vmatpush1.msra.mxu0 %v1101
      %1164 = vmatprep.subr.mxu0 0.0
      %1165 = vmatpush1.msra.mxu0 %v1099
      %1166 = vmatprep.subr.mxu0 0.0
      %1167 = vmatpush1.msra.mxu0 %v1097
      %1168 = vmatprep.subr.mxu0 0.0
      %1169 = vmatpush1.msra.mxu0 %v1095
      %1170 = vmatprep.subr.mxu0 0.0
      %1171 = vmatpush2.msra.mxu0 0.0
      %1172 = vmatprep.subr.mxu0 0.0
      %1173 = vmatpush2.msra.mxu0 0.0
      %1174 = vmatprep.subr.mxu0 0.0
      %1175 = vmatpush2.msra.mxu0 0.0
      %1176 = vmatprep.subr.mxu0 0.0
      %1177 = vmatpush2.msra.mxu0 0.0
      %1178 = vmatprep.subr.mxu0 0.0
      %1179 = vmatpush2.msra.mxu0 0.0
      %1180 = vmatprep.subr.mxu0 0.0
      %1181 = vmatpush2.msra.mxu0 0.0
      %1182 = vmatprep.subr.mxu0 0.0
      %1183 = vmatpush2.msra.mxu0 0.0
      %1184 = vmatprep.subr.mxu0 0.0
      %1185 = vmatpush2.msra.mxu0 0.0
      %1186 = vmatprep.subr.mxu0 0.0
      %1187 = vmatpush2.msra.mxu0 0.0
      %1188 = vmatprep.subr.mxu0 0.0
      %1189 = vmatpush2.msra.mxu0 0.0
      %1190 = vmatprep.subr.mxu0 0.0
      %1191 = vmatpush2.msra.mxu0 0.0
      %1192 = vmatprep.subr.mxu0 0.0
      %1193 = vmatpush2.msra.mxu0 0.0
      %1194 = vmatprep.subr.mxu0 0.0
      %1195 = vmatpush2.msra.mxu0 0.0
      %1196 = vmatprep.subr.mxu0 0.0
      %1197 = vmatpush2.msra.mxu0 0.0
      %1198 = vmatprep.subr.mxu0 0.0
      %1199 = vmatpush2.msra.mxu0 0.0
      %1200 = vmatprep.subr.mxu0 0.0
      %1201 = vmatpush2.msra.mxu0 0.0
      %1202 = vmatprep.mubr.f32.mxu0 0.0
      %1203 = vmatmul.mubr.f32.gmra.mxu0 %v1115
      %v1204 = vpop.f32.mrf.mxu0
      %v1205 = vadd.f32 0.0, %v1204
      %v1206 = vpop.f32.mrf.mxu0
      %1207 = vmatprep.mubr.f32.mxu0 0.0
      %1208 = vmatmul.mubr.f32.gmra.mxu0 %v1118
      %v1209 = vpop.f32.mrf.mxu0
      %v1210 = vadd.f32 0.0, %v1209
      %v1211 = vpop.f32.mrf.mxu0
      %1212 = vmatprep.mubr.f32.mxu0 0.0
      %1213 = vmatmul.mubr.f32.gmra.mxu0 %v1121
      %v1214 = vpop.f32.mrf.mxu0
      %v1215 = vadd.f32 0.0, %v1214
      %v1216 = vpop.f32.mrf.mxu0
      %1217 = vmatprep.mubr.f32.mxu0 0.0
      %1218 = vmatmul.mubr.f32.gmra.mxu0 %v1124
      %v1219 = vpop.f32.mrf.mxu0
      %v1220 = vadd.f32 0.0, %v1219
      %v1221 = vpop.f32.mrf.mxu0
      %1222 = vmatprep.mubr.f32.mxu0 0.0
      %1223 = vmatmul.mubr.f32.gmra.mxu0 %v1127
      %v1224 = vpop.f32.mrf.mxu0
      %v1225 = vadd.f32 0.0, %v1224
      %v1226 = vpop.f32.mrf.mxu0
      %1227 = vmatprep.mubr.f32.mxu0 0.0
      %1228 = vmatmul.mubr.f32.gmra.mxu0 %v1130
      %v1229 = vpop.f32.mrf.mxu0
      %v1230 = vadd.f32 0.0, %v1229
      %v1231 = vpop.f32.mrf.mxu0
      %1232 = vmatprep.mubr.f32.mxu0 0.0
      %1233 = vmatmul.mubr.f32.gmra.mxu0 %v1133
      %v1234 = vpop.f32.mrf.mxu0
      %v1235 = vadd.f32 0.0, %v1234
      %v1236 = vpop.f32.mrf.mxu0
      %1237 = vdwg.mxu0
      %1238 = vst.msk [vmem:[#allocation3] sm:$0xff] %vm865, %v1205
      %1239 = vst.msk [vmem:[#allocation3 + $0x8] sm:$0xff] %vm865, %v1210
      %1240 = vst.msk [vmem:[#allocation3 + $0x10] sm:$0xff] %vm865, %v1215
      %1241 = vst.msk [vmem:[#allocation3 + $0x18] sm:$0xff] %vm865, %v1220
      %1242 = vst.msk [vmem:[#allocation3 + $0x20] sm:$0xff] %vm865, %v1225
      %1243 = vst.msk [vmem:[#allocation3 + $0x28] sm:$0xff] %vm865, %v1230
      %vm1244 = vcmask 57344
      %1245 = vst.msk [vmem:[#allocation3 + $0x30] sm:$0x1] %vm1244, %v1235
      %v1246 = vld [vmem:[#allocation2] sm:$0xff]
      %v1247 = vld [vmem:[#allocation2 + $0x8] sm:$0xff]
      %v1248 = vld [vmem:[#allocation2 + $0x10] sm:$0xff]
      %v1249 = vld [vmem:[#allocation2 + $0x18] sm:$0xff]
      %v1250 = vld [vmem:[#allocation2 + $0x20] sm:$0xff]
      %v1251 = vld [vmem:[#allocation2 + $0x28] sm:$0xff]
      %v1252 = vld [vmem:[#allocation2 + $0x30] sm:$0x1]
      %1260 = vrot.lane.b32.xlu0 %v1246, 120
      %v1261 = vpop.permute.xlu0 %1260
      %1262 = vrot.lane.b32.xlu0 %v1247, 120
      %v1263 = vpop.permute.xlu0 %1262
      %1264 = vrot.lane.b32.xlu0 %v1248, 120
      %v1265 = vpop.permute.xlu0 %1264
      %1266 = vrot.lane.b32.xlu0 %v1249, 120
      %v1267 = vpop.permute.xlu0 %1266
      %1268 = vrot.lane.b32.xlu0 %v1250, 120
      %v1269 = vpop.permute.xlu0 %1268
      %1270 = vrot.lane.b32.xlu0 %v1251, 120
      %v1271 = vpop.permute.xlu0 %1270
      %1272 = vrot.lane.b32.xlu0 %v1252, 120
      %v1273 = vpop.permute.xlu0 %1272
      %1274 = vrot.lane.b32.xlu0 %v1246, 104
      %v1275 = vpop.permute.xlu0 %1274
      %1276 = vrot.lane.b32.xlu0 %v1247, 104
      %v1277 = vpop.permute.xlu0 %1276
      %1278 = vrot.lane.b32.xlu0 %v1248, 104
      %v1279 = vpop.permute.xlu0 %1278
      %1280 = vrot.lane.b32.xlu0 %v1249, 104
      %v1281 = vpop.permute.xlu0 %1280
      %1282 = vrot.lane.b32.xlu0 %v1250, 104
      %v1283 = vpop.permute.xlu0 %1282
      %1284 = vrot.lane.b32.xlu0 %v1251, 104
      %v1285 = vpop.permute.xlu0 %1284
      %1286 = vrot.lane.b32.xlu0 %v1252, 104
      %v1287 = vpop.permute.xlu0 %1286
      %v1288 = vsel %vm865, %v1261, 0
      %v1290 = vsel %vm865, %v1263, 0
      %v1292 = vsel %vm865, %v1265, 0
      %v1294 = vsel %vm865, %v1267, 0
      %v1296 = vsel %vm865, %v1269, 0
      %v1298 = vsel %vm865, %v1271, 0
      %v1300 = vsel %vm865, %v1273, 0
      %v1302 = vsel %vm865, %v1275, 0
      %v1304 = vsel %vm865, %v1277, 0
      %v1306 = vsel %vm865, %v1279, 0
      %v1308 = vsel %vm865, %v1281, 0
      %v1310 = vsel %vm865, %v1283, 0
      %v1312 = vsel %vm865, %v1285, 0
      %v1314 = vsel %vm865, %v1287, 0
      %1316 = vmatprep.subr.mxu0 0.0
      %1317 = vmatpush1.xpose.msra.mxu0 0.0
      %1318 = vmatprep.subr.mxu0 0.0
      %1319 = vmatpush1.xpose.msra.mxu0 0.0
      %1320 = vmatprep.subr.mxu0 0.0
      %1321 = vmatpush1.xpose.msra.mxu0 0.0
      %1322 = vmatprep.subr.mxu0 0.0
      %1323 = vmatpush1.xpose.msra.mxu0 0.0
      %1324 = vmatprep.subr.mxu0 0.0
      %1325 = vmatpush1.xpose.msra.mxu0 0.0
      %1326 = vmatprep.subr.mxu0 0.0
      %1327 = vmatpush1.xpose.msra.mxu0 0.0
      %1328 = vmatprep.subr.mxu0 0.0
      %1329 = vmatpush1.xpose.msra.mxu0 0.0
      %1330 = vmatprep.subr.mxu0 0.0
      %1331 = vmatpush1.xpose.msra.mxu0 0.0
      %1332 = vmatprep.subr.mxu0 0.0
      %1333 = vmatpush1.xpose.msra.mxu0 0.0
      %1334 = vmatprep.subr.mxu0 0.0
      %1335 = vmatpush1.xpose.msra.mxu0 %v1314
      %1336 = vmatprep.subr.mxu0 0.0
      %1337 = vmatpush1.xpose.msra.mxu0 %v1312
      %1338 = vmatprep.subr.mxu0 0.0
      %1339 = vmatpush1.xpose.msra.mxu0 %v1310
      %1340 = vmatprep.subr.mxu0 0.0
      %1341 = vmatpush1.xpose.msra.mxu0 %v1308
      %1342 = vmatprep.subr.mxu0 0.0
      %1343 = vmatpush1.xpose.msra.mxu0 %v1306
      %1344 = vmatprep.subr.mxu0 0.0
      %1345 = vmatpush1.xpose.msra.mxu0 %v1304
      %1346 = vmatprep.subr.mxu0 0.0
      %1347 = vmatpush1.xpose.msra.mxu0 %v1302
      %1348 = vmatprep.subr.mxu0 0.0
      %1349 = vmatpush2.xpose.msra.mxu0 0.0
      %1350 = vmatprep.subr.mxu0 0.0
      %1351 = vmatpush2.xpose.msra.mxu0 0.0
      %1352 = vmatprep.subr.mxu0 0.0
      %1353 = vmatpush2.xpose.msra.mxu0 0.0
      %1354 = vmatprep.subr.mxu0 0.0
      %1355 = vmatpush2.xpose.msra.mxu0 0.0
      %1356 = vmatprep.subr.mxu0 0.0
      %1357 = vmatpush2.xpose.msra.mxu0 0.0
      %1358 = vmatprep.subr.mxu0 0.0
      %1359 = vmatpush2.xpose.msra.mxu0 0.0
      %1360 = vmatprep.subr.mxu0 0.0
      %1361 = vmatpush2.xpose.msra.mxu0 0.0
      %1362 = vmatprep.subr.mxu0 0.0
      %1363 = vmatpush2.xpose.msra.mxu0 0.0
      %1364 = vmatprep.subr.mxu0 0.0
      %1365 = vmatpush2.xpose.msra.mxu0 0.0
      %1366 = vmatprep.subr.mxu0 0.0
      %1367 = vmatpush2.xpose.msra.mxu0 0.0
      %1368 = vmatprep.subr.mxu0 0.0
      %1369 = vmatpush2.xpose.msra.mxu0 0.0
      %1370 = vmatprep.subr.mxu0 0.0
      %1371 = vmatpush2.xpose.msra.mxu0 0.0
      %1372 = vmatprep.subr.mxu0 0.0
      %1373 = vmatpush2.xpose.msra.mxu0 0.0
      %1374 = vmatprep.subr.mxu0 0.0
      %1375 = vmatpush2.xpose.msra.mxu0 0.0
      %1376 = vmatprep.subr.mxu0 0.0
      %1377 = vmatpush2.xpose.msra.mxu0 0.0
      %1378 = vmatprep.subr.mxu0 0.0
      %1379 = vmatpush2.xpose.msra.mxu0 0.0
      %1380 = vmatprep.mubr.f32.mxu0 0.0
      %1381 = vmatmul.mubr.f32.gmra.mxu0 %v1288
      %v1382 = vpop.f32.mrf.mxu0
      %v1383 = vadd.f32 0.0, %v1382
      %v1384 = vpop.f32.mrf.mxu0
      %1385 = vmatprep.mubr.f32.mxu0 0.0
      %1386 = vmatmul.mubr.f32.gmra.mxu0 %v1290
      %v1387 = vpop.f32.mrf.mxu0
      %v1388 = vadd.f32 0.0, %v1387
      %v1389 = vpop.f32.mrf.mxu0
      %1390 = vmatprep.mubr.f32.mxu0 0.0
      %1391 = vmatmul.mubr.f32.gmra.mxu0 %v1292
      %v1392 = vpop.f32.mrf.mxu0
      %v1393 = vadd.f32 0.0, %v1392
      %v1394 = vpop.f32.mrf.mxu0
      %1395 = vmatprep.mubr.f32.mxu0 0.0
      %1396 = vmatmul.mubr.f32.gmra.mxu0 %v1294
      %v1397 = vpop.f32.mrf.mxu0
      %v1398 = vadd.f32 0.0, %v1397
      %v1399 = vpop.f32.mrf.mxu0
      %1400 = vmatprep.mubr.f32.mxu0 0.0
      %1401 = vmatmul.mubr.f32.gmra.mxu0 %v1296
      %v1402 = vpop.f32.mrf.mxu0
      %v1403 = vadd.f32 0.0, %v1402
      %v1404 = vpop.f32.mrf.mxu0
      %1405 = vmatprep.mubr.f32.mxu0 0.0
      %1406 = vmatmul.mubr.f32.gmra.mxu0 %v1298
      %v1407 = vpop.f32.mrf.mxu0
      %v1408 = vadd.f32 0.0, %v1407
      %v1409 = vpop.f32.mrf.mxu0
      %1410 = vmatprep.mubr.f32.mxu0 0.0
      %1411 = vmatmul.mubr.f32.gmra.mxu0 %v1300
      %v1412 = vpop.f32.mrf.mxu0
      %v1413 = vadd.f32 0.0, %v1412
      %v1414 = vpop.f32.mrf.mxu0
      %1415 = vdwg.mxu0
      %v1416 = vmul.f32 %v1383, 0.35355338
      %v1417 = vmul.f32 %v1388, 0.35355338
      %v1418 = vmul.f32 %v1393, 0.35355338
      %v1419 = vmul.f32 %v1398, 0.35355338
      %v1420 = vmul.f32 %v1403, 0.35355338
      %v1421 = vmul.f32 %v1408, 0.35355338
      %v1422 = vmul.f32 %v1413, 0.35355338
      %v1423 = vadd.f32 %v1416, %v830
      %v1424 = vadd.f32 %v1417, %v831
      %v1425 = vadd.f32 %v1418, %v832
      %v1426 = vadd.f32 %v1419, %v833
      %v1427 = vadd.f32 %v1420, %v834
      %v1428 = vadd.f32 %v1421, %v835
      %v1429 = vadd.f32 %v1422, %v836
      %v1430 = vsel %vm1008, %v1423, -inf
      %1431 = vmax.xlane.f32.xlu0 %v1430
      %v1432 = vpop.xlane.xlu0 %1431
      %v1433 = vsel %vm1008, %v1424, -inf
      %1434 = vmax.xlane.f32.xlu0 %v1433
      %v1435 = vpop.xlane.xlu0 %1434
      %v1436 = vsel %vm1008, %v1425, -inf
      %1437 = vmax.xlane.f32.xlu0 %v1436
      %v1438 = vpop.xlane.xlu0 %1437
      %v1439 = vsel %vm1008, %v1426, -inf
      %1440 = vmax.xlane.f32.xlu0 %v1439
      %v1441 = vpop.xlane.xlu0 %1440
      %v1442 = vsel %vm1008, %v1427, -inf
      %1443 = vmax.xlane.f32.xlu0 %v1442
      %v1444 = vpop.xlane.xlu0 %1443
      %v1445 = vsel %vm1008, %v1428, -inf
      %1446 = vmax.xlane.f32.xlu0 %v1445
      %v1447 = vpop.xlane.xlu0 %1446
      %v1448 = vsel %vm1027, %v1429, -inf
      %1449 = vmax.xlane.f32.xlu0 %v1448
      %v1450 = vpop.xlane.xlu0 %1449
      %v1451 = vsub.f32 %v1423, %v1432
      %v1452 = vsub.f32 %v1424, %v1435
      %v1453 = vsub.f32 %v1425, %v1438
      %v1454 = vsub.f32 %v1426, %v1441
      %v1455 = vsub.f32 %v1427, %v1444
      %v1456 = vsub.f32 %v1428, %v1447
      %v1457 = vsub.f32 %v1429, %v1450
      %v1458 = vmul.f32 %v1451, 1.442695
      %v1459 = vpow.pop %v1458
      %v1460 = vmul.f32 %v1452, 1.442695
      %v1461 = vpow.pop %v1460
      %v1462 = vmul.f32 %v1453, 1.442695
      %v1463 = vpow.pop %v1462
      %v1464 = vmul.f32 %v1454, 1.442695
      %v1465 = vpow.pop %v1464
      %v1466 = vmul.f32 %v1455, 1.442695
      %v1467 = vpow.pop %v1466
      %v1468 = vmul.f32 %v1456, 1.442695
      %v1469 = vpow.pop %v1468
      %v1470 = vmul.f32 %v1457, 1.442695
      %v1471 = vpow.pop %v1470
      %v1472 = vsel %vm1008, %v1459, 0.0
      %1473 = vadd.xlane.f32.xlu0 %v1472
      %v1474 = vpop.xlane.xlu0 %1473
      %v1475 = vsel %vm1008, %v1461, 0.0
      %1476 = vadd.xlane.f32.xlu0 %v1475
      %v1477 = vpop.xlane.xlu0 %1476
      %v1478 = vsel %vm1008, %v1463, 0.0
      %1479 = vadd.xlane.f32.xlu0 %v1478
      %v1480 = vpop.xlane.xlu0 %1479
      %v1481 = vsel %vm1008, %v1465, 0.0
      %1482 = vadd.xlane.f32.xlu0 %v1481
      %v1483 = vpop.xlane.xlu0 %1482
      %v1484 = vsel %vm1008, %v1467, 0.0
      %1485 = vadd.xlane.f32.xlu0 %v1484
      %v1486 = vpop.xlane.xlu0 %1485
      %v1487 = vsel %vm1008, %v1469, 0.0
      %1488 = vadd.xlane.f32.xlu0 %v1487
      %v1489 = vpop.xlane.xlu0 %1488
      %v1490 = vsel %vm1027, %v1471, 0.0
      %1491 = vadd.xlane.f32.xlu0 %v1490
      %v1492 = vpop.xlane.xlu0 %1491
      %v1493 = vrcp.pop %v1474
      %v1494 = vrcp.pop %v1477
      %v1495 = vrcp.pop %v1480
      %v1496 = vrcp.pop %v1483
      %v1497 = vrcp.pop %v1486
      %v1498 = vrcp.pop %v1489
      %v1499 = vrcp.pop %v1492
      %v1500 = vmul.f32 %v1459, %v1493
      %v1501 = vmul.f32 %v1461, %v1494
      %v1502 = vmul.f32 %v1463, %v1495
      %v1503 = vmul.f32 %v1465, %v1496
      %v1504 = vmul.f32 %v1467, %v1497
      %v1505 = vmul.f32 %v1469, %v1498
      %v1506 = vmul.f32 %v1471, %v1499
      %s1507 = scalar_lea.vmem %s269, 56
      %1508 = vst.msk [vmem:[%s1507] sm:$0xff] %vm1008, %v1500
      %1509 = vst.msk [vmem:[%s1507 + $0x8] sm:$0xff] %vm1008, %v1501
      %1510 = vst.msk [vmem:[%s1507 + $0x10] sm:$0xff] %vm1008, %v1502
      %1511 = vst.msk [vmem:[%s1507 + $0x18] sm:$0xff] %vm1008, %v1503
      %1512 = vst.msk [vmem:[%s1507 + $0x20] sm:$0xff] %vm1008, %v1504
      %1513 = vst.msk [vmem:[%s1507 + $0x28] sm:$0xff] %vm1008, %v1505
      %1514 = vst.msk [vmem:[%s1507 + $0x30] sm:$0x1] %vm1027, %v1506
      %1515 = vrot.lane.b32.xlu0 %v1246, 88
      %v1516 = vpop.permute.xlu0 %1515
      %1517 = vrot.lane.b32.xlu0 %v1247, 88
      %v1518 = vpop.permute.xlu0 %1517
      %1519 = vrot.lane.b32.xlu0 %v1248, 88
      %v1520 = vpop.permute.xlu0 %1519
      %1521 = vrot.lane.b32.xlu0 %v1249, 88
      %v1522 = vpop.permute.xlu0 %1521
      %1523 = vrot.lane.b32.xlu0 %v1250, 88
      %v1524 = vpop.permute.xlu0 %1523
      %1525 = vrot.lane.b32.xlu0 %v1251, 88
      %v1526 = vpop.permute.xlu0 %1525
      %1527 = vrot.lane.b32.xlu0 %v1252, 88
      %v1528 = vpop.permute.xlu0 %1527
      %v1536 = vsel %vm1008, %v1500, 0
      %v1539 = vsel %vm1008, %v1501, 0
      %v1542 = vsel %vm1008, %v1502, 0
      %v1545 = vsel %vm1008, %v1503, 0
      %v1548 = vsel %vm1008, %v1504, 0
      %v1551 = vsel %vm1008, %v1505, 0
      %v1554 = vsel %vm1008, %v1506, 0
      %v1556 = vsel %vm1135, %v1528, 0
      %1558 = vmatprep.subr.mxu0 0.0
      %1559 = vmatpush1.msra.mxu0 0.0
      %1560 = vmatprep.subr.mxu0 0.0
      %1561 = vmatpush1.msra.mxu0 0.0
      %1562 = vmatprep.subr.mxu0 0.0
      %1563 = vmatpush1.msra.mxu0 0.0
      %1564 = vmatprep.subr.mxu0 0.0
      %1565 = vmatpush1.msra.mxu0 0.0
      %1566 = vmatprep.subr.mxu0 0.0
      %1567 = vmatpush1.msra.mxu0 0.0
      %1568 = vmatprep.subr.mxu0 0.0
      %1569 = vmatpush1.msra.mxu0 0.0
      %1570 = vmatprep.subr.mxu0 0.0
      %1571 = vmatpush1.msra.mxu0 0.0
      %1572 = vmatprep.subr.mxu0 0.0
      %1573 = vmatpush1.msra.mxu0 0.0
      %1574 = vmatprep.subr.mxu0 0.0
      %1575 = vmatpush1.msra.mxu0 0.0
      %1576 = vmatprep.subr.mxu0 0.0
      %1577 = vmatpush1.msra.mxu0 %v1556
      %1578 = vmatprep.subr.mxu0 0.0
      %1579 = vmatpush1.msra.mxu0 %v1526
      %1580 = vmatprep.subr.mxu0 0.0
      %1581 = vmatpush1.msra.mxu0 %v1524
      %1582 = vmatprep.subr.mxu0 0.0
      %1583 = vmatpush1.msra.mxu0 %v1522
      %1584 = vmatprep.subr.mxu0 0.0
      %1585 = vmatpush1.msra.mxu0 %v1520
      %1586 = vmatprep.subr.mxu0 0.0
      %1587 = vmatpush1.msra.mxu0 %v1518
      %1588 = vmatprep.subr.mxu0 0.0
      %1589 = vmatpush1.msra.mxu0 %v1516
      %1590 = vmatprep.subr.mxu0 0.0
      %1591 = vmatpush2.msra.mxu0 0.0
      %1592 = vmatprep.subr.mxu0 0.0
      %1593 = vmatpush2.msra.mxu0 0.0
      %1594 = vmatprep.subr.mxu0 0.0
      %1595 = vmatpush2.msra.mxu0 0.0
      %1596 = vmatprep.subr.mxu0 0.0
      %1597 = vmatpush2.msra.mxu0 0.0
      %1598 = vmatprep.subr.mxu0 0.0
      %1599 = vmatpush2.msra.mxu0 0.0
      %1600 = vmatprep.subr.mxu0 0.0
      %1601 = vmatpush2.msra.mxu0 0.0
      %1602 = vmatprep.subr.mxu0 0.0
      %1603 = vmatpush2.msra.mxu0 0.0
      %1604 = vmatprep.subr.mxu0 0.0
      %1605 = vmatpush2.msra.mxu0 0.0
      %1606 = vmatprep.subr.mxu0 0.0
      %1607 = vmatpush2.msra.mxu0 0.0
      %1608 = vmatprep.subr.mxu0 0.0
      %1609 = vmatpush2.msra.mxu0 0.0
      %1610 = vmatprep.subr.mxu0 0.0
      %1611 = vmatpush2.msra.mxu0 0.0
      %1612 = vmatprep.subr.mxu0 0.0
      %1613 = vmatpush2.msra.mxu0 0.0
      %1614 = vmatprep.subr.mxu0 0.0
      %1615 = vmatpush2.msra.mxu0 0.0
      %1616 = vmatprep.subr.mxu0 0.0
      %1617 = vmatpush2.msra.mxu0 0.0
      %1618 = vmatprep.subr.mxu0 0.0
      %1619 = vmatpush2.msra.mxu0 0.0
      %1620 = vmatprep.subr.mxu0 0.0
      %1621 = vmatpush2.msra.mxu0 0.0
      %1622 = vmatprep.mubr.f32.mxu0 0.0
      %1623 = vmatmul.mubr.f32.gmra.mxu0 %v1536
      %v1624 = vpop.f32.mrf.mxu0
      %v1625 = vadd.f32 0.0, %v1624
      %v1626 = vpop.f32.mrf.mxu0
      %1627 = vmatprep.mubr.f32.mxu0 0.0
      %1628 = vmatmul.mubr.f32.gmra.mxu0 %v1539
      %v1629 = vpop.f32.mrf.mxu0
      %v1630 = vadd.f32 0.0, %v1629
      %v1631 = vpop.f32.mrf.mxu0
      %1632 = vmatprep.mubr.f32.mxu0 0.0
      %1633 = vmatmul.mubr.f32.gmra.mxu0 %v1542
      %v1634 = vpop.f32.mrf.mxu0
      %v1635 = vadd.f32 0.0, %v1634
      %v1636 = vpop.f32.mrf.mxu0
      %1637 = vmatprep.mubr.f32.mxu0 0.0
      %1638 = vmatmul.mubr.f32.gmra.mxu0 %v1545
      %v1639 = vpop.f32.mrf.mxu0
      %v1640 = vadd.f32 0.0, %v1639
      %v1641 = vpop.f32.mrf.mxu0
      %1642 = vmatprep.mubr.f32.mxu0 0.0
      %1643 = vmatmul.mubr.f32.gmra.mxu0 %v1548
      %v1644 = vpop.f32.mrf.mxu0
      %v1645 = vadd.f32 0.0, %v1644
      %v1646 = vpop.f32.mrf.mxu0
      %1647 = vmatprep.mubr.f32.mxu0 0.0
      %1648 = vmatmul.mubr.f32.gmra.mxu0 %v1551
      %v1649 = vpop.f32.mrf.mxu0
      %v1650 = vadd.f32 0.0, %v1649
      %v1651 = vpop.f32.mrf.mxu0
      %1652 = vmatprep.mubr.f32.mxu0 0.0
      %1653 = vmatmul.mubr.f32.gmra.mxu0 %v1554
      %v1654 = vpop.f32.mrf.mxu0
      %v1655 = vadd.f32 0.0, %v1654
      %v1656 = vpop.f32.mrf.mxu0
      %1657 = vdwg.mxu0
      %1665 = vrot.lane.b32.xlu0 %v1625, 8
      %v1666 = vpop.permute.xlu0 %1665
      %1667 = vrot.lane.b32.xlu0 %v1630, 8
      %v1668 = vpop.permute.xlu0 %1667
      %1669 = vrot.lane.b32.xlu0 %v1635, 8
      %v1670 = vpop.permute.xlu0 %1669
      %1671 = vrot.lane.b32.xlu0 %v1640, 8
      %v1672 = vpop.permute.xlu0 %1671
      %1673 = vrot.lane.b32.xlu0 %v1645, 8
      %v1674 = vpop.permute.xlu0 %1673
      %1675 = vrot.lane.b32.xlu0 %v1650, 8
      %v1676 = vpop.permute.xlu0 %1675
      %1677 = vrot.lane.b32.xlu0 %v1655, 8
      %v1678 = vpop.permute.xlu0 %1677
      %vm1686 = vcmask 130112
      %1687 = vst.msk [vmem:[#allocation3] sm:$0xff] %vm1686, %v1666
      %1688 = vst.msk [vmem:[#allocation3 + $0x8] sm:$0xff] %vm1686, %v1668
      %1689 = vst.msk [vmem:[#allocation3 + $0x10] sm:$0xff] %vm1686, %v1670
      %1690 = vst.msk [vmem:[#allocation3 + $0x18] sm:$0xff] %vm1686, %v1672
      %1691 = vst.msk [vmem:[#allocation3 + $0x20] sm:$0xff] %vm1686, %v1674
      %1692 = vst.msk [vmem:[#allocation3 + $0x28] sm:$0xff] %vm1686, %v1676
      %vm1693 = vcmask 122944
      %1694 = vst.msk [vmem:[#allocation3 + $0x30] sm:$0x1] %vm1693, %v1678
      %v1695 = vld [vmem:[#allocation2 + $0x31] sm:$0xff]
      %v1696 = vld [vmem:[#allocation2 + $0x39] sm:$0xff]
      %v1697 = vld [vmem:[#allocation2 + $0x41] sm:$0xff]
      %v1698 = vld [vmem:[#allocation2 + $0x49] sm:$0xff]
      %v1699 = vld [vmem:[#allocation2 + $0x51] sm:$0xff]
      %v1700 = vld [vmem:[#allocation2 + $0x59] sm:$0xff]
      %v1701 = vld [vmem:[#allocation2 + $0x61] sm:$0x1]
      %1709 = vrot.lane.b32.xlu0 %v1695, 112
      %v1710 = vpop.permute.xlu0 %1709
      %1711 = vrot.lane.b32.xlu0 %v1696, 112
      %v1712 = vpop.permute.xlu0 %1711
      %1713 = vrot.lane.b32.xlu0 %v1697, 112
      %v1714 = vpop.permute.xlu0 %1713
      %1715 = vrot.lane.b32.xlu0 %v1698, 112
      %v1716 = vpop.permute.xlu0 %1715
      %1717 = vrot.lane.b32.xlu0 %v1699, 112
      %v1718 = vpop.permute.xlu0 %1717
      %1719 = vrot.lane.b32.xlu0 %v1700, 112
      %v1720 = vpop.permute.xlu0 %1719
      %1721 = vrot.lane.b32.xlu0 %v1701, 112
      %v1722 = vpop.permute.xlu0 %1721
      %v1723 = vsel %vm865, %v1695, 0
      %v1725 = vsel %vm865, %v1696, 0
      %v1727 = vsel %vm865, %v1697, 0
      %v1729 = vsel %vm865, %v1698, 0
      %v1731 = vsel %vm865, %v1699, 0
      %v1733 = vsel %vm865, %v1700, 0
      %v1735 = vsel %vm865, %v1701, 0
      %v1737 = vsel %vm865, %v1710, 0
      %v1739 = vsel %vm865, %v1712, 0
      %v1741 = vsel %vm865, %v1714, 0
      %v1743 = vsel %vm865, %v1716, 0
      %v1745 = vsel %vm865, %v1718, 0
      %v1747 = vsel %vm865, %v1720, 0
      %v1749 = vsel %vm865, %v1722, 0
      %1751 = vmatprep.subr.mxu0 0.0
      %1752 = vmatpush1.xpose.msra.mxu0 0.0
      %1753 = vmatprep.subr.mxu0 0.0
      %1754 = vmatpush1.xpose.msra.mxu0 0.0
      %1755 = vmatprep.subr.mxu0 0.0
      %1756 = vmatpush1.xpose.msra.mxu0 0.0
      %1757 = vmatprep.subr.mxu0 0.0
      %1758 = vmatpush1.xpose.msra.mxu0 0.0
      %1759 = vmatprep.subr.mxu0 0.0
      %1760 = vmatpush1.xpose.msra.mxu0 0.0
      %1761 = vmatprep.subr.mxu0 0.0
      %1762 = vmatpush1.xpose.msra.mxu0 0.0
      %1763 = vmatprep.subr.mxu0 0.0
      %1764 = vmatpush1.xpose.msra.mxu0 0.0
      %1765 = vmatprep.subr.mxu0 0.0
      %1766 = vmatpush1.xpose.msra.mxu0 0.0
      %1767 = vmatprep.subr.mxu0 0.0
      %1768 = vmatpush1.xpose.msra.mxu0 0.0
      %1769 = vmatprep.subr.mxu0 0.0
      %1770 = vmatpush1.xpose.msra.mxu0 %v1749
      %1771 = vmatprep.subr.mxu0 0.0
      %1772 = vmatpush1.xpose.msra.mxu0 %v1747
      %1773 = vmatprep.subr.mxu0 0.0
      %1774 = vmatpush1.xpose.msra.mxu0 %v1745
      %1775 = vmatprep.subr.mxu0 0.0
      %1776 = vmatpush1.xpose.msra.mxu0 %v1743
      %1777 = vmatprep.subr.mxu0 0.0
      %1778 = vmatpush1.xpose.msra.mxu0 %v1741
      %1779 = vmatprep.subr.mxu0 0.0
      %1780 = vmatpush1.xpose.msra.mxu0 %v1739
      %1781 = vmatprep.subr.mxu0 0.0
      %1782 = vmatpush1.xpose.msra.mxu0 %v1737
      %1783 = vmatprep.subr.mxu0 0.0
      %1784 = vmatpush2.xpose.msra.mxu0 0.0
      %1785 = vmatprep.subr.mxu0 0.0
      %1786 = vmatpush2.xpose.msra.mxu0 0.0
      %1787 = vmatprep.subr.mxu0 0.0
      %1788 = vmatpush2.xpose.msra.mxu0 0.0
      %1789 = vmatprep.subr.mxu0 0.0
      %1790 = vmatpush2.xpose.msra.mxu0 0.0
      %1791 = vmatprep.subr.mxu0 0.0
      %1792 = vmatpush2.xpose.msra.mxu0 0.0
      %1793 = vmatprep.subr.mxu0 0.0
      %1794 = vmatpush2.xpose.msra.mxu0 0.0
      %1795 = vmatprep.subr.mxu0 0.0
      %1796 = vmatpush2.xpose.msra.mxu0 0.0
      %1797 = vmatprep.subr.mxu0 0.0
      %1798 = vmatpush2.xpose.msra.mxu0 0.0
      %1799 = vmatprep.subr.mxu0 0.0
      %1800 = vmatpush2.xpose.msra.mxu0 0.0
      %1801 = vmatprep.subr.mxu0 0.0
      %1802 = vmatpush2.xpose.msra.mxu0 0.0
      %1803 = vmatprep.subr.mxu0 0.0
      %1804 = vmatpush2.xpose.msra.mxu0 0.0
      %1805 = vmatprep.subr.mxu0 0.0
      %1806 = vmatpush2.xpose.msra.mxu0 0.0
      %1807 = vmatprep.subr.mxu0 0.0
      %1808 = vmatpush2.xpose.msra.mxu0 0.0
      %1809 = vmatprep.subr.mxu0 0.0
      %1810 = vmatpush2.xpose.msra.mxu0 0.0
      %1811 = vmatprep.subr.mxu0 0.0
      %1812 = vmatpush2.xpose.msra.mxu0 0.0
      %1813 = vmatprep.subr.mxu0 0.0
      %1814 = vmatpush2.xpose.msra.mxu0 0.0
      %1815 = vmatprep.mubr.f32.mxu0 0.0
      %1816 = vmatmul.mubr.f32.gmra.mxu0 %v1723
      %v1817 = vpop.f32.mrf.mxu0
      %v1818 = vadd.f32 0.0, %v1817
      %v1819 = vpop.f32.mrf.mxu0
      %1820 = vmatprep.mubr.f32.mxu0 0.0
      %1821 = vmatmul.mubr.f32.gmra.mxu0 %v1725
      %v1822 = vpop.f32.mrf.mxu0
      %v1823 = vadd.f32 0.0, %v1822
      %v1824 = vpop.f32.mrf.mxu0
      %1825 = vmatprep.mubr.f32.mxu0 0.0
      %1826 = vmatmul.mubr.f32.gmra.mxu0 %v1727
      %v1827 = vpop.f32.mrf.mxu0
      %v1828 = vadd.f32 0.0, %v1827
      %v1829 = vpop.f32.mrf.mxu0
      %1830 = vmatprep.mubr.f32.mxu0 0.0
      %1831 = vmatmul.mubr.f32.gmra.mxu0 %v1729
      %v1832 = vpop.f32.mrf.mxu0
      %v1833 = vadd.f32 0.0, %v1832
      %v1834 = vpop.f32.mrf.mxu0
      %1835 = vmatprep.mubr.f32.mxu0 0.0
      %1836 = vmatmul.mubr.f32.gmra.mxu0 %v1731
      %v1837 = vpop.f32.mrf.mxu0
      %v1838 = vadd.f32 0.0, %v1837
      %v1839 = vpop.f32.mrf.mxu0
      %1840 = vmatprep.mubr.f32.mxu0 0.0
      %1841 = vmatmul.mubr.f32.gmra.mxu0 %v1733
      %v1842 = vpop.f32.mrf.mxu0
      %v1843 = vadd.f32 0.0, %v1842
      %v1844 = vpop.f32.mrf.mxu0
      %1845 = vmatprep.mubr.f32.mxu0 0.0
      %1846 = vmatmul.mubr.f32.gmra.mxu0 %v1735
      %v1847 = vpop.f32.mrf.mxu0
      %v1848 = vadd.f32 0.0, %v1847
      %v1849 = vpop.f32.mrf.mxu0
      %1850 = vdwg.mxu0
      %v1851 = vmul.f32 %v1818, 0.35355338
      %v1852 = vmul.f32 %v1823, 0.35355338
      %v1853 = vmul.f32 %v1828, 0.35355338
      %v1854 = vmul.f32 %v1833, 0.35355338
      %v1855 = vmul.f32 %v1838, 0.35355338
      %v1856 = vmul.f32 %v1843, 0.35355338
      %v1857 = vmul.f32 %v1848, 0.35355338
      %v1858 = vadd.f32 %v1851, %v830
      %v1859 = vadd.f32 %v1852, %v831
      %v1860 = vadd.f32 %v1853, %v832
      %v1861 = vadd.f32 %v1854, %v833
      %v1862 = vadd.f32 %v1855, %v834
      %v1863 = vadd.f32 %v1856, %v835
      %v1864 = vadd.f32 %v1857, %v836
      %v1865 = vsel %vm1008, %v1858, -inf
      %1866 = vmax.xlane.f32.xlu0 %v1865
      %v1867 = vpop.xlane.xlu0 %1866
      %v1868 = vsel %vm1008, %v1859, -inf
      %1869 = vmax.xlane.f32.xlu0 %v1868
      %v1870 = vpop.xlane.xlu0 %1869
      %v1871 = vsel %vm1008, %v1860, -inf
      %1872 = vmax.xlane.f32.xlu0 %v1871
      %v1873 = vpop.xlane.xlu0 %1872
      %v1874 = vsel %vm1008, %v1861, -inf
      %1875 = vmax.xlane.f32.xlu0 %v1874
      %v1876 = vpop.xlane.xlu0 %1875
      %v1877 = vsel %vm1008, %v1862, -inf
      %1878 = vmax.xlane.f32.xlu0 %v1877
      %v1879 = vpop.xlane.xlu0 %1878
      %v1880 = vsel %vm1008, %v1863, -inf
      %1881 = vmax.xlane.f32.xlu0 %v1880
      %v1882 = vpop.xlane.xlu0 %1881
      %v1883 = vsel %vm1027, %v1864, -inf
      %1884 = vmax.xlane.f32.xlu0 %v1883
      %v1885 = vpop.xlane.xlu0 %1884
      %v1886 = vsub.f32 %v1858, %v1867
      %v1887 = vsub.f32 %v1859, %v1870
      %v1888 = vsub.f32 %v1860, %v1873
      %v1889 = vsub.f32 %v1861, %v1876
      %v1890 = vsub.f32 %v1862, %v1879
      %v1891 = vsub.f32 %v1863, %v1882
      %v1892 = vsub.f32 %v1864, %v1885
      %v1893 = vmul.f32 %v1886, 1.442695
      %v1894 = vpow.pop %v1893
      %v1895 = vmul.f32 %v1887, 1.442695
      %v1896 = vpow.pop %v1895
      %v1897 = vmul.f32 %v1888, 1.442695
      %v1898 = vpow.pop %v1897
      %v1899 = vmul.f32 %v1889, 1.442695
      %v1900 = vpow.pop %v1899
      %v1901 = vmul.f32 %v1890, 1.442695
      %v1902 = vpow.pop %v1901
      %v1903 = vmul.f32 %v1891, 1.442695
      %v1904 = vpow.pop %v1903
      %v1905 = vmul.f32 %v1892, 1.442695
      %v1906 = vpow.pop %v1905
      %v1907 = vsel %vm1008, %v1894, 0.0
      %1908 = vadd.xlane.f32.xlu0 %v1907
      %v1909 = vpop.xlane.xlu0 %1908
      %v1910 = vsel %vm1008, %v1896, 0.0
      %1911 = vadd.xlane.f32.xlu0 %v1910
      %v1912 = vpop.xlane.xlu0 %1911
      %v1913 = vsel %vm1008, %v1898, 0.0
      %1914 = vadd.xlane.f32.xlu0 %v1913
      %v1915 = vpop.xlane.xlu0 %1914
      %v1916 = vsel %vm1008, %v1900, 0.0
      %1917 = vadd.xlane.f32.xlu0 %v1916
      %v1918 = vpop.xlane.xlu0 %1917
      %v1919 = vsel %vm1008, %v1902, 0.0
      %1920 = vadd.xlane.f32.xlu0 %v1919
      %v1921 = vpop.xlane.xlu0 %1920
      %v1922 = vsel %vm1008, %v1904, 0.0
      %1923 = vadd.xlane.f32.xlu0 %v1922
      %v1924 = vpop.xlane.xlu0 %1923
      %v1925 = vsel %vm1027, %v1906, 0.0
      %1926 = vadd.xlane.f32.xlu0 %v1925
      %v1927 = vpop.xlane.xlu0 %1926
      %v1928 = vrcp.pop %v1909
      %v1929 = vrcp.pop %v1912
      %v1930 = vrcp.pop %v1915
      %v1931 = vrcp.pop %v1918
      %v1932 = vrcp.pop %v1921
      %v1933 = vrcp.pop %v1924
      %v1934 = vrcp.pop %v1927
      %v1935 = vmul.f32 %v1894, %v1928
      %v1936 = vmul.f32 %v1896, %v1929
      %v1937 = vmul.f32 %v1898, %v1930
      %v1938 = vmul.f32 %v1900, %v1931
      %v1939 = vmul.f32 %v1902, %v1932
      %v1940 = vmul.f32 %v1904, %v1933
      %v1941 = vmul.f32 %v1906, %v1934
      %s1942 = scalar_lea.vmem %s269, 112
      %1943 = vst.msk [vmem:[%s1942] sm:$0xff] %vm1008, %v1935
      %1944 = vst.msk [vmem:[%s1942 + $0x8] sm:$0xff] %vm1008, %v1936
      %1945 = vst.msk [vmem:[%s1942 + $0x10] sm:$0xff] %vm1008, %v1937
      %1946 = vst.msk [vmem:[%s1942 + $0x18] sm:$0xff] %vm1008, %v1938
      %1947 = vst.msk [vmem:[%s1942 + $0x20] sm:$0xff] %vm1008, %v1939
      %1948 = vst.msk [vmem:[%s1942 + $0x28] sm:$0xff] %vm1008, %v1940
      %1949 = vst.msk [vmem:[%s1942 + $0x30] sm:$0x1] %vm1027, %v1941
      %1950 = vrot.lane.b32.xlu0 %v1695, 96
      %v1951 = vpop.permute.xlu0 %1950
      %1952 = vrot.lane.b32.xlu0 %v1696, 96
      %v1953 = vpop.permute.xlu0 %1952
      %1954 = vrot.lane.b32.xlu0 %v1697, 96
      %v1955 = vpop.permute.xlu0 %1954
      %1956 = vrot.lane.b32.xlu0 %v1698, 96
      %v1957 = vpop.permute.xlu0 %1956
      %1958 = vrot.lane.b32.xlu0 %v1699, 96
      %v1959 = vpop.permute.xlu0 %1958
      %1960 = vrot.lane.b32.xlu0 %v1700, 96
      %v1961 = vpop.permute.xlu0 %1960
      %1962 = vrot.lane.b32.xlu0 %v1701, 96
      %v1963 = vpop.permute.xlu0 %1962
      %v1971 = vsel %vm1008, %v1935, 0
      %v1974 = vsel %vm1008, %v1936, 0
      %v1977 = vsel %vm1008, %v1937, 0
      %v1980 = vsel %vm1008, %v1938, 0
      %v1983 = vsel %vm1008, %v1939, 0
      %v1986 = vsel %vm1008, %v1940, 0
      %v1989 = vsel %vm1008, %v1941, 0
      %v1991 = vsel %vm1135, %v1963, 0
      %1993 = vmatprep.subr.mxu0 0.0
      %1994 = vmatpush1.msra.mxu0 0.0
      %1995 = vmatprep.subr.mxu0 0.0
      %1996 = vmatpush1.msra.mxu0 0.0
      %1997 = vmatprep.subr.mxu0 0.0
      %1998 = vmatpush1.msra.mxu0 0.0
      %1999 = vmatprep.subr.mxu0 0.0
      %2000 = vmatpush1.msra.mxu0 0.0
      %2001 = vmatprep.subr.mxu0 0.0
      %2002 = vmatpush1.msra.mxu0 0.0
      %2003 = vmatprep.subr.mxu0 0.0
      %2004 = vmatpush1.msra.mxu0 0.0
      %2005 = vmatprep.subr.mxu0 0.0
      %2006 = vmatpush1.msra.mxu0 0.0
      %2007 = vmatprep.subr.mxu0 0.0
      %2008 = vmatpush1.msra.mxu0 0.0
      %2009 = vmatprep.subr.mxu0 0.0
      %2010 = vmatpush1.msra.mxu0 0.0
      %2011 = vmatprep.subr.mxu0 0.0
      %2012 = vmatpush1.msra.mxu0 %v1991
      %2013 = vmatprep.subr.mxu0 0.0
      %2014 = vmatpush1.msra.mxu0 %v1961
      %2015 = vmatprep.subr.mxu0 0.0
      %2016 = vmatpush1.msra.mxu0 %v1959
      %2017 = vmatprep.subr.mxu0 0.0
      %2018 = vmatpush1.msra.mxu0 %v1957
      %2019 = vmatprep.subr.mxu0 0.0
      %2020 = vmatpush1.msra.mxu0 %v1955
      %2021 = vmatprep.subr.mxu0 0.0
      %2022 = vmatpush1.msra.mxu0 %v1953
      %2023 = vmatprep.subr.mxu0 0.0
      %2024 = vmatpush1.msra.mxu0 %v1951
      %2025 = vmatprep.subr.mxu0 0.0
      %2026 = vmatpush2.msra.mxu0 0.0
      %2027 = vmatprep.subr.mxu0 0.0
      %2028 = vmatpush2.msra.mxu0 0.0
      %2029 = vmatprep.subr.mxu0 0.0
      %2030 = vmatpush2.msra.mxu0 0.0
      %2031 = vmatprep.subr.mxu0 0.0
      %2032 = vmatpush2.msra.mxu0 0.0
      %2033 = vmatprep.subr.mxu0 0.0
      %2034 = vmatpush2.msra.mxu0 0.0
      %2035 = vmatprep.subr.mxu0 0.0
      %2036 = vmatpush2.msra.mxu0 0.0
      %2037 = vmatprep.subr.mxu0 0.0
      %2038 = vmatpush2.msra.mxu0 0.0
      %2039 = vmatprep.subr.mxu0 0.0
      %2040 = vmatpush2.msra.mxu0 0.0
      %2041 = vmatprep.subr.mxu0 0.0
      %2042 = vmatpush2.msra.mxu0 0.0
      %2043 = vmatprep.subr.mxu0 0.0
      %2044 = vmatpush2.msra.mxu0 0.0
      %2045 = vmatprep.subr.mxu0 0.0
      %2046 = vmatpush2.msra.mxu0 0.0
      %2047 = vmatprep.subr.mxu0 0.0
      %2048 = vmatpush2.msra.mxu0 0.0
      %2049 = vmatprep.subr.mxu0 0.0
      %2050 = vmatpush2.msra.mxu0 0.0
      %2051 = vmatprep.subr.mxu0 0.0
      %2052 = vmatpush2.msra.mxu0 0.0
      %2053 = vmatprep.subr.mxu0 0.0
      %2054 = vmatpush2.msra.mxu0 0.0
      %2055 = vmatprep.subr.mxu0 0.0
      %2056 = vmatpush2.msra.mxu0 0.0
      %2057 = vmatprep.mubr.f32.mxu0 0.0
      %2058 = vmatmul.mubr.f32.gmra.mxu0 %v1971
      %v2059 = vpop.f32.mrf.mxu0
      %v2060 = vadd.f32 0.0, %v2059
      %v2061 = vpop.f32.mrf.mxu0
      %2062 = vmatprep.mubr.f32.mxu0 0.0
      %2063 = vmatmul.mubr.f32.gmra.mxu0 %v1974
      %v2064 = vpop.f32.mrf.mxu0
      %v2065 = vadd.f32 0.0, %v2064
      %v2066 = vpop.f32.mrf.mxu0
      %2067 = vmatprep.mubr.f32.mxu0 0.0
      %2068 = vmatmul.mubr.f32.gmra.mxu0 %v1977
      %v2069 = vpop.f32.mrf.mxu0
      %v2070 = vadd.f32 0.0, %v2069
      %v2071 = vpop.f32.mrf.mxu0
      %2072 = vmatprep.mubr.f32.mxu0 0.0
      %2073 = vmatmul.mubr.f32.gmra.mxu0 %v1980
      %v2074 = vpop.f32.mrf.mxu0
      %v2075 = vadd.f32 0.0, %v2074
      %v2076 = vpop.f32.mrf.mxu0
      %2077 = vmatprep.mubr.f32.mxu0 0.0
      %2078 = vmatmul.mubr.f32.gmra.mxu0 %v1983
      %v2079 = vpop.f32.mrf.mxu0
      %v2080 = vadd.f32 0.0, %v2079
      %v2081 = vpop.f32.mrf.mxu0
      %2082 = vmatprep.mubr.f32.mxu0 0.0
      %2083 = vmatmul.mubr.f32.gmra.mxu0 %v1986
      %v2084 = vpop.f32.mrf.mxu0
      %v2085 = vadd.f32 0.0, %v2084
      %v2086 = vpop.f32.mrf.mxu0
      %2087 = vmatprep.mubr.f32.mxu0 0.0
      %2088 = vmatmul.mubr.f32.gmra.mxu0 %v1989
      %v2089 = vpop.f32.mrf.mxu0
      %v2090 = vadd.f32 0.0, %v2089
      %v2091 = vpop.f32.mrf.mxu0
      %2092 = vdwg.mxu0
      %2093 = vst.msk [vmem:[#allocation3 + $0x31] sm:$0xff] %vm865, %v2060
      %2094 = vst.msk [vmem:[#allocation3 + $0x39] sm:$0xff] %vm865, %v2065
      %2095 = vst.msk [vmem:[#allocation3 + $0x41] sm:$0xff] %vm865, %v2070
      %2096 = vst.msk [vmem:[#allocation3 + $0x49] sm:$0xff] %vm865, %v2075
      %2097 = vst.msk [vmem:[#allocation3 + $0x51] sm:$0xff] %vm865, %v2080
      %2098 = vst.msk [vmem:[#allocation3 + $0x59] sm:$0xff] %vm865, %v2085
      %2099 = vst.msk [vmem:[#allocation3 + $0x61] sm:$0x1] %vm1244, %v2090
      %v2100 = vld [vmem:[#allocation2 + $0x31] sm:$0xff]
      %v2101 = vld [vmem:[#allocation2 + $0x39] sm:$0xff]
      %v2102 = vld [vmem:[#allocation2 + $0x41] sm:$0xff]
      %v2103 = vld [vmem:[#allocation2 + $0x49] sm:$0xff]
      %v2104 = vld [vmem:[#allocation2 + $0x51] sm:$0xff]
      %v2105 = vld [vmem:[#allocation2 + $0x59] sm:$0xff]
      %v2106 = vld [vmem:[#allocation2 + $0x61] sm:$0x1]
      %2114 = vrot.lane.b32.xlu0 %v2100, 120
      %v2115 = vpop.permute.xlu0 %2114
      %2116 = vrot.lane.b32.xlu0 %v2101, 120
      %v2117 = vpop.permute.xlu0 %2116
      %2118 = vrot.lane.b32.xlu0 %v2102, 120
      %v2119 = vpop.permute.xlu0 %2118
      %2120 = vrot.lane.b32.xlu0 %v2103, 120
      %v2121 = vpop.permute.xlu0 %2120
      %2122 = vrot.lane.b32.xlu0 %v2104, 120
      %v2123 = vpop.permute.xlu0 %2122
      %2124 = vrot.lane.b32.xlu0 %v2105, 120
      %v2125 = vpop.permute.xlu0 %2124
      %2126 = vrot.lane.b32.xlu0 %v2106, 120
      %v2127 = vpop.permute.xlu0 %2126
      %2128 = vrot.lane.b32.xlu0 %v2100, 104
      %v2129 = vpop.permute.xlu0 %2128
      %2130 = vrot.lane.b32.xlu0 %v2101, 104
      %v2131 = vpop.permute.xlu0 %2130
      %2132 = vrot.lane.b32.xlu0 %v2102, 104
      %v2133 = vpop.permute.xlu0 %2132
      %2134 = vrot.lane.b32.xlu0 %v2103, 104
      %v2135 = vpop.permute.xlu0 %2134
      %2136 = vrot.lane.b32.xlu0 %v2104, 104
      %v2137 = vpop.permute.xlu0 %2136
      %2138 = vrot.lane.b32.xlu0 %v2105, 104
      %v2139 = vpop.permute.xlu0 %2138
      %2140 = vrot.lane.b32.xlu0 %v2106, 104
      %v2141 = vpop.permute.xlu0 %2140
      %v2142 = vsel %vm865, %v2115, 0
      %v2144 = vsel %vm865, %v2117, 0
      %v2146 = vsel %vm865, %v2119, 0
      %v2148 = vsel %vm865, %v2121, 0
      %v2150 = vsel %vm865, %v2123, 0
      %v2152 = vsel %vm865, %v2125, 0
      %v2154 = vsel %vm865, %v2127, 0
      %v2156 = vsel %vm865, %v2129, 0
      %v2158 = vsel %vm865, %v2131, 0
      %v2160 = vsel %vm865, %v2133, 0
      %v2162 = vsel %vm865, %v2135, 0
      %v2164 = vsel %vm865, %v2137, 0
      %v2166 = vsel %vm865, %v2139, 0
      %v2168 = vsel %vm865, %v2141, 0
      %2170 = vmatprep.subr.mxu0 0.0
      %2171 = vmatpush1.xpose.msra.mxu0 0.0
      %2172 = vmatprep.subr.mxu0 0.0
      %2173 = vmatpush1.xpose.msra.mxu0 0.0
      %2174 = vmatprep.subr.mxu0 0.0
      %2175 = vmatpush1.xpose.msra.mxu0 0.0
      %2176 = vmatprep.subr.mxu0 0.0
      %2177 = vmatpush1.xpose.msra.mxu0 0.0
      %2178 = vmatprep.subr.mxu0 0.0
      %2179 = vmatpush1.xpose.msra.mxu0 0.0
      %2180 = vmatprep.subr.mxu0 0.0
      %2181 = vmatpush1.xpose.msra.mxu0 0.0
      %2182 = vmatprep.subr.mxu0 0.0
      %2183 = vmatpush1.xpose.msra.mxu0 0.0
      %2184 = vmatprep.subr.mxu0 0.0
      %2185 = vmatpush1.xpose.msra.mxu0 0.0
      %2186 = vmatprep.subr.mxu0 0.0
      %2187 = vmatpush1.xpose.msra.mxu0 0.0
      %2188 = vmatprep.subr.mxu0 0.0
      %2189 = vmatpush1.xpose.msra.mxu0 %v2168
      %2190 = vmatprep.subr.mxu0 0.0
      %2191 = vmatpush1.xpose.msra.mxu0 %v2166
      %2192 = vmatprep.subr.mxu0 0.0
      %2193 = vmatpush1.xpose.msra.mxu0 %v2164
      %2194 = vmatprep.subr.mxu0 0.0
      %2195 = vmatpush1.xpose.msra.mxu0 %v2162
      %2196 = vmatprep.subr.mxu0 0.0
      %2197 = vmatpush1.xpose.msra.mxu0 %v2160
      %2198 = vmatprep.subr.mxu0 0.0
      %2199 = vmatpush1.xpose.msra.mxu0 %v2158
      %2200 = vmatprep.subr.mxu0 0.0
      %2201 = vmatpush1.xpose.msra.mxu0 %v2156
      %2202 = vmatprep.subr.mxu0 0.0
      %2203 = vmatpush2.xpose.msra.mxu0 0.0
      %2204 = vmatprep.subr.mxu0 0.0
      %2205 = vmatpush2.xpose.msra.mxu0 0.0
      %2206 = vmatprep.subr.mxu0 0.0
      %2207 = vmatpush2.xpose.msra.mxu0 0.0
      %2208 = vmatprep.subr.mxu0 0.0
      %2209 = vmatpush2.xpose.msra.mxu0 0.0
      %2210 = vmatprep.subr.mxu0 0.0
      %2211 = vmatpush2.xpose.msra.mxu0 0.0
      %2212 = vmatprep.subr.mxu0 0.0
      %2213 = vmatpush2.xpose.msra.mxu0 0.0
      %2214 = vmatprep.subr.mxu0 0.0
      %2215 = vmatpush2.xpose.msra.mxu0 0.0
      %2216 = vmatprep.subr.mxu0 0.0
      %2217 = vmatpush2.xpose.msra.mxu0 0.0
      %2218 = vmatprep.subr.mxu0 0.0
      %2219 = vmatpush2.xpose.msra.mxu0 0.0
      %2220 = vmatprep.subr.mxu0 0.0
      %2221 = vmatpush2.xpose.msra.mxu0 0.0
      %2222 = vmatprep.subr.mxu0 0.0
      %2223 = vmatpush2.xpose.msra.mxu0 0.0
      %2224 = vmatprep.subr.mxu0 0.0
      %2225 = vmatpush2.xpose.msra.mxu0 0.0
      %2226 = vmatprep.subr.mxu0 0.0
      %2227 = vmatpush2.xpose.msra.mxu0 0.0
      %2228 = vmatprep.subr.mxu0 0.0
      %2229 = vmatpush2.xpose.msra.mxu0 0.0
      %2230 = vmatprep.subr.mxu0 0.0
      %2231 = vmatpush2.xpose.msra.mxu0 0.0
      %2232 = vmatprep.subr.mxu0 0.0
      %2233 = vmatpush2.xpose.msra.mxu0 0.0
      %2234 = vmatprep.mubr.f32.mxu0 0.0
      %2235 = vmatmul.mubr.f32.gmra.mxu0 %v2142
      %v2236 = vpop.f32.mrf.mxu0
      %v2237 = vadd.f32 0.0, %v2236
      %v2238 = vpop.f32.mrf.mxu0
      %2239 = vmatprep.mubr.f32.mxu0 0.0
      %2240 = vmatmul.mubr.f32.gmra.mxu0 %v2144
      %v2241 = vpop.f32.mrf.mxu0
      %v2242 = vadd.f32 0.0, %v2241
      %v2243 = vpop.f32.mrf.mxu0
      %2244 = vmatprep.mubr.f32.mxu0 0.0
      %2245 = vmatmul.mubr.f32.gmra.mxu0 %v2146
      %v2246 = vpop.f32.mrf.mxu0
      %v2247 = vadd.f32 0.0, %v2246
      %v2248 = vpop.f32.mrf.mxu0
      %2249 = vmatprep.mubr.f32.mxu0 0.0
      %2250 = vmatmul.mubr.f32.gmra.mxu0 %v2148
      %v2251 = vpop.f32.mrf.mxu0
      %v2252 = vadd.f32 0.0, %v2251
      %v2253 = vpop.f32.mrf.mxu0
      %2254 = vmatprep.mubr.f32.mxu0 0.0
      %2255 = vmatmul.mubr.f32.gmra.mxu0 %v2150
      %v2256 = vpop.f32.mrf.mxu0
      %v2257 = vadd.f32 0.0, %v2256
      %v2258 = vpop.f32.mrf.mxu0
      %2259 = vmatprep.mubr.f32.mxu0 0.0
      %2260 = vmatmul.mubr.f32.gmra.mxu0 %v2152
      %v2261 = vpop.f32.mrf.mxu0
      %v2262 = vadd.f32 0.0, %v2261
      %v2263 = vpop.f32.mrf.mxu0
      %2264 = vmatprep.mubr.f32.mxu0 0.0
      %2265 = vmatmul.mubr.f32.gmra.mxu0 %v2154
      %v2266 = vpop.f32.mrf.mxu0
      %v2267 = vadd.f32 0.0, %v2266
      %v2268 = vpop.f32.mrf.mxu0
      %2269 = vdwg.mxu0
      %v2270 = vmul.f32 %v2237, 0.35355338
      %v2271 = vmul.f32 %v2242, 0.35355338
      %v2272 = vmul.f32 %v2247, 0.35355338
      %v2273 = vmul.f32 %v2252, 0.35355338
      %v2274 = vmul.f32 %v2257, 0.35355338
      %v2275 = vmul.f32 %v2262, 0.35355338
      %v2276 = vmul.f32 %v2267, 0.35355338
      %v2277 = vadd.f32 %v2270, %v830
      %v2278 = vadd.f32 %v2271, %v831
      %v2279 = vadd.f32 %v2272, %v832
      %v2280 = vadd.f32 %v2273, %v833
      %v2281 = vadd.f32 %v2274, %v834
      %v2282 = vadd.f32 %v2275, %v835
      %v2283 = vadd.f32 %v2276, %v836
      %v2284 = vsel %vm1008, %v2277, -inf
      %2285 = vmax.xlane.f32.xlu0 %v2284
      %v2286 = vpop.xlane.xlu0 %2285
      %v2287 = vsel %vm1008, %v2278, -inf
      %2288 = vmax.xlane.f32.xlu0 %v2287
      %v2289 = vpop.xlane.xlu0 %2288
      %v2290 = vsel %vm1008, %v2279, -inf
      %2291 = vmax.xlane.f32.xlu0 %v2290
      %v2292 = vpop.xlane.xlu0 %2291
      %v2293 = vsel %vm1008, %v2280, -inf
      %2294 = vmax.xlane.f32.xlu0 %v2293
      %v2295 = vpop.xlane.xlu0 %2294
      %v2296 = vsel %vm1008, %v2281, -inf
      %2297 = vmax.xlane.f32.xlu0 %v2296
      %v2298 = vpop.xlane.xlu0 %2297
      %v2299 = vsel %vm1008, %v2282, -inf
      %2300 = vmax.xlane.f32.xlu0 %v2299
      %v2301 = vpop.xlane.xlu0 %2300
      %v2302 = vsel %vm1027, %v2283, -inf
      %2303 = vmax.xlane.f32.xlu0 %v2302
      %v2304 = vpop.xlane.xlu0 %2303
      %v2305 = vsub.f32 %v2277, %v2286
      %v2306 = vsub.f32 %v2278, %v2289
      %v2307 = vsub.f32 %v2279, %v2292
      %v2308 = vsub.f32 %v2280, %v2295
      %v2309 = vsub.f32 %v2281, %v2298
      %v2310 = vsub.f32 %v2282, %v2301
      %v2311 = vsub.f32 %v2283, %v2304
      %v2312 = vmul.f32 %v2305, 1.442695
      %v2313 = vpow.pop %v2312
      %v2314 = vmul.f32 %v2306, 1.442695
      %v2315 = vpow.pop %v2314
      %v2316 = vmul.f32 %v2307, 1.442695
      %v2317 = vpow.pop %v2316
      %v2318 = vmul.f32 %v2308, 1.442695
      %v2319 = vpow.pop %v2318
      %v2320 = vmul.f32 %v2309, 1.442695
      %v2321 = vpow.pop %v2320
      %v2322 = vmul.f32 %v2310, 1.442695
      %v2323 = vpow.pop %v2322
      %v2324 = vmul.f32 %v2311, 1.442695
      %v2325 = vpow.pop %v2324
      %v2326 = vsel %vm1008, %v2313, 0.0
      %2327 = vadd.xlane.f32.xlu0 %v2326
      %v2328 = vpop.xlane.xlu0 %2327
      %v2329 = vsel %vm1008, %v2315, 0.0
      %2330 = vadd.xlane.f32.xlu0 %v2329
      %v2331 = vpop.xlane.xlu0 %2330
      %v2332 = vsel %vm1008, %v2317, 0.0
      %2333 = vadd.xlane.f32.xlu0 %v2332
      %v2334 = vpop.xlane.xlu0 %2333
      %v2335 = vsel %vm1008, %v2319, 0.0
      %2336 = vadd.xlane.f32.xlu0 %v2335
      %v2337 = vpop.xlane.xlu0 %2336
      %v2338 = vsel %vm1008, %v2321, 0.0
      %2339 = vadd.xlane.f32.xlu0 %v2338
      %v2340 = vpop.xlane.xlu0 %2339
      %v2341 = vsel %vm1008, %v2323, 0.0
      %2342 = vadd.xlane.f32.xlu0 %v2341
      %v2343 = vpop.xlane.xlu0 %2342
      %v2344 = vsel %vm1027, %v2325, 0.0
      %2345 = vadd.xlane.f32.xlu0 %v2344
      %v2346 = vpop.xlane.xlu0 %2345
      %v2347 = vrcp.pop %v2328
      %v2348 = vrcp.pop %v2331
      %v2349 = vrcp.pop %v2334
      %v2350 = vrcp.pop %v2337
      %v2351 = vrcp.pop %v2340
      %v2352 = vrcp.pop %v2343
      %v2353 = vrcp.pop %v2346
      %v2354 = vmul.f32 %v2313, %v2347
      %v2355 = vmul.f32 %v2315, %v2348
      %v2356 = vmul.f32 %v2317, %v2349
      %v2357 = vmul.f32 %v2319, %v2350
      %v2358 = vmul.f32 %v2321, %v2351
      %v2359 = vmul.f32 %v2323, %v2352
      %v2360 = vmul.f32 %v2325, %v2353
      %s2361 = scalar_lea.vmem %s269, 168
      %2362 = vst.msk [vmem:[%s2361] sm:$0xff] %vm1008, %v2354
      %2363 = vst.msk [vmem:[%s2361 + $0x8] sm:$0xff] %vm1008, %v2355
      %2364 = vst.msk [vmem:[%s2361 + $0x10] sm:$0xff] %vm1008, %v2356
      %2365 = vst.msk [vmem:[%s2361 + $0x18] sm:$0xff] %vm1008, %v2357
      %2366 = vst.msk [vmem:[%s2361 + $0x20] sm:$0xff] %vm1008, %v2358
      %2367 = vst.msk [vmem:[%s2361 + $0x28] sm:$0xff] %vm1008, %v2359
      %2368 = vst.msk [vmem:[%s2361 + $0x30] sm:$0x1] %vm1027, %v2360
      %2369 = vrot.lane.b32.xlu0 %v2100, 88
      %v2370 = vpop.permute.xlu0 %2369
      %2371 = vrot.lane.b32.xlu0 %v2101, 88
      %v2372 = vpop.permute.xlu0 %2371
      %2373 = vrot.lane.b32.xlu0 %v2102, 88
      %v2374 = vpop.permute.xlu0 %2373
      %2375 = vrot.lane.b32.xlu0 %v2103, 88
      %v2376 = vpop.permute.xlu0 %2375
      %2377 = vrot.lane.b32.xlu0 %v2104, 88
      %v2378 = vpop.permute.xlu0 %2377
      %2379 = vrot.lane.b32.xlu0 %v2105, 88
      %v2380 = vpop.permute.xlu0 %2379
      %2381 = vrot.lane.b32.xlu0 %v2106, 88
      %v2382 = vpop.permute.xlu0 %2381
      %v2390 = vsel %vm1008, %v2354, 0
      %v2393 = vsel %vm1008, %v2355, 0
      %v2396 = vsel %vm1008, %v2356, 0
      %v2399 = vsel %vm1008, %v2357, 0
      %v2402 = vsel %vm1008, %v2358, 0
      %v2405 = vsel %vm1008, %v2359, 0
      %v2408 = vsel %vm1008, %v2360, 0
      %v2410 = vsel %vm1135, %v2382, 0
      %2412 = vmatprep.subr.mxu0 0.0
      %2413 = vmatpush1.msra.mxu0 0.0
      %2414 = vmatprep.subr.mxu0 0.0
      %2415 = vmatpush1.msra.mxu0 0.0
      %2416 = vmatprep.subr.mxu0 0.0
      %2417 = vmatpush1.msra.mxu0 0.0
      %2418 = vmatprep.subr.mxu0 0.0
      %2419 = vmatpush1.msra.mxu0 0.0
      %2420 = vmatprep.subr.mxu0 0.0
      %2421 = vmatpush1.msra.mxu0 0.0
      %2422 = vmatprep.subr.mxu0 0.0
      %2423 = vmatpush1.msra.mxu0 0.0
      %2424 = vmatprep.subr.mxu0 0.0
      %2425 = vmatpush1.msra.mxu0 0.0
      %2426 = vmatprep.subr.mxu0 0.0
      %2427 = vmatpush1.msra.mxu0 0.0
      %2428 = vmatprep.subr.mxu0 0.0
      %2429 = vmatpush1.msra.mxu0 0.0
      %2430 = vmatprep.subr.mxu0 0.0
      %2431 = vmatpush1.msra.mxu0 %v2410
      %2432 = vmatprep.subr.mxu0 0.0
      %2433 = vmatpush1.msra.mxu0 %v2380
      %2434 = vmatprep.subr.mxu0 0.0
      %2435 = vmatpush1.msra.mxu0 %v2378
      %2436 = vmatprep.subr.mxu0 0.0
      %2437 = vmatpush1.msra.mxu0 %v2376
      %2438 = vmatprep.subr.mxu0 0.0
      %2439 = vmatpush1.msra.mxu0 %v2374
      %2440 = vmatprep.subr.mxu0 0.0
      %2441 = vmatpush1.msra.mxu0 %v2372
      %2442 = vmatprep.subr.mxu0 0.0
      %2443 = vmatpush1.msra.mxu0 %v2370
      %2444 = vmatprep.subr.mxu0 0.0
      %2445 = vmatpush2.msra.mxu0 0.0
      %2446 = vmatprep.subr.mxu0 0.0
      %2447 = vmatpush2.msra.mxu0 0.0
      %2448 = vmatprep.subr.mxu0 0.0
      %2449 = vmatpush2.msra.mxu0 0.0
      %2450 = vmatprep.subr.mxu0 0.0
      %2451 = vmatpush2.msra.mxu0 0.0
      %2452 = vmatprep.subr.mxu0 0.0
      %2453 = vmatpush2.msra.mxu0 0.0
      %2454 = vmatprep.subr.mxu0 0.0
      %2455 = vmatpush2.msra.mxu0 0.0
      %2456 = vmatprep.subr.mxu0 0.0
      %2457 = vmatpush2.msra.mxu0 0.0
      %2458 = vmatprep.subr.mxu0 0.0
      %2459 = vmatpush2.msra.mxu0 0.0
      %2460 = vmatprep.subr.mxu0 0.0
      %2461 = vmatpush2.msra.mxu0 0.0
      %2462 = vmatprep.subr.mxu0 0.0
      %2463 = vmatpush2.msra.mxu0 0.0
      %2464 = vmatprep.subr.mxu0 0.0
      %2465 = vmatpush2.msra.mxu0 0.0
      %2466 = vmatprep.subr.mxu0 0.0
      %2467 = vmatpush2.msra.mxu0 0.0
      %2468 = vmatprep.subr.mxu0 0.0
      %2469 = vmatpush2.msra.mxu0 0.0
      %2470 = vmatprep.subr.mxu0 0.0
      %2471 = vmatpush2.msra.mxu0 0.0
      %2472 = vmatprep.subr.mxu0 0.0
      %2473 = vmatpush2.msra.mxu0 0.0
      %2474 = vmatprep.subr.mxu0 0.0
      %2475 = vmatpush2.msra.mxu0 0.0
      %2476 = vmatprep.mubr.f32.mxu0 0.0
      %2477 = vmatmul.mubr.f32.gmra.mxu0 %v2390
      %v2478 = vpop.f32.mrf.mxu0
      %v2479 = vadd.f32 0.0, %v2478
      %v2480 = vpop.f32.mrf.mxu0
      %2481 = vmatprep.mubr.f32.mxu0 0.0
      %2482 = vmatmul.mubr.f32.gmra.mxu0 %v2393
      %v2483 = vpop.f32.mrf.mxu0
      %v2484 = vadd.f32 0.0, %v2483
      %v2485 = vpop.f32.mrf.mxu0
      %2486 = vmatprep.mubr.f32.mxu0 0.0
      %2487 = vmatmul.mubr.f32.gmra.mxu0 %v2396
      %v2488 = vpop.f32.mrf.mxu0
      %v2489 = vadd.f32 0.0, %v2488
      %v2490 = vpop.f32.mrf.mxu0
      %2491 = vmatprep.mubr.f32.mxu0 0.0
      %2492 = vmatmul.mubr.f32.gmra.mxu0 %v2399
      %v2493 = vpop.f32.mrf.mxu0
      %v2494 = vadd.f32 0.0, %v2493
      %v2495 = vpop.f32.mrf.mxu0
      %2496 = vmatprep.mubr.f32.mxu0 0.0
      %2497 = vmatmul.mubr.f32.gmra.mxu0 %v2402
      %v2498 = vpop.f32.mrf.mxu0
      %v2499 = vadd.f32 0.0, %v2498
      %v2500 = vpop.f32.mrf.mxu0
      %2501 = vmatprep.mubr.f32.mxu0 0.0
      %2502 = vmatmul.mubr.f32.gmra.mxu0 %v2405
      %v2503 = vpop.f32.mrf.mxu0
      %v2504 = vadd.f32 0.0, %v2503
      %v2505 = vpop.f32.mrf.mxu0
      %2506 = vmatprep.mubr.f32.mxu0 0.0
      %2507 = vmatmul.mubr.f32.gmra.mxu0 %v2408
      %v2508 = vpop.f32.mrf.mxu0
      %v2509 = vadd.f32 0.0, %v2508
      %v2510 = vpop.f32.mrf.mxu0
      %2511 = vdwg.mxu0
      %2519 = vrot.lane.b32.xlu0 %v2479, 8
      %v2520 = vpop.permute.xlu0 %2519
      %2521 = vrot.lane.b32.xlu0 %v2484, 8
      %v2522 = vpop.permute.xlu0 %2521
      %2523 = vrot.lane.b32.xlu0 %v2489, 8
      %v2524 = vpop.permute.xlu0 %2523
      %2525 = vrot.lane.b32.xlu0 %v2494, 8
      %v2526 = vpop.permute.xlu0 %2525
      %2527 = vrot.lane.b32.xlu0 %v2499, 8
      %v2528 = vpop.permute.xlu0 %2527
      %2529 = vrot.lane.b32.xlu0 %v2504, 8
      %v2530 = vpop.permute.xlu0 %2529
      %2531 = vrot.lane.b32.xlu0 %v2509, 8
      %v2532 = vpop.permute.xlu0 %2531
      %2540 = vst.msk [vmem:[#allocation3 + $0x31] sm:$0xff] %vm1686, %v2520
      %2541 = vst.msk [vmem:[#allocation3 + $0x39] sm:$0xff] %vm1686, %v2522
      %2542 = vst.msk [vmem:[#allocation3 + $0x41] sm:$0xff] %vm1686, %v2524
      %2543 = vst.msk [vmem:[#allocation3 + $0x49] sm:$0xff] %vm1686, %v2526
      %2544 = vst.msk [vmem:[#allocation3 + $0x51] sm:$0xff] %vm1686, %v2528
      %2545 = vst.msk [vmem:[#allocation3 + $0x59] sm:$0xff] %vm1686, %v2530
      %2546 = vst.msk [vmem:[#allocation3 + $0x61] sm:$0x1] %vm1693, %v2532
      %v2547 = vld [vmem:[#allocation2 + $0x62] sm:$0xff]
      %v2548 = vld [vmem:[#allocation2 + $0x6a] sm:$0xff]
      %v2549 = vld [vmem:[#allocation2 + $0x72] sm:$0xff]
      %v2550 = vld [vmem:[#allocation2 + $0x7a] sm:$0xff]
      %v2551 = vld [vmem:[#allocation2 + $0x82] sm:$0xff]
      %v2552 = vld [vmem:[#allocation2 + $0x8a] sm:$0xff]
      %v2553 = vld [vmem:[#allocation2 + $0x92] sm:$0x1]
      %2561 = vrot.lane.b32.xlu0 %v2547, 112
      %v2562 = vpop.permute.xlu0 %2561
      %2563 = vrot.lane.b32.xlu0 %v2548, 112
      %v2564 = vpop.permute.xlu0 %2563
      %2565 = vrot.lane.b32.xlu0 %v2549, 112
      %v2566 = vpop.permute.xlu0 %2565
      %2567 = vrot.lane.b32.xlu0 %v2550, 112
      %v2568 = vpop.permute.xlu0 %2567
      %2569 = vrot.lane.b32.xlu0 %v2551, 112
      %v2570 = vpop.permute.xlu0 %2569
      %2571 = vrot.lane.b32.xlu0 %v2552, 112
      %v2572 = vpop.permute.xlu0 %2571
      %2573 = vrot.lane.b32.xlu0 %v2553, 112
      %v2574 = vpop.permute.xlu0 %2573
      %v2575 = vsel %vm865, %v2547, 0
      %v2577 = vsel %vm865, %v2548, 0
      %v2579 = vsel %vm865, %v2549, 0
      %v2581 = vsel %vm865, %v2550, 0
      %v2583 = vsel %vm865, %v2551, 0
      %v2585 = vsel %vm865, %v2552, 0
      %v2587 = vsel %vm865, %v2553, 0
      %v2589 = vsel %vm865, %v2562, 0
      %v2591 = vsel %vm865, %v2564, 0
      %v2593 = vsel %vm865, %v2566, 0
      %v2595 = vsel %vm865, %v2568, 0
      %v2597 = vsel %vm865, %v2570, 0
      %v2599 = vsel %vm865, %v2572, 0
      %v2601 = vsel %vm865, %v2574, 0
      %2603 = vmatprep.subr.mxu0 0.0
      %2604 = vmatpush1.xpose.msra.mxu0 0.0
      %2605 = vmatprep.subr.mxu0 0.0
      %2606 = vmatpush1.xpose.msra.mxu0 0.0
      %2607 = vmatprep.subr.mxu0 0.0
      %2608 = vmatpush1.xpose.msra.mxu0 0.0
      %2609 = vmatprep.subr.mxu0 0.0
      %2610 = vmatpush1.xpose.msra.mxu0 0.0
      %2611 = vmatprep.subr.mxu0 0.0
      %2612 = vmatpush1.xpose.msra.mxu0 0.0
      %2613 = vmatprep.subr.mxu0 0.0
      %2614 = vmatpush1.xpose.msra.mxu0 0.0
      %2615 = vmatprep.subr.mxu0 0.0
      %2616 = vmatpush1.xpose.msra.mxu0 0.0
      %2617 = vmatprep.subr.mxu0 0.0
      %2618 = vmatpush1.xpose.msra.mxu0 0.0
      %2619 = vmatprep.subr.mxu0 0.0
      %2620 = vmatpush1.xpose.msra.mxu0 0.0
      %2621 = vmatprep.subr.mxu0 0.0
      %2622 = vmatpush1.xpose.msra.mxu0 %v2601
      %2623 = vmatprep.subr.mxu0 0.0
      %2624 = vmatpush1.xpose.msra.mxu0 %v2599
      %2625 = vmatprep.subr.mxu0 0.0
      %2626 = vmatpush1.xpose.msra.mxu0 %v2597
      %2627 = vmatprep.subr.mxu0 0.0
      %2628 = vmatpush1.xpose.msra.mxu0 %v2595
      %2629 = vmatprep.subr.mxu0 0.0
      %2630 = vmatpush1.xpose.msra.mxu0 %v2593
      %2631 = vmatprep.subr.mxu0 0.0
      %2632 = vmatpush1.xpose.msra.mxu0 %v2591
      %2633 = vmatprep.subr.mxu0 0.0
      %2634 = vmatpush1.xpose.msra.mxu0 %v2589
      %2635 = vmatprep.subr.mxu0 0.0
      %2636 = vmatpush2.xpose.msra.mxu0 0.0
      %2637 = vmatprep.subr.mxu0 0.0
      %2638 = vmatpush2.xpose.msra.mxu0 0.0
      %2639 = vmatprep.subr.mxu0 0.0
      %2640 = vmatpush2.xpose.msra.mxu0 0.0
      %2641 = vmatprep.subr.mxu0 0.0
      %2642 = vmatpush2.xpose.msra.mxu0 0.0
      %2643 = vmatprep.subr.mxu0 0.0
      %2644 = vmatpush2.xpose.msra.mxu0 0.0
      %2645 = vmatprep.subr.mxu0 0.0
      %2646 = vmatpush2.xpose.msra.mxu0 0.0
      %2647 = vmatprep.subr.mxu0 0.0
      %2648 = vmatpush2.xpose.msra.mxu0 0.0
      %2649 = vmatprep.subr.mxu0 0.0
      %2650 = vmatpush2.xpose.msra.mxu0 0.0
      %2651 = vmatprep.subr.mxu0 0.0
      %2652 = vmatpush2.xpose.msra.mxu0 0.0
      %2653 = vmatprep.subr.mxu0 0.0
      %2654 = vmatpush2.xpose.msra.mxu0 0.0
      %2655 = vmatprep.subr.mxu0 0.0
      %2656 = vmatpush2.xpose.msra.mxu0 0.0
      %2657 = vmatprep.subr.mxu0 0.0
      %2658 = vmatpush2.xpose.msra.mxu0 0.0
      %2659 = vmatprep.subr.mxu0 0.0
      %2660 = vmatpush2.xpose.msra.mxu0 0.0
      %2661 = vmatprep.subr.mxu0 0.0
      %2662 = vmatpush2.xpose.msra.mxu0 0.0
      %2663 = vmatprep.subr.mxu0 0.0
      %2664 = vmatpush2.xpose.msra.mxu0 0.0
      %2665 = vmatprep.subr.mxu0 0.0
      %2666 = vmatpush2.xpose.msra.mxu0 0.0
      %2667 = vmatprep.mubr.f32.mxu0 0.0
      %2668 = vmatmul.mubr.f32.gmra.mxu0 %v2575
      %v2669 = vpop.f32.mrf.mxu0
      %v2670 = vadd.f32 0.0, %v2669
      %v2671 = vpop.f32.mrf.mxu0
      %2672 = vmatprep.mubr.f32.mxu0 0.0
      %2673 = vmatmul.mubr.f32.gmra.mxu0 %v2577
      %v2674 = vpop.f32.mrf.mxu0
      %v2675 = vadd.f32 0.0, %v2674
      %v2676 = vpop.f32.mrf.mxu0
      %2677 = vmatprep.mubr.f32.mxu0 0.0
      %2678 = vmatmul.mubr.f32.gmra.mxu0 %v2579
      %v2679 = vpop.f32.mrf.mxu0
      %v2680 = vadd.f32 0.0, %v2679
      %v2681 = vpop.f32.mrf.mxu0
      %2682 = vmatprep.mubr.f32.mxu0 0.0
      %2683 = vmatmul.mubr.f32.gmra.mxu0 %v2581
      %v2684 = vpop.f32.mrf.mxu0
      %v2685 = vadd.f32 0.0, %v2684
      %v2686 = vpop.f32.mrf.mxu0
      %2687 = vmatprep.mubr.f32.mxu0 0.0
      %2688 = vmatmul.mubr.f32.gmra.mxu0 %v2583
      %v2689 = vpop.f32.mrf.mxu0
      %v2690 = vadd.f32 0.0, %v2689
      %v2691 = vpop.f32.mrf.mxu0
      %2692 = vmatprep.mubr.f32.mxu0 0.0
      %2693 = vmatmul.mubr.f32.gmra.mxu0 %v2585
      %v2694 = vpop.f32.mrf.mxu0
      %v2695 = vadd.f32 0.0, %v2694
      %v2696 = vpop.f32.mrf.mxu0
      %2697 = vmatprep.mubr.f32.mxu0 0.0
      %2698 = vmatmul.mubr.f32.gmra.mxu0 %v2587
      %v2699 = vpop.f32.mrf.mxu0
      %v2700 = vadd.f32 0.0, %v2699
      %v2701 = vpop.f32.mrf.mxu0
      %2702 = vdwg.mxu0
      %v2703 = vmul.f32 %v2670, 0.35355338
      %v2704 = vmul.f32 %v2675, 0.35355338
      %v2705 = vmul.f32 %v2680, 0.35355338
      %v2706 = vmul.f32 %v2685, 0.35355338
      %v2707 = vmul.f32 %v2690, 0.35355338
      %v2708 = vmul.f32 %v2695, 0.35355338
      %v2709 = vmul.f32 %v2700, 0.35355338
      %v2710 = vadd.f32 %v2703, %v830
      %v2711 = vadd.f32 %v2704, %v831
      %v2712 = vadd.f32 %v2705, %v832
      %v2713 = vadd.f32 %v2706, %v833
      %v2714 = vadd.f32 %v2707, %v834
      %v2715 = vadd.f32 %v2708, %v835
      %v2716 = vadd.f32 %v2709, %v836
      %v2717 = vsel %vm1008, %v2710, -inf
      %2718 = vmax.xlane.f32.xlu0 %v2717
      %v2719 = vpop.xlane.xlu0 %2718
      %v2720 = vsel %vm1008, %v2711, -inf
      %2721 = vmax.xlane.f32.xlu0 %v2720
      %v2722 = vpop.xlane.xlu0 %2721
      %v2723 = vsel %vm1008, %v2712, -inf
      %2724 = vmax.xlane.f32.xlu0 %v2723
      %v2725 = vpop.xlane.xlu0 %2724
      %v2726 = vsel %vm1008, %v2713, -inf
      %2727 = vmax.xlane.f32.xlu0 %v2726
      %v2728 = vpop.xlane.xlu0 %2727
      %v2729 = vsel %vm1008, %v2714, -inf
      %2730 = vmax.xlane.f32.xlu0 %v2729
      %v2731 = vpop.xlane.xlu0 %2730
      %v2732 = vsel %vm1008, %v2715, -inf
      %2733 = vmax.xlane.f32.xlu0 %v2732
      %v2734 = vpop.xlane.xlu0 %2733
      %v2735 = vsel %vm1027, %v2716, -inf
      %2736 = vmax.xlane.f32.xlu0 %v2735
      %v2737 = vpop.xlane.xlu0 %2736
      %v2738 = vsub.f32 %v2710, %v2719
      %v2739 = vsub.f32 %v2711, %v2722
      %v2740 = vsub.f32 %v2712, %v2725
      %v2741 = vsub.f32 %v2713, %v2728
      %v2742 = vsub.f32 %v2714, %v2731
      %v2743 = vsub.f32 %v2715, %v2734
      %v2744 = vsub.f32 %v2716, %v2737
      %v2745 = vmul.f32 %v2738, 1.442695
      %v2746 = vpow.pop %v2745
      %v2747 = vmul.f32 %v2739, 1.442695
      %v2748 = vpow.pop %v2747
      %v2749 = vmul.f32 %v2740, 1.442695
      %v2750 = vpow.pop %v2749
      %v2751 = vmul.f32 %v2741, 1.442695
      %v2752 = vpow.pop %v2751
      %v2753 = vmul.f32 %v2742, 1.442695
      %v2754 = vpow.pop %v2753
      %v2755 = vmul.f32 %v2743, 1.442695
      %v2756 = vpow.pop %v2755
      %v2757 = vmul.f32 %v2744, 1.442695
      %v2758 = vpow.pop %v2757
      %v2759 = vsel %vm1008, %v2746, 0.0
      %2760 = vadd.xlane.f32.xlu0 %v2759
      %v2761 = vpop.xlane.xlu0 %2760
      %v2762 = vsel %vm1008, %v2748, 0.0
      %2763 = vadd.xlane.f32.xlu0 %v2762
      %v2764 = vpop.xlane.xlu0 %2763
      %v2765 = vsel %vm1008, %v2750, 0.0
      %2766 = vadd.xlane.f32.xlu0 %v2765
      %v2767 = vpop.xlane.xlu0 %2766
      %v2768 = vsel %vm1008, %v2752, 0.0
      %2769 = vadd.xlane.f32.xlu0 %v2768
      %v2770 = vpop.xlane.xlu0 %2769
      %v2771 = vsel %vm1008, %v2754, 0.0
      %2772 = vadd.xlane.f32.xlu0 %v2771
      %v2773 = vpop.xlane.xlu0 %2772
      %v2774 = vsel %vm1008, %v2756, 0.0
      %2775 = vadd.xlane.f32.xlu0 %v2774
      %v2776 = vpop.xlane.xlu0 %2775
      %v2777 = vsel %vm1027, %v2758, 0.0
      %2778 = vadd.xlane.f32.xlu0 %v2777
      %v2779 = vpop.xlane.xlu0 %2778
      %v2780 = vrcp.pop %v2761
      %v2781 = vrcp.pop %v2764
      %v2782 = vrcp.pop %v2767
      %v2783 = vrcp.pop %v2770
      %v2784 = vrcp.pop %v2773
      %v2785 = vrcp.pop %v2776
      %v2786 = vrcp.pop %v2779
      %v2787 = vmul.f32 %v2746, %v2780
      %v2788 = vmul.f32 %v2748, %v2781
      %v2789 = vmul.f32 %v2750, %v2782
      %v2790 = vmul.f32 %v2752, %v2783
      %v2791 = vmul.f32 %v2754, %v2784
      %v2792 = vmul.f32 %v2756, %v2785
      %v2793 = vmul.f32 %v2758, %v2786
      %s2794 = scalar_lea.vmem %s269, 224
      %2795 = vst.msk [vmem:[%s2794] sm:$0xff] %vm1008, %v2787
      %2796 = vst.msk [vmem:[%s2794 + $0x8] sm:$0xff] %vm1008, %v2788
      %2797 = vst.msk [vmem:[%s2794 + $0x10] sm:$0xff] %vm1008, %v2789
      %2798 = vst.msk [vmem:[%s2794 + $0x18] sm:$0xff] %vm1008, %v2790
      %2799 = vst.msk [vmem:[%s2794 + $0x20] sm:$0xff] %vm1008, %v2791
      %2800 = vst.msk [vmem:[%s2794 + $0x28] sm:$0xff] %vm1008, %v2792
      %2801 = vst.msk [vmem:[%s2794 + $0x30] sm:$0x1] %vm1027, %v2793
      %2802 = vrot.lane.b32.xlu0 %v2547, 96
      %v2803 = vpop.permute.xlu0 %2802
      %2804 = vrot.lane.b32.xlu0 %v2548, 96
      %v2805 = vpop.permute.xlu0 %2804
      %2806 = vrot.lane.b32.xlu0 %v2549, 96
      %v2807 = vpop.permute.xlu0 %2806
      %2808 = vrot.lane.b32.xlu0 %v2550, 96
      %v2809 = vpop.permute.xlu0 %2808
      %2810 = vrot.lane.b32.xlu0 %v2551, 96
      %v2811 = vpop.permute.xlu0 %2810
      %2812 = vrot.lane.b32.xlu0 %v2552, 96
      %v2813 = vpop.permute.xlu0 %2812
      %2814 = vrot.lane.b32.xlu0 %v2553, 96
      %v2815 = vpop.permute.xlu0 %2814
      %v2823 = vsel %vm1008, %v2787, 0
      %v2826 = vsel %vm1008, %v2788, 0
      %v2829 = vsel %vm1008, %v2789, 0
      %v2832 = vsel %vm1008, %v2790, 0
      %v2835 = vsel %vm1008, %v2791, 0
      %v2838 = vsel %vm1008, %v2792, 0
      %v2841 = vsel %vm1008, %v2793, 0
      %v2843 = vsel %vm1135, %v2815, 0
      %2845 = vmatprep.subr.mxu0 0.0
      %2846 = vmatpush1.msra.mxu0 0.0
      %2847 = vmatprep.subr.mxu0 0.0
      %2848 = vmatpush1.msra.mxu0 0.0
      %2849 = vmatprep.subr.mxu0 0.0
      %2850 = vmatpush1.msra.mxu0 0.0
      %2851 = vmatprep.subr.mxu0 0.0
      %2852 = vmatpush1.msra.mxu0 0.0
      %2853 = vmatprep.subr.mxu0 0.0
      %2854 = vmatpush1.msra.mxu0 0.0
      %2855 = vmatprep.subr.mxu0 0.0
      %2856 = vmatpush1.msra.mxu0 0.0
      %2857 = vmatprep.subr.mxu0 0.0
      %2858 = vmatpush1.msra.mxu0 0.0
      %2859 = vmatprep.subr.mxu0 0.0
      %2860 = vmatpush1.msra.mxu0 0.0
      %2861 = vmatprep.subr.mxu0 0.0
      %2862 = vmatpush1.msra.mxu0 0.0
      %2863 = vmatprep.subr.mxu0 0.0
      %2864 = vmatpush1.msra.mxu0 %v2843
      %2865 = vmatprep.subr.mxu0 0.0
      %2866 = vmatpush1.msra.mxu0 %v2813
      %2867 = vmatprep.subr.mxu0 0.0
      %2868 = vmatpush1.msra.mxu0 %v2811
      %2869 = vmatprep.subr.mxu0 0.0
      %2870 = vmatpush1.msra.mxu0 %v2809
      %2871 = vmatprep.subr.mxu0 0.0
      %2872 = vmatpush1.msra.mxu0 %v2807
      %2873 = vmatprep.subr.mxu0 0.0
      %2874 = vmatpush1.msra.mxu0 %v2805
      %2875 = vmatprep.subr.mxu0 0.0
      %2876 = vmatpush1.msra.mxu0 %v2803
      %2877 = vmatprep.subr.mxu0 0.0
      %2878 = vmatpush2.msra.mxu0 0.0
      %2879 = vmatprep.subr.mxu0 0.0
      %2880 = vmatpush2.msra.mxu0 0.0
      %2881 = vmatprep.subr.mxu0 0.0
      %2882 = vmatpush2.msra.mxu0 0.0
      %2883 = vmatprep.subr.mxu0 0.0
      %2884 = vmatpush2.msra.mxu0 0.0
      %2885 = vmatprep.subr.mxu0 0.0
      %2886 = vmatpush2.msra.mxu0 0.0
      %2887 = vmatprep.subr.mxu0 0.0
      %2888 = vmatpush2.msra.mxu0 0.0
      %2889 = vmatprep.subr.mxu0 0.0
      %2890 = vmatpush2.msra.mxu0 0.0
      %2891 = vmatprep.subr.mxu0 0.0
      %2892 = vmatpush2.msra.mxu0 0.0
      %2893 = vmatprep.subr.mxu0 0.0
      %2894 = vmatpush2.msra.mxu0 0.0
      %2895 = vmatprep.subr.mxu0 0.0
      %2896 = vmatpush2.msra.mxu0 0.0
      %2897 = vmatprep.subr.mxu0 0.0
      %2898 = vmatpush2.msra.mxu0 0.0
      %2899 = vmatprep.subr.mxu0 0.0
      %2900 = vmatpush2.msra.mxu0 0.0
      %2901 = vmatprep.subr.mxu0 0.0
      %2902 = vmatpush2.msra.mxu0 0.0
      %2903 = vmatprep.subr.mxu0 0.0
      %2904 = vmatpush2.msra.mxu0 0.0
      %2905 = vmatprep.subr.mxu0 0.0
      %2906 = vmatpush2.msra.mxu0 0.0
      %2907 = vmatprep.subr.mxu0 0.0
      %2908 = vmatpush2.msra.mxu0 0.0
      %2909 = vmatprep.mubr.f32.mxu0 0.0
      %2910 = vmatmul.mubr.f32.gmra.mxu0 %v2823
      %v2911 = vpop.f32.mrf.mxu0
      %v2912 = vadd.f32 0.0, %v2911
      %v2913 = vpop.f32.mrf.mxu0
      %2914 = vmatprep.mubr.f32.mxu0 0.0
      %2915 = vmatmul.mubr.f32.gmra.mxu0 %v2826
      %v2916 = vpop.f32.mrf.mxu0
      %v2917 = vadd.f32 0.0, %v2916
      %v2918 = vpop.f32.mrf.mxu0
      %2919 = vmatprep.mubr.f32.mxu0 0.0
      %2920 = vmatmul.mubr.f32.gmra.mxu0 %v2829
      %v2921 = vpop.f32.mrf.mxu0
      %v2922 = vadd.f32 0.0, %v2921
      %v2923 = vpop.f32.mrf.mxu0
      %2924 = vmatprep.mubr.f32.mxu0 0.0
      %2925 = vmatmul.mubr.f32.gmra.mxu0 %v2832
      %v2926 = vpop.f32.mrf.mxu0
      %v2927 = vadd.f32 0.0, %v2926
      %v2928 = vpop.f32.mrf.mxu0
      %2929 = vmatprep.mubr.f32.mxu0 0.0
      %2930 = vmatmul.mubr.f32.gmra.mxu0 %v2835
      %v2931 = vpop.f32.mrf.mxu0
      %v2932 = vadd.f32 0.0, %v2931
      %v2933 = vpop.f32.mrf.mxu0
      %2934 = vmatprep.mubr.f32.mxu0 0.0
      %2935 = vmatmul.mubr.f32.gmra.mxu0 %v2838
      %v2936 = vpop.f32.mrf.mxu0
      %v2937 = vadd.f32 0.0, %v2936
      %v2938 = vpop.f32.mrf.mxu0
      %2939 = vmatprep.mubr.f32.mxu0 0.0
      %2940 = vmatmul.mubr.f32.gmra.mxu0 %v2841
      %v2941 = vpop.f32.mrf.mxu0
      %v2942 = vadd.f32 0.0, %v2941
      %v2943 = vpop.f32.mrf.mxu0
      %2944 = vdwg.mxu0
      %2945 = vst.msk [vmem:[#allocation3 + $0x62] sm:$0xff] %vm865, %v2912
      %2946 = vst.msk [vmem:[#allocation3 + $0x6a] sm:$0xff] %vm865, %v2917
      %2947 = vst.msk [vmem:[#allocation3 + $0x72] sm:$0xff] %vm865, %v2922
      %2948 = vst.msk [vmem:[#allocation3 + $0x7a] sm:$0xff] %vm865, %v2927
      %2949 = vst.msk [vmem:[#allocation3 + $0x82] sm:$0xff] %vm865, %v2932
      %2950 = vst.msk [vmem:[#allocation3 + $0x8a] sm:$0xff] %vm865, %v2937
      %2951 = vst.msk [vmem:[#allocation3 + $0x92] sm:$0x1] %vm1244, %v2942
      %v2952 = vld [vmem:[#allocation2 + $0x62] sm:$0xff]
      %v2953 = vld [vmem:[#allocation2 + $0x6a] sm:$0xff]
      %v2954 = vld [vmem:[#allocation2 + $0x72] sm:$0xff]
      %v2955 = vld [vmem:[#allocation2 + $0x7a] sm:$0xff]
      %v2956 = vld [vmem:[#allocation2 + $0x82] sm:$0xff]
      %v2957 = vld [vmem:[#allocation2 + $0x8a] sm:$0xff]
      %v2958 = vld [vmem:[#allocation2 + $0x92] sm:$0x1]
      %2966 = vrot.lane.b32.xlu0 %v2952, 120
      %v2967 = vpop.permute.xlu0 %2966
      %2968 = vrot.lane.b32.xlu0 %v2953, 120
      %v2969 = vpop.permute.xlu0 %2968
      %2970 = vrot.lane.b32.xlu0 %v2954, 120
      %v2971 = vpop.permute.xlu0 %2970
      %2972 = vrot.lane.b32.xlu0 %v2955, 120
      %v2973 = vpop.permute.xlu0 %2972
      %2974 = vrot.lane.b32.xlu0 %v2956, 120
      %v2975 = vpop.permute.xlu0 %2974
      %2976 = vrot.lane.b32.xlu0 %v2957, 120
      %v2977 = vpop.permute.xlu0 %2976
      %2978 = vrot.lane.b32.xlu0 %v2958, 120
      %v2979 = vpop.permute.xlu0 %2978
      %2980 = vrot.lane.b32.xlu0 %v2952, 104
      %v2981 = vpop.permute.xlu0 %2980
      %2982 = vrot.lane.b32.xlu0 %v2953, 104
      %v2983 = vpop.permute.xlu0 %2982
      %2984 = vrot.lane.b32.xlu0 %v2954, 104
      %v2985 = vpop.permute.xlu0 %2984
      %2986 = vrot.lane.b32.xlu0 %v2955, 104
      %v2987 = vpop.permute.xlu0 %2986
      %2988 = vrot.lane.b32.xlu0 %v2956, 104
      %v2989 = vpop.permute.xlu0 %2988
      %2990 = vrot.lane.b32.xlu0 %v2957, 104
      %v2991 = vpop.permute.xlu0 %2990
      %2992 = vrot.lane.b32.xlu0 %v2958, 104
      %v2993 = vpop.permute.xlu0 %2992
      %v2994 = vsel %vm865, %v2967, 0
      %v2996 = vsel %vm865, %v2969, 0
      %v2998 = vsel %vm865, %v2971, 0
      %v3000 = vsel %vm865, %v2973, 0
      %v3002 = vsel %vm865, %v2975, 0
      %v3004 = vsel %vm865, %v2977, 0
      %v3006 = vsel %vm865, %v2979, 0
      %v3008 = vsel %vm865, %v2981, 0
      %v3010 = vsel %vm865, %v2983, 0
      %v3012 = vsel %vm865, %v2985, 0
      %v3014 = vsel %vm865, %v2987, 0
      %v3016 = vsel %vm865, %v2989, 0
      %v3018 = vsel %vm865, %v2991, 0
      %v3020 = vsel %vm865, %v2993, 0
      %3022 = vmatprep.subr.mxu0 0.0
      %3023 = vmatpush1.xpose.msra.mxu0 0.0
      %3024 = vmatprep.subr.mxu0 0.0
      %3025 = vmatpush1.xpose.msra.mxu0 0.0
      %3026 = vmatprep.subr.mxu0 0.0
      %3027 = vmatpush1.xpose.msra.mxu0 0.0
      %3028 = vmatprep.subr.mxu0 0.0
      %3029 = vmatpush1.xpose.msra.mxu0 0.0
      %3030 = vmatprep.subr.mxu0 0.0
      %3031 = vmatpush1.xpose.msra.mxu0 0.0
      %3032 = vmatprep.subr.mxu0 0.0
      %3033 = vmatpush1.xpose.msra.mxu0 0.0
      %3034 = vmatprep.subr.mxu0 0.0
      %3035 = vmatpush1.xpose.msra.mxu0 0.0
      %3036 = vmatprep.subr.mxu0 0.0
      %3037 = vmatpush1.xpose.msra.mxu0 0.0
      %3038 = vmatprep.subr.mxu0 0.0
      %3039 = vmatpush1.xpose.msra.mxu0 0.0
      %3040 = vmatprep.subr.mxu0 0.0
      %3041 = vmatpush1.xpose.msra.mxu0 %v3020
      %3042 = vmatprep.subr.mxu0 0.0
      %3043 = vmatpush1.xpose.msra.mxu0 %v3018
      %3044 = vmatprep.subr.mxu0 0.0
      %3045 = vmatpush1.xpose.msra.mxu0 %v3016
      %3046 = vmatprep.subr.mxu0 0.0
      %3047 = vmatpush1.xpose.msra.mxu0 %v3014
      %3048 = vmatprep.subr.mxu0 0.0
      %3049 = vmatpush1.xpose.msra.mxu0 %v3012
      %3050 = vmatprep.subr.mxu0 0.0
      %3051 = vmatpush1.xpose.msra.mxu0 %v3010
      %3052 = vmatprep.subr.mxu0 0.0
      %3053 = vmatpush1.xpose.msra.mxu0 %v3008
      %3054 = vmatprep.subr.mxu0 0.0
      %3055 = vmatpush2.xpose.msra.mxu0 0.0
      %3056 = vmatprep.subr.mxu0 0.0
      %3057 = vmatpush2.xpose.msra.mxu0 0.0
      %3058 = vmatprep.subr.mxu0 0.0
      %3059 = vmatpush2.xpose.msra.mxu0 0.0
      %3060 = vmatprep.subr.mxu0 0.0
      %3061 = vmatpush2.xpose.msra.mxu0 0.0
      %3062 = vmatprep.subr.mxu0 0.0
      %3063 = vmatpush2.xpose.msra.mxu0 0.0
      %3064 = vmatprep.subr.mxu0 0.0
      %3065 = vmatpush2.xpose.msra.mxu0 0.0
      %3066 = vmatprep.subr.mxu0 0.0
      %3067 = vmatpush2.xpose.msra.mxu0 0.0
      %3068 = vmatprep.subr.mxu0 0.0
      %3069 = vmatpush2.xpose.msra.mxu0 0.0
      %3070 = vmatprep.subr.mxu0 0.0
      %3071 = vmatpush2.xpose.msra.mxu0 0.0
      %3072 = vmatprep.subr.mxu0 0.0
      %3073 = vmatpush2.xpose.msra.mxu0 0.0
      %3074 = vmatprep.subr.mxu0 0.0
      %3075 = vmatpush2.xpose.msra.mxu0 0.0
      %3076 = vmatprep.subr.mxu0 0.0
      %3077 = vmatpush2.xpose.msra.mxu0 0.0
      %3078 = vmatprep.subr.mxu0 0.0
      %3079 = vmatpush2.xpose.msra.mxu0 0.0
      %3080 = vmatprep.subr.mxu0 0.0
      %3081 = vmatpush2.xpose.msra.mxu0 0.0
      %3082 = vmatprep.subr.mxu0 0.0
      %3083 = vmatpush2.xpose.msra.mxu0 0.0
      %3084 = vmatprep.subr.mxu0 0.0
      %3085 = vmatpush2.xpose.msra.mxu0 0.0
      %3086 = vmatprep.mubr.f32.mxu0 0.0
      %3087 = vmatmul.mubr.f32.gmra.mxu0 %v2994
      %v3088 = vpop.f32.mrf.mxu0
      %v3089 = vadd.f32 0.0, %v3088
      %v3090 = vpop.f32.mrf.mxu0
      %3091 = vmatprep.mubr.f32.mxu0 0.0
      %3092 = vmatmul.mubr.f32.gmra.mxu0 %v2996
      %v3093 = vpop.f32.mrf.mxu0
      %v3094 = vadd.f32 0.0, %v3093
      %v3095 = vpop.f32.mrf.mxu0
      %3096 = vmatprep.mubr.f32.mxu0 0.0
      %3097 = vmatmul.mubr.f32.gmra.mxu0 %v2998
      %v3098 = vpop.f32.mrf.mxu0
      %v3099 = vadd.f32 0.0, %v3098
      %v3100 = vpop.f32.mrf.mxu0
      %3101 = vmatprep.mubr.f32.mxu0 0.0
      %3102 = vmatmul.mubr.f32.gmra.mxu0 %v3000
      %v3103 = vpop.f32.mrf.mxu0
      %v3104 = vadd.f32 0.0, %v3103
      %v3105 = vpop.f32.mrf.mxu0
      %3106 = vmatprep.mubr.f32.mxu0 0.0
      %3107 = vmatmul.mubr.f32.gmra.mxu0 %v3002
      %v3108 = vpop.f32.mrf.mxu0
      %v3109 = vadd.f32 0.0, %v3108
      %v3110 = vpop.f32.mrf.mxu0
      %3111 = vmatprep.mubr.f32.mxu0 0.0
      %3112 = vmatmul.mubr.f32.gmra.mxu0 %v3004
      %v3113 = vpop.f32.mrf.mxu0
      %v3114 = vadd.f32 0.0, %v3113
      %v3115 = vpop.f32.mrf.mxu0
      %3116 = vmatprep.mubr.f32.mxu0 0.0
      %3117 = vmatmul.mubr.f32.gmra.mxu0 %v3006
      %v3118 = vpop.f32.mrf.mxu0
      %v3119 = vadd.f32 0.0, %v3118
      %v3120 = vpop.f32.mrf.mxu0
      %3121 = vdwg.mxu0
      %v3122 = vmul.f32 %v3089, 0.35355338
      %v3123 = vmul.f32 %v3094, 0.35355338
      %v3124 = vmul.f32 %v3099, 0.35355338
      %v3125 = vmul.f32 %v3104, 0.35355338
      %v3126 = vmul.f32 %v3109, 0.35355338
      %v3127 = vmul.f32 %v3114, 0.35355338
      %v3128 = vmul.f32 %v3119, 0.35355338
      %v3129 = vadd.f32 %v3122, %v830
      %v3130 = vadd.f32 %v3123, %v831
      %v3131 = vadd.f32 %v3124, %v832
      %v3132 = vadd.f32 %v3125, %v833
      %v3133 = vadd.f32 %v3126, %v834
      %v3134 = vadd.f32 %v3127, %v835
      %v3135 = vadd.f32 %v3128, %v836
      %v3136 = vsel %vm1008, %v3129, -inf
      %3137 = vmax.xlane.f32.xlu0 %v3136
      %v3138 = vpop.xlane.xlu0 %3137
      %v3139 = vsel %vm1008, %v3130, -inf
      %3140 = vmax.xlane.f32.xlu0 %v3139
      %v3141 = vpop.xlane.xlu0 %3140
      %v3142 = vsel %vm1008, %v3131, -inf
      %3143 = vmax.xlane.f32.xlu0 %v3142
      %v3144 = vpop.xlane.xlu0 %3143
      %v3145 = vsel %vm1008, %v3132, -inf
      %3146 = vmax.xlane.f32.xlu0 %v3145
      %v3147 = vpop.xlane.xlu0 %3146
      %v3148 = vsel %vm1008, %v3133, -inf
      %3149 = vmax.xlane.f32.xlu0 %v3148
      %v3150 = vpop.xlane.xlu0 %3149
      %v3151 = vsel %vm1008, %v3134, -inf
      %3152 = vmax.xlane.f32.xlu0 %v3151
      %v3153 = vpop.xlane.xlu0 %3152
      %v3154 = vsel %vm1027, %v3135, -inf
      %3155 = vmax.xlane.f32.xlu0 %v3154
      %v3156 = vpop.xlane.xlu0 %3155
      %v3157 = vsub.f32 %v3129, %v3138
      %v3158 = vsub.f32 %v3130, %v3141
      %v3159 = vsub.f32 %v3131, %v3144
      %v3160 = vsub.f32 %v3132, %v3147
      %v3161 = vsub.f32 %v3133, %v3150
      %v3162 = vsub.f32 %v3134, %v3153
      %v3163 = vsub.f32 %v3135, %v3156
      %v3164 = vmul.f32 %v3157, 1.442695
      %v3165 = vpow.pop %v3164
      %v3166 = vmul.f32 %v3158, 1.442695
      %v3167 = vpow.pop %v3166
      %v3168 = vmul.f32 %v3159, 1.442695
      %v3169 = vpow.pop %v3168
      %v3170 = vmul.f32 %v3160, 1.442695
      %v3171 = vpow.pop %v3170
      %v3172 = vmul.f32 %v3161, 1.442695
      %v3173 = vpow.pop %v3172
      %v3174 = vmul.f32 %v3162, 1.442695
      %v3175 = vpow.pop %v3174
      %v3176 = vmul.f32 %v3163, 1.442695
      %v3177 = vpow.pop %v3176
      %v3178 = vsel %vm1008, %v3165, 0.0
      %3179 = vadd.xlane.f32.xlu0 %v3178
      %v3180 = vpop.xlane.xlu0 %3179
      %v3181 = vsel %vm1008, %v3167, 0.0
      %3182 = vadd.xlane.f32.xlu0 %v3181
      %v3183 = vpop.xlane.xlu0 %3182
      %v3184 = vsel %vm1008, %v3169, 0.0
      %3185 = vadd.xlane.f32.xlu0 %v3184
      %v3186 = vpop.xlane.xlu0 %3185
      %v3187 = vsel %vm1008, %v3171, 0.0
      %3188 = vadd.xlane.f32.xlu0 %v3187
      %v3189 = vpop.xlane.xlu0 %3188
      %v3190 = vsel %vm1008, %v3173, 0.0
      %3191 = vadd.xlane.f32.xlu0 %v3190
      %v3192 = vpop.xlane.xlu0 %3191
      %v3193 = vsel %vm1008, %v3175, 0.0
      %3194 = vadd.xlane.f32.xlu0 %v3193
      %v3195 = vpop.xlane.xlu0 %3194
      %v3196 = vsel %vm1027, %v3177, 0.0
      %3197 = vadd.xlane.f32.xlu0 %v3196
      %v3198 = vpop.xlane.xlu0 %3197
      %v3199 = vrcp.pop %v3180
      %v3200 = vrcp.pop %v3183
      %v3201 = vrcp.pop %v3186
      %v3202 = vrcp.pop %v3189
      %v3203 = vrcp.pop %v3192
      %v3204 = vrcp.pop %v3195
      %v3205 = vrcp.pop %v3198
      %v3206 = vmul.f32 %v3165, %v3199
      %v3207 = vmul.f32 %v3167, %v3200
      %v3208 = vmul.f32 %v3169, %v3201
      %v3209 = vmul.f32 %v3171, %v3202
      %v3210 = vmul.f32 %v3173, %v3203
      %v3211 = vmul.f32 %v3175, %v3204
      %v3212 = vmul.f32 %v3177, %v3205
      %s3213 = scalar_lea.vmem %s269, 280
      %3214 = vst.msk [vmem:[%s3213] sm:$0xff] %vm1008, %v3206
      %3215 = vst.msk [vmem:[%s3213 + $0x8] sm:$0xff] %vm1008, %v3207
      %3216 = vst.msk [vmem:[%s3213 + $0x10] sm:$0xff] %vm1008, %v3208
      %3217 = vst.msk [vmem:[%s3213 + $0x18] sm:$0xff] %vm1008, %v3209
      %3218 = vst.msk [vmem:[%s3213 + $0x20] sm:$0xff] %vm1008, %v3210
      %3219 = vst.msk [vmem:[%s3213 + $0x28] sm:$0xff] %vm1008, %v3211
      %3220 = vst.msk [vmem:[%s3213 + $0x30] sm:$0x1] %vm1027, %v3212
      %3221 = vrot.lane.b32.xlu0 %v2952, 88
      %v3222 = vpop.permute.xlu0 %3221
      %3223 = vrot.lane.b32.xlu0 %v2953, 88
      %v3224 = vpop.permute.xlu0 %3223
      %3225 = vrot.lane.b32.xlu0 %v2954, 88
      %v3226 = vpop.permute.xlu0 %3225
      %3227 = vrot.lane.b32.xlu0 %v2955, 88
      %v3228 = vpop.permute.xlu0 %3227
      %3229 = vrot.lane.b32.xlu0 %v2956, 88
      %v3230 = vpop.permute.xlu0 %3229
      %3231 = vrot.lane.b32.xlu0 %v2957, 88
      %v3232 = vpop.permute.xlu0 %3231
      %3233 = vrot.lane.b32.xlu0 %v2958, 88
      %v3234 = vpop.permute.xlu0 %3233
      %v3242 = vsel %vm1008, %v3206, 0
      %v3245 = vsel %vm1008, %v3207, 0
      %v3248 = vsel %vm1008, %v3208, 0
      %v3251 = vsel %vm1008, %v3209, 0
      %v3254 = vsel %vm1008, %v3210, 0
      %v3257 = vsel %vm1008, %v3211, 0
      %v3260 = vsel %vm1008, %v3212, 0
      %v3262 = vsel %vm1135, %v3234, 0
      %3264 = vmatprep.subr.mxu0 0.0
      %3265 = vmatpush1.msra.mxu0 0.0
      %3266 = vmatprep.subr.mxu0 0.0
      %3267 = vmatpush1.msra.mxu0 0.0
      %3268 = vmatprep.subr.mxu0 0.0
      %3269 = vmatpush1.msra.mxu0 0.0
      %3270 = vmatprep.subr.mxu0 0.0
      %3271 = vmatpush1.msra.mxu0 0.0
      %3272 = vmatprep.subr.mxu0 0.0
      %3273 = vmatpush1.msra.mxu0 0.0
      %3274 = vmatprep.subr.mxu0 0.0
      %3275 = vmatpush1.msra.mxu0 0.0
      %3276 = vmatprep.subr.mxu0 0.0
      %3277 = vmatpush1.msra.mxu0 0.0
      %3278 = vmatprep.subr.mxu0 0.0
      %3279 = vmatpush1.msra.mxu0 0.0
      %3280 = vmatprep.subr.mxu0 0.0
      %3281 = vmatpush1.msra.mxu0 0.0
      %3282 = vmatprep.subr.mxu0 0.0
      %3283 = vmatpush1.msra.mxu0 %v3262
      %3284 = vmatprep.subr.mxu0 0.0
      %3285 = vmatpush1.msra.mxu0 %v3232
      %3286 = vmatprep.subr.mxu0 0.0
      %3287 = vmatpush1.msra.mxu0 %v3230
      %3288 = vmatprep.subr.mxu0 0.0
      %3289 = vmatpush1.msra.mxu0 %v3228
      %3290 = vmatprep.subr.mxu0 0.0
      %3291 = vmatpush1.msra.mxu0 %v3226
      %3292 = vmatprep.subr.mxu0 0.0
      %3293 = vmatpush1.msra.mxu0 %v3224
      %3294 = vmatprep.subr.mxu0 0.0
      %3295 = vmatpush1.msra.mxu0 %v3222
      %3296 = vmatprep.subr.mxu0 0.0
      %3297 = vmatpush2.msra.mxu0 0.0
      %3298 = vmatprep.subr.mxu0 0.0
      %3299 = vmatpush2.msra.mxu0 0.0
      %3300 = vmatprep.subr.mxu0 0.0
      %3301 = vmatpush2.msra.mxu0 0.0
      %3302 = vmatprep.subr.mxu0 0.0
      %3303 = vmatpush2.msra.mxu0 0.0
      %3304 = vmatprep.subr.mxu0 0.0
      %3305 = vmatpush2.msra.mxu0 0.0
      %3306 = vmatprep.subr.mxu0 0.0
      %3307 = vmatpush2.msra.mxu0 0.0
      %3308 = vmatprep.subr.mxu0 0.0
      %3309 = vmatpush2.msra.mxu0 0.0
      %3310 = vmatprep.subr.mxu0 0.0
      %3311 = vmatpush2.msra.mxu0 0.0
      %3312 = vmatprep.subr.mxu0 0.0
      %3313 = vmatpush2.msra.mxu0 0.0
      %3314 = vmatprep.subr.mxu0 0.0
      %3315 = vmatpush2.msra.mxu0 0.0
      %3316 = vmatprep.subr.mxu0 0.0
      %3317 = vmatpush2.msra.mxu0 0.0
      %3318 = vmatprep.subr.mxu0 0.0
      %3319 = vmatpush2.msra.mxu0 0.0
      %3320 = vmatprep.subr.mxu0 0.0
      %3321 = vmatpush2.msra.mxu0 0.0
      %3322 = vmatprep.subr.mxu0 0.0
      %3323 = vmatpush2.msra.mxu0 0.0
      %3324 = vmatprep.subr.mxu0 0.0
      %3325 = vmatpush2.msra.mxu0 0.0
      %3326 = vmatprep.subr.mxu0 0.0
      %3327 = vmatpush2.msra.mxu0 0.0
      %3328 = vmatprep.mubr.f32.mxu0 0.0
      %3329 = vmatmul.mubr.f32.gmra.mxu0 %v3242
      %v3330 = vpop.f32.mrf.mxu0
      %v3331 = vadd.f32 0.0, %v3330
      %v3332 = vpop.f32.mrf.mxu0
      %3333 = vmatprep.mubr.f32.mxu0 0.0
      %3334 = vmatmul.mubr.f32.gmra.mxu0 %v3245
      %v3335 = vpop.f32.mrf.mxu0
      %v3336 = vadd.f32 0.0, %v3335
      %v3337 = vpop.f32.mrf.mxu0
      %3338 = vmatprep.mubr.f32.mxu0 0.0
      %3339 = vmatmul.mubr.f32.gmra.mxu0 %v3248
      %v3340 = vpop.f32.mrf.mxu0
      %v3341 = vadd.f32 0.0, %v3340
      %v3342 = vpop.f32.mrf.mxu0
      %3343 = vmatprep.mubr.f32.mxu0 0.0
      %3344 = vmatmul.mubr.f32.gmra.mxu0 %v3251
      %v3345 = vpop.f32.mrf.mxu0
      %v3346 = vadd.f32 0.0, %v3345
      %v3347 = vpop.f32.mrf.mxu0
      %3348 = vmatprep.mubr.f32.mxu0 0.0
      %3349 = vmatmul.mubr.f32.gmra.mxu0 %v3254
      %v3350 = vpop.f32.mrf.mxu0
      %v3351 = vadd.f32 0.0, %v3350
      %v3352 = vpop.f32.mrf.mxu0
      %3353 = vmatprep.mubr.f32.mxu0 0.0
      %3354 = vmatmul.mubr.f32.gmra.mxu0 %v3257
      %v3355 = vpop.f32.mrf.mxu0
      %v3356 = vadd.f32 0.0, %v3355
      %v3357 = vpop.f32.mrf.mxu0
      %3358 = vmatprep.mubr.f32.mxu0 0.0
      %3359 = vmatmul.mubr.f32.gmra.mxu0 %v3260
      %v3360 = vpop.f32.mrf.mxu0
      %v3361 = vadd.f32 0.0, %v3360
      %v3362 = vpop.f32.mrf.mxu0
      %3363 = vdwg.mxu0
      %3371 = vrot.lane.b32.xlu0 %v3331, 8
      %v3372 = vpop.permute.xlu0 %3371
      %3373 = vrot.lane.b32.xlu0 %v3336, 8
      %v3374 = vpop.permute.xlu0 %3373
      %3375 = vrot.lane.b32.xlu0 %v3341, 8
      %v3376 = vpop.permute.xlu0 %3375
      %3377 = vrot.lane.b32.xlu0 %v3346, 8
      %v3378 = vpop.permute.xlu0 %3377
      %3379 = vrot.lane.b32.xlu0 %v3351, 8
      %v3380 = vpop.permute.xlu0 %3379
      %3381 = vrot.lane.b32.xlu0 %v3356, 8
      %v3382 = vpop.permute.xlu0 %3381
      %3383 = vrot.lane.b32.xlu0 %v3361, 8
      %v3384 = vpop.permute.xlu0 %3383
      %3392 = vst.msk [vmem:[#allocation3 + $0x62] sm:$0xff] %vm1686, %v3372
      %3393 = vst.msk [vmem:[#allocation3 + $0x6a] sm:$0xff] %vm1686, %v3374
      %3394 = vst.msk [vmem:[#allocation3 + $0x72] sm:$0xff] %vm1686, %v3376
      %3395 = vst.msk [vmem:[#allocation3 + $0x7a] sm:$0xff] %vm1686, %v3378
      %3396 = vst.msk [vmem:[#allocation3 + $0x82] sm:$0xff] %vm1686, %v3380
      %3397 = vst.msk [vmem:[#allocation3 + $0x8a] sm:$0xff] %vm1686, %v3382
      %3398 = vst.msk [vmem:[#allocation3 + $0x92] sm:$0x1] %vm1693, %v3384
      %v3399 = vld [vmem:[#allocation2 + $0x93] sm:$0xff]
      %v3400 = vld [vmem:[#allocation2 + $0x9b] sm:$0xff]
      %v3401 = vld [vmem:[#allocation2 + $0xa3] sm:$0xff]
      %v3402 = vld [vmem:[#allocation2 + $0xab] sm:$0xff]
      %v3403 = vld [vmem:[#allocation2 + $0xb3] sm:$0xff]
      %v3404 = vld [vmem:[#allocation2 + $0xbb] sm:$0xff]
      %v3405 = vld [vmem:[#allocation2 + $0xc3] sm:$0x1]
      %3413 = vrot.lane.b32.xlu0 %v3399, 112
      %v3414 = vpop.permute.xlu0 %3413
      %3415 = vrot.lane.b32.xlu0 %v3400, 112
      %v3416 = vpop.permute.xlu0 %3415
      %3417 = vrot.lane.b32.xlu0 %v3401, 112
      %v3418 = vpop.permute.xlu0 %3417
      %3419 = vrot.lane.b32.xlu0 %v3402, 112
      %v3420 = vpop.permute.xlu0 %3419
      %3421 = vrot.lane.b32.xlu0 %v3403, 112
      %v3422 = vpop.permute.xlu0 %3421
      %3423 = vrot.lane.b32.xlu0 %v3404, 112
      %v3424 = vpop.permute.xlu0 %3423
      %3425 = vrot.lane.b32.xlu0 %v3405, 112
      %v3426 = vpop.permute.xlu0 %3425
      %v3427 = vsel %vm865, %v3399, 0
      %v3429 = vsel %vm865, %v3400, 0
      %v3431 = vsel %vm865, %v3401, 0
      %v3433 = vsel %vm865, %v3402, 0
      %v3435 = vsel %vm865, %v3403, 0
      %v3437 = vsel %vm865, %v3404, 0
      %v3439 = vsel %vm865, %v3405, 0
      %v3441 = vsel %vm865, %v3414, 0
      %v3443 = vsel %vm865, %v3416, 0
      %v3445 = vsel %vm865, %v3418, 0
      %v3447 = vsel %vm865, %v3420, 0
      %v3449 = vsel %vm865, %v3422, 0
      %v3451 = vsel %vm865, %v3424, 0
      %v3453 = vsel %vm865, %v3426, 0
      %3455 = vmatprep.subr.mxu0 0.0
      %3456 = vmatpush1.xpose.msra.mxu0 0.0
      %3457 = vmatprep.subr.mxu0 0.0
      %3458 = vmatpush1.xpose.msra.mxu0 0.0
      %3459 = vmatprep.subr.mxu0 0.0
      %3460 = vmatpush1.xpose.msra.mxu0 0.0
      %3461 = vmatprep.subr.mxu0 0.0
      %3462 = vmatpush1.xpose.msra.mxu0 0.0
      %3463 = vmatprep.subr.mxu0 0.0
      %3464 = vmatpush1.xpose.msra.mxu0 0.0
      %3465 = vmatprep.subr.mxu0 0.0
      %3466 = vmatpush1.xpose.msra.mxu0 0.0
      %3467 = vmatprep.subr.mxu0 0.0
      %3468 = vmatpush1.xpose.msra.mxu0 0.0
      %3469 = vmatprep.subr.mxu0 0.0
      %3470 = vmatpush1.xpose.msra.mxu0 0.0
      %3471 = vmatprep.subr.mxu0 0.0
      %3472 = vmatpush1.xpose.msra.mxu0 0.0
      %3473 = vmatprep.subr.mxu0 0.0
      %3474 = vmatpush1.xpose.msra.mxu0 %v3453
      %3475 = vmatprep.subr.mxu0 0.0
      %3476 = vmatpush1.xpose.msra.mxu0 %v3451
      %3477 = vmatprep.subr.mxu0 0.0
      %3478 = vmatpush1.xpose.msra.mxu0 %v3449
      %3479 = vmatprep.subr.mxu0 0.0
      %3480 = vmatpush1.xpose.msra.mxu0 %v3447
      %3481 = vmatprep.subr.mxu0 0.0
      %3482 = vmatpush1.xpose.msra.mxu0 %v3445
      %3483 = vmatprep.subr.mxu0 0.0
      %3484 = vmatpush1.xpose.msra.mxu0 %v3443
      %3485 = vmatprep.subr.mxu0 0.0
      %3486 = vmatpush1.xpose.msra.mxu0 %v3441
      %3487 = vmatprep.subr.mxu0 0.0
      %3488 = vmatpush2.xpose.msra.mxu0 0.0
      %3489 = vmatprep.subr.mxu0 0.0
      %3490 = vmatpush2.xpose.msra.mxu0 0.0
      %3491 = vmatprep.subr.mxu0 0.0
      %3492 = vmatpush2.xpose.msra.mxu0 0.0
      %3493 = vmatprep.subr.mxu0 0.0
      %3494 = vmatpush2.xpose.msra.mxu0 0.0
      %3495 = vmatprep.subr.mxu0 0.0
      %3496 = vmatpush2.xpose.msra.mxu0 0.0
      %3497 = vmatprep.subr.mxu0 0.0
      %3498 = vmatpush2.xpose.msra.mxu0 0.0
      %3499 = vmatprep.subr.mxu0 0.0
      %3500 = vmatpush2.xpose.msra.mxu0 0.0
      %3501 = vmatprep.subr.mxu0 0.0
      %3502 = vmatpush2.xpose.msra.mxu0 0.0
      %3503 = vmatprep.subr.mxu0 0.0
      %3504 = vmatpush2.xpose.msra.mxu0 0.0
      %3505 = vmatprep.subr.mxu0 0.0
      %3506 = vmatpush2.xpose.msra.mxu0 0.0
      %3507 = vmatprep.subr.mxu0 0.0
      %3508 = vmatpush2.xpose.msra.mxu0 0.0
      %3509 = vmatprep.subr.mxu0 0.0
      %3510 = vmatpush2.xpose.msra.mxu0 0.0
      %3511 = vmatprep.subr.mxu0 0.0
      %3512 = vmatpush2.xpose.msra.mxu0 0.0
      %3513 = vmatprep.subr.mxu0 0.0
      %3514 = vmatpush2.xpose.msra.mxu0 0.0
      %3515 = vmatprep.subr.mxu0 0.0
      %3516 = vmatpush2.xpose.msra.mxu0 0.0
      %3517 = vmatprep.subr.mxu0 0.0
      %3518 = vmatpush2.xpose.msra.mxu0 0.0
      %3519 = vmatprep.mubr.f32.mxu0 0.0
      %3520 = vmatmul.mubr.f32.gmra.mxu0 %v3427
      %v3521 = vpop.f32.mrf.mxu0
      %v3522 = vadd.f32 0.0, %v3521
      %v3523 = vpop.f32.mrf.mxu0
      %3524 = vmatprep.mubr.f32.mxu0 0.0
      %3525 = vmatmul.mubr.f32.gmra.mxu0 %v3429
      %v3526 = vpop.f32.mrf.mxu0
      %v3527 = vadd.f32 0.0, %v3526
      %v3528 = vpop.f32.mrf.mxu0
      %3529 = vmatprep.mubr.f32.mxu0 0.0
      %3530 = vmatmul.mubr.f32.gmra.mxu0 %v3431
      %v3531 = vpop.f32.mrf.mxu0
      %v3532 = vadd.f32 0.0, %v3531
      %v3533 = vpop.f32.mrf.mxu0
      %3534 = vmatprep.mubr.f32.mxu0 0.0
      %3535 = vmatmul.mubr.f32.gmra.mxu0 %v3433
      %v3536 = vpop.f32.mrf.mxu0
      %v3537 = vadd.f32 0.0, %v3536
      %v3538 = vpop.f32.mrf.mxu0
      %3539 = vmatprep.mubr.f32.mxu0 0.0
      %3540 = vmatmul.mubr.f32.gmra.mxu0 %v3435
      %v3541 = vpop.f32.mrf.mxu0
      %v3542 = vadd.f32 0.0, %v3541
      %v3543 = vpop.f32.mrf.mxu0
      %3544 = vmatprep.mubr.f32.mxu0 0.0
      %3545 = vmatmul.mubr.f32.gmra.mxu0 %v3437
      %v3546 = vpop.f32.mrf.mxu0
      %v3547 = vadd.f32 0.0, %v3546
      %v3548 = vpop.f32.mrf.mxu0
      %3549 = vmatprep.mubr.f32.mxu0 0.0
      %3550 = vmatmul.mubr.f32.gmra.mxu0 %v3439
      %v3551 = vpop.f32.mrf.mxu0
      %v3552 = vadd.f32 0.0, %v3551
      %v3553 = vpop.f32.mrf.mxu0
      %3554 = vdwg.mxu0
      %v3555 = vmul.f32 %v3522, 0.35355338
      %v3556 = vmul.f32 %v3527, 0.35355338
      %v3557 = vmul.f32 %v3532, 0.35355338
      %v3558 = vmul.f32 %v3537, 0.35355338
      %v3559 = vmul.f32 %v3542, 0.35355338
      %v3560 = vmul.f32 %v3547, 0.35355338
      %v3561 = vmul.f32 %v3552, 0.35355338
      %v3562 = vadd.f32 %v3555, %v830
      %v3563 = vadd.f32 %v3556, %v831
      %v3564 = vadd.f32 %v3557, %v832
      %v3565 = vadd.f32 %v3558, %v833
      %v3566 = vadd.f32 %v3559, %v834
      %v3567 = vadd.f32 %v3560, %v835
      %v3568 = vadd.f32 %v3561, %v836
      %v3569 = vsel %vm1008, %v3562, -inf
      %3570 = vmax.xlane.f32.xlu0 %v3569
      %v3571 = vpop.xlane.xlu0 %3570
      %v3572 = vsel %vm1008, %v3563, -inf
      %3573 = vmax.xlane.f32.xlu0 %v3572
      %v3574 = vpop.xlane.xlu0 %3573
      %v3575 = vsel %vm1008, %v3564, -inf
      %3576 = vmax.xlane.f32.xlu0 %v3575
      %v3577 = vpop.xlane.xlu0 %3576
      %v3578 = vsel %vm1008, %v3565, -inf
      %3579 = vmax.xlane.f32.xlu0 %v3578
      %v3580 = vpop.xlane.xlu0 %3579
      %v3581 = vsel %vm1008, %v3566, -inf
      %3582 = vmax.xlane.f32.xlu0 %v3581
      %v3583 = vpop.xlane.xlu0 %3582
      %v3584 = vsel %vm1008, %v3567, -inf
      %3585 = vmax.xlane.f32.xlu0 %v3584
      %v3586 = vpop.xlane.xlu0 %3585
      %v3587 = vsel %vm1027, %v3568, -inf
      %3588 = vmax.xlane.f32.xlu0 %v3587
      %v3589 = vpop.xlane.xlu0 %3588
      %v3590 = vsub.f32 %v3562, %v3571
      %v3591 = vsub.f32 %v3563, %v3574
      %v3592 = vsub.f32 %v3564, %v3577
      %v3593 = vsub.f32 %v3565, %v3580
      %v3594 = vsub.f32 %v3566, %v3583
      %v3595 = vsub.f32 %v3567, %v3586
      %v3596 = vsub.f32 %v3568, %v3589
      %v3597 = vmul.f32 %v3590, 1.442695
      %v3598 = vpow.pop %v3597
      %v3599 = vmul.f32 %v3591, 1.442695
      %v3600 = vpow.pop %v3599
      %v3601 = vmul.f32 %v3592, 1.442695
      %v3602 = vpow.pop %v3601
      %v3603 = vmul.f32 %v3593, 1.442695
      %v3604 = vpow.pop %v3603
      %v3605 = vmul.f32 %v3594, 1.442695
      %v3606 = vpow.pop %v3605
      %v3607 = vmul.f32 %v3595, 1.442695
      %v3608 = vpow.pop %v3607
      %v3609 = vmul.f32 %v3596, 1.442695
      %v3610 = vpow.pop %v3609
      %v3611 = vsel %vm1008, %v3598, 0.0
      %3612 = vadd.xlane.f32.xlu0 %v3611
      %v3613 = vpop.xlane.xlu0 %3612
      %v3614 = vsel %vm1008, %v3600, 0.0
      %3615 = vadd.xlane.f32.xlu0 %v3614
      %v3616 = vpop.xlane.xlu0 %3615
      %v3617 = vsel %vm1008, %v3602, 0.0
      %3618 = vadd.xlane.f32.xlu0 %v3617
      %v3619 = vpop.xlane.xlu0 %3618
      %v3620 = vsel %vm1008, %v3604, 0.0
      %3621 = vadd.xlane.f32.xlu0 %v3620
      %v3622 = vpop.xlane.xlu0 %3621
      %v3623 = vsel %vm1008, %v3606, 0.0
      %3624 = vadd.xlane.f32.xlu0 %v3623
      %v3625 = vpop.xlane.xlu0 %3624
      %v3626 = vsel %vm1008, %v3608, 0.0
      %3627 = vadd.xlane.f32.xlu0 %v3626
      %v3628 = vpop.xlane.xlu0 %3627
      %v3629 = vsel %vm1027, %v3610, 0.0
      %3630 = vadd.xlane.f32.xlu0 %v3629
      %v3631 = vpop.xlane.xlu0 %3630
      %v3632 = vrcp.pop %v3613
      %v3633 = vrcp.pop %v3616
      %v3634 = vrcp.pop %v3619
      %v3635 = vrcp.pop %v3622
      %v3636 = vrcp.pop %v3625
      %v3637 = vrcp.pop %v3628
      %v3638 = vrcp.pop %v3631
      %v3639 = vmul.f32 %v3598, %v3632
      %v3640 = vmul.f32 %v3600, %v3633
      %v3641 = vmul.f32 %v3602, %v3634
      %v3642 = vmul.f32 %v3604, %v3635
      %v3643 = vmul.f32 %v3606, %v3636
      %v3644 = vmul.f32 %v3608, %v3637
      %v3645 = vmul.f32 %v3610, %v3638
      %s3646 = scalar_lea.vmem %s269, 336
      %3647 = vst.msk [vmem:[%s3646] sm:$0xff] %vm1008, %v3639
      %3648 = vst.msk [vmem:[%s3646 + $0x8] sm:$0xff] %vm1008, %v3640
      %3649 = vst.msk [vmem:[%s3646 + $0x10] sm:$0xff] %vm1008, %v3641
      %3650 = vst.msk [vmem:[%s3646 + $0x18] sm:$0xff] %vm1008, %v3642
      %3651 = vst.msk [vmem:[%s3646 + $0x20] sm:$0xff] %vm1008, %v3643
      %3652 = vst.msk [vmem:[%s3646 + $0x28] sm:$0xff] %vm1008, %v3644
      %3653 = vst.msk [vmem:[%s3646 + $0x30] sm:$0x1] %vm1027, %v3645
      %3654 = vrot.lane.b32.xlu0 %v3399, 96
      %v3655 = vpop.permute.xlu0 %3654
      %3656 = vrot.lane.b32.xlu0 %v3400, 96
      %v3657 = vpop.permute.xlu0 %3656
      %3658 = vrot.lane.b32.xlu0 %v3401, 96
      %v3659 = vpop.permute.xlu0 %3658
      %3660 = vrot.lane.b32.xlu0 %v3402, 96
      %v3661 = vpop.permute.xlu0 %3660
      %3662 = vrot.lane.b32.xlu0 %v3403, 96
      %v3663 = vpop.permute.xlu0 %3662
      %3664 = vrot.lane.b32.xlu0 %v3404, 96
      %v3665 = vpop.permute.xlu0 %3664
      %3666 = vrot.lane.b32.xlu0 %v3405, 96
      %v3667 = vpop.permute.xlu0 %3666
      %v3675 = vsel %vm1008, %v3639, 0
      %v3678 = vsel %vm1008, %v3640, 0
      %v3681 = vsel %vm1008, %v3641, 0
      %v3684 = vsel %vm1008, %v3642, 0
      %v3687 = vsel %vm1008, %v3643, 0
      %v3690 = vsel %vm1008, %v3644, 0
      %v3693 = vsel %vm1008, %v3645, 0
      %v3695 = vsel %vm1135, %v3667, 0
      %3697 = vmatprep.subr.mxu0 0.0
      %3698 = vmatpush1.msra.mxu0 0.0
      %3699 = vmatprep.subr.mxu0 0.0
      %3700 = vmatpush1.msra.mxu0 0.0
      %3701 = vmatprep.subr.mxu0 0.0
      %3702 = vmatpush1.msra.mxu0 0.0
      %3703 = vmatprep.subr.mxu0 0.0
      %3704 = vmatpush1.msra.mxu0 0.0
      %3705 = vmatprep.subr.mxu0 0.0
      %3706 = vmatpush1.msra.mxu0 0.0
      %3707 = vmatprep.subr.mxu0 0.0
      %3708 = vmatpush1.msra.mxu0 0.0
      %3709 = vmatprep.subr.mxu0 0.0
      %3710 = vmatpush1.msra.mxu0 0.0
      %3711 = vmatprep.subr.mxu0 0.0
      %3712 = vmatpush1.msra.mxu0 0.0
      %3713 = vmatprep.subr.mxu0 0.0
      %3714 = vmatpush1.msra.mxu0 0.0
      %3715 = vmatprep.subr.mxu0 0.0
      %3716 = vmatpush1.msra.mxu0 %v3695
      %3717 = vmatprep.subr.mxu0 0.0
      %3718 = vmatpush1.msra.mxu0 %v3665
      %3719 = vmatprep.subr.mxu0 0.0
      %3720 = vmatpush1.msra.mxu0 %v3663
      %3721 = vmatprep.subr.mxu0 0.0
      %3722 = vmatpush1.msra.mxu0 %v3661
      %3723 = vmatprep.subr.mxu0 0.0
      %3724 = vmatpush1.msra.mxu0 %v3659
      %3725 = vmatprep.subr.mxu0 0.0
      %3726 = vmatpush1.msra.mxu0 %v3657
      %3727 = vmatprep.subr.mxu0 0.0
      %3728 = vmatpush1.msra.mxu0 %v3655
      %3729 = vmatprep.subr.mxu0 0.0
      %3730 = vmatpush2.msra.mxu0 0.0
      %3731 = vmatprep.subr.mxu0 0.0
      %3732 = vmatpush2.msra.mxu0 0.0
      %3733 = vmatprep.subr.mxu0 0.0
      %3734 = vmatpush2.msra.mxu0 0.0
      %3735 = vmatprep.subr.mxu0 0.0
      %3736 = vmatpush2.msra.mxu0 0.0
      %3737 = vmatprep.subr.mxu0 0.0
      %3738 = vmatpush2.msra.mxu0 0.0
      %3739 = vmatprep.subr.mxu0 0.0
      %3740 = vmatpush2.msra.mxu0 0.0
      %3741 = vmatprep.subr.mxu0 0.0
      %3742 = vmatpush2.msra.mxu0 0.0
      %3743 = vmatprep.subr.mxu0 0.0
      %3744 = vmatpush2.msra.mxu0 0.0
      %3745 = vmatprep.subr.mxu0 0.0
      %3746 = vmatpush2.msra.mxu0 0.0
      %3747 = vmatprep.subr.mxu0 0.0
      %3748 = vmatpush2.msra.mxu0 0.0
      %3749 = vmatprep.subr.mxu0 0.0
      %3750 = vmatpush2.msra.mxu0 0.0
      %3751 = vmatprep.subr.mxu0 0.0
      %3752 = vmatpush2.msra.mxu0 0.0
      %3753 = vmatprep.subr.mxu0 0.0
      %3754 = vmatpush2.msra.mxu0 0.0
      %3755 = vmatprep.subr.mxu0 0.0
      %3756 = vmatpush2.msra.mxu0 0.0
      %3757 = vmatprep.subr.mxu0 0.0
      %3758 = vmatpush2.msra.mxu0 0.0
      %3759 = vmatprep.subr.mxu0 0.0
      %3760 = vmatpush2.msra.mxu0 0.0
      %3761 = vmatprep.mubr.f32.mxu0 0.0
      %3762 = vmatmul.mubr.f32.gmra.mxu0 %v3675
      %v3763 = vpop.f32.mrf.mxu0
      %v3764 = vadd.f32 0.0, %v3763
      %v3765 = vpop.f32.mrf.mxu0
      %3766 = vmatprep.mubr.f32.mxu0 0.0
      %3767 = vmatmul.mubr.f32.gmra.mxu0 %v3678
      %v3768 = vpop.f32.mrf.mxu0
      %v3769 = vadd.f32 0.0, %v3768
      %v3770 = vpop.f32.mrf.mxu0
      %3771 = vmatprep.mubr.f32.mxu0 0.0
      %3772 = vmatmul.mubr.f32.gmra.mxu0 %v3681
      %v3773 = vpop.f32.mrf.mxu0
      %v3774 = vadd.f32 0.0, %v3773
      %v3775 = vpop.f32.mrf.mxu0
      %3776 = vmatprep.mubr.f32.mxu0 0.0
      %3777 = vmatmul.mubr.f32.gmra.mxu0 %v3684
      %v3778 = vpop.f32.mrf.mxu0
      %v3779 = vadd.f32 0.0, %v3778
      %v3780 = vpop.f32.mrf.mxu0
      %3781 = vmatprep.mubr.f32.mxu0 0.0
      %3782 = vmatmul.mubr.f32.gmra.mxu0 %v3687
      %v3783 = vpop.f32.mrf.mxu0
      %v3784 = vadd.f32 0.0, %v3783
      %v3785 = vpop.f32.mrf.mxu0
      %3786 = vmatprep.mubr.f32.mxu0 0.0
      %3787 = vmatmul.mubr.f32.gmra.mxu0 %v3690
      %v3788 = vpop.f32.mrf.mxu0
      %v3789 = vadd.f32 0.0, %v3788
      %v3790 = vpop.f32.mrf.mxu0
      %3791 = vmatprep.mubr.f32.mxu0 0.0
      %3792 = vmatmul.mubr.f32.gmra.mxu0 %v3693
      %v3793 = vpop.f32.mrf.mxu0
      %v3794 = vadd.f32 0.0, %v3793
      %v3795 = vpop.f32.mrf.mxu0
      %3796 = vdwg.mxu0
      %3797 = vst.msk [vmem:[#allocation3 + $0x93] sm:$0xff] %vm865, %v3764
      %3798 = vst.msk [vmem:[#allocation3 + $0x9b] sm:$0xff] %vm865, %v3769
      %3799 = vst.msk [vmem:[#allocation3 + $0xa3] sm:$0xff] %vm865, %v3774
      %3800 = vst.msk [vmem:[#allocation3 + $0xab] sm:$0xff] %vm865, %v3779
      %3801 = vst.msk [vmem:[#allocation3 + $0xb3] sm:$0xff] %vm865, %v3784
      %3802 = vst.msk [vmem:[#allocation3 + $0xbb] sm:$0xff] %vm865, %v3789
      %3803 = vst.msk [vmem:[#allocation3 + $0xc3] sm:$0x1] %vm1244, %v3794
      %v3804 = vld [vmem:[#allocation2 + $0x93] sm:$0xff]
      %v3805 = vld [vmem:[#allocation2 + $0x9b] sm:$0xff]
      %v3806 = vld [vmem:[#allocation2 + $0xa3] sm:$0xff]
      %v3807 = vld [vmem:[#allocation2 + $0xab] sm:$0xff]
      %v3808 = vld [vmem:[#allocation2 + $0xb3] sm:$0xff]
      %v3809 = vld [vmem:[#allocation2 + $0xbb] sm:$0xff]
      %v3810 = vld [vmem:[#allocation2 + $0xc3] sm:$0x1]
      %3818 = vrot.lane.b32.xlu0 %v3804, 120
      %v3819 = vpop.permute.xlu0 %3818
      %3820 = vrot.lane.b32.xlu0 %v3805, 120
      %v3821 = vpop.permute.xlu0 %3820
      %3822 = vrot.lane.b32.xlu0 %v3806, 120
      %v3823 = vpop.permute.xlu0 %3822
      %3824 = vrot.lane.b32.xlu0 %v3807, 120
      %v3825 = vpop.permute.xlu0 %3824
      %3826 = vrot.lane.b32.xlu0 %v3808, 120
      %v3827 = vpop.permute.xlu0 %3826
      %3828 = vrot.lane.b32.xlu0 %v3809, 120
      %v3829 = vpop.permute.xlu0 %3828
      %3830 = vrot.lane.b32.xlu0 %v3810, 120
      %v3831 = vpop.permute.xlu0 %3830
      %3832 = vrot.lane.b32.xlu0 %v3804, 104
      %v3833 = vpop.permute.xlu0 %3832
      %3834 = vrot.lane.b32.xlu0 %v3805, 104
      %v3835 = vpop.permute.xlu0 %3834
      %3836 = vrot.lane.b32.xlu0 %v3806, 104
      %v3837 = vpop.permute.xlu0 %3836
      %3838 = vrot.lane.b32.xlu0 %v3807, 104
      %v3839 = vpop.permute.xlu0 %3838
      %3840 = vrot.lane.b32.xlu0 %v3808, 104
      %v3841 = vpop.permute.xlu0 %3840
      %3842 = vrot.lane.b32.xlu0 %v3809, 104
      %v3843 = vpop.permute.xlu0 %3842
      %3844 = vrot.lane.b32.xlu0 %v3810, 104
      %v3845 = vpop.permute.xlu0 %3844
      %v3846 = vsel %vm865, %v3819, 0
      %v3848 = vsel %vm865, %v3821, 0
      %v3850 = vsel %vm865, %v3823, 0
      %v3852 = vsel %vm865, %v3825, 0
      %v3854 = vsel %vm865, %v3827, 0
      %v3856 = vsel %vm865, %v3829, 0
      %v3858 = vsel %vm865, %v3831, 0
      %v3860 = vsel %vm865, %v3833, 0
      %v3862 = vsel %vm865, %v3835, 0
      %v3864 = vsel %vm865, %v3837, 0
      %v3866 = vsel %vm865, %v3839, 0
      %v3868 = vsel %vm865, %v3841, 0
      %v3870 = vsel %vm865, %v3843, 0
      %v3872 = vsel %vm865, %v3845, 0
      %3874 = vmatprep.subr.mxu0 0.0
      %3875 = vmatpush1.xpose.msra.mxu0 0.0
      %3876 = vmatprep.subr.mxu0 0.0
      %3877 = vmatpush1.xpose.msra.mxu0 0.0
      %3878 = vmatprep.subr.mxu0 0.0
      %3879 = vmatpush1.xpose.msra.mxu0 0.0
      %3880 = vmatprep.subr.mxu0 0.0
      %3881 = vmatpush1.xpose.msra.mxu0 0.0
      %3882 = vmatprep.subr.mxu0 0.0
      %3883 = vmatpush1.xpose.msra.mxu0 0.0
      %3884 = vmatprep.subr.mxu0 0.0
      %3885 = vmatpush1.xpose.msra.mxu0 0.0
      %3886 = vmatprep.subr.mxu0 0.0
      %3887 = vmatpush1.xpose.msra.mxu0 0.0
      %3888 = vmatprep.subr.mxu0 0.0
      %3889 = vmatpush1.xpose.msra.mxu0 0.0
      %3890 = vmatprep.subr.mxu0 0.0
      %3891 = vmatpush1.xpose.msra.mxu0 0.0
      %3892 = vmatprep.subr.mxu0 0.0
      %3893 = vmatpush1.xpose.msra.mxu0 %v3872
      %3894 = vmatprep.subr.mxu0 0.0
      %3895 = vmatpush1.xpose.msra.mxu0 %v3870
      %3896 = vmatprep.subr.mxu0 0.0
      %3897 = vmatpush1.xpose.msra.mxu0 %v3868
      %3898 = vmatprep.subr.mxu0 0.0
      %3899 = vmatpush1.xpose.msra.mxu0 %v3866
      %3900 = vmatprep.subr.mxu0 0.0
      %3901 = vmatpush1.xpose.msra.mxu0 %v3864
      %3902 = vmatprep.subr.mxu0 0.0
      %3903 = vmatpush1.xpose.msra.mxu0 %v3862
      %3904 = vmatprep.subr.mxu0 0.0
      %3905 = vmatpush1.xpose.msra.mxu0 %v3860
      %3906 = vmatprep.subr.mxu0 0.0
      %3907 = vmatpush2.xpose.msra.mxu0 0.0
      %3908 = vmatprep.subr.mxu0 0.0
      %3909 = vmatpush2.xpose.msra.mxu0 0.0
      %3910 = vmatprep.subr.mxu0 0.0
      %3911 = vmatpush2.xpose.msra.mxu0 0.0
      %3912 = vmatprep.subr.mxu0 0.0
      %3913 = vmatpush2.xpose.msra.mxu0 0.0
      %3914 = vmatprep.subr.mxu0 0.0
      %3915 = vmatpush2.xpose.msra.mxu0 0.0
      %3916 = vmatprep.subr.mxu0 0.0
      %3917 = vmatpush2.xpose.msra.mxu0 0.0
      %3918 = vmatprep.subr.mxu0 0.0
      %3919 = vmatpush2.xpose.msra.mxu0 0.0
      %3920 = vmatprep.subr.mxu0 0.0
      %3921 = vmatpush2.xpose.msra.mxu0 0.0
      %3922 = vmatprep.subr.mxu0 0.0
      %3923 = vmatpush2.xpose.msra.mxu0 0.0
      %3924 = vmatprep.subr.mxu0 0.0
      %3925 = vmatpush2.xpose.msra.mxu0 0.0
      %3926 = vmatprep.subr.mxu0 0.0
      %3927 = vmatpush2.xpose.msra.mxu0 0.0
      %3928 = vmatprep.subr.mxu0 0.0
      %3929 = vmatpush2.xpose.msra.mxu0 0.0
      %3930 = vmatprep.subr.mxu0 0.0
      %3931 = vmatpush2.xpose.msra.mxu0 0.0
      %3932 = vmatprep.subr.mxu0 0.0
      %3933 = vmatpush2.xpose.msra.mxu0 0.0
      %3934 = vmatprep.subr.mxu0 0.0
      %3935 = vmatpush2.xpose.msra.mxu0 0.0
      %3936 = vmatprep.subr.mxu0 0.0
      %3937 = vmatpush2.xpose.msra.mxu0 0.0
      %3938 = vmatprep.mubr.f32.mxu0 0.0
      %3939 = vmatmul.mubr.f32.gmra.mxu0 %v3846
      %v3940 = vpop.f32.mrf.mxu0
      %v3941 = vadd.f32 0.0, %v3940
      %v3942 = vpop.f32.mrf.mxu0
      %3943 = vmatprep.mubr.f32.mxu0 0.0
      %3944 = vmatmul.mubr.f32.gmra.mxu0 %v3848
      %v3945 = vpop.f32.mrf.mxu0
      %v3946 = vadd.f32 0.0, %v3945
      %v3947 = vpop.f32.mrf.mxu0
      %3948 = vmatprep.mubr.f32.mxu0 0.0
      %3949 = vmatmul.mubr.f32.gmra.mxu0 %v3850
      %v3950 = vpop.f32.mrf.mxu0
      %v3951 = vadd.f32 0.0, %v3950
      %v3952 = vpop.f32.mrf.mxu0
      %3953 = vmatprep.mubr.f32.mxu0 0.0
      %3954 = vmatmul.mubr.f32.gmra.mxu0 %v3852
      %v3955 = vpop.f32.mrf.mxu0
      %v3956 = vadd.f32 0.0, %v3955
      %v3957 = vpop.f32.mrf.mxu0
      %3958 = vmatprep.mubr.f32.mxu0 0.0
      %3959 = vmatmul.mubr.f32.gmra.mxu0 %v3854
      %v3960 = vpop.f32.mrf.mxu0
      %v3961 = vadd.f32 0.0, %v3960
      %v3962 = vpop.f32.mrf.mxu0
      %3963 = vmatprep.mubr.f32.mxu0 0.0
      %3964 = vmatmul.mubr.f32.gmra.mxu0 %v3856
      %v3965 = vpop.f32.mrf.mxu0
      %v3966 = vadd.f32 0.0, %v3965
      %v3967 = vpop.f32.mrf.mxu0
      %3968 = vmatprep.mubr.f32.mxu0 0.0
      %3969 = vmatmul.mubr.f32.gmra.mxu0 %v3858
      %v3970 = vpop.f32.mrf.mxu0
      %v3971 = vadd.f32 0.0, %v3970
      %v3972 = vpop.f32.mrf.mxu0
      %3973 = vdwg.mxu0
      %v3974 = vmul.f32 %v3941, 0.35355338
      %v3975 = vmul.f32 %v3946, 0.35355338
      %v3976 = vmul.f32 %v3951, 0.35355338
      %v3977 = vmul.f32 %v3956, 0.35355338
      %v3978 = vmul.f32 %v3961, 0.35355338
      %v3979 = vmul.f32 %v3966, 0.35355338
      %v3980 = vmul.f32 %v3971, 0.35355338
      %v3981 = vadd.f32 %v3974, %v830
      %v3982 = vadd.f32 %v3975, %v831
      %v3983 = vadd.f32 %v3976, %v832
      %v3984 = vadd.f32 %v3977, %v833
      %v3985 = vadd.f32 %v3978, %v834
      %v3986 = vadd.f32 %v3979, %v835
      %v3987 = vadd.f32 %v3980, %v836
      %v3988 = vsel %vm1008, %v3981, -inf
      %3989 = vmax.xlane.f32.xlu0 %v3988
      %v3990 = vpop.xlane.xlu0 %3989
      %v3991 = vsel %vm1008, %v3982, -inf
      %3992 = vmax.xlane.f32.xlu0 %v3991
      %v3993 = vpop.xlane.xlu0 %3992
      %v3994 = vsel %vm1008, %v3983, -inf
      %3995 = vmax.xlane.f32.xlu0 %v3994
      %v3996 = vpop.xlane.xlu0 %3995
      %v3997 = vsel %vm1008, %v3984, -inf
      %3998 = vmax.xlane.f32.xlu0 %v3997
      %v3999 = vpop.xlane.xlu0 %3998
      %v4000 = vsel %vm1008, %v3985, -inf
      %4001 = vmax.xlane.f32.xlu0 %v4000
      %v4002 = vpop.xlane.xlu0 %4001
      %v4003 = vsel %vm1008, %v3986, -inf
      %4004 = vmax.xlane.f32.xlu0 %v4003
      %v4005 = vpop.xlane.xlu0 %4004
      %v4006 = vsel %vm1027, %v3987, -inf
      %4007 = vmax.xlane.f32.xlu0 %v4006
      %v4008 = vpop.xlane.xlu0 %4007
      %v4009 = vsub.f32 %v3981, %v3990
      %v4010 = vsub.f32 %v3982, %v3993
      %v4011 = vsub.f32 %v3983, %v3996
      %v4012 = vsub.f32 %v3984, %v3999
      %v4013 = vsub.f32 %v3985, %v4002
      %v4014 = vsub.f32 %v3986, %v4005
      %v4015 = vsub.f32 %v3987, %v4008
      %v4016 = vmul.f32 %v4009, 1.442695
      %v4017 = vpow.pop %v4016
      %v4018 = vmul.f32 %v4010, 1.442695
      %v4019 = vpow.pop %v4018
      %v4020 = vmul.f32 %v4011, 1.442695
      %v4021 = vpow.pop %v4020
      %v4022 = vmul.f32 %v4012, 1.442695
      %v4023 = vpow.pop %v4022
      %v4024 = vmul.f32 %v4013, 1.442695
      %v4025 = vpow.pop %v4024
      %v4026 = vmul.f32 %v4014, 1.442695
      %v4027 = vpow.pop %v4026
      %v4028 = vmul.f32 %v4015, 1.442695
      %v4029 = vpow.pop %v4028
      %v4030 = vsel %vm1008, %v4017, 0.0
      %4031 = vadd.xlane.f32.xlu0 %v4030
      %v4032 = vpop.xlane.xlu0 %4031
      %v4033 = vsel %vm1008, %v4019, 0.0
      %4034 = vadd.xlane.f32.xlu0 %v4033
      %v4035 = vpop.xlane.xlu0 %4034
      %v4036 = vsel %vm1008, %v4021, 0.0
      %4037 = vadd.xlane.f32.xlu0 %v4036
      %v4038 = vpop.xlane.xlu0 %4037
      %v4039 = vsel %vm1008, %v4023, 0.0
      %4040 = vadd.xlane.f32.xlu0 %v4039
      %v4041 = vpop.xlane.xlu0 %4040
      %v4042 = vsel %vm1008, %v4025, 0.0
      %4043 = vadd.xlane.f32.xlu0 %v4042
      %v4044 = vpop.xlane.xlu0 %4043
      %v4045 = vsel %vm1008, %v4027, 0.0
      %4046 = vadd.xlane.f32.xlu0 %v4045
      %v4047 = vpop.xlane.xlu0 %4046
      %v4048 = vsel %vm1027, %v4029, 0.0
      %4049 = vadd.xlane.f32.xlu0 %v4048
      %v4050 = vpop.xlane.xlu0 %4049
      %v4051 = vrcp.pop %v4032
      %v4052 = vrcp.pop %v4035
      %v4053 = vrcp.pop %v4038
      %v4054 = vrcp.pop %v4041
      %v4055 = vrcp.pop %v4044
      %v4056 = vrcp.pop %v4047
      %v4057 = vrcp.pop %v4050
      %v4058 = vmul.f32 %v4017, %v4051
      %v4059 = vmul.f32 %v4019, %v4052
      %v4060 = vmul.f32 %v4021, %v4053
      %v4061 = vmul.f32 %v4023, %v4054
      %v4062 = vmul.f32 %v4025, %v4055
      %v4063 = vmul.f32 %v4027, %v4056
      %v4064 = vmul.f32 %v4029, %v4057
      %s4065 = scalar_lea.vmem %s269, 392
      %4066 = vst.msk [vmem:[%s4065] sm:$0xff] %vm1008, %v4058
      %4067 = vst.msk [vmem:[%s4065 + $0x8] sm:$0xff] %vm1008, %v4059
      %4068 = vst.msk [vmem:[%s4065 + $0x10] sm:$0xff] %vm1008, %v4060
      %4069 = vst.msk [vmem:[%s4065 + $0x18] sm:$0xff] %vm1008, %v4061
      %4070 = vst.msk [vmem:[%s4065 + $0x20] sm:$0xff] %vm1008, %v4062
      %4071 = vst.msk [vmem:[%s4065 + $0x28] sm:$0xff] %vm1008, %v4063
      %4072 = vst.msk [vmem:[%s4065 + $0x30] sm:$0x1] %vm1027, %v4064
      %4073 = vrot.lane.b32.xlu0 %v3804, 88
      %v4074 = vpop.permute.xlu0 %4073
      %4075 = vrot.lane.b32.xlu0 %v3805, 88
      %v4076 = vpop.permute.xlu0 %4075
      %4077 = vrot.lane.b32.xlu0 %v3806, 88
      %v4078 = vpop.permute.xlu0 %4077
      %4079 = vrot.lane.b32.xlu0 %v3807, 88
      %v4080 = vpop.permute.xlu0 %4079
      %4081 = vrot.lane.b32.xlu0 %v3808, 88
      %v4082 = vpop.permute.xlu0 %4081
      %4083 = vrot.lane.b32.xlu0 %v3809, 88
      %v4084 = vpop.permute.xlu0 %4083
      %4085 = vrot.lane.b32.xlu0 %v3810, 88
      %v4086 = vpop.permute.xlu0 %4085
      %v4094 = vsel %vm1008, %v4058, 0
      %v4097 = vsel %vm1008, %v4059, 0
      %v4100 = vsel %vm1008, %v4060, 0
      %v4103 = vsel %vm1008, %v4061, 0
      %v4106 = vsel %vm1008, %v4062, 0
      %v4109 = vsel %vm1008, %v4063, 0
      %v4112 = vsel %vm1008, %v4064, 0
      %v4114 = vsel %vm1135, %v4086, 0
      %4116 = vmatprep.subr.mxu0 0.0
      %4117 = vmatpush1.msra.mxu0 0.0
      %4118 = vmatprep.subr.mxu0 0.0
      %4119 = vmatpush1.msra.mxu0 0.0
      %4120 = vmatprep.subr.mxu0 0.0
      %4121 = vmatpush1.msra.mxu0 0.0
      %4122 = vmatprep.subr.mxu0 0.0
      %4123 = vmatpush1.msra.mxu0 0.0
      %4124 = vmatprep.subr.mxu0 0.0
      %4125 = vmatpush1.msra.mxu0 0.0
      %4126 = vmatprep.subr.mxu0 0.0
      %4127 = vmatpush1.msra.mxu0 0.0
      %4128 = vmatprep.subr.mxu0 0.0
      %4129 = vmatpush1.msra.mxu0 0.0
      %4130 = vmatprep.subr.mxu0 0.0
      %4131 = vmatpush1.msra.mxu0 0.0
      %4132 = vmatprep.subr.mxu0 0.0
      %4133 = vmatpush1.msra.mxu0 0.0
      %4134 = vmatprep.subr.mxu0 0.0
      %4135 = vmatpush1.msra.mxu0 %v4114
      %4136 = vmatprep.subr.mxu0 0.0
      %4137 = vmatpush1.msra.mxu0 %v4084
      %4138 = vmatprep.subr.mxu0 0.0
      %4139 = vmatpush1.msra.mxu0 %v4082
      %4140 = vmatprep.subr.mxu0 0.0
      %4141 = vmatpush1.msra.mxu0 %v4080
      %4142 = vmatprep.subr.mxu0 0.0
      %4143 = vmatpush1.msra.mxu0 %v4078
      %4144 = vmatprep.subr.mxu0 0.0
      %4145 = vmatpush1.msra.mxu0 %v4076
      %4146 = vmatprep.subr.mxu0 0.0
      %4147 = vmatpush1.msra.mxu0 %v4074
      %4148 = vmatprep.subr.mxu0 0.0
      %4149 = vmatpush2.msra.mxu0 0.0
      %4150 = vmatprep.subr.mxu0 0.0
      %4151 = vmatpush2.msra.mxu0 0.0
      %4152 = vmatprep.subr.mxu0 0.0
      %4153 = vmatpush2.msra.mxu0 0.0
      %4154 = vmatprep.subr.mxu0 0.0
      %4155 = vmatpush2.msra.mxu0 0.0
      %4156 = vmatprep.subr.mxu0 0.0
      %4157 = vmatpush2.msra.mxu0 0.0
      %4158 = vmatprep.subr.mxu0 0.0
      %4159 = vmatpush2.msra.mxu0 0.0
      %4160 = vmatprep.subr.mxu0 0.0
      %4161 = vmatpush2.msra.mxu0 0.0
      %4162 = vmatprep.subr.mxu0 0.0
      %4163 = vmatpush2.msra.mxu0 0.0
      %4164 = vmatprep.subr.mxu0 0.0
      %4165 = vmatpush2.msra.mxu0 0.0
      %4166 = vmatprep.subr.mxu0 0.0
      %4167 = vmatpush2.msra.mxu0 0.0
      %4168 = vmatprep.subr.mxu0 0.0
      %4169 = vmatpush2.msra.mxu0 0.0
      %4170 = vmatprep.subr.mxu0 0.0
      %4171 = vmatpush2.msra.mxu0 0.0
      %4172 = vmatprep.subr.mxu0 0.0
      %4173 = vmatpush2.msra.mxu0 0.0
      %4174 = vmatprep.subr.mxu0 0.0
      %4175 = vmatpush2.msra.mxu0 0.0
      %4176 = vmatprep.subr.mxu0 0.0
      %4177 = vmatpush2.msra.mxu0 0.0
      %4178 = vmatprep.subr.mxu0 0.0
      %4179 = vmatpush2.msra.mxu0 0.0
      %4180 = vmatprep.mubr.f32.mxu0 0.0
      %4181 = vmatmul.mubr.f32.gmra.mxu0 %v4094
      %v4182 = vpop.f32.mrf.mxu0
      %v4183 = vadd.f32 0.0, %v4182
      %v4184 = vpop.f32.mrf.mxu0
      %4185 = vmatprep.mubr.f32.mxu0 0.0
      %4186 = vmatmul.mubr.f32.gmra.mxu0 %v4097
      %v4187 = vpop.f32.mrf.mxu0
      %v4188 = vadd.f32 0.0, %v4187
      %v4189 = vpop.f32.mrf.mxu0
      %4190 = vmatprep.mubr.f32.mxu0 0.0
      %4191 = vmatmul.mubr.f32.gmra.mxu0 %v4100
      %v4192 = vpop.f32.mrf.mxu0
      %v4193 = vadd.f32 0.0, %v4192
      %v4194 = vpop.f32.mrf.mxu0
      %4195 = vmatprep.mubr.f32.mxu0 0.0
      %4196 = vmatmul.mubr.f32.gmra.mxu0 %v4103
      %v4197 = vpop.f32.mrf.mxu0
      %v4198 = vadd.f32 0.0, %v4197
      %v4199 = vpop.f32.mrf.mxu0
      %4200 = vmatprep.mubr.f32.mxu0 0.0
      %4201 = vmatmul.mubr.f32.gmra.mxu0 %v4106
      %v4202 = vpop.f32.mrf.mxu0
      %v4203 = vadd.f32 0.0, %v4202
      %v4204 = vpop.f32.mrf.mxu0
      %4205 = vmatprep.mubr.f32.mxu0 0.0
      %4206 = vmatmul.mubr.f32.gmra.mxu0 %v4109
      %v4207 = vpop.f32.mrf.mxu0
      %v4208 = vadd.f32 0.0, %v4207
      %v4209 = vpop.f32.mrf.mxu0
      %4210 = vmatprep.mubr.f32.mxu0 0.0
      %4211 = vmatmul.mubr.f32.gmra.mxu0 %v4112
      %v4212 = vpop.f32.mrf.mxu0
      %v4213 = vadd.f32 0.0, %v4212
      %v4214 = vpop.f32.mrf.mxu0
      %4215 = vdwg.mxu0
      %4223 = vrot.lane.b32.xlu0 %v4183, 8
      %v4224 = vpop.permute.xlu0 %4223
      %4225 = vrot.lane.b32.xlu0 %v4188, 8
      %v4226 = vpop.permute.xlu0 %4225
      %4227 = vrot.lane.b32.xlu0 %v4193, 8
      %v4228 = vpop.permute.xlu0 %4227
      %4229 = vrot.lane.b32.xlu0 %v4198, 8
      %v4230 = vpop.permute.xlu0 %4229
      %4231 = vrot.lane.b32.xlu0 %v4203, 8
      %v4232 = vpop.permute.xlu0 %4231
      %4233 = vrot.lane.b32.xlu0 %v4208, 8
      %v4234 = vpop.permute.xlu0 %4233
      %4235 = vrot.lane.b32.xlu0 %v4213, 8
      %v4236 = vpop.permute.xlu0 %4235
      %4244 = vst.msk [vmem:[#allocation3 + $0x93] sm:$0xff] %vm1686, %v4224
      %4245 = vst.msk [vmem:[#allocation3 + $0x9b] sm:$0xff] %vm1686, %v4226
      %4246 = vst.msk [vmem:[#allocation3 + $0xa3] sm:$0xff] %vm1686, %v4228
      %4247 = vst.msk [vmem:[#allocation3 + $0xab] sm:$0xff] %vm1686, %v4230
      %4248 = vst.msk [vmem:[#allocation3 + $0xb3] sm:$0xff] %vm1686, %v4232
      %4249 = vst.msk [vmem:[#allocation3 + $0xbb] sm:$0xff] %vm1686, %v4234
      %4250 = vst.msk [vmem:[#allocation3 + $0xc3] sm:$0x1] %vm1693, %v4236
      %v4251 = vld [vmem:[#allocation2 + $0xc4] sm:$0xff]
      %v4252 = vld [vmem:[#allocation2 + $0xcc] sm:$0xff]
      %v4253 = vld [vmem:[#allocation2 + $0xd4] sm:$0xff]
      %v4254 = vld [vmem:[#allocation2 + $0xdc] sm:$0xff]
      %v4255 = vld [vmem:[#allocation2 + $0xe4] sm:$0xff]
      %v4256 = vld [vmem:[#allocation2 + $0xec] sm:$0xff]
      %v4257 = vld [vmem:[#allocation2 + $0xf4] sm:$0x1]
      %4265 = vrot.lane.b32.xlu0 %v4251, 112
      %v4266 = vpop.permute.xlu0 %4265
      %4267 = vrot.lane.b32.xlu0 %v4252, 112
      %v4268 = vpop.permute.xlu0 %4267
      %4269 = vrot.lane.b32.xlu0 %v4253, 112
      %v4270 = vpop.permute.xlu0 %4269
      %4271 = vrot.lane.b32.xlu0 %v4254, 112
      %v4272 = vpop.permute.xlu0 %4271
      %4273 = vrot.lane.b32.xlu0 %v4255, 112
      %v4274 = vpop.permute.xlu0 %4273
      %4275 = vrot.lane.b32.xlu0 %v4256, 112
      %v4276 = vpop.permute.xlu0 %4275
      %4277 = vrot.lane.b32.xlu0 %v4257, 112
      %v4278 = vpop.permute.xlu0 %4277
      %v4279 = vsel %vm865, %v4251, 0
      %v4281 = vsel %vm865, %v4252, 0
      %v4283 = vsel %vm865, %v4253, 0
      %v4285 = vsel %vm865, %v4254, 0
      %v4287 = vsel %vm865, %v4255, 0
      %v4289 = vsel %vm865, %v4256, 0
      %v4291 = vsel %vm865, %v4257, 0
      %v4293 = vsel %vm865, %v4266, 0
      %v4295 = vsel %vm865, %v4268, 0
      %v4297 = vsel %vm865, %v4270, 0
      %v4299 = vsel %vm865, %v4272, 0
      %v4301 = vsel %vm865, %v4274, 0
      %v4303 = vsel %vm865, %v4276, 0
      %v4305 = vsel %vm865, %v4278, 0
      %4307 = vmatprep.subr.mxu0 0.0
      %4308 = vmatpush1.xpose.msra.mxu0 0.0
      %4309 = vmatprep.subr.mxu0 0.0
      %4310 = vmatpush1.xpose.msra.mxu0 0.0
      %4311 = vmatprep.subr.mxu0 0.0
      %4312 = vmatpush1.xpose.msra.mxu0 0.0
      %4313 = vmatprep.subr.mxu0 0.0
      %4314 = vmatpush1.xpose.msra.mxu0 0.0
      %4315 = vmatprep.subr.mxu0 0.0
      %4316 = vmatpush1.xpose.msra.mxu0 0.0
      %4317 = vmatprep.subr.mxu0 0.0
      %4318 = vmatpush1.xpose.msra.mxu0 0.0
      %4319 = vmatprep.subr.mxu0 0.0
      %4320 = vmatpush1.xpose.msra.mxu0 0.0
      %4321 = vmatprep.subr.mxu0 0.0
      %4322 = vmatpush1.xpose.msra.mxu0 0.0
      %4323 = vmatprep.subr.mxu0 0.0
      %4324 = vmatpush1.xpose.msra.mxu0 0.0
      %4325 = vmatprep.subr.mxu0 0.0
      %4326 = vmatpush1.xpose.msra.mxu0 %v4305
      %4327 = vmatprep.subr.mxu0 0.0
      %4328 = vmatpush1.xpose.msra.mxu0 %v4303
      %4329 = vmatprep.subr.mxu0 0.0
      %4330 = vmatpush1.xpose.msra.mxu0 %v4301
      %4331 = vmatprep.subr.mxu0 0.0
      %4332 = vmatpush1.xpose.msra.mxu0 %v4299
      %4333 = vmatprep.subr.mxu0 0.0
      %4334 = vmatpush1.xpose.msra.mxu0 %v4297
      %4335 = vmatprep.subr.mxu0 0.0
      %4336 = vmatpush1.xpose.msra.mxu0 %v4295
      %4337 = vmatprep.subr.mxu0 0.0
      %4338 = vmatpush1.xpose.msra.mxu0 %v4293
      %4339 = vmatprep.subr.mxu0 0.0
      %4340 = vmatpush2.xpose.msra.mxu0 0.0
      %4341 = vmatprep.subr.mxu0 0.0
      %4342 = vmatpush2.xpose.msra.mxu0 0.0
      %4343 = vmatprep.subr.mxu0 0.0
      %4344 = vmatpush2.xpose.msra.mxu0 0.0
      %4345 = vmatprep.subr.mxu0 0.0
      %4346 = vmatpush2.xpose.msra.mxu0 0.0
      %4347 = vmatprep.subr.mxu0 0.0
      %4348 = vmatpush2.xpose.msra.mxu0 0.0
      %4349 = vmatprep.subr.mxu0 0.0
      %4350 = vmatpush2.xpose.msra.mxu0 0.0
      %4351 = vmatprep.subr.mxu0 0.0
      %4352 = vmatpush2.xpose.msra.mxu0 0.0
      %4353 = vmatprep.subr.mxu0 0.0
      %4354 = vmatpush2.xpose.msra.mxu0 0.0
      %4355 = vmatprep.subr.mxu0 0.0
      %4356 = vmatpush2.xpose.msra.mxu0 0.0
      %4357 = vmatprep.subr.mxu0 0.0
      %4358 = vmatpush2.xpose.msra.mxu0 0.0
      %4359 = vmatprep.subr.mxu0 0.0
      %4360 = vmatpush2.xpose.msra.mxu0 0.0
      %4361 = vmatprep.subr.mxu0 0.0
      %4362 = vmatpush2.xpose.msra.mxu0 0.0
      %4363 = vmatprep.subr.mxu0 0.0
      %4364 = vmatpush2.xpose.msra.mxu0 0.0
      %4365 = vmatprep.subr.mxu0 0.0
      %4366 = vmatpush2.xpose.msra.mxu0 0.0
      %4367 = vmatprep.subr.mxu0 0.0
      %4368 = vmatpush2.xpose.msra.mxu0 0.0
      %4369 = vmatprep.subr.mxu0 0.0
      %4370 = vmatpush2.xpose.msra.mxu0 0.0
      %4371 = vmatprep.mubr.f32.mxu0 0.0
      %4372 = vmatmul.mubr.f32.gmra.mxu0 %v4279
      %v4373 = vpop.f32.mrf.mxu0
      %v4374 = vadd.f32 0.0, %v4373
      %v4375 = vpop.f32.mrf.mxu0
      %4376 = vmatprep.mubr.f32.mxu0 0.0
      %4377 = vmatmul.mubr.f32.gmra.mxu0 %v4281
      %v4378 = vpop.f32.mrf.mxu0
      %v4379 = vadd.f32 0.0, %v4378
      %v4380 = vpop.f32.mrf.mxu0
      %4381 = vmatprep.mubr.f32.mxu0 0.0
      %4382 = vmatmul.mubr.f32.gmra.mxu0 %v4283
      %v4383 = vpop.f32.mrf.mxu0
      %v4384 = vadd.f32 0.0, %v4383
      %v4385 = vpop.f32.mrf.mxu0
      %4386 = vmatprep.mubr.f32.mxu0 0.0
      %4387 = vmatmul.mubr.f32.gmra.mxu0 %v4285
      %v4388 = vpop.f32.mrf.mxu0
      %v4389 = vadd.f32 0.0, %v4388
      %v4390 = vpop.f32.mrf.mxu0
      %4391 = vmatprep.mubr.f32.mxu0 0.0
      %4392 = vmatmul.mubr.f32.gmra.mxu0 %v4287
      %v4393 = vpop.f32.mrf.mxu0
      %v4394 = vadd.f32 0.0, %v4393
      %v4395 = vpop.f32.mrf.mxu0
      %4396 = vmatprep.mubr.f32.mxu0 0.0
      %4397 = vmatmul.mubr.f32.gmra.mxu0 %v4289
      %v4398 = vpop.f32.mrf.mxu0
      %v4399 = vadd.f32 0.0, %v4398
      %v4400 = vpop.f32.mrf.mxu0
      %4401 = vmatprep.mubr.f32.mxu0 0.0
      %4402 = vmatmul.mubr.f32.gmra.mxu0 %v4291
      %v4403 = vpop.f32.mrf.mxu0
      %v4404 = vadd.f32 0.0, %v4403
      %v4405 = vpop.f32.mrf.mxu0
      %4406 = vdwg.mxu0
      %v4407 = vmul.f32 %v4374, 0.35355338
      %v4408 = vmul.f32 %v4379, 0.35355338
      %v4409 = vmul.f32 %v4384, 0.35355338
      %v4410 = vmul.f32 %v4389, 0.35355338
      %v4411 = vmul.f32 %v4394, 0.35355338
      %v4412 = vmul.f32 %v4399, 0.35355338
      %v4413 = vmul.f32 %v4404, 0.35355338
      %v4414 = vadd.f32 %v4407, %v830
      %v4415 = vadd.f32 %v4408, %v831
      %v4416 = vadd.f32 %v4409, %v832
      %v4417 = vadd.f32 %v4410, %v833
      %v4418 = vadd.f32 %v4411, %v834
      %v4419 = vadd.f32 %v4412, %v835
      %v4420 = vadd.f32 %v4413, %v836
      %v4421 = vsel %vm1008, %v4414, -inf
      %4422 = vmax.xlane.f32.xlu0 %v4421
      %v4423 = vpop.xlane.xlu0 %4422
      %v4424 = vsel %vm1008, %v4415, -inf
      %4425 = vmax.xlane.f32.xlu0 %v4424
      %v4426 = vpop.xlane.xlu0 %4425
      %v4427 = vsel %vm1008, %v4416, -inf
      %4428 = vmax.xlane.f32.xlu0 %v4427
      %v4429 = vpop.xlane.xlu0 %4428
      %v4430 = vsel %vm1008, %v4417, -inf
      %4431 = vmax.xlane.f32.xlu0 %v4430
      %v4432 = vpop.xlane.xlu0 %4431
      %v4433 = vsel %vm1008, %v4418, -inf
      %4434 = vmax.xlane.f32.xlu0 %v4433
      %v4435 = vpop.xlane.xlu0 %4434
      %v4436 = vsel %vm1008, %v4419, -inf
      %4437 = vmax.xlane.f32.xlu0 %v4436
      %v4438 = vpop.xlane.xlu0 %4437
      %v4439 = vsel %vm1027, %v4420, -inf
      %4440 = vmax.xlane.f32.xlu0 %v4439
      %v4441 = vpop.xlane.xlu0 %4440
      %v4442 = vsub.f32 %v4414, %v4423
      %v4443 = vsub.f32 %v4415, %v4426
      %v4444 = vsub.f32 %v4416, %v4429
      %v4445 = vsub.f32 %v4417, %v4432
      %v4446 = vsub.f32 %v4418, %v4435
      %v4447 = vsub.f32 %v4419, %v4438
      %v4448 = vsub.f32 %v4420, %v4441
      %v4449 = vmul.f32 %v4442, 1.442695
      %v4450 = vpow.pop %v4449
      %v4451 = vmul.f32 %v4443, 1.442695
      %v4452 = vpow.pop %v4451
      %v4453 = vmul.f32 %v4444, 1.442695
      %v4454 = vpow.pop %v4453
      %v4455 = vmul.f32 %v4445, 1.442695
      %v4456 = vpow.pop %v4455
      %v4457 = vmul.f32 %v4446, 1.442695
      %v4458 = vpow.pop %v4457
      %v4459 = vmul.f32 %v4447, 1.442695
      %v4460 = vpow.pop %v4459
      %v4461 = vmul.f32 %v4448, 1.442695
      %v4462 = vpow.pop %v4461
      %v4463 = vsel %vm1008, %v4450, 0.0
      %4464 = vadd.xlane.f32.xlu0 %v4463
      %v4465 = vpop.xlane.xlu0 %4464
      %v4466 = vsel %vm1008, %v4452, 0.0
      %4467 = vadd.xlane.f32.xlu0 %v4466
      %v4468 = vpop.xlane.xlu0 %4467
      %v4469 = vsel %vm1008, %v4454, 0.0
      %4470 = vadd.xlane.f32.xlu0 %v4469
      %v4471 = vpop.xlane.xlu0 %4470
      %v4472 = vsel %vm1008, %v4456, 0.0
      %4473 = vadd.xlane.f32.xlu0 %v4472
      %v4474 = vpop.xlane.xlu0 %4473
      %v4475 = vsel %vm1008, %v4458, 0.0
      %4476 = vadd.xlane.f32.xlu0 %v4475
      %v4477 = vpop.xlane.xlu0 %4476
      %v4478 = vsel %vm1008, %v4460, 0.0
      %4479 = vadd.xlane.f32.xlu0 %v4478
      %v4480 = vpop.xlane.xlu0 %4479
      %v4481 = vsel %vm1027, %v4462, 0.0
      %4482 = vadd.xlane.f32.xlu0 %v4481
      %v4483 = vpop.xlane.xlu0 %4482
      %v4484 = vrcp.pop %v4465
      %v4485 = vrcp.pop %v4468
      %v4486 = vrcp.pop %v4471
      %v4487 = vrcp.pop %v4474
      %v4488 = vrcp.pop %v4477
      %v4489 = vrcp.pop %v4480
      %v4490 = vrcp.pop %v4483
      %v4491 = vmul.f32 %v4450, %v4484
      %v4492 = vmul.f32 %v4452, %v4485
      %v4493 = vmul.f32 %v4454, %v4486
      %v4494 = vmul.f32 %v4456, %v4487
      %v4495 = vmul.f32 %v4458, %v4488
      %v4496 = vmul.f32 %v4460, %v4489
      %v4497 = vmul.f32 %v4462, %v4490
      %s4498 = scalar_lea.vmem %s269, 448
      %4499 = vst.msk [vmem:[%s4498] sm:$0xff] %vm1008, %v4491
      %4500 = vst.msk [vmem:[%s4498 + $0x8] sm:$0xff] %vm1008, %v4492
      %4501 = vst.msk [vmem:[%s4498 + $0x10] sm:$0xff] %vm1008, %v4493
      %4502 = vst.msk [vmem:[%s4498 + $0x18] sm:$0xff] %vm1008, %v4494
      %4503 = vst.msk [vmem:[%s4498 + $0x20] sm:$0xff] %vm1008, %v4495
      %4504 = vst.msk [vmem:[%s4498 + $0x28] sm:$0xff] %vm1008, %v4496
      %4505 = vst.msk [vmem:[%s4498 + $0x30] sm:$0x1] %vm1027, %v4497
      %4506 = vrot.lane.b32.xlu0 %v4251, 96
      %v4507 = vpop.permute.xlu0 %4506
      %4508 = vrot.lane.b32.xlu0 %v4252, 96
      %v4509 = vpop.permute.xlu0 %4508
      %4510 = vrot.lane.b32.xlu0 %v4253, 96
      %v4511 = vpop.permute.xlu0 %4510
      %4512 = vrot.lane.b32.xlu0 %v4254, 96
      %v4513 = vpop.permute.xlu0 %4512
      %4514 = vrot.lane.b32.xlu0 %v4255, 96
      %v4515 = vpop.permute.xlu0 %4514
      %4516 = vrot.lane.b32.xlu0 %v4256, 96
      %v4517 = vpop.permute.xlu0 %4516
      %4518 = vrot.lane.b32.xlu0 %v4257, 96
      %v4519 = vpop.permute.xlu0 %4518
      %v4527 = vsel %vm1008, %v4491, 0
      %v4530 = vsel %vm1008, %v4492, 0
      %v4533 = vsel %vm1008, %v4493, 0
      %v4536 = vsel %vm1008, %v4494, 0
      %v4539 = vsel %vm1008, %v4495, 0
      %v4542 = vsel %vm1008, %v4496, 0
      %v4545 = vsel %vm1008, %v4497, 0
      %v4547 = vsel %vm1135, %v4519, 0
      %4549 = vmatprep.subr.mxu0 0.0
      %4550 = vmatpush1.msra.mxu0 0.0
      %4551 = vmatprep.subr.mxu0 0.0
      %4552 = vmatpush1.msra.mxu0 0.0
      %4553 = vmatprep.subr.mxu0 0.0
      %4554 = vmatpush1.msra.mxu0 0.0
      %4555 = vmatprep.subr.mxu0 0.0
      %4556 = vmatpush1.msra.mxu0 0.0
      %4557 = vmatprep.subr.mxu0 0.0
      %4558 = vmatpush1.msra.mxu0 0.0
      %4559 = vmatprep.subr.mxu0 0.0
      %4560 = vmatpush1.msra.mxu0 0.0
      %4561 = vmatprep.subr.mxu0 0.0
      %4562 = vmatpush1.msra.mxu0 0.0
      %4563 = vmatprep.subr.mxu0 0.0
      %4564 = vmatpush1.msra.mxu0 0.0
      %4565 = vmatprep.subr.mxu0 0.0
      %4566 = vmatpush1.msra.mxu0 0.0
      %4567 = vmatprep.subr.mxu0 0.0
      %4568 = vmatpush1.msra.mxu0 %v4547
      %4569 = vmatprep.subr.mxu0 0.0
      %4570 = vmatpush1.msra.mxu0 %v4517
      %4571 = vmatprep.subr.mxu0 0.0
      %4572 = vmatpush1.msra.mxu0 %v4515
      %4573 = vmatprep.subr.mxu0 0.0
      %4574 = vmatpush1.msra.mxu0 %v4513
      %4575 = vmatprep.subr.mxu0 0.0
      %4576 = vmatpush1.msra.mxu0 %v4511
      %4577 = vmatprep.subr.mxu0 0.0
      %4578 = vmatpush1.msra.mxu0 %v4509
      %4579 = vmatprep.subr.mxu0 0.0
      %4580 = vmatpush1.msra.mxu0 %v4507
      %4581 = vmatprep.subr.mxu0 0.0
      %4582 = vmatpush2.msra.mxu0 0.0
      %4583 = vmatprep.subr.mxu0 0.0
      %4584 = vmatpush2.msra.mxu0 0.0
      %4585 = vmatprep.subr.mxu0 0.0
      %4586 = vmatpush2.msra.mxu0 0.0
      %4587 = vmatprep.subr.mxu0 0.0
      %4588 = vmatpush2.msra.mxu0 0.0
      %4589 = vmatprep.subr.mxu0 0.0
      %4590 = vmatpush2.msra.mxu0 0.0
      %4591 = vmatprep.subr.mxu0 0.0
      %4592 = vmatpush2.msra.mxu0 0.0
      %4593 = vmatprep.subr.mxu0 0.0
      %4594 = vmatpush2.msra.mxu0 0.0
      %4595 = vmatprep.subr.mxu0 0.0
      %4596 = vmatpush2.msra.mxu0 0.0
      %4597 = vmatprep.subr.mxu0 0.0
      %4598 = vmatpush2.msra.mxu0 0.0
      %4599 = vmatprep.subr.mxu0 0.0
      %4600 = vmatpush2.msra.mxu0 0.0
      %4601 = vmatprep.subr.mxu0 0.0
      %4602 = vmatpush2.msra.mxu0 0.0
      %4603 = vmatprep.subr.mxu0 0.0
      %4604 = vmatpush2.msra.mxu0 0.0
      %4605 = vmatprep.subr.mxu0 0.0
      %4606 = vmatpush2.msra.mxu0 0.0
      %4607 = vmatprep.subr.mxu0 0.0
      %4608 = vmatpush2.msra.mxu0 0.0
      %4609 = vmatprep.subr.mxu0 0.0
      %4610 = vmatpush2.msra.mxu0 0.0
      %4611 = vmatprep.subr.mxu0 0.0
      %4612 = vmatpush2.msra.mxu0 0.0
      %4613 = vmatprep.mubr.f32.mxu0 0.0
      %4614 = vmatmul.mubr.f32.gmra.mxu0 %v4527
      %v4615 = vpop.f32.mrf.mxu0
      %v4616 = vadd.f32 0.0, %v4615
      %v4617 = vpop.f32.mrf.mxu0
      %4618 = vmatprep.mubr.f32.mxu0 0.0
      %4619 = vmatmul.mubr.f32.gmra.mxu0 %v4530
      %v4620 = vpop.f32.mrf.mxu0
      %v4621 = vadd.f32 0.0, %v4620
      %v4622 = vpop.f32.mrf.mxu0
      %4623 = vmatprep.mubr.f32.mxu0 0.0
      %4624 = vmatmul.mubr.f32.gmra.mxu0 %v4533
      %v4625 = vpop.f32.mrf.mxu0
      %v4626 = vadd.f32 0.0, %v4625
      %v4627 = vpop.f32.mrf.mxu0
      %4628 = vmatprep.mubr.f32.mxu0 0.0
      %4629 = vmatmul.mubr.f32.gmra.mxu0 %v4536
      %v4630 = vpop.f32.mrf.mxu0
      %v4631 = vadd.f32 0.0, %v4630
      %v4632 = vpop.f32.mrf.mxu0
      %4633 = vmatprep.mubr.f32.mxu0 0.0
      %4634 = vmatmul.mubr.f32.gmra.mxu0 %v4539
      %v4635 = vpop.f32.mrf.mxu0
      %v4636 = vadd.f32 0.0, %v4635
      %v4637 = vpop.f32.mrf.mxu0
      %4638 = vmatprep.mubr.f32.mxu0 0.0
      %4639 = vmatmul.mubr.f32.gmra.mxu0 %v4542
      %v4640 = vpop.f32.mrf.mxu0
      %v4641 = vadd.f32 0.0, %v4640
      %v4642 = vpop.f32.mrf.mxu0
      %4643 = vmatprep.mubr.f32.mxu0 0.0
      %4644 = vmatmul.mubr.f32.gmra.mxu0 %v4545
      %v4645 = vpop.f32.mrf.mxu0
      %v4646 = vadd.f32 0.0, %v4645
      %v4647 = vpop.f32.mrf.mxu0
      %4648 = vdwg.mxu0
      %4649 = vst.msk [vmem:[#allocation3 + $0xc4] sm:$0xff] %vm865, %v4616
      %4650 = vst.msk [vmem:[#allocation3 + $0xcc] sm:$0xff] %vm865, %v4621
      %4651 = vst.msk [vmem:[#allocation3 + $0xd4] sm:$0xff] %vm865, %v4626
      %4652 = vst.msk [vmem:[#allocation3 + $0xdc] sm:$0xff] %vm865, %v4631
      %4653 = vst.msk [vmem:[#allocation3 + $0xe4] sm:$0xff] %vm865, %v4636
      %4654 = vst.msk [vmem:[#allocation3 + $0xec] sm:$0xff] %vm865, %v4641
      %4655 = vst.msk [vmem:[#allocation3 + $0xf4] sm:$0x1] %vm1244, %v4646
      %v4656 = vld [vmem:[#allocation2 + $0xc4] sm:$0xff]
      %v4657 = vld [vmem:[#allocation2 + $0xcc] sm:$0xff]
      %v4658 = vld [vmem:[#allocation2 + $0xd4] sm:$0xff]
      %v4659 = vld [vmem:[#allocation2 + $0xdc] sm:$0xff]
      %v4660 = vld [vmem:[#allocation2 + $0xe4] sm:$0xff]
      %v4661 = vld [vmem:[#allocation2 + $0xec] sm:$0xff]
      %v4662 = vld [vmem:[#allocation2 + $0xf4] sm:$0x1]
      %4670 = vrot.lane.b32.xlu0 %v4656, 120
      %v4671 = vpop.permute.xlu0 %4670
      %4672 = vrot.lane.b32.xlu0 %v4657, 120
      %v4673 = vpop.permute.xlu0 %4672
      %4674 = vrot.lane.b32.xlu0 %v4658, 120
      %v4675 = vpop.permute.xlu0 %4674
      %4676 = vrot.lane.b32.xlu0 %v4659, 120
      %v4677 = vpop.permute.xlu0 %4676
      %4678 = vrot.lane.b32.xlu0 %v4660, 120
      %v4679 = vpop.permute.xlu0 %4678
      %4680 = vrot.lane.b32.xlu0 %v4661, 120
      %v4681 = vpop.permute.xlu0 %4680
      %4682 = vrot.lane.b32.xlu0 %v4662, 120
      %v4683 = vpop.permute.xlu0 %4682
      %4684 = vrot.lane.b32.xlu0 %v4656, 104
      %v4685 = vpop.permute.xlu0 %4684
      %4686 = vrot.lane.b32.xlu0 %v4657, 104
      %v4687 = vpop.permute.xlu0 %4686
      %4688 = vrot.lane.b32.xlu0 %v4658, 104
      %v4689 = vpop.permute.xlu0 %4688
      %4690 = vrot.lane.b32.xlu0 %v4659, 104
      %v4691 = vpop.permute.xlu0 %4690
      %4692 = vrot.lane.b32.xlu0 %v4660, 104
      %v4693 = vpop.permute.xlu0 %4692
      %4694 = vrot.lane.b32.xlu0 %v4661, 104
      %v4695 = vpop.permute.xlu0 %4694
      %4696 = vrot.lane.b32.xlu0 %v4662, 104
      %v4697 = vpop.permute.xlu0 %4696
      %v4698 = vsel %vm865, %v4671, 0
      %v4700 = vsel %vm865, %v4673, 0
      %v4702 = vsel %vm865, %v4675, 0
      %v4704 = vsel %vm865, %v4677, 0
      %v4706 = vsel %vm865, %v4679, 0
      %v4708 = vsel %vm865, %v4681, 0
      %v4710 = vsel %vm865, %v4683, 0
      %v4712 = vsel %vm865, %v4685, 0
      %v4714 = vsel %vm865, %v4687, 0
      %v4716 = vsel %vm865, %v4689, 0
      %v4718 = vsel %vm865, %v4691, 0
      %v4720 = vsel %vm865, %v4693, 0
      %v4722 = vsel %vm865, %v4695, 0
      %v4724 = vsel %vm865, %v4697, 0
      %4726 = vmatprep.subr.mxu0 0.0
      %4727 = vmatpush1.xpose.msra.mxu0 0.0
      %4728 = vmatprep.subr.mxu0 0.0
      %4729 = vmatpush1.xpose.msra.mxu0 0.0
      %4730 = vmatprep.subr.mxu0 0.0
      %4731 = vmatpush1.xpose.msra.mxu0 0.0
      %4732 = vmatprep.subr.mxu0 0.0
      %4733 = vmatpush1.xpose.msra.mxu0 0.0
      %4734 = vmatprep.subr.mxu0 0.0
      %4735 = vmatpush1.xpose.msra.mxu0 0.0
      %4736 = vmatprep.subr.mxu0 0.0
      %4737 = vmatpush1.xpose.msra.mxu0 0.0
      %4738 = vmatprep.subr.mxu0 0.0
      %4739 = vmatpush1.xpose.msra.mxu0 0.0
      %4740 = vmatprep.subr.mxu0 0.0
      %4741 = vmatpush1.xpose.msra.mxu0 0.0
      %4742 = vmatprep.subr.mxu0 0.0
      %4743 = vmatpush1.xpose.msra.mxu0 0.0
      %4744 = vmatprep.subr.mxu0 0.0
      %4745 = vmatpush1.xpose.msra.mxu0 %v4724
      %4746 = vmatprep.subr.mxu0 0.0
      %4747 = vmatpush1.xpose.msra.mxu0 %v4722
      %4748 = vmatprep.subr.mxu0 0.0
      %4749 = vmatpush1.xpose.msra.mxu0 %v4720
      %4750 = vmatprep.subr.mxu0 0.0
      %4751 = vmatpush1.xpose.msra.mxu0 %v4718
      %4752 = vmatprep.subr.mxu0 0.0
      %4753 = vmatpush1.xpose.msra.mxu0 %v4716
      %4754 = vmatprep.subr.mxu0 0.0
      %4755 = vmatpush1.xpose.msra.mxu0 %v4714
      %4756 = vmatprep.subr.mxu0 0.0
      %4757 = vmatpush1.xpose.msra.mxu0 %v4712
      %4758 = vmatprep.subr.mxu0 0.0
      %4759 = vmatpush2.xpose.msra.mxu0 0.0
      %4760 = vmatprep.subr.mxu0 0.0
      %4761 = vmatpush2.xpose.msra.mxu0 0.0
      %4762 = vmatprep.subr.mxu0 0.0
      %4763 = vmatpush2.xpose.msra.mxu0 0.0
      %4764 = vmatprep.subr.mxu0 0.0
      %4765 = vmatpush2.xpose.msra.mxu0 0.0
      %4766 = vmatprep.subr.mxu0 0.0
      %4767 = vmatpush2.xpose.msra.mxu0 0.0
      %4768 = vmatprep.subr.mxu0 0.0
      %4769 = vmatpush2.xpose.msra.mxu0 0.0
      %4770 = vmatprep.subr.mxu0 0.0
      %4771 = vmatpush2.xpose.msra.mxu0 0.0
      %4772 = vmatprep.subr.mxu0 0.0
      %4773 = vmatpush2.xpose.msra.mxu0 0.0
      %4774 = vmatprep.subr.mxu0 0.0
      %4775 = vmatpush2.xpose.msra.mxu0 0.0
      %4776 = vmatprep.subr.mxu0 0.0
      %4777 = vmatpush2.xpose.msra.mxu0 0.0
      %4778 = vmatprep.subr.mxu0 0.0
      %4779 = vmatpush2.xpose.msra.mxu0 0.0
      %4780 = vmatprep.subr.mxu0 0.0
      %4781 = vmatpush2.xpose.msra.mxu0 0.0
      %4782 = vmatprep.subr.mxu0 0.0
      %4783 = vmatpush2.xpose.msra.mxu0 0.0
      %4784 = vmatprep.subr.mxu0 0.0
      %4785 = vmatpush2.xpose.msra.mxu0 0.0
      %4786 = vmatprep.subr.mxu0 0.0
      %4787 = vmatpush2.xpose.msra.mxu0 0.0
      %4788 = vmatprep.subr.mxu0 0.0
      %4789 = vmatpush2.xpose.msra.mxu0 0.0
      %4790 = vmatprep.mubr.f32.mxu0 0.0
      %4791 = vmatmul.mubr.f32.gmra.mxu0 %v4698
      %v4792 = vpop.f32.mrf.mxu0
      %v4793 = vadd.f32 0.0, %v4792
      %v4794 = vpop.f32.mrf.mxu0
      %4795 = vmatprep.mubr.f32.mxu0 0.0
      %4796 = vmatmul.mubr.f32.gmra.mxu0 %v4700
      %v4797 = vpop.f32.mrf.mxu0
      %v4798 = vadd.f32 0.0, %v4797
      %v4799 = vpop.f32.mrf.mxu0
      %4800 = vmatprep.mubr.f32.mxu0 0.0
      %4801 = vmatmul.mubr.f32.gmra.mxu0 %v4702
      %v4802 = vpop.f32.mrf.mxu0
      %v4803 = vadd.f32 0.0, %v4802
      %v4804 = vpop.f32.mrf.mxu0
      %4805 = vmatprep.mubr.f32.mxu0 0.0
      %4806 = vmatmul.mubr.f32.gmra.mxu0 %v4704
      %v4807 = vpop.f32.mrf.mxu0
      %v4808 = vadd.f32 0.0, %v4807
      %v4809 = vpop.f32.mrf.mxu0
      %4810 = vmatprep.mubr.f32.mxu0 0.0
      %4811 = vmatmul.mubr.f32.gmra.mxu0 %v4706
      %v4812 = vpop.f32.mrf.mxu0
      %v4813 = vadd.f32 0.0, %v4812
      %v4814 = vpop.f32.mrf.mxu0
      %4815 = vmatprep.mubr.f32.mxu0 0.0
      %4816 = vmatmul.mubr.f32.gmra.mxu0 %v4708
      %v4817 = vpop.f32.mrf.mxu0
      %v4818 = vadd.f32 0.0, %v4817
      %v4819 = vpop.f32.mrf.mxu0
      %4820 = vmatprep.mubr.f32.mxu0 0.0
      %4821 = vmatmul.mubr.f32.gmra.mxu0 %v4710
      %v4822 = vpop.f32.mrf.mxu0
      %v4823 = vadd.f32 0.0, %v4822
      %v4824 = vpop.f32.mrf.mxu0
      %4825 = vdwg.mxu0
      %v4826 = vmul.f32 %v4793, 0.35355338
      %v4827 = vmul.f32 %v4798, 0.35355338
      %v4828 = vmul.f32 %v4803, 0.35355338
      %v4829 = vmul.f32 %v4808, 0.35355338
      %v4830 = vmul.f32 %v4813, 0.35355338
      %v4831 = vmul.f32 %v4818, 0.35355338
      %v4832 = vmul.f32 %v4823, 0.35355338
      %v4833 = vadd.f32 %v4826, %v830
      %v4834 = vadd.f32 %v4827, %v831
      %v4835 = vadd.f32 %v4828, %v832
      %v4836 = vadd.f32 %v4829, %v833
      %v4837 = vadd.f32 %v4830, %v834
      %v4838 = vadd.f32 %v4831, %v835
      %v4839 = vadd.f32 %v4832, %v836
      %v4840 = vsel %vm1008, %v4833, -inf
      %4841 = vmax.xlane.f32.xlu0 %v4840
      %v4842 = vpop.xlane.xlu0 %4841
      %v4843 = vsel %vm1008, %v4834, -inf
      %4844 = vmax.xlane.f32.xlu0 %v4843
      %v4845 = vpop.xlane.xlu0 %4844
      %v4846 = vsel %vm1008, %v4835, -inf
      %4847 = vmax.xlane.f32.xlu0 %v4846
      %v4848 = vpop.xlane.xlu0 %4847
      %v4849 = vsel %vm1008, %v4836, -inf
      %4850 = vmax.xlane.f32.xlu0 %v4849
      %v4851 = vpop.xlane.xlu0 %4850
      %v4852 = vsel %vm1008, %v4837, -inf
      %4853 = vmax.xlane.f32.xlu0 %v4852
      %v4854 = vpop.xlane.xlu0 %4853
      %v4855 = vsel %vm1008, %v4838, -inf
      %4856 = vmax.xlane.f32.xlu0 %v4855
      %v4857 = vpop.xlane.xlu0 %4856
      %v4858 = vsel %vm1027, %v4839, -inf
      %4859 = vmax.xlane.f32.xlu0 %v4858
      %v4860 = vpop.xlane.xlu0 %4859
      %v4861 = vsub.f32 %v4833, %v4842
      %v4862 = vsub.f32 %v4834, %v4845
      %v4863 = vsub.f32 %v4835, %v4848
      %v4864 = vsub.f32 %v4836, %v4851
      %v4865 = vsub.f32 %v4837, %v4854
      %v4866 = vsub.f32 %v4838, %v4857
      %v4867 = vsub.f32 %v4839, %v4860
      %v4868 = vmul.f32 %v4861, 1.442695
      %v4869 = vpow.pop %v4868
      %v4870 = vmul.f32 %v4862, 1.442695
      %v4871 = vpow.pop %v4870
      %v4872 = vmul.f32 %v4863, 1.442695
      %v4873 = vpow.pop %v4872
      %v4874 = vmul.f32 %v4864, 1.442695
      %v4875 = vpow.pop %v4874
      %v4876 = vmul.f32 %v4865, 1.442695
      %v4877 = vpow.pop %v4876
      %v4878 = vmul.f32 %v4866, 1.442695
      %v4879 = vpow.pop %v4878
      %v4880 = vmul.f32 %v4867, 1.442695
      %v4881 = vpow.pop %v4880
      %v4882 = vsel %vm1008, %v4869, 0.0
      %4883 = vadd.xlane.f32.xlu0 %v4882
      %v4884 = vpop.xlane.xlu0 %4883
      %v4885 = vsel %vm1008, %v4871, 0.0
      %4886 = vadd.xlane.f32.xlu0 %v4885
      %v4887 = vpop.xlane.xlu0 %4886
      %v4888 = vsel %vm1008, %v4873, 0.0
      %4889 = vadd.xlane.f32.xlu0 %v4888
      %v4890 = vpop.xlane.xlu0 %4889
      %v4891 = vsel %vm1008, %v4875, 0.0
      %4892 = vadd.xlane.f32.xlu0 %v4891
      %v4893 = vpop.xlane.xlu0 %4892
      %v4894 = vsel %vm1008, %v4877, 0.0
      %4895 = vadd.xlane.f32.xlu0 %v4894
      %v4896 = vpop.xlane.xlu0 %4895
      %v4897 = vsel %vm1008, %v4879, 0.0
      %4898 = vadd.xlane.f32.xlu0 %v4897
      %v4899 = vpop.xlane.xlu0 %4898
      %v4900 = vsel %vm1027, %v4881, 0.0
      %4901 = vadd.xlane.f32.xlu0 %v4900
      %v4902 = vpop.xlane.xlu0 %4901
      %v4903 = vrcp.pop %v4884
      %v4904 = vrcp.pop %v4887
      %v4905 = vrcp.pop %v4890
      %v4906 = vrcp.pop %v4893
      %v4907 = vrcp.pop %v4896
      %v4908 = vrcp.pop %v4899
      %v4909 = vrcp.pop %v4902
      %v4910 = vmul.f32 %v4869, %v4903
      %v4911 = vmul.f32 %v4871, %v4904
      %v4912 = vmul.f32 %v4873, %v4905
      %v4913 = vmul.f32 %v4875, %v4906
      %v4914 = vmul.f32 %v4877, %v4907
      %v4915 = vmul.f32 %v4879, %v4908
      %v4916 = vmul.f32 %v4881, %v4909
      %s4917 = scalar_lea.vmem %s269, 504
      %4918 = vst.msk [vmem:[%s4917] sm:$0xff] %vm1008, %v4910
      %4919 = vst.msk [vmem:[%s4917 + $0x8] sm:$0xff] %vm1008, %v4911
      %4920 = vst.msk [vmem:[%s4917 + $0x10] sm:$0xff] %vm1008, %v4912
      %4921 = vst.msk [vmem:[%s4917 + $0x18] sm:$0xff] %vm1008, %v4913
      %4922 = vst.msk [vmem:[%s4917 + $0x20] sm:$0xff] %vm1008, %v4914
      %4923 = vst.msk [vmem:[%s4917 + $0x28] sm:$0xff] %vm1008, %v4915
      %4924 = vst.msk [vmem:[%s4917 + $0x30] sm:$0x1] %vm1027, %v4916
      %4925 = vrot.lane.b32.xlu0 %v4656, 88
      %v4926 = vpop.permute.xlu0 %4925
      %4927 = vrot.lane.b32.xlu0 %v4657, 88
      %v4928 = vpop.permute.xlu0 %4927
      %4929 = vrot.lane.b32.xlu0 %v4658, 88
      %v4930 = vpop.permute.xlu0 %4929
      %4931 = vrot.lane.b32.xlu0 %v4659, 88
      %v4932 = vpop.permute.xlu0 %4931
      %4933 = vrot.lane.b32.xlu0 %v4660, 88
      %v4934 = vpop.permute.xlu0 %4933
      %4935 = vrot.lane.b32.xlu0 %v4661, 88
      %v4936 = vpop.permute.xlu0 %4935
      %4937 = vrot.lane.b32.xlu0 %v4662, 88
      %v4938 = vpop.permute.xlu0 %4937
      %v4946 = vsel %vm1008, %v4910, 0
      %v4949 = vsel %vm1008, %v4911, 0
      %v4952 = vsel %vm1008, %v4912, 0
      %v4955 = vsel %vm1008, %v4913, 0
      %v4958 = vsel %vm1008, %v4914, 0
      %v4961 = vsel %vm1008, %v4915, 0
      %v4964 = vsel %vm1008, %v4916, 0
      %v4966 = vsel %vm1135, %v4938, 0
      %4968 = vmatprep.subr.mxu0 0.0
      %4969 = vmatpush1.msra.mxu0 0.0
      %4970 = vmatprep.subr.mxu0 0.0
      %4971 = vmatpush1.msra.mxu0 0.0
      %4972 = vmatprep.subr.mxu0 0.0
      %4973 = vmatpush1.msra.mxu0 0.0
      %4974 = vmatprep.subr.mxu0 0.0
      %4975 = vmatpush1.msra.mxu0 0.0
      %4976 = vmatprep.subr.mxu0 0.0
      %4977 = vmatpush1.msra.mxu0 0.0
      %4978 = vmatprep.subr.mxu0 0.0
      %4979 = vmatpush1.msra.mxu0 0.0
      %4980 = vmatprep.subr.mxu0 0.0
      %4981 = vmatpush1.msra.mxu0 0.0
      %4982 = vmatprep.subr.mxu0 0.0
      %4983 = vmatpush1.msra.mxu0 0.0
      %4984 = vmatprep.subr.mxu0 0.0
      %4985 = vmatpush1.msra.mxu0 0.0
      %4986 = vmatprep.subr.mxu0 0.0
      %4987 = vmatpush1.msra.mxu0 %v4966
      %4988 = vmatprep.subr.mxu0 0.0
      %4989 = vmatpush1.msra.mxu0 %v4936
      %4990 = vmatprep.subr.mxu0 0.0
      %4991 = vmatpush1.msra.mxu0 %v4934
      %4992 = vmatprep.subr.mxu0 0.0
      %4993 = vmatpush1.msra.mxu0 %v4932
      %4994 = vmatprep.subr.mxu0 0.0
      %4995 = vmatpush1.msra.mxu0 %v4930
      %4996 = vmatprep.subr.mxu0 0.0
      %4997 = vmatpush1.msra.mxu0 %v4928
      %4998 = vmatprep.subr.mxu0 0.0
      %4999 = vmatpush1.msra.mxu0 %v4926
      %5000 = vmatprep.subr.mxu0 0.0
      %5001 = vmatpush2.msra.mxu0 0.0
      %5002 = vmatprep.subr.mxu0 0.0
      %5003 = vmatpush2.msra.mxu0 0.0
      %5004 = vmatprep.subr.mxu0 0.0
      %5005 = vmatpush2.msra.mxu0 0.0
      %5006 = vmatprep.subr.mxu0 0.0
      %5007 = vmatpush2.msra.mxu0 0.0
      %5008 = vmatprep.subr.mxu0 0.0
      %5009 = vmatpush2.msra.mxu0 0.0
      %5010 = vmatprep.subr.mxu0 0.0
      %5011 = vmatpush2.msra.mxu0 0.0
      %5012 = vmatprep.subr.mxu0 0.0
      %5013 = vmatpush2.msra.mxu0 0.0
      %5014 = vmatprep.subr.mxu0 0.0
      %5015 = vmatpush2.msra.mxu0 0.0
      %5016 = vmatprep.subr.mxu0 0.0
      %5017 = vmatpush2.msra.mxu0 0.0
      %5018 = vmatprep.subr.mxu0 0.0
      %5019 = vmatpush2.msra.mxu0 0.0
      %5020 = vmatprep.subr.mxu0 0.0
      %5021 = vmatpush2.msra.mxu0 0.0
      %5022 = vmatprep.subr.mxu0 0.0
      %5023 = vmatpush2.msra.mxu0 0.0
      %5024 = vmatprep.subr.mxu0 0.0
      %5025 = vmatpush2.msra.mxu0 0.0
      %5026 = vmatprep.subr.mxu0 0.0
      %5027 = vmatpush2.msra.mxu0 0.0
      %5028 = vmatprep.subr.mxu0 0.0
      %5029 = vmatpush2.msra.mxu0 0.0
      %5030 = vmatprep.subr.mxu0 0.0
      %5031 = vmatpush2.msra.mxu0 0.0
      %5032 = vmatprep.mubr.f32.mxu0 0.0
      %5033 = vmatmul.mubr.f32.gmra.mxu0 %v4946
      %v5034 = vpop.f32.mrf.mxu0
      %v5035 = vadd.f32 0.0, %v5034
      %v5036 = vpop.f32.mrf.mxu0
      %5037 = vmatprep.mubr.f32.mxu0 0.0
      %5038 = vmatmul.mubr.f32.gmra.mxu0 %v4949
      %v5039 = vpop.f32.mrf.mxu0
      %v5040 = vadd.f32 0.0, %v5039
      %v5041 = vpop.f32.mrf.mxu0
      %5042 = vmatprep.mubr.f32.mxu0 0.0
      %5043 = vmatmul.mubr.f32.gmra.mxu0 %v4952
      %v5044 = vpop.f32.mrf.mxu0
      %v5045 = vadd.f32 0.0, %v5044
      %v5046 = vpop.f32.mrf.mxu0
      %5047 = vmatprep.mubr.f32.mxu0 0.0
      %5048 = vmatmul.mubr.f32.gmra.mxu0 %v4955
      %v5049 = vpop.f32.mrf.mxu0
      %v5050 = vadd.f32 0.0, %v5049
      %v5051 = vpop.f32.mrf.mxu0
      %5052 = vmatprep.mubr.f32.mxu0 0.0
      %5053 = vmatmul.mubr.f32.gmra.mxu0 %v4958
      %v5054 = vpop.f32.mrf.mxu0
      %v5055 = vadd.f32 0.0, %v5054
      %v5056 = vpop.f32.mrf.mxu0
      %5057 = vmatprep.mubr.f32.mxu0 0.0
      %5058 = vmatmul.mubr.f32.gmra.mxu0 %v4961
      %v5059 = vpop.f32.mrf.mxu0
      %v5060 = vadd.f32 0.0, %v5059
      %v5061 = vpop.f32.mrf.mxu0
      %5062 = vmatprep.mubr.f32.mxu0 0.0
      %5063 = vmatmul.mubr.f32.gmra.mxu0 %v4964
      %v5064 = vpop.f32.mrf.mxu0
      %v5065 = vadd.f32 0.0, %v5064
      %v5066 = vpop.f32.mrf.mxu0
      %5067 = vdwg.mxu0
      %5075 = vrot.lane.b32.xlu0 %v5035, 8
      %v5076 = vpop.permute.xlu0 %5075
      %5077 = vrot.lane.b32.xlu0 %v5040, 8
      %v5078 = vpop.permute.xlu0 %5077
      %5079 = vrot.lane.b32.xlu0 %v5045, 8
      %v5080 = vpop.permute.xlu0 %5079
      %5081 = vrot.lane.b32.xlu0 %v5050, 8
      %v5082 = vpop.permute.xlu0 %5081
      %5083 = vrot.lane.b32.xlu0 %v5055, 8
      %v5084 = vpop.permute.xlu0 %5083
      %5085 = vrot.lane.b32.xlu0 %v5060, 8
      %v5086 = vpop.permute.xlu0 %5085
      %5087 = vrot.lane.b32.xlu0 %v5065, 8
      %v5088 = vpop.permute.xlu0 %5087
      %5096 = vst.msk [vmem:[#allocation3 + $0xc4] sm:$0xff] %vm1686, %v5076
      %5097 = vst.msk [vmem:[#allocation3 + $0xcc] sm:$0xff] %vm1686, %v5078
      %5098 = vst.msk [vmem:[#allocation3 + $0xd4] sm:$0xff] %vm1686, %v5080
      %5099 = vst.msk [vmem:[#allocation3 + $0xdc] sm:$0xff] %vm1686, %v5082
      %5100 = vst.msk [vmem:[#allocation3 + $0xe4] sm:$0xff] %vm1686, %v5084
      %5101 = vst.msk [vmem:[#allocation3 + $0xec] sm:$0xff] %vm1686, %v5086
      %5102 = vst.msk [vmem:[#allocation3 + $0xf4] sm:$0x1] %vm1693, %v5088
      %v5103 = vld [vmem:[#allocation2 + $0xf5] sm:$0xff]
      %v5104 = vld [vmem:[#allocation2 + $0xfd] sm:$0xff]
      %v5105 = vld [vmem:[#allocation2 + $0x105] sm:$0xff]
      %v5106 = vld [vmem:[#allocation2 + $0x10d] sm:$0xff]
      %v5107 = vld [vmem:[#allocation2 + $0x115] sm:$0xff]
      %v5108 = vld [vmem:[#allocation2 + $0x11d] sm:$0xff]
      %v5109 = vld [vmem:[#allocation2 + $0x125] sm:$0x1]
      %5117 = vrot.lane.b32.xlu0 %v5103, 112
      %v5118 = vpop.permute.xlu0 %5117
      %5119 = vrot.lane.b32.xlu0 %v5104, 112
      %v5120 = vpop.permute.xlu0 %5119
      %5121 = vrot.lane.b32.xlu0 %v5105, 112
      %v5122 = vpop.permute.xlu0 %5121
      %5123 = vrot.lane.b32.xlu0 %v5106, 112
      %v5124 = vpop.permute.xlu0 %5123
      %5125 = vrot.lane.b32.xlu0 %v5107, 112
      %v5126 = vpop.permute.xlu0 %5125
      %5127 = vrot.lane.b32.xlu0 %v5108, 112
      %v5128 = vpop.permute.xlu0 %5127
      %5129 = vrot.lane.b32.xlu0 %v5109, 112
      %v5130 = vpop.permute.xlu0 %5129
      %v5131 = vsel %vm865, %v5103, 0
      %v5133 = vsel %vm865, %v5104, 0
      %v5135 = vsel %vm865, %v5105, 0
      %v5137 = vsel %vm865, %v5106, 0
      %v5139 = vsel %vm865, %v5107, 0
      %v5141 = vsel %vm865, %v5108, 0
      %v5143 = vsel %vm865, %v5109, 0
      %v5145 = vsel %vm865, %v5118, 0
      %v5147 = vsel %vm865, %v5120, 0
      %v5149 = vsel %vm865, %v5122, 0
      %v5151 = vsel %vm865, %v5124, 0
      %v5153 = vsel %vm865, %v5126, 0
      %v5155 = vsel %vm865, %v5128, 0
      %v5157 = vsel %vm865, %v5130, 0
      %5159 = vmatprep.subr.mxu0 0.0
      %5160 = vmatpush1.xpose.msra.mxu0 0.0
      %5161 = vmatprep.subr.mxu0 0.0
      %5162 = vmatpush1.xpose.msra.mxu0 0.0
      %5163 = vmatprep.subr.mxu0 0.0
      %5164 = vmatpush1.xpose.msra.mxu0 0.0
      %5165 = vmatprep.subr.mxu0 0.0
      %5166 = vmatpush1.xpose.msra.mxu0 0.0
      %5167 = vmatprep.subr.mxu0 0.0
      %5168 = vmatpush1.xpose.msra.mxu0 0.0
      %5169 = vmatprep.subr.mxu0 0.0
      %5170 = vmatpush1.xpose.msra.mxu0 0.0
      %5171 = vmatprep.subr.mxu0 0.0
      %5172 = vmatpush1.xpose.msra.mxu0 0.0
      %5173 = vmatprep.subr.mxu0 0.0
      %5174 = vmatpush1.xpose.msra.mxu0 0.0
      %5175 = vmatprep.subr.mxu0 0.0
      %5176 = vmatpush1.xpose.msra.mxu0 0.0
      %5177 = vmatprep.subr.mxu0 0.0
      %5178 = vmatpush1.xpose.msra.mxu0 %v5157
      %5179 = vmatprep.subr.mxu0 0.0
      %5180 = vmatpush1.xpose.msra.mxu0 %v5155
      %5181 = vmatprep.subr.mxu0 0.0
      %5182 = vmatpush1.xpose.msra.mxu0 %v5153
      %5183 = vmatprep.subr.mxu0 0.0
      %5184 = vmatpush1.xpose.msra.mxu0 %v5151
      %5185 = vmatprep.subr.mxu0 0.0
      %5186 = vmatpush1.xpose.msra.mxu0 %v5149
      %5187 = vmatprep.subr.mxu0 0.0
      %5188 = vmatpush1.xpose.msra.mxu0 %v5147
      %5189 = vmatprep.subr.mxu0 0.0
      %5190 = vmatpush1.xpose.msra.mxu0 %v5145
      %5191 = vmatprep.subr.mxu0 0.0
      %5192 = vmatpush2.xpose.msra.mxu0 0.0
      %5193 = vmatprep.subr.mxu0 0.0
      %5194 = vmatpush2.xpose.msra.mxu0 0.0
      %5195 = vmatprep.subr.mxu0 0.0
      %5196 = vmatpush2.xpose.msra.mxu0 0.0
      %5197 = vmatprep.subr.mxu0 0.0
      %5198 = vmatpush2.xpose.msra.mxu0 0.0
      %5199 = vmatprep.subr.mxu0 0.0
      %5200 = vmatpush2.xpose.msra.mxu0 0.0
      %5201 = vmatprep.subr.mxu0 0.0
      %5202 = vmatpush2.xpose.msra.mxu0 0.0
      %5203 = vmatprep.subr.mxu0 0.0
      %5204 = vmatpush2.xpose.msra.mxu0 0.0
      %5205 = vmatprep.subr.mxu0 0.0
      %5206 = vmatpush2.xpose.msra.mxu0 0.0
      %5207 = vmatprep.subr.mxu0 0.0
      %5208 = vmatpush2.xpose.msra.mxu0 0.0
      %5209 = vmatprep.subr.mxu0 0.0
      %5210 = vmatpush2.xpose.msra.mxu0 0.0
      %5211 = vmatprep.subr.mxu0 0.0
      %5212 = vmatpush2.xpose.msra.mxu0 0.0
      %5213 = vmatprep.subr.mxu0 0.0
      %5214 = vmatpush2.xpose.msra.mxu0 0.0
      %5215 = vmatprep.subr.mxu0 0.0
      %5216 = vmatpush2.xpose.msra.mxu0 0.0
      %5217 = vmatprep.subr.mxu0 0.0
      %5218 = vmatpush2.xpose.msra.mxu0 0.0
      %5219 = vmatprep.subr.mxu0 0.0
      %5220 = vmatpush2.xpose.msra.mxu0 0.0
      %5221 = vmatprep.subr.mxu0 0.0
      %5222 = vmatpush2.xpose.msra.mxu0 0.0
      %5223 = vmatprep.mubr.f32.mxu0 0.0
      %5224 = vmatmul.mubr.f32.gmra.mxu0 %v5131
      %v5225 = vpop.f32.mrf.mxu0
      %v5226 = vadd.f32 0.0, %v5225
      %v5227 = vpop.f32.mrf.mxu0
      %5228 = vmatprep.mubr.f32.mxu0 0.0
      %5229 = vmatmul.mubr.f32.gmra.mxu0 %v5133
      %v5230 = vpop.f32.mrf.mxu0
      %v5231 = vadd.f32 0.0, %v5230
      %v5232 = vpop.f32.mrf.mxu0
      %5233 = vmatprep.mubr.f32.mxu0 0.0
      %5234 = vmatmul.mubr.f32.gmra.mxu0 %v5135
      %v5235 = vpop.f32.mrf.mxu0
      %v5236 = vadd.f32 0.0, %v5235
      %v5237 = vpop.f32.mrf.mxu0
      %5238 = vmatprep.mubr.f32.mxu0 0.0
      %5239 = vmatmul.mubr.f32.gmra.mxu0 %v5137
      %v5240 = vpop.f32.mrf.mxu0
      %v5241 = vadd.f32 0.0, %v5240
      %v5242 = vpop.f32.mrf.mxu0
      %5243 = vmatprep.mubr.f32.mxu0 0.0
      %5244 = vmatmul.mubr.f32.gmra.mxu0 %v5139
      %v5245 = vpop.f32.mrf.mxu0
      %v5246 = vadd.f32 0.0, %v5245
      %v5247 = vpop.f32.mrf.mxu0
      %5248 = vmatprep.mubr.f32.mxu0 0.0
      %5249 = vmatmul.mubr.f32.gmra.mxu0 %v5141
      %v5250 = vpop.f32.mrf.mxu0
      %v5251 = vadd.f32 0.0, %v5250
      %v5252 = vpop.f32.mrf.mxu0
      %5253 = vmatprep.mubr.f32.mxu0 0.0
      %5254 = vmatmul.mubr.f32.gmra.mxu0 %v5143
      %v5255 = vpop.f32.mrf.mxu0
      %v5256 = vadd.f32 0.0, %v5255
      %v5257 = vpop.f32.mrf.mxu0
      %5258 = vdwg.mxu0
      %v5259 = vmul.f32 %v5226, 0.35355338
      %v5260 = vmul.f32 %v5231, 0.35355338
      %v5261 = vmul.f32 %v5236, 0.35355338
      %v5262 = vmul.f32 %v5241, 0.35355338
      %v5263 = vmul.f32 %v5246, 0.35355338
      %v5264 = vmul.f32 %v5251, 0.35355338
      %v5265 = vmul.f32 %v5256, 0.35355338
      %v5266 = vadd.f32 %v5259, %v830
      %v5267 = vadd.f32 %v5260, %v831
      %v5268 = vadd.f32 %v5261, %v832
      %v5269 = vadd.f32 %v5262, %v833
      %v5270 = vadd.f32 %v5263, %v834
      %v5271 = vadd.f32 %v5264, %v835
      %v5272 = vadd.f32 %v5265, %v836
      %v5273 = vsel %vm1008, %v5266, -inf
      %5274 = vmax.xlane.f32.xlu0 %v5273
      %v5275 = vpop.xlane.xlu0 %5274
      %v5276 = vsel %vm1008, %v5267, -inf
      %5277 = vmax.xlane.f32.xlu0 %v5276
      %v5278 = vpop.xlane.xlu0 %5277
      %v5279 = vsel %vm1008, %v5268, -inf
      %5280 = vmax.xlane.f32.xlu0 %v5279
      %v5281 = vpop.xlane.xlu0 %5280
      %v5282 = vsel %vm1008, %v5269, -inf
      %5283 = vmax.xlane.f32.xlu0 %v5282
      %v5284 = vpop.xlane.xlu0 %5283
      %v5285 = vsel %vm1008, %v5270, -inf
      %5286 = vmax.xlane.f32.xlu0 %v5285
      %v5287 = vpop.xlane.xlu0 %5286
      %v5288 = vsel %vm1008, %v5271, -inf
      %5289 = vmax.xlane.f32.xlu0 %v5288
      %v5290 = vpop.xlane.xlu0 %5289
      %v5291 = vsel %vm1027, %v5272, -inf
      %5292 = vmax.xlane.f32.xlu0 %v5291
      %v5293 = vpop.xlane.xlu0 %5292
      %v5294 = vsub.f32 %v5266, %v5275
      %v5295 = vsub.f32 %v5267, %v5278
      %v5296 = vsub.f32 %v5268, %v5281
      %v5297 = vsub.f32 %v5269, %v5284
      %v5298 = vsub.f32 %v5270, %v5287
      %v5299 = vsub.f32 %v5271, %v5290
      %v5300 = vsub.f32 %v5272, %v5293
      %v5301 = vmul.f32 %v5294, 1.442695
      %v5302 = vpow.pop %v5301
      %v5303 = vmul.f32 %v5295, 1.442695
      %v5304 = vpow.pop %v5303
      %v5305 = vmul.f32 %v5296, 1.442695
      %v5306 = vpow.pop %v5305
      %v5307 = vmul.f32 %v5297, 1.442695
      %v5308 = vpow.pop %v5307
      %v5309 = vmul.f32 %v5298, 1.442695
      %v5310 = vpow.pop %v5309
      %v5311 = vmul.f32 %v5299, 1.442695
      %v5312 = vpow.pop %v5311
      %v5313 = vmul.f32 %v5300, 1.442695
      %v5314 = vpow.pop %v5313
      %v5315 = vsel %vm1008, %v5302, 0.0
      %5316 = vadd.xlane.f32.xlu0 %v5315
      %v5317 = vpop.xlane.xlu0 %5316
      %v5318 = vsel %vm1008, %v5304, 0.0
      %5319 = vadd.xlane.f32.xlu0 %v5318
      %v5320 = vpop.xlane.xlu0 %5319
      %v5321 = vsel %vm1008, %v5306, 0.0
      %5322 = vadd.xlane.f32.xlu0 %v5321
      %v5323 = vpop.xlane.xlu0 %5322
      %v5324 = vsel %vm1008, %v5308, 0.0
      %5325 = vadd.xlane.f32.xlu0 %v5324
      %v5326 = vpop.xlane.xlu0 %5325
      %v5327 = vsel %vm1008, %v5310, 0.0
      %5328 = vadd.xlane.f32.xlu0 %v5327
      %v5329 = vpop.xlane.xlu0 %5328
      %v5330 = vsel %vm1008, %v5312, 0.0
      %5331 = vadd.xlane.f32.xlu0 %v5330
      %v5332 = vpop.xlane.xlu0 %5331
      %v5333 = vsel %vm1027, %v5314, 0.0
      %5334 = vadd.xlane.f32.xlu0 %v5333
      %v5335 = vpop.xlane.xlu0 %5334
      %v5336 = vrcp.pop %v5317
      %v5337 = vrcp.pop %v5320
      %v5338 = vrcp.pop %v5323
      %v5339 = vrcp.pop %v5326
      %v5340 = vrcp.pop %v5329
      %v5341 = vrcp.pop %v5332
      %v5342 = vrcp.pop %v5335
      %v5343 = vmul.f32 %v5302, %v5336
      %v5344 = vmul.f32 %v5304, %v5337
      %v5345 = vmul.f32 %v5306, %v5338
      %v5346 = vmul.f32 %v5308, %v5339
      %v5347 = vmul.f32 %v5310, %v5340
      %v5348 = vmul.f32 %v5312, %v5341
      %v5349 = vmul.f32 %v5314, %v5342
      %s5350 = scalar_lea.vmem %s269, 560
      %5351 = vst.msk [vmem:[%s5350] sm:$0xff] %vm1008, %v5343
      %5352 = vst.msk [vmem:[%s5350 + $0x8] sm:$0xff] %vm1008, %v5344
      %5353 = vst.msk [vmem:[%s5350 + $0x10] sm:$0xff] %vm1008, %v5345
      %5354 = vst.msk [vmem:[%s5350 + $0x18] sm:$0xff] %vm1008, %v5346
      %5355 = vst.msk [vmem:[%s5350 + $0x20] sm:$0xff] %vm1008, %v5347
      %5356 = vst.msk [vmem:[%s5350 + $0x28] sm:$0xff] %vm1008, %v5348
      %5357 = vst.msk [vmem:[%s5350 + $0x30] sm:$0x1] %vm1027, %v5349
      %5358 = vrot.lane.b32.xlu0 %v5103, 96
      %v5359 = vpop.permute.xlu0 %5358
      %5360 = vrot.lane.b32.xlu0 %v5104, 96
      %v5361 = vpop.permute.xlu0 %5360
      %5362 = vrot.lane.b32.xlu0 %v5105, 96
      %v5363 = vpop.permute.xlu0 %5362
      %5364 = vrot.lane.b32.xlu0 %v5106, 96
      %v5365 = vpop.permute.xlu0 %5364
      %5366 = vrot.lane.b32.xlu0 %v5107, 96
      %v5367 = vpop.permute.xlu0 %5366
      %5368 = vrot.lane.b32.xlu0 %v5108, 96
      %v5369 = vpop.permute.xlu0 %5368
      %5370 = vrot.lane.b32.xlu0 %v5109, 96
      %v5371 = vpop.permute.xlu0 %5370
      %v5379 = vsel %vm1008, %v5343, 0
      %v5382 = vsel %vm1008, %v5344, 0
      %v5385 = vsel %vm1008, %v5345, 0
      %v5388 = vsel %vm1008, %v5346, 0
      %v5391 = vsel %vm1008, %v5347, 0
      %v5394 = vsel %vm1008, %v5348, 0
      %v5397 = vsel %vm1008, %v5349, 0
      %v5399 = vsel %vm1135, %v5371, 0
      %5401 = vmatprep.subr.mxu0 0.0
      %5402 = vmatpush1.msra.mxu0 0.0
      %5403 = vmatprep.subr.mxu0 0.0
      %5404 = vmatpush1.msra.mxu0 0.0
      %5405 = vmatprep.subr.mxu0 0.0
      %5406 = vmatpush1.msra.mxu0 0.0
      %5407 = vmatprep.subr.mxu0 0.0
      %5408 = vmatpush1.msra.mxu0 0.0
      %5409 = vmatprep.subr.mxu0 0.0
      %5410 = vmatpush1.msra.mxu0 0.0
      %5411 = vmatprep.subr.mxu0 0.0
      %5412 = vmatpush1.msra.mxu0 0.0
      %5413 = vmatprep.subr.mxu0 0.0
      %5414 = vmatpush1.msra.mxu0 0.0
      %5415 = vmatprep.subr.mxu0 0.0
      %5416 = vmatpush1.msra.mxu0 0.0
      %5417 = vmatprep.subr.mxu0 0.0
      %5418 = vmatpush1.msra.mxu0 0.0
      %5419 = vmatprep.subr.mxu0 0.0
      %5420 = vmatpush1.msra.mxu0 %v5399
      %5421 = vmatprep.subr.mxu0 0.0
      %5422 = vmatpush1.msra.mxu0 %v5369
      %5423 = vmatprep.subr.mxu0 0.0
      %5424 = vmatpush1.msra.mxu0 %v5367
      %5425 = vmatprep.subr.mxu0 0.0
      %5426 = vmatpush1.msra.mxu0 %v5365
      %5427 = vmatprep.subr.mxu0 0.0
      %5428 = vmatpush1.msra.mxu0 %v5363
      %5429 = vmatprep.subr.mxu0 0.0
      %5430 = vmatpush1.msra.mxu0 %v5361
      %5431 = vmatprep.subr.mxu0 0.0
      %5432 = vmatpush1.msra.mxu0 %v5359
      %5433 = vmatprep.subr.mxu0 0.0
      %5434 = vmatpush2.msra.mxu0 0.0
      %5435 = vmatprep.subr.mxu0 0.0
      %5436 = vmatpush2.msra.mxu0 0.0
      %5437 = vmatprep.subr.mxu0 0.0
      %5438 = vmatpush2.msra.mxu0 0.0
      %5439 = vmatprep.subr.mxu0 0.0
      %5440 = vmatpush2.msra.mxu0 0.0
      %5441 = vmatprep.subr.mxu0 0.0
      %5442 = vmatpush2.msra.mxu0 0.0
      %5443 = vmatprep.subr.mxu0 0.0
      %5444 = vmatpush2.msra.mxu0 0.0
      %5445 = vmatprep.subr.mxu0 0.0
      %5446 = vmatpush2.msra.mxu0 0.0
      %5447 = vmatprep.subr.mxu0 0.0
      %5448 = vmatpush2.msra.mxu0 0.0
      %5449 = vmatprep.subr.mxu0 0.0
      %5450 = vmatpush2.msra.mxu0 0.0
      %5451 = vmatprep.subr.mxu0 0.0
      %5452 = vmatpush2.msra.mxu0 0.0
      %5453 = vmatprep.subr.mxu0 0.0
      %5454 = vmatpush2.msra.mxu0 0.0
      %5455 = vmatprep.subr.mxu0 0.0
      %5456 = vmatpush2.msra.mxu0 0.0
      %5457 = vmatprep.subr.mxu0 0.0
      %5458 = vmatpush2.msra.mxu0 0.0
      %5459 = vmatprep.subr.mxu0 0.0
      %5460 = vmatpush2.msra.mxu0 0.0
      %5461 = vmatprep.subr.mxu0 0.0
      %5462 = vmatpush2.msra.mxu0 0.0
      %5463 = vmatprep.subr.mxu0 0.0
      %5464 = vmatpush2.msra.mxu0 0.0
      %5465 = vmatprep.mubr.f32.mxu0 0.0
      %5466 = vmatmul.mubr.f32.gmra.mxu0 %v5379
      %v5467 = vpop.f32.mrf.mxu0
      %v5468 = vadd.f32 0.0, %v5467
      %v5469 = vpop.f32.mrf.mxu0
      %5470 = vmatprep.mubr.f32.mxu0 0.0
      %5471 = vmatmul.mubr.f32.gmra.mxu0 %v5382
      %v5472 = vpop.f32.mrf.mxu0
      %v5473 = vadd.f32 0.0, %v5472
      %v5474 = vpop.f32.mrf.mxu0
      %5475 = vmatprep.mubr.f32.mxu0 0.0
      %5476 = vmatmul.mubr.f32.gmra.mxu0 %v5385
      %v5477 = vpop.f32.mrf.mxu0
      %v5478 = vadd.f32 0.0, %v5477
      %v5479 = vpop.f32.mrf.mxu0
      %5480 = vmatprep.mubr.f32.mxu0 0.0
      %5481 = vmatmul.mubr.f32.gmra.mxu0 %v5388
      %v5482 = vpop.f32.mrf.mxu0
      %v5483 = vadd.f32 0.0, %v5482
      %v5484 = vpop.f32.mrf.mxu0
      %5485 = vmatprep.mubr.f32.mxu0 0.0
      %5486 = vmatmul.mubr.f32.gmra.mxu0 %v5391
      %v5487 = vpop.f32.mrf.mxu0
      %v5488 = vadd.f32 0.0, %v5487
      %v5489 = vpop.f32.mrf.mxu0
      %5490 = vmatprep.mubr.f32.mxu0 0.0
      %5491 = vmatmul.mubr.f32.gmra.mxu0 %v5394
      %v5492 = vpop.f32.mrf.mxu0
      %v5493 = vadd.f32 0.0, %v5492
      %v5494 = vpop.f32.mrf.mxu0
      %5495 = vmatprep.mubr.f32.mxu0 0.0
      %5496 = vmatmul.mubr.f32.gmra.mxu0 %v5397
      %v5497 = vpop.f32.mrf.mxu0
      %v5498 = vadd.f32 0.0, %v5497
      %v5499 = vpop.f32.mrf.mxu0
      %5500 = vdwg.mxu0
      %5501 = vst.msk [vmem:[#allocation3 + $0xf5] sm:$0xff] %vm865, %v5468
      %5502 = vst.msk [vmem:[#allocation3 + $0xfd] sm:$0xff] %vm865, %v5473
      %5503 = vst.msk [vmem:[#allocation3 + $0x105] sm:$0xff] %vm865, %v5478
      %5504 = vst.msk [vmem:[#allocation3 + $0x10d] sm:$0xff] %vm865, %v5483
      %5505 = vst.msk [vmem:[#allocation3 + $0x115] sm:$0xff] %vm865, %v5488
      %5506 = vst.msk [vmem:[#allocation3 + $0x11d] sm:$0xff] %vm865, %v5493
      %5507 = vst.msk [vmem:[#allocation3 + $0x125] sm:$0x1] %vm1244, %v5498
      %v5508 = vld [vmem:[#allocation2 + $0xf5] sm:$0xff]
      %v5509 = vld [vmem:[#allocation2 + $0xfd] sm:$0xff]
      %v5510 = vld [vmem:[#allocation2 + $0x105] sm:$0xff]
      %v5511 = vld [vmem:[#allocation2 + $0x10d] sm:$0xff]
      %v5512 = vld [vmem:[#allocation2 + $0x115] sm:$0xff]
      %v5513 = vld [vmem:[#allocation2 + $0x11d] sm:$0xff]
      %v5514 = vld [vmem:[#allocation2 + $0x125] sm:$0x1]
      %5522 = vrot.lane.b32.xlu0 %v5508, 120
      %v5523 = vpop.permute.xlu0 %5522
      %5524 = vrot.lane.b32.xlu0 %v5509, 120
      %v5525 = vpop.permute.xlu0 %5524
      %5526 = vrot.lane.b32.xlu0 %v5510, 120
      %v5527 = vpop.permute.xlu0 %5526
      %5528 = vrot.lane.b32.xlu0 %v5511, 120
      %v5529 = vpop.permute.xlu0 %5528
      %5530 = vrot.lane.b32.xlu0 %v5512, 120
      %v5531 = vpop.permute.xlu0 %5530
      %5532 = vrot.lane.b32.xlu0 %v5513, 120
      %v5533 = vpop.permute.xlu0 %5532
      %5534 = vrot.lane.b32.xlu0 %v5514, 120
      %v5535 = vpop.permute.xlu0 %5534
      %5536 = vrot.lane.b32.xlu0 %v5508, 104
      %v5537 = vpop.permute.xlu0 %5536
      %5538 = vrot.lane.b32.xlu0 %v5509, 104
      %v5539 = vpop.permute.xlu0 %5538
      %5540 = vrot.lane.b32.xlu0 %v5510, 104
      %v5541 = vpop.permute.xlu0 %5540
      %5542 = vrot.lane.b32.xlu0 %v5511, 104
      %v5543 = vpop.permute.xlu0 %5542
      %5544 = vrot.lane.b32.xlu0 %v5512, 104
      %v5545 = vpop.permute.xlu0 %5544
      %5546 = vrot.lane.b32.xlu0 %v5513, 104
      %v5547 = vpop.permute.xlu0 %5546
      %5548 = vrot.lane.b32.xlu0 %v5514, 104
      %v5549 = vpop.permute.xlu0 %5548
      %v5550 = vsel %vm865, %v5523, 0
      %v5552 = vsel %vm865, %v5525, 0
      %v5554 = vsel %vm865, %v5527, 0
      %v5556 = vsel %vm865, %v5529, 0
      %v5558 = vsel %vm865, %v5531, 0
      %v5560 = vsel %vm865, %v5533, 0
      %v5562 = vsel %vm865, %v5535, 0
      %v5564 = vsel %vm865, %v5537, 0
      %v5566 = vsel %vm865, %v5539, 0
      %v5568 = vsel %vm865, %v5541, 0
      %v5570 = vsel %vm865, %v5543, 0
      %v5572 = vsel %vm865, %v5545, 0
      %v5574 = vsel %vm865, %v5547, 0
      %v5576 = vsel %vm865, %v5549, 0
      %5578 = vmatprep.subr.mxu0 0.0
      %5579 = vmatpush1.xpose.msra.mxu0 0.0
      %5580 = vmatprep.subr.mxu0 0.0
      %5581 = vmatpush1.xpose.msra.mxu0 0.0
      %5582 = vmatprep.subr.mxu0 0.0
      %5583 = vmatpush1.xpose.msra.mxu0 0.0
      %5584 = vmatprep.subr.mxu0 0.0
      %5585 = vmatpush1.xpose.msra.mxu0 0.0
      %5586 = vmatprep.subr.mxu0 0.0
      %5587 = vmatpush1.xpose.msra.mxu0 0.0
      %5588 = vmatprep.subr.mxu0 0.0
      %5589 = vmatpush1.xpose.msra.mxu0 0.0
      %5590 = vmatprep.subr.mxu0 0.0
      %5591 = vmatpush1.xpose.msra.mxu0 0.0
      %5592 = vmatprep.subr.mxu0 0.0
      %5593 = vmatpush1.xpose.msra.mxu0 0.0
      %5594 = vmatprep.subr.mxu0 0.0
      %5595 = vmatpush1.xpose.msra.mxu0 0.0
      %5596 = vmatprep.subr.mxu0 0.0
      %5597 = vmatpush1.xpose.msra.mxu0 %v5576
      %5598 = vmatprep.subr.mxu0 0.0
      %5599 = vmatpush1.xpose.msra.mxu0 %v5574
      %5600 = vmatprep.subr.mxu0 0.0
      %5601 = vmatpush1.xpose.msra.mxu0 %v5572
      %5602 = vmatprep.subr.mxu0 0.0
      %5603 = vmatpush1.xpose.msra.mxu0 %v5570
      %5604 = vmatprep.subr.mxu0 0.0
      %5605 = vmatpush1.xpose.msra.mxu0 %v5568
      %5606 = vmatprep.subr.mxu0 0.0
      %5607 = vmatpush1.xpose.msra.mxu0 %v5566
      %5608 = vmatprep.subr.mxu0 0.0
      %5609 = vmatpush1.xpose.msra.mxu0 %v5564
      %5610 = vmatprep.subr.mxu0 0.0
      %5611 = vmatpush2.xpose.msra.mxu0 0.0
      %5612 = vmatprep.subr.mxu0 0.0
      %5613 = vmatpush2.xpose.msra.mxu0 0.0
      %5614 = vmatprep.subr.mxu0 0.0
      %5615 = vmatpush2.xpose.msra.mxu0 0.0
      %5616 = vmatprep.subr.mxu0 0.0
      %5617 = vmatpush2.xpose.msra.mxu0 0.0
      %5618 = vmatprep.subr.mxu0 0.0
      %5619 = vmatpush2.xpose.msra.mxu0 0.0
      %5620 = vmatprep.subr.mxu0 0.0
      %5621 = vmatpush2.xpose.msra.mxu0 0.0
      %5622 = vmatprep.subr.mxu0 0.0
      %5623 = vmatpush2.xpose.msra.mxu0 0.0
      %5624 = vmatprep.subr.mxu0 0.0
      %5625 = vmatpush2.xpose.msra.mxu0 0.0
      %5626 = vmatprep.subr.mxu0 0.0
      %5627 = vmatpush2.xpose.msra.mxu0 0.0
      %5628 = vmatprep.subr.mxu0 0.0
      %5629 = vmatpush2.xpose.msra.mxu0 0.0
      %5630 = vmatprep.subr.mxu0 0.0
      %5631 = vmatpush2.xpose.msra.mxu0 0.0
      %5632 = vmatprep.subr.mxu0 0.0
      %5633 = vmatpush2.xpose.msra.mxu0 0.0
      %5634 = vmatprep.subr.mxu0 0.0
      %5635 = vmatpush2.xpose.msra.mxu0 0.0
      %5636 = vmatprep.subr.mxu0 0.0
      %5637 = vmatpush2.xpose.msra.mxu0 0.0
      %5638 = vmatprep.subr.mxu0 0.0
      %5639 = vmatpush2.xpose.msra.mxu0 0.0
      %5640 = vmatprep.subr.mxu0 0.0
      %5641 = vmatpush2.xpose.msra.mxu0 0.0
      %5642 = vmatprep.mubr.f32.mxu0 0.0
      %5643 = vmatmul.mubr.f32.gmra.mxu0 %v5550
      %v5644 = vpop.f32.mrf.mxu0
      %v5645 = vadd.f32 0.0, %v5644
      %v5646 = vpop.f32.mrf.mxu0
      %5647 = vmatprep.mubr.f32.mxu0 0.0
      %5648 = vmatmul.mubr.f32.gmra.mxu0 %v5552
      %v5649 = vpop.f32.mrf.mxu0
      %v5650 = vadd.f32 0.0, %v5649
      %v5651 = vpop.f32.mrf.mxu0
      %5652 = vmatprep.mubr.f32.mxu0 0.0
      %5653 = vmatmul.mubr.f32.gmra.mxu0 %v5554
      %v5654 = vpop.f32.mrf.mxu0
      %v5655 = vadd.f32 0.0, %v5654
      %v5656 = vpop.f32.mrf.mxu0
      %5657 = vmatprep.mubr.f32.mxu0 0.0
      %5658 = vmatmul.mubr.f32.gmra.mxu0 %v5556
      %v5659 = vpop.f32.mrf.mxu0
      %v5660 = vadd.f32 0.0, %v5659
      %v5661 = vpop.f32.mrf.mxu0
      %5662 = vmatprep.mubr.f32.mxu0 0.0
      %5663 = vmatmul.mubr.f32.gmra.mxu0 %v5558
      %v5664 = vpop.f32.mrf.mxu0
      %v5665 = vadd.f32 0.0, %v5664
      %v5666 = vpop.f32.mrf.mxu0
      %5667 = vmatprep.mubr.f32.mxu0 0.0
      %5668 = vmatmul.mubr.f32.gmra.mxu0 %v5560
      %v5669 = vpop.f32.mrf.mxu0
      %v5670 = vadd.f32 0.0, %v5669
      %v5671 = vpop.f32.mrf.mxu0
      %5672 = vmatprep.mubr.f32.mxu0 0.0
      %5673 = vmatmul.mubr.f32.gmra.mxu0 %v5562
      %v5674 = vpop.f32.mrf.mxu0
      %v5675 = vadd.f32 0.0, %v5674
      %v5676 = vpop.f32.mrf.mxu0
      %5677 = vdwg.mxu0
      %v5678 = vmul.f32 %v5645, 0.35355338
      %v5679 = vmul.f32 %v5650, 0.35355338
      %v5680 = vmul.f32 %v5655, 0.35355338
      %v5681 = vmul.f32 %v5660, 0.35355338
      %v5682 = vmul.f32 %v5665, 0.35355338
      %v5683 = vmul.f32 %v5670, 0.35355338
      %v5684 = vmul.f32 %v5675, 0.35355338
      %v5685 = vadd.f32 %v5678, %v830
      %v5686 = vadd.f32 %v5679, %v831
      %v5687 = vadd.f32 %v5680, %v832
      %v5688 = vadd.f32 %v5681, %v833
      %v5689 = vadd.f32 %v5682, %v834
      %v5690 = vadd.f32 %v5683, %v835
      %v5691 = vadd.f32 %v5684, %v836
      %v5692 = vsel %vm1008, %v5685, -inf
      %5693 = vmax.xlane.f32.xlu0 %v5692
      %v5694 = vpop.xlane.xlu0 %5693
      %v5695 = vsel %vm1008, %v5686, -inf
      %5696 = vmax.xlane.f32.xlu0 %v5695
      %v5697 = vpop.xlane.xlu0 %5696
      %v5698 = vsel %vm1008, %v5687, -inf
      %5699 = vmax.xlane.f32.xlu0 %v5698
      %v5700 = vpop.xlane.xlu0 %5699
      %v5701 = vsel %vm1008, %v5688, -inf
      %5702 = vmax.xlane.f32.xlu0 %v5701
      %v5703 = vpop.xlane.xlu0 %5702
      %v5704 = vsel %vm1008, %v5689, -inf
      %5705 = vmax.xlane.f32.xlu0 %v5704
      %v5706 = vpop.xlane.xlu0 %5705
      %v5707 = vsel %vm1008, %v5690, -inf
      %5708 = vmax.xlane.f32.xlu0 %v5707
      %v5709 = vpop.xlane.xlu0 %5708
      %v5710 = vsel %vm1027, %v5691, -inf
      %5711 = vmax.xlane.f32.xlu0 %v5710
      %v5712 = vpop.xlane.xlu0 %5711
      %v5713 = vsub.f32 %v5685, %v5694
      %v5714 = vsub.f32 %v5686, %v5697
      %v5715 = vsub.f32 %v5687, %v5700
      %v5716 = vsub.f32 %v5688, %v5703
      %v5717 = vsub.f32 %v5689, %v5706
      %v5718 = vsub.f32 %v5690, %v5709
      %v5719 = vsub.f32 %v5691, %v5712
      %v5720 = vmul.f32 %v5713, 1.442695
      %v5721 = vpow.pop %v5720
      %v5722 = vmul.f32 %v5714, 1.442695
      %v5723 = vpow.pop %v5722
      %v5724 = vmul.f32 %v5715, 1.442695
      %v5725 = vpow.pop %v5724
      %v5726 = vmul.f32 %v5716, 1.442695
      %v5727 = vpow.pop %v5726
      %v5728 = vmul.f32 %v5717, 1.442695
      %v5729 = vpow.pop %v5728
      %v5730 = vmul.f32 %v5718, 1.442695
      %v5731 = vpow.pop %v5730
      %v5732 = vmul.f32 %v5719, 1.442695
      %v5733 = vpow.pop %v5732
      %v5734 = vsel %vm1008, %v5721, 0.0
      %5735 = vadd.xlane.f32.xlu0 %v5734
      %v5736 = vpop.xlane.xlu0 %5735
      %v5737 = vsel %vm1008, %v5723, 0.0
      %5738 = vadd.xlane.f32.xlu0 %v5737
      %v5739 = vpop.xlane.xlu0 %5738
      %v5740 = vsel %vm1008, %v5725, 0.0
      %5741 = vadd.xlane.f32.xlu0 %v5740
      %v5742 = vpop.xlane.xlu0 %5741
      %v5743 = vsel %vm1008, %v5727, 0.0
      %5744 = vadd.xlane.f32.xlu0 %v5743
      %v5745 = vpop.xlane.xlu0 %5744
      %v5746 = vsel %vm1008, %v5729, 0.0
      %5747 = vadd.xlane.f32.xlu0 %v5746
      %v5748 = vpop.xlane.xlu0 %5747
      %v5749 = vsel %vm1008, %v5731, 0.0
      %5750 = vadd.xlane.f32.xlu0 %v5749
      %v5751 = vpop.xlane.xlu0 %5750
      %v5752 = vsel %vm1027, %v5733, 0.0
      %5753 = vadd.xlane.f32.xlu0 %v5752
      %v5754 = vpop.xlane.xlu0 %5753
      %v5755 = vrcp.pop %v5736
      %v5756 = vrcp.pop %v5739
      %v5757 = vrcp.pop %v5742
      %v5758 = vrcp.pop %v5745
      %v5759 = vrcp.pop %v5748
      %v5760 = vrcp.pop %v5751
      %v5761 = vrcp.pop %v5754
      %v5762 = vmul.f32 %v5721, %v5755
      %v5763 = vmul.f32 %v5723, %v5756
      %v5764 = vmul.f32 %v5725, %v5757
      %v5765 = vmul.f32 %v5727, %v5758
      %v5766 = vmul.f32 %v5729, %v5759
      %v5767 = vmul.f32 %v5731, %v5760
      %v5768 = vmul.f32 %v5733, %v5761
      %s5769 = scalar_lea.vmem %s269, 616
      %5770 = vst.msk [vmem:[%s5769] sm:$0xff] %vm1008, %v5762
      %5771 = vst.msk [vmem:[%s5769 + $0x8] sm:$0xff] %vm1008, %v5763
      %5772 = vst.msk [vmem:[%s5769 + $0x10] sm:$0xff] %vm1008, %v5764
      %5773 = vst.msk [vmem:[%s5769 + $0x18] sm:$0xff] %vm1008, %v5765
      %5774 = vst.msk [vmem:[%s5769 + $0x20] sm:$0xff] %vm1008, %v5766
      %5775 = vst.msk [vmem:[%s5769 + $0x28] sm:$0xff] %vm1008, %v5767
      %5776 = vst.msk [vmem:[%s5769 + $0x30] sm:$0x1] %vm1027, %v5768
      %5777 = vrot.lane.b32.xlu0 %v5508, 88
      %v5778 = vpop.permute.xlu0 %5777
      %5779 = vrot.lane.b32.xlu0 %v5509, 88
      %v5780 = vpop.permute.xlu0 %5779
      %5781 = vrot.lane.b32.xlu0 %v5510, 88
      %v5782 = vpop.permute.xlu0 %5781
      %5783 = vrot.lane.b32.xlu0 %v5511, 88
      %v5784 = vpop.permute.xlu0 %5783
      %5785 = vrot.lane.b32.xlu0 %v5512, 88
      %v5786 = vpop.permute.xlu0 %5785
      %5787 = vrot.lane.b32.xlu0 %v5513, 88
      %v5788 = vpop.permute.xlu0 %5787
      %5789 = vrot.lane.b32.xlu0 %v5514, 88
      %v5790 = vpop.permute.xlu0 %5789
      %v5798 = vsel %vm1008, %v5762, 0
      %v5801 = vsel %vm1008, %v5763, 0
      %v5804 = vsel %vm1008, %v5764, 0
      %v5807 = vsel %vm1008, %v5765, 0
      %v5810 = vsel %vm1008, %v5766, 0
      %v5813 = vsel %vm1008, %v5767, 0
      %v5816 = vsel %vm1008, %v5768, 0
      %v5818 = vsel %vm1135, %v5790, 0
      %5820 = vmatprep.subr.mxu0 0.0
      %5821 = vmatpush1.msra.mxu0 0.0
      %5822 = vmatprep.subr.mxu0 0.0
      %5823 = vmatpush1.msra.mxu0 0.0
      %5824 = vmatprep.subr.mxu0 0.0
      %5825 = vmatpush1.msra.mxu0 0.0
      %5826 = vmatprep.subr.mxu0 0.0
      %5827 = vmatpush1.msra.mxu0 0.0
      %5828 = vmatprep.subr.mxu0 0.0
      %5829 = vmatpush1.msra.mxu0 0.0
      %5830 = vmatprep.subr.mxu0 0.0
      %5831 = vmatpush1.msra.mxu0 0.0
      %5832 = vmatprep.subr.mxu0 0.0
      %5833 = vmatpush1.msra.mxu0 0.0
      %5834 = vmatprep.subr.mxu0 0.0
      %5835 = vmatpush1.msra.mxu0 0.0
      %5836 = vmatprep.subr.mxu0 0.0
      %5837 = vmatpush1.msra.mxu0 0.0
      %5838 = vmatprep.subr.mxu0 0.0
      %5839 = vmatpush1.msra.mxu0 %v5818
      %5840 = vmatprep.subr.mxu0 0.0
      %5841 = vmatpush1.msra.mxu0 %v5788
      %5842 = vmatprep.subr.mxu0 0.0
      %5843 = vmatpush1.msra.mxu0 %v5786
      %5844 = vmatprep.subr.mxu0 0.0
      %5845 = vmatpush1.msra.mxu0 %v5784
      %5846 = vmatprep.subr.mxu0 0.0
      %5847 = vmatpush1.msra.mxu0 %v5782
      %5848 = vmatprep.subr.mxu0 0.0
      %5849 = vmatpush1.msra.mxu0 %v5780
      %5850 = vmatprep.subr.mxu0 0.0
      %5851 = vmatpush1.msra.mxu0 %v5778
      %5852 = vmatprep.subr.mxu0 0.0
      %5853 = vmatpush2.msra.mxu0 0.0
      %5854 = vmatprep.subr.mxu0 0.0
      %5855 = vmatpush2.msra.mxu0 0.0
      %5856 = vmatprep.subr.mxu0 0.0
      %5857 = vmatpush2.msra.mxu0 0.0
      %5858 = vmatprep.subr.mxu0 0.0
      %5859 = vmatpush2.msra.mxu0 0.0
      %5860 = vmatprep.subr.mxu0 0.0
      %5861 = vmatpush2.msra.mxu0 0.0
      %5862 = vmatprep.subr.mxu0 0.0
      %5863 = vmatpush2.msra.mxu0 0.0
      %5864 = vmatprep.subr.mxu0 0.0
      %5865 = vmatpush2.msra.mxu0 0.0
      %5866 = vmatprep.subr.mxu0 0.0
      %5867 = vmatpush2.msra.mxu0 0.0
      %5868 = vmatprep.subr.mxu0 0.0
      %5869 = vmatpush2.msra.mxu0 0.0
      %5870 = vmatprep.subr.mxu0 0.0
      %5871 = vmatpush2.msra.mxu0 0.0
      %5872 = vmatprep.subr.mxu0 0.0
      %5873 = vmatpush2.msra.mxu0 0.0
      %5874 = vmatprep.subr.mxu0 0.0
      %5875 = vmatpush2.msra.mxu0 0.0
      %5876 = vmatprep.subr.mxu0 0.0
      %5877 = vmatpush2.msra.mxu0 0.0
      %5878 = vmatprep.subr.mxu0 0.0
      %5879 = vmatpush2.msra.mxu0 0.0
      %5880 = vmatprep.subr.mxu0 0.0
      %5881 = vmatpush2.msra.mxu0 0.0
      %5882 = vmatprep.subr.mxu0 0.0
      %5883 = vmatpush2.msra.mxu0 0.0
      %5884 = vmatprep.mubr.f32.mxu0 0.0
      %5885 = vmatmul.mubr.f32.gmra.mxu0 %v5798
      %v5886 = vpop.f32.mrf.mxu0
      %v5887 = vadd.f32 0.0, %v5886
      %v5888 = vpop.f32.mrf.mxu0
      %5889 = vmatprep.mubr.f32.mxu0 0.0
      %5890 = vmatmul.mubr.f32.gmra.mxu0 %v5801
      %v5891 = vpop.f32.mrf.mxu0
      %v5892 = vadd.f32 0.0, %v5891
      %v5893 = vpop.f32.mrf.mxu0
      %5894 = vmatprep.mubr.f32.mxu0 0.0
      %5895 = vmatmul.mubr.f32.gmra.mxu0 %v5804
      %v5896 = vpop.f32.mrf.mxu0
      %v5897 = vadd.f32 0.0, %v5896
      %v5898 = vpop.f32.mrf.mxu0
      %5899 = vmatprep.mubr.f32.mxu0 0.0
      %5900 = vmatmul.mubr.f32.gmra.mxu0 %v5807
      %v5901 = vpop.f32.mrf.mxu0
      %v5902 = vadd.f32 0.0, %v5901
      %v5903 = vpop.f32.mrf.mxu0
      %5904 = vmatprep.mubr.f32.mxu0 0.0
      %5905 = vmatmul.mubr.f32.gmra.mxu0 %v5810
      %v5906 = vpop.f32.mrf.mxu0
      %v5907 = vadd.f32 0.0, %v5906
      %v5908 = vpop.f32.mrf.mxu0
      %5909 = vmatprep.mubr.f32.mxu0 0.0
      %5910 = vmatmul.mubr.f32.gmra.mxu0 %v5813
      %v5911 = vpop.f32.mrf.mxu0
      %v5912 = vadd.f32 0.0, %v5911
      %v5913 = vpop.f32.mrf.mxu0
      %5914 = vmatprep.mubr.f32.mxu0 0.0
      %5915 = vmatmul.mubr.f32.gmra.mxu0 %v5816
      %v5916 = vpop.f32.mrf.mxu0
      %v5917 = vadd.f32 0.0, %v5916
      %v5918 = vpop.f32.mrf.mxu0
      %5919 = vdwg.mxu0
      %5927 = vrot.lane.b32.xlu0 %v5887, 8
      %v5928 = vpop.permute.xlu0 %5927
      %5929 = vrot.lane.b32.xlu0 %v5892, 8
      %v5930 = vpop.permute.xlu0 %5929
      %5931 = vrot.lane.b32.xlu0 %v5897, 8
      %v5932 = vpop.permute.xlu0 %5931
      %5933 = vrot.lane.b32.xlu0 %v5902, 8
      %v5934 = vpop.permute.xlu0 %5933
      %5935 = vrot.lane.b32.xlu0 %v5907, 8
      %v5936 = vpop.permute.xlu0 %5935
      %5937 = vrot.lane.b32.xlu0 %v5912, 8
      %v5938 = vpop.permute.xlu0 %5937
      %5939 = vrot.lane.b32.xlu0 %v5917, 8
      %v5940 = vpop.permute.xlu0 %5939
      %5948 = vst.msk [vmem:[#allocation3 + $0xf5] sm:$0xff] %vm1686, %v5928
      %5949 = vst.msk [vmem:[#allocation3 + $0xfd] sm:$0xff] %vm1686, %v5930
      %5950 = vst.msk [vmem:[#allocation3 + $0x105] sm:$0xff] %vm1686, %v5932
      %5951 = vst.msk [vmem:[#allocation3 + $0x10d] sm:$0xff] %vm1686, %v5934
      %5952 = vst.msk [vmem:[#allocation3 + $0x115] sm:$0xff] %vm1686, %v5936
      %5953 = vst.msk [vmem:[#allocation3 + $0x11d] sm:$0xff] %vm1686, %v5938
      %5954 = vst.msk [vmem:[#allocation3 + $0x125] sm:$0x1] %vm1693, %v5940
      %v5955 = vld [vmem:[#allocation2 + $0x126] sm:$0xff]
      %v5956 = vld [vmem:[#allocation2 + $0x12e] sm:$0xff]
      %v5957 = vld [vmem:[#allocation2 + $0x136] sm:$0xff]
      %v5958 = vld [vmem:[#allocation2 + $0x13e] sm:$0xff]
      %v5959 = vld [vmem:[#allocation2 + $0x146] sm:$0xff]
      %v5960 = vld [vmem:[#allocation2 + $0x14e] sm:$0xff]
      %v5961 = vld [vmem:[#allocation2 + $0x156] sm:$0x1]
      %5969 = vrot.lane.b32.xlu0 %v5955, 112
      %v5970 = vpop.permute.xlu0 %5969
      %5971 = vrot.lane.b32.xlu0 %v5956, 112
      %v5972 = vpop.permute.xlu0 %5971
      %5973 = vrot.lane.b32.xlu0 %v5957, 112
      %v5974 = vpop.permute.xlu0 %5973
      %5975 = vrot.lane.b32.xlu0 %v5958, 112
      %v5976 = vpop.permute.xlu0 %5975
      %5977 = vrot.lane.b32.xlu0 %v5959, 112
      %v5978 = vpop.permute.xlu0 %5977
      %5979 = vrot.lane.b32.xlu0 %v5960, 112
      %v5980 = vpop.permute.xlu0 %5979
      %5981 = vrot.lane.b32.xlu0 %v5961, 112
      %v5982 = vpop.permute.xlu0 %5981
      %v5983 = vsel %vm865, %v5955, 0
      %v5985 = vsel %vm865, %v5956, 0
      %v5987 = vsel %vm865, %v5957, 0
      %v5989 = vsel %vm865, %v5958, 0
      %v5991 = vsel %vm865, %v5959, 0
      %v5993 = vsel %vm865, %v5960, 0
      %v5995 = vsel %vm865, %v5961, 0
      %v5997 = vsel %vm865, %v5970, 0
      %v5999 = vsel %vm865, %v5972, 0
      %v6001 = vsel %vm865, %v5974, 0
      %v6003 = vsel %vm865, %v5976, 0
      %v6005 = vsel %vm865, %v5978, 0
      %v6007 = vsel %vm865, %v5980, 0
      %v6009 = vsel %vm865, %v5982, 0
      %6011 = vmatprep.subr.mxu0 0.0
      %6012 = vmatpush1.xpose.msra.mxu0 0.0
      %6013 = vmatprep.subr.mxu0 0.0
      %6014 = vmatpush1.xpose.msra.mxu0 0.0
      %6015 = vmatprep.subr.mxu0 0.0
      %6016 = vmatpush1.xpose.msra.mxu0 0.0
      %6017 = vmatprep.subr.mxu0 0.0
      %6018 = vmatpush1.xpose.msra.mxu0 0.0
      %6019 = vmatprep.subr.mxu0 0.0
      %6020 = vmatpush1.xpose.msra.mxu0 0.0
      %6021 = vmatprep.subr.mxu0 0.0
      %6022 = vmatpush1.xpose.msra.mxu0 0.0
      %6023 = vmatprep.subr.mxu0 0.0
      %6024 = vmatpush1.xpose.msra.mxu0 0.0
      %6025 = vmatprep.subr.mxu0 0.0
      %6026 = vmatpush1.xpose.msra.mxu0 0.0
      %6027 = vmatprep.subr.mxu0 0.0
      %6028 = vmatpush1.xpose.msra.mxu0 0.0
      %6029 = vmatprep.subr.mxu0 0.0
      %6030 = vmatpush1.xpose.msra.mxu0 %v6009
      %6031 = vmatprep.subr.mxu0 0.0
      %6032 = vmatpush1.xpose.msra.mxu0 %v6007
      %6033 = vmatprep.subr.mxu0 0.0
      %6034 = vmatpush1.xpose.msra.mxu0 %v6005
      %6035 = vmatprep.subr.mxu0 0.0
      %6036 = vmatpush1.xpose.msra.mxu0 %v6003
      %6037 = vmatprep.subr.mxu0 0.0
      %6038 = vmatpush1.xpose.msra.mxu0 %v6001
      %6039 = vmatprep.subr.mxu0 0.0
      %6040 = vmatpush1.xpose.msra.mxu0 %v5999
      %6041 = vmatprep.subr.mxu0 0.0
      %6042 = vmatpush1.xpose.msra.mxu0 %v5997
      %6043 = vmatprep.subr.mxu0 0.0
      %6044 = vmatpush2.xpose.msra.mxu0 0.0
      %6045 = vmatprep.subr.mxu0 0.0
      %6046 = vmatpush2.xpose.msra.mxu0 0.0
      %6047 = vmatprep.subr.mxu0 0.0
      %6048 = vmatpush2.xpose.msra.mxu0 0.0
      %6049 = vmatprep.subr.mxu0 0.0
      %6050 = vmatpush2.xpose.msra.mxu0 0.0
      %6051 = vmatprep.subr.mxu0 0.0
      %6052 = vmatpush2.xpose.msra.mxu0 0.0
      %6053 = vmatprep.subr.mxu0 0.0
      %6054 = vmatpush2.xpose.msra.mxu0 0.0
      %6055 = vmatprep.subr.mxu0 0.0
      %6056 = vmatpush2.xpose.msra.mxu0 0.0
      %6057 = vmatprep.subr.mxu0 0.0
      %6058 = vmatpush2.xpose.msra.mxu0 0.0
      %6059 = vmatprep.subr.mxu0 0.0
      %6060 = vmatpush2.xpose.msra.mxu0 0.0
      %6061 = vmatprep.subr.mxu0 0.0
      %6062 = vmatpush2.xpose.msra.mxu0 0.0
      %6063 = vmatprep.subr.mxu0 0.0
      %6064 = vmatpush2.xpose.msra.mxu0 0.0
      %6065 = vmatprep.subr.mxu0 0.0
      %6066 = vmatpush2.xpose.msra.mxu0 0.0
      %6067 = vmatprep.subr.mxu0 0.0
      %6068 = vmatpush2.xpose.msra.mxu0 0.0
      %6069 = vmatprep.subr.mxu0 0.0
      %6070 = vmatpush2.xpose.msra.mxu0 0.0
      %6071 = vmatprep.subr.mxu0 0.0
      %6072 = vmatpush2.xpose.msra.mxu0 0.0
      %6073 = vmatprep.subr.mxu0 0.0
      %6074 = vmatpush2.xpose.msra.mxu0 0.0
      %6075 = vmatprep.mubr.f32.mxu0 0.0
      %6076 = vmatmul.mubr.f32.gmra.mxu0 %v5983
      %v6077 = vpop.f32.mrf.mxu0
      %v6078 = vadd.f32 0.0, %v6077
      %v6079 = vpop.f32.mrf.mxu0
      %6080 = vmatprep.mubr.f32.mxu0 0.0
      %6081 = vmatmul.mubr.f32.gmra.mxu0 %v5985
      %v6082 = vpop.f32.mrf.mxu0
      %v6083 = vadd.f32 0.0, %v6082
      %v6084 = vpop.f32.mrf.mxu0
      %6085 = vmatprep.mubr.f32.mxu0 0.0
      %6086 = vmatmul.mubr.f32.gmra.mxu0 %v5987
      %v6087 = vpop.f32.mrf.mxu0
      %v6088 = vadd.f32 0.0, %v6087
      %v6089 = vpop.f32.mrf.mxu0
      %6090 = vmatprep.mubr.f32.mxu0 0.0
      %6091 = vmatmul.mubr.f32.gmra.mxu0 %v5989
      %v6092 = vpop.f32.mrf.mxu0
      %v6093 = vadd.f32 0.0, %v6092
      %v6094 = vpop.f32.mrf.mxu0
      %6095 = vmatprep.mubr.f32.mxu0 0.0
      %6096 = vmatmul.mubr.f32.gmra.mxu0 %v5991
      %v6097 = vpop.f32.mrf.mxu0
      %v6098 = vadd.f32 0.0, %v6097
      %v6099 = vpop.f32.mrf.mxu0
      %6100 = vmatprep.mubr.f32.mxu0 0.0
      %6101 = vmatmul.mubr.f32.gmra.mxu0 %v5993
      %v6102 = vpop.f32.mrf.mxu0
      %v6103 = vadd.f32 0.0, %v6102
      %v6104 = vpop.f32.mrf.mxu0
      %6105 = vmatprep.mubr.f32.mxu0 0.0
      %6106 = vmatmul.mubr.f32.gmra.mxu0 %v5995
      %v6107 = vpop.f32.mrf.mxu0
      %v6108 = vadd.f32 0.0, %v6107
      %v6109 = vpop.f32.mrf.mxu0
      %6110 = vdwg.mxu0
      %v6111 = vmul.f32 %v6078, 0.35355338
      %v6112 = vmul.f32 %v6083, 0.35355338
      %v6113 = vmul.f32 %v6088, 0.35355338
      %v6114 = vmul.f32 %v6093, 0.35355338
      %v6115 = vmul.f32 %v6098, 0.35355338
      %v6116 = vmul.f32 %v6103, 0.35355338
      %v6117 = vmul.f32 %v6108, 0.35355338
      %v6118 = vadd.f32 %v6111, %v830
      %v6119 = vadd.f32 %v6112, %v831
      %v6120 = vadd.f32 %v6113, %v832
      %v6121 = vadd.f32 %v6114, %v833
      %v6122 = vadd.f32 %v6115, %v834
      %v6123 = vadd.f32 %v6116, %v835
      %v6124 = vadd.f32 %v6117, %v836
      %v6125 = vsel %vm1008, %v6118, -inf
      %6126 = vmax.xlane.f32.xlu0 %v6125
      %v6127 = vpop.xlane.xlu0 %6126
      %v6128 = vsel %vm1008, %v6119, -inf
      %6129 = vmax.xlane.f32.xlu0 %v6128
      %v6130 = vpop.xlane.xlu0 %6129
      %v6131 = vsel %vm1008, %v6120, -inf
      %6132 = vmax.xlane.f32.xlu0 %v6131
      %v6133 = vpop.xlane.xlu0 %6132
      %v6134 = vsel %vm1008, %v6121, -inf
      %6135 = vmax.xlane.f32.xlu0 %v6134
      %v6136 = vpop.xlane.xlu0 %6135
      %v6137 = vsel %vm1008, %v6122, -inf
      %6138 = vmax.xlane.f32.xlu0 %v6137
      %v6139 = vpop.xlane.xlu0 %6138
      %v6140 = vsel %vm1008, %v6123, -inf
      %6141 = vmax.xlane.f32.xlu0 %v6140
      %v6142 = vpop.xlane.xlu0 %6141
      %v6143 = vsel %vm1027, %v6124, -inf
      %6144 = vmax.xlane.f32.xlu0 %v6143
      %v6145 = vpop.xlane.xlu0 %6144
      %v6146 = vsub.f32 %v6118, %v6127
      %v6147 = vsub.f32 %v6119, %v6130
      %v6148 = vsub.f32 %v6120, %v6133
      %v6149 = vsub.f32 %v6121, %v6136
      %v6150 = vsub.f32 %v6122, %v6139
      %v6151 = vsub.f32 %v6123, %v6142
      %v6152 = vsub.f32 %v6124, %v6145
      %v6153 = vmul.f32 %v6146, 1.442695
      %v6154 = vpow.pop %v6153
      %v6155 = vmul.f32 %v6147, 1.442695
      %v6156 = vpow.pop %v6155
      %v6157 = vmul.f32 %v6148, 1.442695
      %v6158 = vpow.pop %v6157
      %v6159 = vmul.f32 %v6149, 1.442695
      %v6160 = vpow.pop %v6159
      %v6161 = vmul.f32 %v6150, 1.442695
      %v6162 = vpow.pop %v6161
      %v6163 = vmul.f32 %v6151, 1.442695
      %v6164 = vpow.pop %v6163
      %v6165 = vmul.f32 %v6152, 1.442695
      %v6166 = vpow.pop %v6165
      %v6167 = vsel %vm1008, %v6154, 0.0
      %6168 = vadd.xlane.f32.xlu0 %v6167
      %v6169 = vpop.xlane.xlu0 %6168
      %v6170 = vsel %vm1008, %v6156, 0.0
      %6171 = vadd.xlane.f32.xlu0 %v6170
      %v6172 = vpop.xlane.xlu0 %6171
      %v6173 = vsel %vm1008, %v6158, 0.0
      %6174 = vadd.xlane.f32.xlu0 %v6173
      %v6175 = vpop.xlane.xlu0 %6174
      %v6176 = vsel %vm1008, %v6160, 0.0
      %6177 = vadd.xlane.f32.xlu0 %v6176
      %v6178 = vpop.xlane.xlu0 %6177
      %v6179 = vsel %vm1008, %v6162, 0.0
      %6180 = vadd.xlane.f32.xlu0 %v6179
      %v6181 = vpop.xlane.xlu0 %6180
      %v6182 = vsel %vm1008, %v6164, 0.0
      %6183 = vadd.xlane.f32.xlu0 %v6182
      %v6184 = vpop.xlane.xlu0 %6183
      %v6185 = vsel %vm1027, %v6166, 0.0
      %6186 = vadd.xlane.f32.xlu0 %v6185
      %v6187 = vpop.xlane.xlu0 %6186
      %v6188 = vrcp.pop %v6169
      %v6189 = vrcp.pop %v6172
      %v6190 = vrcp.pop %v6175
      %v6191 = vrcp.pop %v6178
      %v6192 = vrcp.pop %v6181
      %v6193 = vrcp.pop %v6184
      %v6194 = vrcp.pop %v6187
      %v6195 = vmul.f32 %v6154, %v6188
      %v6196 = vmul.f32 %v6156, %v6189
      %v6197 = vmul.f32 %v6158, %v6190
      %v6198 = vmul.f32 %v6160, %v6191
      %v6199 = vmul.f32 %v6162, %v6192
      %v6200 = vmul.f32 %v6164, %v6193
      %v6201 = vmul.f32 %v6166, %v6194
      %s6202 = scalar_lea.vmem %s269, 672
      %6203 = vst.msk [vmem:[%s6202] sm:$0xff] %vm1008, %v6195
      %6204 = vst.msk [vmem:[%s6202 + $0x8] sm:$0xff] %vm1008, %v6196
      %6205 = vst.msk [vmem:[%s6202 + $0x10] sm:$0xff] %vm1008, %v6197
      %6206 = vst.msk [vmem:[%s6202 + $0x18] sm:$0xff] %vm1008, %v6198
      %6207 = vst.msk [vmem:[%s6202 + $0x20] sm:$0xff] %vm1008, %v6199
      %6208 = vst.msk [vmem:[%s6202 + $0x28] sm:$0xff] %vm1008, %v6200
      %6209 = vst.msk [vmem:[%s6202 + $0x30] sm:$0x1] %vm1027, %v6201
      %6210 = vrot.lane.b32.xlu0 %v5955, 96
      %v6211 = vpop.permute.xlu0 %6210
      %6212 = vrot.lane.b32.xlu0 %v5956, 96
      %v6213 = vpop.permute.xlu0 %6212
      %6214 = vrot.lane.b32.xlu0 %v5957, 96
      %v6215 = vpop.permute.xlu0 %6214
      %6216 = vrot.lane.b32.xlu0 %v5958, 96
      %v6217 = vpop.permute.xlu0 %6216
      %6218 = vrot.lane.b32.xlu0 %v5959, 96
      %v6219 = vpop.permute.xlu0 %6218
      %6220 = vrot.lane.b32.xlu0 %v5960, 96
      %v6221 = vpop.permute.xlu0 %6220
      %6222 = vrot.lane.b32.xlu0 %v5961, 96
      %v6223 = vpop.permute.xlu0 %6222
      %v6231 = vsel %vm1008, %v6195, 0
      %v6234 = vsel %vm1008, %v6196, 0
      %v6237 = vsel %vm1008, %v6197, 0
      %v6240 = vsel %vm1008, %v6198, 0
      %v6243 = vsel %vm1008, %v6199, 0
      %v6246 = vsel %vm1008, %v6200, 0
      %v6249 = vsel %vm1008, %v6201, 0
      %v6251 = vsel %vm1135, %v6223, 0
      %6253 = vmatprep.subr.mxu0 0.0
      %6254 = vmatpush1.msra.mxu0 0.0
      %6255 = vmatprep.subr.mxu0 0.0
      %6256 = vmatpush1.msra.mxu0 0.0
      %6257 = vmatprep.subr.mxu0 0.0
      %6258 = vmatpush1.msra.mxu0 0.0
      %6259 = vmatprep.subr.mxu0 0.0
      %6260 = vmatpush1.msra.mxu0 0.0
      %6261 = vmatprep.subr.mxu0 0.0
      %6262 = vmatpush1.msra.mxu0 0.0
      %6263 = vmatprep.subr.mxu0 0.0
      %6264 = vmatpush1.msra.mxu0 0.0
      %6265 = vmatprep.subr.mxu0 0.0
      %6266 = vmatpush1.msra.mxu0 0.0
      %6267 = vmatprep.subr.mxu0 0.0
      %6268 = vmatpush1.msra.mxu0 0.0
      %6269 = vmatprep.subr.mxu0 0.0
      %6270 = vmatpush1.msra.mxu0 0.0
      %6271 = vmatprep.subr.mxu0 0.0
      %6272 = vmatpush1.msra.mxu0 %v6251
      %6273 = vmatprep.subr.mxu0 0.0
      %6274 = vmatpush1.msra.mxu0 %v6221
      %6275 = vmatprep.subr.mxu0 0.0
      %6276 = vmatpush1.msra.mxu0 %v6219
      %6277 = vmatprep.subr.mxu0 0.0
      %6278 = vmatpush1.msra.mxu0 %v6217
      %6279 = vmatprep.subr.mxu0 0.0
      %6280 = vmatpush1.msra.mxu0 %v6215
      %6281 = vmatprep.subr.mxu0 0.0
      %6282 = vmatpush1.msra.mxu0 %v6213
      %6283 = vmatprep.subr.mxu0 0.0
      %6284 = vmatpush1.msra.mxu0 %v6211
      %6285 = vmatprep.subr.mxu0 0.0
      %6286 = vmatpush2.msra.mxu0 0.0
      %6287 = vmatprep.subr.mxu0 0.0
      %6288 = vmatpush2.msra.mxu0 0.0
      %6289 = vmatprep.subr.mxu0 0.0
      %6290 = vmatpush2.msra.mxu0 0.0
      %6291 = vmatprep.subr.mxu0 0.0
      %6292 = vmatpush2.msra.mxu0 0.0
      %6293 = vmatprep.subr.mxu0 0.0
      %6294 = vmatpush2.msra.mxu0 0.0
      %6295 = vmatprep.subr.mxu0 0.0
      %6296 = vmatpush2.msra.mxu0 0.0
      %6297 = vmatprep.subr.mxu0 0.0
      %6298 = vmatpush2.msra.mxu0 0.0
      %6299 = vmatprep.subr.mxu0 0.0
      %6300 = vmatpush2.msra.mxu0 0.0
      %6301 = vmatprep.subr.mxu0 0.0
      %6302 = vmatpush2.msra.mxu0 0.0
      %6303 = vmatprep.subr.mxu0 0.0
      %6304 = vmatpush2.msra.mxu0 0.0
      %6305 = vmatprep.subr.mxu0 0.0
      %6306 = vmatpush2.msra.mxu0 0.0
      %6307 = vmatprep.subr.mxu0 0.0
      %6308 = vmatpush2.msra.mxu0 0.0
      %6309 = vmatprep.subr.mxu0 0.0
      %6310 = vmatpush2.msra.mxu0 0.0
      %6311 = vmatprep.subr.mxu0 0.0
      %6312 = vmatpush2.msra.mxu0 0.0
      %6313 = vmatprep.subr.mxu0 0.0
      %6314 = vmatpush2.msra.mxu0 0.0
      %6315 = vmatprep.subr.mxu0 0.0
      %6316 = vmatpush2.msra.mxu0 0.0
      %6317 = vmatprep.mubr.f32.mxu0 0.0
      %6318 = vmatmul.mubr.f32.gmra.mxu0 %v6231
      %v6319 = vpop.f32.mrf.mxu0
      %v6320 = vadd.f32 0.0, %v6319
      %v6321 = vpop.f32.mrf.mxu0
      %6322 = vmatprep.mubr.f32.mxu0 0.0
      %6323 = vmatmul.mubr.f32.gmra.mxu0 %v6234
      %v6324 = vpop.f32.mrf.mxu0
      %v6325 = vadd.f32 0.0, %v6324
      %v6326 = vpop.f32.mrf.mxu0
      %6327 = vmatprep.mubr.f32.mxu0 0.0
      %6328 = vmatmul.mubr.f32.gmra.mxu0 %v6237
      %v6329 = vpop.f32.mrf.mxu0
      %v6330 = vadd.f32 0.0, %v6329
      %v6331 = vpop.f32.mrf.mxu0
      %6332 = vmatprep.mubr.f32.mxu0 0.0
      %6333 = vmatmul.mubr.f32.gmra.mxu0 %v6240
      %v6334 = vpop.f32.mrf.mxu0
      %v6335 = vadd.f32 0.0, %v6334
      %v6336 = vpop.f32.mrf.mxu0
      %6337 = vmatprep.mubr.f32.mxu0 0.0
      %6338 = vmatmul.mubr.f32.gmra.mxu0 %v6243
      %v6339 = vpop.f32.mrf.mxu0
      %v6340 = vadd.f32 0.0, %v6339
      %v6341 = vpop.f32.mrf.mxu0
      %6342 = vmatprep.mubr.f32.mxu0 0.0
      %6343 = vmatmul.mubr.f32.gmra.mxu0 %v6246
      %v6344 = vpop.f32.mrf.mxu0
      %v6345 = vadd.f32 0.0, %v6344
      %v6346 = vpop.f32.mrf.mxu0
      %6347 = vmatprep.mubr.f32.mxu0 0.0
      %6348 = vmatmul.mubr.f32.gmra.mxu0 %v6249
      %v6349 = vpop.f32.mrf.mxu0
      %v6350 = vadd.f32 0.0, %v6349
      %v6351 = vpop.f32.mrf.mxu0
      %6352 = vdwg.mxu0
      %6353 = vst.msk [vmem:[#allocation3 + $0x126] sm:$0xff] %vm865, %v6320
      %6354 = vst.msk [vmem:[#allocation3 + $0x12e] sm:$0xff] %vm865, %v6325
      %6355 = vst.msk [vmem:[#allocation3 + $0x136] sm:$0xff] %vm865, %v6330
      %6356 = vst.msk [vmem:[#allocation3 + $0x13e] sm:$0xff] %vm865, %v6335
      %6357 = vst.msk [vmem:[#allocation3 + $0x146] sm:$0xff] %vm865, %v6340
      %6358 = vst.msk [vmem:[#allocation3 + $0x14e] sm:$0xff] %vm865, %v6345
      %6359 = vst.msk [vmem:[#allocation3 + $0x156] sm:$0x1] %vm1244, %v6350
      %v6360 = vld [vmem:[#allocation2 + $0x126] sm:$0xff]
      %v6361 = vld [vmem:[#allocation2 + $0x12e] sm:$0xff]
      %v6362 = vld [vmem:[#allocation2 + $0x136] sm:$0xff]
      %v6363 = vld [vmem:[#allocation2 + $0x13e] sm:$0xff]
      %v6364 = vld [vmem:[#allocation2 + $0x146] sm:$0xff]
      %v6365 = vld [vmem:[#allocation2 + $0x14e] sm:$0xff]
      %v6366 = vld [vmem:[#allocation2 + $0x156] sm:$0x1]
      %6374 = vrot.lane.b32.xlu0 %v6360, 120
      %v6375 = vpop.permute.xlu0 %6374
      %6376 = vrot.lane.b32.xlu0 %v6361, 120
      %v6377 = vpop.permute.xlu0 %6376
      %6378 = vrot.lane.b32.xlu0 %v6362, 120
      %v6379 = vpop.permute.xlu0 %6378
      %6380 = vrot.lane.b32.xlu0 %v6363, 120
      %v6381 = vpop.permute.xlu0 %6380
      %6382 = vrot.lane.b32.xlu0 %v6364, 120
      %v6383 = vpop.permute.xlu0 %6382
      %6384 = vrot.lane.b32.xlu0 %v6365, 120
      %v6385 = vpop.permute.xlu0 %6384
      %6386 = vrot.lane.b32.xlu0 %v6366, 120
      %v6387 = vpop.permute.xlu0 %6386
      %6388 = vrot.lane.b32.xlu0 %v6360, 104
      %v6389 = vpop.permute.xlu0 %6388
      %6390 = vrot.lane.b32.xlu0 %v6361, 104
      %v6391 = vpop.permute.xlu0 %6390
      %6392 = vrot.lane.b32.xlu0 %v6362, 104
      %v6393 = vpop.permute.xlu0 %6392
      %6394 = vrot.lane.b32.xlu0 %v6363, 104
      %v6395 = vpop.permute.xlu0 %6394
      %6396 = vrot.lane.b32.xlu0 %v6364, 104
      %v6397 = vpop.permute.xlu0 %6396
      %6398 = vrot.lane.b32.xlu0 %v6365, 104
      %v6399 = vpop.permute.xlu0 %6398
      %6400 = vrot.lane.b32.xlu0 %v6366, 104
      %v6401 = vpop.permute.xlu0 %6400
      %v6402 = vsel %vm865, %v6375, 0
      %v6404 = vsel %vm865, %v6377, 0
      %v6406 = vsel %vm865, %v6379, 0
      %v6408 = vsel %vm865, %v6381, 0
      %v6410 = vsel %vm865, %v6383, 0
      %v6412 = vsel %vm865, %v6385, 0
      %v6414 = vsel %vm865, %v6387, 0
      %v6416 = vsel %vm865, %v6389, 0
      %v6418 = vsel %vm865, %v6391, 0
      %v6420 = vsel %vm865, %v6393, 0
      %v6422 = vsel %vm865, %v6395, 0
      %v6424 = vsel %vm865, %v6397, 0
      %v6426 = vsel %vm865, %v6399, 0
      %v6428 = vsel %vm865, %v6401, 0
      %6430 = vmatprep.subr.mxu0 0.0
      %6431 = vmatpush1.xpose.msra.mxu0 0.0
      %6432 = vmatprep.subr.mxu0 0.0
      %6433 = vmatpush1.xpose.msra.mxu0 0.0
      %6434 = vmatprep.subr.mxu0 0.0
      %6435 = vmatpush1.xpose.msra.mxu0 0.0
      %6436 = vmatprep.subr.mxu0 0.0
      %6437 = vmatpush1.xpose.msra.mxu0 0.0
      %6438 = vmatprep.subr.mxu0 0.0
      %6439 = vmatpush1.xpose.msra.mxu0 0.0
      %6440 = vmatprep.subr.mxu0 0.0
      %6441 = vmatpush1.xpose.msra.mxu0 0.0
      %6442 = vmatprep.subr.mxu0 0.0
      %6443 = vmatpush1.xpose.msra.mxu0 0.0
      %6444 = vmatprep.subr.mxu0 0.0
      %6445 = vmatpush1.xpose.msra.mxu0 0.0
      %6446 = vmatprep.subr.mxu0 0.0
      %6447 = vmatpush1.xpose.msra.mxu0 0.0
      %6448 = vmatprep.subr.mxu0 0.0
      %6449 = vmatpush1.xpose.msra.mxu0 %v6428
      %6450 = vmatprep.subr.mxu0 0.0
      %6451 = vmatpush1.xpose.msra.mxu0 %v6426
      %6452 = vmatprep.subr.mxu0 0.0
      %6453 = vmatpush1.xpose.msra.mxu0 %v6424
      %6454 = vmatprep.subr.mxu0 0.0
      %6455 = vmatpush1.xpose.msra.mxu0 %v6422
      %6456 = vmatprep.subr.mxu0 0.0
      %6457 = vmatpush1.xpose.msra.mxu0 %v6420
      %6458 = vmatprep.subr.mxu0 0.0
      %6459 = vmatpush1.xpose.msra.mxu0 %v6418
      %6460 = vmatprep.subr.mxu0 0.0
      %6461 = vmatpush1.xpose.msra.mxu0 %v6416
      %6462 = vmatprep.subr.mxu0 0.0
      %6463 = vmatpush2.xpose.msra.mxu0 0.0
      %6464 = vmatprep.subr.mxu0 0.0
      %6465 = vmatpush2.xpose.msra.mxu0 0.0
      %6466 = vmatprep.subr.mxu0 0.0
      %6467 = vmatpush2.xpose.msra.mxu0 0.0
      %6468 = vmatprep.subr.mxu0 0.0
      %6469 = vmatpush2.xpose.msra.mxu0 0.0
      %6470 = vmatprep.subr.mxu0 0.0
      %6471 = vmatpush2.xpose.msra.mxu0 0.0
      %6472 = vmatprep.subr.mxu0 0.0
      %6473 = vmatpush2.xpose.msra.mxu0 0.0
      %6474 = vmatprep.subr.mxu0 0.0
      %6475 = vmatpush2.xpose.msra.mxu0 0.0
      %6476 = vmatprep.subr.mxu0 0.0
      %6477 = vmatpush2.xpose.msra.mxu0 0.0
      %6478 = vmatprep.subr.mxu0 0.0
      %6479 = vmatpush2.xpose.msra.mxu0 0.0
      %6480 = vmatprep.subr.mxu0 0.0
      %6481 = vmatpush2.xpose.msra.mxu0 0.0
      %6482 = vmatprep.subr.mxu0 0.0
      %6483 = vmatpush2.xpose.msra.mxu0 0.0
      %6484 = vmatprep.subr.mxu0 0.0
      %6485 = vmatpush2.xpose.msra.mxu0 0.0
      %6486 = vmatprep.subr.mxu0 0.0
      %6487 = vmatpush2.xpose.msra.mxu0 0.0
      %6488 = vmatprep.subr.mxu0 0.0
      %6489 = vmatpush2.xpose.msra.mxu0 0.0
      %6490 = vmatprep.subr.mxu0 0.0
      %6491 = vmatpush2.xpose.msra.mxu0 0.0
      %6492 = vmatprep.subr.mxu0 0.0
      %6493 = vmatpush2.xpose.msra.mxu0 0.0
      %6494 = vmatprep.mubr.f32.mxu0 0.0
      %6495 = vmatmul.mubr.f32.gmra.mxu0 %v6402
      %v6496 = vpop.f32.mrf.mxu0
      %v6497 = vadd.f32 0.0, %v6496
      %v6498 = vpop.f32.mrf.mxu0
      %6499 = vmatprep.mubr.f32.mxu0 0.0
      %6500 = vmatmul.mubr.f32.gmra.mxu0 %v6404
      %v6501 = vpop.f32.mrf.mxu0
      %v6502 = vadd.f32 0.0, %v6501
      %v6503 = vpop.f32.mrf.mxu0
      %6504 = vmatprep.mubr.f32.mxu0 0.0
      %6505 = vmatmul.mubr.f32.gmra.mxu0 %v6406
      %v6506 = vpop.f32.mrf.mxu0
      %v6507 = vadd.f32 0.0, %v6506
      %v6508 = vpop.f32.mrf.mxu0
      %6509 = vmatprep.mubr.f32.mxu0 0.0
      %6510 = vmatmul.mubr.f32.gmra.mxu0 %v6408
      %v6511 = vpop.f32.mrf.mxu0
      %v6512 = vadd.f32 0.0, %v6511
      %v6513 = vpop.f32.mrf.mxu0
      %6514 = vmatprep.mubr.f32.mxu0 0.0
      %6515 = vmatmul.mubr.f32.gmra.mxu0 %v6410
      %v6516 = vpop.f32.mrf.mxu0
      %v6517 = vadd.f32 0.0, %v6516
      %v6518 = vpop.f32.mrf.mxu0
      %6519 = vmatprep.mubr.f32.mxu0 0.0
      %6520 = vmatmul.mubr.f32.gmra.mxu0 %v6412
      %v6521 = vpop.f32.mrf.mxu0
      %v6522 = vadd.f32 0.0, %v6521
      %v6523 = vpop.f32.mrf.mxu0
      %6524 = vmatprep.mubr.f32.mxu0 0.0
      %6525 = vmatmul.mubr.f32.gmra.mxu0 %v6414
      %v6526 = vpop.f32.mrf.mxu0
      %v6527 = vadd.f32 0.0, %v6526
      %v6528 = vpop.f32.mrf.mxu0
      %6529 = vdwg.mxu0
      %v6530 = vmul.f32 %v6497, 0.35355338
      %v6531 = vmul.f32 %v6502, 0.35355338
      %v6532 = vmul.f32 %v6507, 0.35355338
      %v6533 = vmul.f32 %v6512, 0.35355338
      %v6534 = vmul.f32 %v6517, 0.35355338
      %v6535 = vmul.f32 %v6522, 0.35355338
      %v6536 = vmul.f32 %v6527, 0.35355338
      %v6537 = vadd.f32 %v6530, %v830
      %v6538 = vadd.f32 %v6531, %v831
      %v6539 = vadd.f32 %v6532, %v832
      %v6540 = vadd.f32 %v6533, %v833
      %v6541 = vadd.f32 %v6534, %v834
      %v6542 = vadd.f32 %v6535, %v835
      %v6543 = vadd.f32 %v6536, %v836
      %v6544 = vsel %vm1008, %v6537, -inf
      %6545 = vmax.xlane.f32.xlu0 %v6544
      %v6546 = vpop.xlane.xlu0 %6545
      %v6547 = vsel %vm1008, %v6538, -inf
      %6548 = vmax.xlane.f32.xlu0 %v6547
      %v6549 = vpop.xlane.xlu0 %6548
      %v6550 = vsel %vm1008, %v6539, -inf
      %6551 = vmax.xlane.f32.xlu0 %v6550
      %v6552 = vpop.xlane.xlu0 %6551
      %v6553 = vsel %vm1008, %v6540, -inf
      %6554 = vmax.xlane.f32.xlu0 %v6553
      %v6555 = vpop.xlane.xlu0 %6554
      %v6556 = vsel %vm1008, %v6541, -inf
      %6557 = vmax.xlane.f32.xlu0 %v6556
      %v6558 = vpop.xlane.xlu0 %6557
      %v6559 = vsel %vm1008, %v6542, -inf
      %6560 = vmax.xlane.f32.xlu0 %v6559
      %v6561 = vpop.xlane.xlu0 %6560
      %v6562 = vsel %vm1027, %v6543, -inf
      %6563 = vmax.xlane.f32.xlu0 %v6562
      %v6564 = vpop.xlane.xlu0 %6563
      %v6565 = vsub.f32 %v6537, %v6546
      %v6566 = vsub.f32 %v6538, %v6549
      %v6567 = vsub.f32 %v6539, %v6552
      %v6568 = vsub.f32 %v6540, %v6555
      %v6569 = vsub.f32 %v6541, %v6558
      %v6570 = vsub.f32 %v6542, %v6561
      %v6571 = vsub.f32 %v6543, %v6564
      %v6572 = vmul.f32 %v6565, 1.442695
      %v6573 = vpow.pop %v6572
      %v6574 = vmul.f32 %v6566, 1.442695
      %v6575 = vpow.pop %v6574
      %v6576 = vmul.f32 %v6567, 1.442695
      %v6577 = vpow.pop %v6576
      %v6578 = vmul.f32 %v6568, 1.442695
      %v6579 = vpow.pop %v6578
      %v6580 = vmul.f32 %v6569, 1.442695
      %v6581 = vpow.pop %v6580
      %v6582 = vmul.f32 %v6570, 1.442695
      %v6583 = vpow.pop %v6582
      %v6584 = vmul.f32 %v6571, 1.442695
      %v6585 = vpow.pop %v6584
      %v6586 = vsel %vm1008, %v6573, 0.0
      %6587 = vadd.xlane.f32.xlu0 %v6586
      %v6588 = vpop.xlane.xlu0 %6587
      %v6589 = vsel %vm1008, %v6575, 0.0
      %6590 = vadd.xlane.f32.xlu0 %v6589
      %v6591 = vpop.xlane.xlu0 %6590
      %v6592 = vsel %vm1008, %v6577, 0.0
      %6593 = vadd.xlane.f32.xlu0 %v6592
      %v6594 = vpop.xlane.xlu0 %6593
      %v6595 = vsel %vm1008, %v6579, 0.0
      %6596 = vadd.xlane.f32.xlu0 %v6595
      %v6597 = vpop.xlane.xlu0 %6596
      %v6598 = vsel %vm1008, %v6581, 0.0
      %6599 = vadd.xlane.f32.xlu0 %v6598
      %v6600 = vpop.xlane.xlu0 %6599
      %v6601 = vsel %vm1008, %v6583, 0.0
      %6602 = vadd.xlane.f32.xlu0 %v6601
      %v6603 = vpop.xlane.xlu0 %6602
      %v6604 = vsel %vm1027, %v6585, 0.0
      %6605 = vadd.xlane.f32.xlu0 %v6604
      %v6606 = vpop.xlane.xlu0 %6605
      %v6607 = vrcp.pop %v6588
      %v6608 = vrcp.pop %v6591
      %v6609 = vrcp.pop %v6594
      %v6610 = vrcp.pop %v6597
      %v6611 = vrcp.pop %v6600
      %v6612 = vrcp.pop %v6603
      %v6613 = vrcp.pop %v6606
      %v6614 = vmul.f32 %v6573, %v6607
      %v6615 = vmul.f32 %v6575, %v6608
      %v6616 = vmul.f32 %v6577, %v6609
      %v6617 = vmul.f32 %v6579, %v6610
      %v6618 = vmul.f32 %v6581, %v6611
      %v6619 = vmul.f32 %v6583, %v6612
      %v6620 = vmul.f32 %v6585, %v6613
      %s6621 = scalar_lea.vmem %s269, 728
      %6622 = vst.msk [vmem:[%s6621] sm:$0xff] %vm1008, %v6614
      %6623 = vst.msk [vmem:[%s6621 + $0x8] sm:$0xff] %vm1008, %v6615
      %6624 = vst.msk [vmem:[%s6621 + $0x10] sm:$0xff] %vm1008, %v6616
      %6625 = vst.msk [vmem:[%s6621 + $0x18] sm:$0xff] %vm1008, %v6617
      %6626 = vst.msk [vmem:[%s6621 + $0x20] sm:$0xff] %vm1008, %v6618
      %6627 = vst.msk [vmem:[%s6621 + $0x28] sm:$0xff] %vm1008, %v6619
      %6628 = vst.msk [vmem:[%s6621 + $0x30] sm:$0x1] %vm1027, %v6620
      %6629 = vrot.lane.b32.xlu0 %v6360, 88
      %v6630 = vpop.permute.xlu0 %6629
      %6631 = vrot.lane.b32.xlu0 %v6361, 88
      %v6632 = vpop.permute.xlu0 %6631
      %6633 = vrot.lane.b32.xlu0 %v6362, 88
      %v6634 = vpop.permute.xlu0 %6633
      %6635 = vrot.lane.b32.xlu0 %v6363, 88
      %v6636 = vpop.permute.xlu0 %6635
      %6637 = vrot.lane.b32.xlu0 %v6364, 88
      %v6638 = vpop.permute.xlu0 %6637
      %6639 = vrot.lane.b32.xlu0 %v6365, 88
      %v6640 = vpop.permute.xlu0 %6639
      %6641 = vrot.lane.b32.xlu0 %v6366, 88
      %v6642 = vpop.permute.xlu0 %6641
      %v6650 = vsel %vm1008, %v6614, 0
      %v6653 = vsel %vm1008, %v6615, 0
      %v6656 = vsel %vm1008, %v6616, 0
      %v6659 = vsel %vm1008, %v6617, 0
      %v6662 = vsel %vm1008, %v6618, 0
      %v6665 = vsel %vm1008, %v6619, 0
      %v6668 = vsel %vm1008, %v6620, 0
      %v6670 = vsel %vm1135, %v6642, 0
      %6672 = vmatprep.subr.mxu0 0.0
      %6673 = vmatpush1.msra.mxu0 0.0
      %6674 = vmatprep.subr.mxu0 0.0
      %6675 = vmatpush1.msra.mxu0 0.0
      %6676 = vmatprep.subr.mxu0 0.0
      %6677 = vmatpush1.msra.mxu0 0.0
      %6678 = vmatprep.subr.mxu0 0.0
      %6679 = vmatpush1.msra.mxu0 0.0
      %6680 = vmatprep.subr.mxu0 0.0
      %6681 = vmatpush1.msra.mxu0 0.0
      %6682 = vmatprep.subr.mxu0 0.0
      %6683 = vmatpush1.msra.mxu0 0.0
      %6684 = vmatprep.subr.mxu0 0.0
      %6685 = vmatpush1.msra.mxu0 0.0
      %6686 = vmatprep.subr.mxu0 0.0
      %6687 = vmatpush1.msra.mxu0 0.0
      %6688 = vmatprep.subr.mxu0 0.0
      %6689 = vmatpush1.msra.mxu0 0.0
      %6690 = vmatprep.subr.mxu0 0.0
      %6691 = vmatpush1.msra.mxu0 %v6670
      %6692 = vmatprep.subr.mxu0 0.0
      %6693 = vmatpush1.msra.mxu0 %v6640
      %6694 = vmatprep.subr.mxu0 0.0
      %6695 = vmatpush1.msra.mxu0 %v6638
      %6696 = vmatprep.subr.mxu0 0.0
      %6697 = vmatpush1.msra.mxu0 %v6636
      %6698 = vmatprep.subr.mxu0 0.0
      %6699 = vmatpush1.msra.mxu0 %v6634
      %6700 = vmatprep.subr.mxu0 0.0
      %6701 = vmatpush1.msra.mxu0 %v6632
      %6702 = vmatprep.subr.mxu0 0.0
      %6703 = vmatpush1.msra.mxu0 %v6630
      %6704 = vmatprep.subr.mxu0 0.0
      %6705 = vmatpush2.msra.mxu0 0.0
      %6706 = vmatprep.subr.mxu0 0.0
      %6707 = vmatpush2.msra.mxu0 0.0
      %6708 = vmatprep.subr.mxu0 0.0
      %6709 = vmatpush2.msra.mxu0 0.0
      %6710 = vmatprep.subr.mxu0 0.0
      %6711 = vmatpush2.msra.mxu0 0.0
      %6712 = vmatprep.subr.mxu0 0.0
      %6713 = vmatpush2.msra.mxu0 0.0
      %6714 = vmatprep.subr.mxu0 0.0
      %6715 = vmatpush2.msra.mxu0 0.0
      %6716 = vmatprep.subr.mxu0 0.0
      %6717 = vmatpush2.msra.mxu0 0.0
      %6718 = vmatprep.subr.mxu0 0.0
      %6719 = vmatpush2.msra.mxu0 0.0
      %6720 = vmatprep.subr.mxu0 0.0
      %6721 = vmatpush2.msra.mxu0 0.0
      %6722 = vmatprep.subr.mxu0 0.0
      %6723 = vmatpush2.msra.mxu0 0.0
      %6724 = vmatprep.subr.mxu0 0.0
      %6725 = vmatpush2.msra.mxu0 0.0
      %6726 = vmatprep.subr.mxu0 0.0
      %6727 = vmatpush2.msra.mxu0 0.0
      %6728 = vmatprep.subr.mxu0 0.0
      %6729 = vmatpush2.msra.mxu0 0.0
      %6730 = vmatprep.subr.mxu0 0.0
      %6731 = vmatpush2.msra.mxu0 0.0
      %6732 = vmatprep.subr.mxu0 0.0
      %6733 = vmatpush2.msra.mxu0 0.0
      %6734 = vmatprep.subr.mxu0 0.0
      %6735 = vmatpush2.msra.mxu0 0.0
      %6736 = vmatprep.mubr.f32.mxu0 0.0
      %6737 = vmatmul.mubr.f32.gmra.mxu0 %v6650
      %v6738 = vpop.f32.mrf.mxu0
      %v6739 = vadd.f32 0.0, %v6738
      %v6740 = vpop.f32.mrf.mxu0
      %6741 = vmatprep.mubr.f32.mxu0 0.0
      %6742 = vmatmul.mubr.f32.gmra.mxu0 %v6653
      %v6743 = vpop.f32.mrf.mxu0
      %v6744 = vadd.f32 0.0, %v6743
      %v6745 = vpop.f32.mrf.mxu0
      %6746 = vmatprep.mubr.f32.mxu0 0.0
      %6747 = vmatmul.mubr.f32.gmra.mxu0 %v6656
      %v6748 = vpop.f32.mrf.mxu0
      %v6749 = vadd.f32 0.0, %v6748
      %v6750 = vpop.f32.mrf.mxu0
      %6751 = vmatprep.mubr.f32.mxu0 0.0
      %6752 = vmatmul.mubr.f32.gmra.mxu0 %v6659
      %v6753 = vpop.f32.mrf.mxu0
      %v6754 = vadd.f32 0.0, %v6753
      %v6755 = vpop.f32.mrf.mxu0
      %6756 = vmatprep.mubr.f32.mxu0 0.0
      %6757 = vmatmul.mubr.f32.gmra.mxu0 %v6662
      %v6758 = vpop.f32.mrf.mxu0
      %v6759 = vadd.f32 0.0, %v6758
      %v6760 = vpop.f32.mrf.mxu0
      %6761 = vmatprep.mubr.f32.mxu0 0.0
      %6762 = vmatmul.mubr.f32.gmra.mxu0 %v6665
      %v6763 = vpop.f32.mrf.mxu0
      %v6764 = vadd.f32 0.0, %v6763
      %v6765 = vpop.f32.mrf.mxu0
      %6766 = vmatprep.mubr.f32.mxu0 0.0
      %6767 = vmatmul.mubr.f32.gmra.mxu0 %v6668
      %v6768 = vpop.f32.mrf.mxu0
      %v6769 = vadd.f32 0.0, %v6768
      %v6770 = vpop.f32.mrf.mxu0
      %6771 = vdwg.mxu0
      %6779 = vrot.lane.b32.xlu0 %v6739, 8
      %v6780 = vpop.permute.xlu0 %6779
      %6781 = vrot.lane.b32.xlu0 %v6744, 8
      %v6782 = vpop.permute.xlu0 %6781
      %6783 = vrot.lane.b32.xlu0 %v6749, 8
      %v6784 = vpop.permute.xlu0 %6783
      %6785 = vrot.lane.b32.xlu0 %v6754, 8
      %v6786 = vpop.permute.xlu0 %6785
      %6787 = vrot.lane.b32.xlu0 %v6759, 8
      %v6788 = vpop.permute.xlu0 %6787
      %6789 = vrot.lane.b32.xlu0 %v6764, 8
      %v6790 = vpop.permute.xlu0 %6789
      %6791 = vrot.lane.b32.xlu0 %v6769, 8
      %v6792 = vpop.permute.xlu0 %6791
      %6800 = vst.msk [vmem:[#allocation3 + $0x126] sm:$0xff] %vm1686, %v6780
      %6801 = vst.msk [vmem:[#allocation3 + $0x12e] sm:$0xff] %vm1686, %v6782
      %6802 = vst.msk [vmem:[#allocation3 + $0x136] sm:$0xff] %vm1686, %v6784
      %6803 = vst.msk [vmem:[#allocation3 + $0x13e] sm:$0xff] %vm1686, %v6786
      %6804 = vst.msk [vmem:[#allocation3 + $0x146] sm:$0xff] %vm1686, %v6788
      %6805 = vst.msk [vmem:[#allocation3 + $0x14e] sm:$0xff] %vm1686, %v6790
      %6806 = vst.msk [vmem:[#allocation3 + $0x156] sm:$0x1] %vm1693, %v6792
      %v6807 = vld [vmem:[#allocation2 + $0x157] sm:$0xff]
      %v6808 = vld [vmem:[#allocation2 + $0x15f] sm:$0xff]
      %v6809 = vld [vmem:[#allocation2 + $0x167] sm:$0xff]
      %v6810 = vld [vmem:[#allocation2 + $0x16f] sm:$0xff]
      %v6811 = vld [vmem:[#allocation2 + $0x177] sm:$0xff]
      %v6812 = vld [vmem:[#allocation2 + $0x17f] sm:$0xff]
      %v6813 = vld [vmem:[#allocation2 + $0x187] sm:$0x1]
      %6821 = vrot.lane.b32.xlu0 %v6807, 112
      %v6822 = vpop.permute.xlu0 %6821
      %6823 = vrot.lane.b32.xlu0 %v6808, 112
      %v6824 = vpop.permute.xlu0 %6823
      %6825 = vrot.lane.b32.xlu0 %v6809, 112
      %v6826 = vpop.permute.xlu0 %6825
      %6827 = vrot.lane.b32.xlu0 %v6810, 112
      %v6828 = vpop.permute.xlu0 %6827
      %6829 = vrot.lane.b32.xlu0 %v6811, 112
      %v6830 = vpop.permute.xlu0 %6829
      %6831 = vrot.lane.b32.xlu0 %v6812, 112
      %v6832 = vpop.permute.xlu0 %6831
      %6833 = vrot.lane.b32.xlu0 %v6813, 112
      %v6834 = vpop.permute.xlu0 %6833
      %v6835 = vsel %vm865, %v6807, 0
      %v6837 = vsel %vm865, %v6808, 0
      %v6839 = vsel %vm865, %v6809, 0
      %v6841 = vsel %vm865, %v6810, 0
      %v6843 = vsel %vm865, %v6811, 0
      %v6845 = vsel %vm865, %v6812, 0
      %v6847 = vsel %vm865, %v6813, 0
      %v6849 = vsel %vm865, %v6822, 0
      %v6851 = vsel %vm865, %v6824, 0
      %v6853 = vsel %vm865, %v6826, 0
      %v6855 = vsel %vm865, %v6828, 0
      %v6857 = vsel %vm865, %v6830, 0
      %v6859 = vsel %vm865, %v6832, 0
      %v6861 = vsel %vm865, %v6834, 0
      %6863 = vmatprep.subr.mxu0 0.0
      %6864 = vmatpush1.xpose.msra.mxu0 0.0
      %6865 = vmatprep.subr.mxu0 0.0
      %6866 = vmatpush1.xpose.msra.mxu0 0.0
      %6867 = vmatprep.subr.mxu0 0.0
      %6868 = vmatpush1.xpose.msra.mxu0 0.0
      %6869 = vmatprep.subr.mxu0 0.0
      %6870 = vmatpush1.xpose.msra.mxu0 0.0
      %6871 = vmatprep.subr.mxu0 0.0
      %6872 = vmatpush1.xpose.msra.mxu0 0.0
      %6873 = vmatprep.subr.mxu0 0.0
      %6874 = vmatpush1.xpose.msra.mxu0 0.0
      %6875 = vmatprep.subr.mxu0 0.0
      %6876 = vmatpush1.xpose.msra.mxu0 0.0
      %6877 = vmatprep.subr.mxu0 0.0
      %6878 = vmatpush1.xpose.msra.mxu0 0.0
      %6879 = vmatprep.subr.mxu0 0.0
      %6880 = vmatpush1.xpose.msra.mxu0 0.0
      %6881 = vmatprep.subr.mxu0 0.0
      %6882 = vmatpush1.xpose.msra.mxu0 %v6861
      %6883 = vmatprep.subr.mxu0 0.0
      %6884 = vmatpush1.xpose.msra.mxu0 %v6859
      %6885 = vmatprep.subr.mxu0 0.0
      %6886 = vmatpush1.xpose.msra.mxu0 %v6857
      %6887 = vmatprep.subr.mxu0 0.0
      %6888 = vmatpush1.xpose.msra.mxu0 %v6855
      %6889 = vmatprep.subr.mxu0 0.0
      %6890 = vmatpush1.xpose.msra.mxu0 %v6853
      %6891 = vmatprep.subr.mxu0 0.0
      %6892 = vmatpush1.xpose.msra.mxu0 %v6851
      %6893 = vmatprep.subr.mxu0 0.0
      %6894 = vmatpush1.xpose.msra.mxu0 %v6849
      %6895 = vmatprep.subr.mxu0 0.0
      %6896 = vmatpush2.xpose.msra.mxu0 0.0
      %6897 = vmatprep.subr.mxu0 0.0
      %6898 = vmatpush2.xpose.msra.mxu0 0.0
      %6899 = vmatprep.subr.mxu0 0.0
      %6900 = vmatpush2.xpose.msra.mxu0 0.0
      %6901 = vmatprep.subr.mxu0 0.0
      %6902 = vmatpush2.xpose.msra.mxu0 0.0
      %6903 = vmatprep.subr.mxu0 0.0
      %6904 = vmatpush2.xpose.msra.mxu0 0.0
      %6905 = vmatprep.subr.mxu0 0.0
      %6906 = vmatpush2.xpose.msra.mxu0 0.0
      %6907 = vmatprep.subr.mxu0 0.0
      %6908 = vmatpush2.xpose.msra.mxu0 0.0
      %6909 = vmatprep.subr.mxu0 0.0
      %6910 = vmatpush2.xpose.msra.mxu0 0.0
      %6911 = vmatprep.subr.mxu0 0.0
      %6912 = vmatpush2.xpose.msra.mxu0 0.0
      %6913 = vmatprep.subr.mxu0 0.0
      %6914 = vmatpush2.xpose.msra.mxu0 0.0
      %6915 = vmatprep.subr.mxu0 0.0
      %6916 = vmatpush2.xpose.msra.mxu0 0.0
      %6917 = vmatprep.subr.mxu0 0.0
      %6918 = vmatpush2.xpose.msra.mxu0 0.0
      %6919 = vmatprep.subr.mxu0 0.0
      %6920 = vmatpush2.xpose.msra.mxu0 0.0
      %6921 = vmatprep.subr.mxu0 0.0
      %6922 = vmatpush2.xpose.msra.mxu0 0.0
      %6923 = vmatprep.subr.mxu0 0.0
      %6924 = vmatpush2.xpose.msra.mxu0 0.0
      %6925 = vmatprep.subr.mxu0 0.0
      %6926 = vmatpush2.xpose.msra.mxu0 0.0
      %6927 = vmatprep.mubr.f32.mxu0 0.0
      %6928 = vmatmul.mubr.f32.gmra.mxu0 %v6835
      %v6929 = vpop.f32.mrf.mxu0
      %v6930 = vadd.f32 0.0, %v6929
      %v6931 = vpop.f32.mrf.mxu0
      %6932 = vmatprep.mubr.f32.mxu0 0.0
      %6933 = vmatmul.mubr.f32.gmra.mxu0 %v6837
      %v6934 = vpop.f32.mrf.mxu0
      %v6935 = vadd.f32 0.0, %v6934
      %v6936 = vpop.f32.mrf.mxu0
      %6937 = vmatprep.mubr.f32.mxu0 0.0
      %6938 = vmatmul.mubr.f32.gmra.mxu0 %v6839
      %v6939 = vpop.f32.mrf.mxu0
      %v6940 = vadd.f32 0.0, %v6939
      %v6941 = vpop.f32.mrf.mxu0
      %6942 = vmatprep.mubr.f32.mxu0 0.0
      %6943 = vmatmul.mubr.f32.gmra.mxu0 %v6841
      %v6944 = vpop.f32.mrf.mxu0
      %v6945 = vadd.f32 0.0, %v6944
      %v6946 = vpop.f32.mrf.mxu0
      %6947 = vmatprep.mubr.f32.mxu0 0.0
      %6948 = vmatmul.mubr.f32.gmra.mxu0 %v6843
      %v6949 = vpop.f32.mrf.mxu0
      %v6950 = vadd.f32 0.0, %v6949
      %v6951 = vpop.f32.mrf.mxu0
      %6952 = vmatprep.mubr.f32.mxu0 0.0
      %6953 = vmatmul.mubr.f32.gmra.mxu0 %v6845
      %v6954 = vpop.f32.mrf.mxu0
      %v6955 = vadd.f32 0.0, %v6954
      %v6956 = vpop.f32.mrf.mxu0
      %6957 = vmatprep.mubr.f32.mxu0 0.0
      %6958 = vmatmul.mubr.f32.gmra.mxu0 %v6847
      %v6959 = vpop.f32.mrf.mxu0
      %v6960 = vadd.f32 0.0, %v6959
      %v6961 = vpop.f32.mrf.mxu0
      %6962 = vdwg.mxu0
      %v6963 = vmul.f32 %v6930, 0.35355338
      %v6964 = vmul.f32 %v6935, 0.35355338
      %v6965 = vmul.f32 %v6940, 0.35355338
      %v6966 = vmul.f32 %v6945, 0.35355338
      %v6967 = vmul.f32 %v6950, 0.35355338
      %v6968 = vmul.f32 %v6955, 0.35355338
      %v6969 = vmul.f32 %v6960, 0.35355338
      %v6970 = vadd.f32 %v6963, %v830
      %v6971 = vadd.f32 %v6964, %v831
      %v6972 = vadd.f32 %v6965, %v832
      %v6973 = vadd.f32 %v6966, %v833
      %v6974 = vadd.f32 %v6967, %v834
      %v6975 = vadd.f32 %v6968, %v835
      %v6976 = vadd.f32 %v6969, %v836
      %v6977 = vsel %vm1008, %v6970, -inf
      %6978 = vmax.xlane.f32.xlu0 %v6977
      %v6979 = vpop.xlane.xlu0 %6978
      %v6980 = vsel %vm1008, %v6971, -inf
      %6981 = vmax.xlane.f32.xlu0 %v6980
      %v6982 = vpop.xlane.xlu0 %6981
      %v6983 = vsel %vm1008, %v6972, -inf
      %6984 = vmax.xlane.f32.xlu0 %v6983
      %v6985 = vpop.xlane.xlu0 %6984
      %v6986 = vsel %vm1008, %v6973, -inf
      %6987 = vmax.xlane.f32.xlu0 %v6986
      %v6988 = vpop.xlane.xlu0 %6987
      %v6989 = vsel %vm1008, %v6974, -inf
      %6990 = vmax.xlane.f32.xlu0 %v6989
      %v6991 = vpop.xlane.xlu0 %6990
      %v6992 = vsel %vm1008, %v6975, -inf
      %6993 = vmax.xlane.f32.xlu0 %v6992
      %v6994 = vpop.xlane.xlu0 %6993
      %v6995 = vsel %vm1027, %v6976, -inf
      %6996 = vmax.xlane.f32.xlu0 %v6995
      %v6997 = vpop.xlane.xlu0 %6996
      %v6998 = vsub.f32 %v6970, %v6979
      %v6999 = vsub.f32 %v6971, %v6982
      %v7000 = vsub.f32 %v6972, %v6985
      %v7001 = vsub.f32 %v6973, %v6988
      %v7002 = vsub.f32 %v6974, %v6991
      %v7003 = vsub.f32 %v6975, %v6994
      %v7004 = vsub.f32 %v6976, %v6997
      %v7005 = vmul.f32 %v6998, 1.442695
      %v7006 = vpow.pop %v7005
      %v7007 = vmul.f32 %v6999, 1.442695
      %v7008 = vpow.pop %v7007
      %v7009 = vmul.f32 %v7000, 1.442695
      %v7010 = vpow.pop %v7009
      %v7011 = vmul.f32 %v7001, 1.442695
      %v7012 = vpow.pop %v7011
      %v7013 = vmul.f32 %v7002, 1.442695
      %v7014 = vpow.pop %v7013
      %v7015 = vmul.f32 %v7003, 1.442695
      %v7016 = vpow.pop %v7015
      %v7017 = vmul.f32 %v7004, 1.442695
      %v7018 = vpow.pop %v7017
      %v7019 = vsel %vm1008, %v7006, 0.0
      %7020 = vadd.xlane.f32.xlu0 %v7019
      %v7021 = vpop.xlane.xlu0 %7020
      %v7022 = vsel %vm1008, %v7008, 0.0
      %7023 = vadd.xlane.f32.xlu0 %v7022
      %v7024 = vpop.xlane.xlu0 %7023
      %v7025 = vsel %vm1008, %v7010, 0.0
      %7026 = vadd.xlane.f32.xlu0 %v7025
      %v7027 = vpop.xlane.xlu0 %7026
      %v7028 = vsel %vm1008, %v7012, 0.0
      %7029 = vadd.xlane.f32.xlu0 %v7028
      %v7030 = vpop.xlane.xlu0 %7029
      %v7031 = vsel %vm1008, %v7014, 0.0
      %7032 = vadd.xlane.f32.xlu0 %v7031
      %v7033 = vpop.xlane.xlu0 %7032
      %v7034 = vsel %vm1008, %v7016, 0.0
      %7035 = vadd.xlane.f32.xlu0 %v7034
      %v7036 = vpop.xlane.xlu0 %7035
      %v7037 = vsel %vm1027, %v7018, 0.0
      %7038 = vadd.xlane.f32.xlu0 %v7037
      %v7039 = vpop.xlane.xlu0 %7038
      %v7040 = vrcp.pop %v7021
      %v7041 = vrcp.pop %v7024
      %v7042 = vrcp.pop %v7027
      %v7043 = vrcp.pop %v7030
      %v7044 = vrcp.pop %v7033
      %v7045 = vrcp.pop %v7036
      %v7046 = vrcp.pop %v7039
      %v7047 = vmul.f32 %v7006, %v7040
      %v7048 = vmul.f32 %v7008, %v7041
      %v7049 = vmul.f32 %v7010, %v7042
      %v7050 = vmul.f32 %v7012, %v7043
      %v7051 = vmul.f32 %v7014, %v7044
      %v7052 = vmul.f32 %v7016, %v7045
      %v7053 = vmul.f32 %v7018, %v7046
      %s7054 = scalar_lea.vmem %s269, 784
      %7055 = vst.msk [vmem:[%s7054] sm:$0xff] %vm1008, %v7047
      %7056 = vst.msk [vmem:[%s7054 + $0x8] sm:$0xff] %vm1008, %v7048
      %7057 = vst.msk [vmem:[%s7054 + $0x10] sm:$0xff] %vm1008, %v7049
      %7058 = vst.msk [vmem:[%s7054 + $0x18] sm:$0xff] %vm1008, %v7050
      %7059 = vst.msk [vmem:[%s7054 + $0x20] sm:$0xff] %vm1008, %v7051
      %7060 = vst.msk [vmem:[%s7054 + $0x28] sm:$0xff] %vm1008, %v7052
      %7061 = vst.msk [vmem:[%s7054 + $0x30] sm:$0x1] %vm1027, %v7053
      %7062 = vrot.lane.b32.xlu0 %v6807, 96
      %v7063 = vpop.permute.xlu0 %7062
      %7064 = vrot.lane.b32.xlu0 %v6808, 96
      %v7065 = vpop.permute.xlu0 %7064
      %7066 = vrot.lane.b32.xlu0 %v6809, 96
      %v7067 = vpop.permute.xlu0 %7066
      %7068 = vrot.lane.b32.xlu0 %v6810, 96
      %v7069 = vpop.permute.xlu0 %7068
      %7070 = vrot.lane.b32.xlu0 %v6811, 96
      %v7071 = vpop.permute.xlu0 %7070
      %7072 = vrot.lane.b32.xlu0 %v6812, 96
      %v7073 = vpop.permute.xlu0 %7072
      %7074 = vrot.lane.b32.xlu0 %v6813, 96
      %v7075 = vpop.permute.xlu0 %7074
      %v7083 = vsel %vm1008, %v7047, 0
      %v7086 = vsel %vm1008, %v7048, 0
      %v7089 = vsel %vm1008, %v7049, 0
      %v7092 = vsel %vm1008, %v7050, 0
      %v7095 = vsel %vm1008, %v7051, 0
      %v7098 = vsel %vm1008, %v7052, 0
      %v7101 = vsel %vm1008, %v7053, 0
      %v7103 = vsel %vm1135, %v7075, 0
      %7105 = vmatprep.subr.mxu0 0.0
      %7106 = vmatpush1.msra.mxu0 0.0
      %7107 = vmatprep.subr.mxu0 0.0
      %7108 = vmatpush1.msra.mxu0 0.0
      %7109 = vmatprep.subr.mxu0 0.0
      %7110 = vmatpush1.msra.mxu0 0.0
      %7111 = vmatprep.subr.mxu0 0.0
      %7112 = vmatpush1.msra.mxu0 0.0
      %7113 = vmatprep.subr.mxu0 0.0
      %7114 = vmatpush1.msra.mxu0 0.0
      %7115 = vmatprep.subr.mxu0 0.0
      %7116 = vmatpush1.msra.mxu0 0.0
      %7117 = vmatprep.subr.mxu0 0.0
      %7118 = vmatpush1.msra.mxu0 0.0
      %7119 = vmatprep.subr.mxu0 0.0
      %7120 = vmatpush1.msra.mxu0 0.0
      %7121 = vmatprep.subr.mxu0 0.0
      %7122 = vmatpush1.msra.mxu0 0.0
      %7123 = vmatprep.subr.mxu0 0.0
      %7124 = vmatpush1.msra.mxu0 %v7103
      %7125 = vmatprep.subr.mxu0 0.0
      %7126 = vmatpush1.msra.mxu0 %v7073
      %7127 = vmatprep.subr.mxu0 0.0
      %7128 = vmatpush1.msra.mxu0 %v7071
      %7129 = vmatprep.subr.mxu0 0.0
      %7130 = vmatpush1.msra.mxu0 %v7069
      %7131 = vmatprep.subr.mxu0 0.0
      %7132 = vmatpush1.msra.mxu0 %v7067
      %7133 = vmatprep.subr.mxu0 0.0
      %7134 = vmatpush1.msra.mxu0 %v7065
      %7135 = vmatprep.subr.mxu0 0.0
      %7136 = vmatpush1.msra.mxu0 %v7063
      %7137 = vmatprep.subr.mxu0 0.0
      %7138 = vmatpush2.msra.mxu0 0.0
      %7139 = vmatprep.subr.mxu0 0.0
      %7140 = vmatpush2.msra.mxu0 0.0
      %7141 = vmatprep.subr.mxu0 0.0
      %7142 = vmatpush2.msra.mxu0 0.0
      %7143 = vmatprep.subr.mxu0 0.0
      %7144 = vmatpush2.msra.mxu0 0.0
      %7145 = vmatprep.subr.mxu0 0.0
      %7146 = vmatpush2.msra.mxu0 0.0
      %7147 = vmatprep.subr.mxu0 0.0
      %7148 = vmatpush2.msra.mxu0 0.0
      %7149 = vmatprep.subr.mxu0 0.0
      %7150 = vmatpush2.msra.mxu0 0.0
      %7151 = vmatprep.subr.mxu0 0.0
      %7152 = vmatpush2.msra.mxu0 0.0
      %7153 = vmatprep.subr.mxu0 0.0
      %7154 = vmatpush2.msra.mxu0 0.0
      %7155 = vmatprep.subr.mxu0 0.0
      %7156 = vmatpush2.msra.mxu0 0.0
      %7157 = vmatprep.subr.mxu0 0.0
      %7158 = vmatpush2.msra.mxu0 0.0
      %7159 = vmatprep.subr.mxu0 0.0
      %7160 = vmatpush2.msra.mxu0 0.0
      %7161 = vmatprep.subr.mxu0 0.0
      %7162 = vmatpush2.msra.mxu0 0.0
      %7163 = vmatprep.subr.mxu0 0.0
      %7164 = vmatpush2.msra.mxu0 0.0
      %7165 = vmatprep.subr.mxu0 0.0
      %7166 = vmatpush2.msra.mxu0 0.0
      %7167 = vmatprep.subr.mxu0 0.0
      %7168 = vmatpush2.msra.mxu0 0.0
      %7169 = vmatprep.mubr.f32.mxu0 0.0
      %7170 = vmatmul.mubr.f32.gmra.mxu0 %v7083
      %v7171 = vpop.f32.mrf.mxu0
      %v7172 = vadd.f32 0.0, %v7171
      %v7173 = vpop.f32.mrf.mxu0
      %7174 = vmatprep.mubr.f32.mxu0 0.0
      %7175 = vmatmul.mubr.f32.gmra.mxu0 %v7086
      %v7176 = vpop.f32.mrf.mxu0
      %v7177 = vadd.f32 0.0, %v7176
      %v7178 = vpop.f32.mrf.mxu0
      %7179 = vmatprep.mubr.f32.mxu0 0.0
      %7180 = vmatmul.mubr.f32.gmra.mxu0 %v7089
      %v7181 = vpop.f32.mrf.mxu0
      %v7182 = vadd.f32 0.0, %v7181
      %v7183 = vpop.f32.mrf.mxu0
      %7184 = vmatprep.mubr.f32.mxu0 0.0
      %7185 = vmatmul.mubr.f32.gmra.mxu0 %v7092
      %v7186 = vpop.f32.mrf.mxu0
      %v7187 = vadd.f32 0.0, %v7186
      %v7188 = vpop.f32.mrf.mxu0
      %7189 = vmatprep.mubr.f32.mxu0 0.0
      %7190 = vmatmul.mubr.f32.gmra.mxu0 %v7095
      %v7191 = vpop.f32.mrf.mxu0
      %v7192 = vadd.f32 0.0, %v7191
      %v7193 = vpop.f32.mrf.mxu0
      %7194 = vmatprep.mubr.f32.mxu0 0.0
      %7195 = vmatmul.mubr.f32.gmra.mxu0 %v7098
      %v7196 = vpop.f32.mrf.mxu0
      %v7197 = vadd.f32 0.0, %v7196
      %v7198 = vpop.f32.mrf.mxu0
      %7199 = vmatprep.mubr.f32.mxu0 0.0
      %7200 = vmatmul.mubr.f32.gmra.mxu0 %v7101
      %v7201 = vpop.f32.mrf.mxu0
      %v7202 = vadd.f32 0.0, %v7201
      %v7203 = vpop.f32.mrf.mxu0
      %7204 = vdwg.mxu0
      %7205 = vst.msk [vmem:[#allocation3 + $0x157] sm:$0xff] %vm865, %v7172
      %7206 = vst.msk [vmem:[#allocation3 + $0x15f] sm:$0xff] %vm865, %v7177
      %7207 = vst.msk [vmem:[#allocation3 + $0x167] sm:$0xff] %vm865, %v7182
      %7208 = vst.msk [vmem:[#allocation3 + $0x16f] sm:$0xff] %vm865, %v7187
      %7209 = vst.msk [vmem:[#allocation3 + $0x177] sm:$0xff] %vm865, %v7192
      %7210 = vst.msk [vmem:[#allocation3 + $0x17f] sm:$0xff] %vm865, %v7197
      %7211 = vst.msk [vmem:[#allocation3 + $0x187] sm:$0x1] %vm1244, %v7202
      %v7212 = vld [vmem:[#allocation2 + $0x157] sm:$0xff]
      %v7213 = vld [vmem:[#allocation2 + $0x15f] sm:$0xff]
      %v7214 = vld [vmem:[#allocation2 + $0x167] sm:$0xff]
      %v7215 = vld [vmem:[#allocation2 + $0x16f] sm:$0xff]
      %v7216 = vld [vmem:[#allocation2 + $0x177] sm:$0xff]
      %v7217 = vld [vmem:[#allocation2 + $0x17f] sm:$0xff]
      %v7218 = vld [vmem:[#allocation2 + $0x187] sm:$0x1]
      %7226 = vrot.lane.b32.xlu0 %v7212, 120
      %v7227 = vpop.permute.xlu0 %7226
      %7228 = vrot.lane.b32.xlu0 %v7213, 120
      %v7229 = vpop.permute.xlu0 %7228
      %7230 = vrot.lane.b32.xlu0 %v7214, 120
      %v7231 = vpop.permute.xlu0 %7230
      %7232 = vrot.lane.b32.xlu0 %v7215, 120
      %v7233 = vpop.permute.xlu0 %7232
      %7234 = vrot.lane.b32.xlu0 %v7216, 120
      %v7235 = vpop.permute.xlu0 %7234
      %7236 = vrot.lane.b32.xlu0 %v7217, 120
      %v7237 = vpop.permute.xlu0 %7236
      %7238 = vrot.lane.b32.xlu0 %v7218, 120
      %v7239 = vpop.permute.xlu0 %7238
      %7240 = vrot.lane.b32.xlu0 %v7212, 104
      %v7241 = vpop.permute.xlu0 %7240
      %7242 = vrot.lane.b32.xlu0 %v7213, 104
      %v7243 = vpop.permute.xlu0 %7242
      %7244 = vrot.lane.b32.xlu0 %v7214, 104
      %v7245 = vpop.permute.xlu0 %7244
      %7246 = vrot.lane.b32.xlu0 %v7215, 104
      %v7247 = vpop.permute.xlu0 %7246
      %7248 = vrot.lane.b32.xlu0 %v7216, 104
      %v7249 = vpop.permute.xlu0 %7248
      %7250 = vrot.lane.b32.xlu0 %v7217, 104
      %v7251 = vpop.permute.xlu0 %7250
      %7252 = vrot.lane.b32.xlu0 %v7218, 104
      %v7253 = vpop.permute.xlu0 %7252
      %v7254 = vsel %vm865, %v7227, 0
      %v7256 = vsel %vm865, %v7229, 0
      %v7258 = vsel %vm865, %v7231, 0
      %v7260 = vsel %vm865, %v7233, 0
      %v7262 = vsel %vm865, %v7235, 0
      %v7264 = vsel %vm865, %v7237, 0
      %v7266 = vsel %vm865, %v7239, 0
      %v7268 = vsel %vm865, %v7241, 0
      %v7270 = vsel %vm865, %v7243, 0
      %v7272 = vsel %vm865, %v7245, 0
      %v7274 = vsel %vm865, %v7247, 0
      %v7276 = vsel %vm865, %v7249, 0
      %v7278 = vsel %vm865, %v7251, 0
      %v7280 = vsel %vm865, %v7253, 0
      %7282 = vmatprep.subr.mxu0 0.0
      %7283 = vmatpush1.xpose.msra.mxu0 0.0
      %7284 = vmatprep.subr.mxu0 0.0
      %7285 = vmatpush1.xpose.msra.mxu0 0.0
      %7286 = vmatprep.subr.mxu0 0.0
      %7287 = vmatpush1.xpose.msra.mxu0 0.0
      %7288 = vmatprep.subr.mxu0 0.0
      %7289 = vmatpush1.xpose.msra.mxu0 0.0
      %7290 = vmatprep.subr.mxu0 0.0
      %7291 = vmatpush1.xpose.msra.mxu0 0.0
      %7292 = vmatprep.subr.mxu0 0.0
      %7293 = vmatpush1.xpose.msra.mxu0 0.0
      %7294 = vmatprep.subr.mxu0 0.0
      %7295 = vmatpush1.xpose.msra.mxu0 0.0
      %7296 = vmatprep.subr.mxu0 0.0
      %7297 = vmatpush1.xpose.msra.mxu0 0.0
      %7298 = vmatprep.subr.mxu0 0.0
      %7299 = vmatpush1.xpose.msra.mxu0 0.0
      %7300 = vmatprep.subr.mxu0 0.0
      %7301 = vmatpush1.xpose.msra.mxu0 %v7280
      %7302 = vmatprep.subr.mxu0 0.0
      %7303 = vmatpush1.xpose.msra.mxu0 %v7278
      %7304 = vmatprep.subr.mxu0 0.0
      %7305 = vmatpush1.xpose.msra.mxu0 %v7276
      %7306 = vmatprep.subr.mxu0 0.0
      %7307 = vmatpush1.xpose.msra.mxu0 %v7274
      %7308 = vmatprep.subr.mxu0 0.0
      %7309 = vmatpush1.xpose.msra.mxu0 %v7272
      %7310 = vmatprep.subr.mxu0 0.0
      %7311 = vmatpush1.xpose.msra.mxu0 %v7270
      %7312 = vmatprep.subr.mxu0 0.0
      %7313 = vmatpush1.xpose.msra.mxu0 %v7268
      %7314 = vmatprep.subr.mxu0 0.0
      %7315 = vmatpush2.xpose.msra.mxu0 0.0
      %7316 = vmatprep.subr.mxu0 0.0
      %7317 = vmatpush2.xpose.msra.mxu0 0.0
      %7318 = vmatprep.subr.mxu0 0.0
      %7319 = vmatpush2.xpose.msra.mxu0 0.0
      %7320 = vmatprep.subr.mxu0 0.0
      %7321 = vmatpush2.xpose.msra.mxu0 0.0
      %7322 = vmatprep.subr.mxu0 0.0
      %7323 = vmatpush2.xpose.msra.mxu0 0.0
      %7324 = vmatprep.subr.mxu0 0.0
      %7325 = vmatpush2.xpose.msra.mxu0 0.0
      %7326 = vmatprep.subr.mxu0 0.0
      %7327 = vmatpush2.xpose.msra.mxu0 0.0
      %7328 = vmatprep.subr.mxu0 0.0
      %7329 = vmatpush2.xpose.msra.mxu0 0.0
      %7330 = vmatprep.subr.mxu0 0.0
      %7331 = vmatpush2.xpose.msra.mxu0 0.0
      %7332 = vmatprep.subr.mxu0 0.0
      %7333 = vmatpush2.xpose.msra.mxu0 0.0
      %7334 = vmatprep.subr.mxu0 0.0
      %7335 = vmatpush2.xpose.msra.mxu0 0.0
      %7336 = vmatprep.subr.mxu0 0.0
      %7337 = vmatpush2.xpose.msra.mxu0 0.0
      %7338 = vmatprep.subr.mxu0 0.0
      %7339 = vmatpush2.xpose.msra.mxu0 0.0
      %7340 = vmatprep.subr.mxu0 0.0
      %7341 = vmatpush2.xpose.msra.mxu0 0.0
      %7342 = vmatprep.subr.mxu0 0.0
      %7343 = vmatpush2.xpose.msra.mxu0 0.0
      %7344 = vmatprep.subr.mxu0 0.0
      %7345 = vmatpush2.xpose.msra.mxu0 0.0
      %7346 = vmatprep.mubr.f32.mxu0 0.0
      %7347 = vmatmul.mubr.f32.gmra.mxu0 %v7254
      %v7348 = vpop.f32.mrf.mxu0
      %v7349 = vadd.f32 0.0, %v7348
      %v7350 = vpop.f32.mrf.mxu0
      %7351 = vmatprep.mubr.f32.mxu0 0.0
      %7352 = vmatmul.mubr.f32.gmra.mxu0 %v7256
      %v7353 = vpop.f32.mrf.mxu0
      %v7354 = vadd.f32 0.0, %v7353
      %v7355 = vpop.f32.mrf.mxu0
      %7356 = vmatprep.mubr.f32.mxu0 0.0
      %7357 = vmatmul.mubr.f32.gmra.mxu0 %v7258
      %v7358 = vpop.f32.mrf.mxu0
      %v7359 = vadd.f32 0.0, %v7358
      %v7360 = vpop.f32.mrf.mxu0
      %7361 = vmatprep.mubr.f32.mxu0 0.0
      %7362 = vmatmul.mubr.f32.gmra.mxu0 %v7260
      %v7363 = vpop.f32.mrf.mxu0
      %v7364 = vadd.f32 0.0, %v7363
      %v7365 = vpop.f32.mrf.mxu0
      %7366 = vmatprep.mubr.f32.mxu0 0.0
      %7367 = vmatmul.mubr.f32.gmra.mxu0 %v7262
      %v7368 = vpop.f32.mrf.mxu0
      %v7369 = vadd.f32 0.0, %v7368
      %v7370 = vpop.f32.mrf.mxu0
      %7371 = vmatprep.mubr.f32.mxu0 0.0
      %7372 = vmatmul.mubr.f32.gmra.mxu0 %v7264
      %v7373 = vpop.f32.mrf.mxu0
      %v7374 = vadd.f32 0.0, %v7373
      %v7375 = vpop.f32.mrf.mxu0
      %7376 = vmatprep.mubr.f32.mxu0 0.0
      %7377 = vmatmul.mubr.f32.gmra.mxu0 %v7266
      %v7378 = vpop.f32.mrf.mxu0
      %v7379 = vadd.f32 0.0, %v7378
      %v7380 = vpop.f32.mrf.mxu0
      %7381 = vdwg.mxu0
      %v7382 = vmul.f32 %v7349, 0.35355338
      %v7383 = vmul.f32 %v7354, 0.35355338
      %v7384 = vmul.f32 %v7359, 0.35355338
      %v7385 = vmul.f32 %v7364, 0.35355338
      %v7386 = vmul.f32 %v7369, 0.35355338
      %v7387 = vmul.f32 %v7374, 0.35355338
      %v7388 = vmul.f32 %v7379, 0.35355338
      %v7389 = vadd.f32 %v7382, %v830
      %v7390 = vadd.f32 %v7383, %v831
      %v7391 = vadd.f32 %v7384, %v832
      %v7392 = vadd.f32 %v7385, %v833
      %v7393 = vadd.f32 %v7386, %v834
      %v7394 = vadd.f32 %v7387, %v835
      %v7395 = vadd.f32 %v7388, %v836
      %v7396 = vsel %vm1008, %v7389, -inf
      %7397 = vmax.xlane.f32.xlu0 %v7396
      %v7398 = vpop.xlane.xlu0 %7397
      %v7399 = vsel %vm1008, %v7390, -inf
      %7400 = vmax.xlane.f32.xlu0 %v7399
      %v7401 = vpop.xlane.xlu0 %7400
      %v7402 = vsel %vm1008, %v7391, -inf
      %7403 = vmax.xlane.f32.xlu0 %v7402
      %v7404 = vpop.xlane.xlu0 %7403
      %v7405 = vsel %vm1008, %v7392, -inf
      %7406 = vmax.xlane.f32.xlu0 %v7405
      %v7407 = vpop.xlane.xlu0 %7406
      %v7408 = vsel %vm1008, %v7393, -inf
      %7409 = vmax.xlane.f32.xlu0 %v7408
      %v7410 = vpop.xlane.xlu0 %7409
      %v7411 = vsel %vm1008, %v7394, -inf
      %7412 = vmax.xlane.f32.xlu0 %v7411
      %v7413 = vpop.xlane.xlu0 %7412
      %v7414 = vsel %vm1027, %v7395, -inf
      %7415 = vmax.xlane.f32.xlu0 %v7414
      %v7416 = vpop.xlane.xlu0 %7415
      %v7417 = vsub.f32 %v7389, %v7398
      %v7418 = vsub.f32 %v7390, %v7401
      %v7419 = vsub.f32 %v7391, %v7404
      %v7420 = vsub.f32 %v7392, %v7407
      %v7421 = vsub.f32 %v7393, %v7410
      %v7422 = vsub.f32 %v7394, %v7413
      %v7423 = vsub.f32 %v7395, %v7416
      %v7424 = vmul.f32 %v7417, 1.442695
      %v7425 = vpow.pop %v7424
      %v7426 = vmul.f32 %v7418, 1.442695
      %v7427 = vpow.pop %v7426
      %v7428 = vmul.f32 %v7419, 1.442695
      %v7429 = vpow.pop %v7428
      %v7430 = vmul.f32 %v7420, 1.442695
      %v7431 = vpow.pop %v7430
      %v7432 = vmul.f32 %v7421, 1.442695
      %v7433 = vpow.pop %v7432
      %v7434 = vmul.f32 %v7422, 1.442695
      %v7435 = vpow.pop %v7434
      %v7436 = vmul.f32 %v7423, 1.442695
      %v7437 = vpow.pop %v7436
      %v7438 = vsel %vm1008, %v7425, 0.0
      %7439 = vadd.xlane.f32.xlu0 %v7438
      %v7440 = vpop.xlane.xlu0 %7439
      %v7441 = vsel %vm1008, %v7427, 0.0
      %7442 = vadd.xlane.f32.xlu0 %v7441
      %v7443 = vpop.xlane.xlu0 %7442
      %v7444 = vsel %vm1008, %v7429, 0.0
      %7445 = vadd.xlane.f32.xlu0 %v7444
      %v7446 = vpop.xlane.xlu0 %7445
      %v7447 = vsel %vm1008, %v7431, 0.0
      %7448 = vadd.xlane.f32.xlu0 %v7447
      %v7449 = vpop.xlane.xlu0 %7448
      %v7450 = vsel %vm1008, %v7433, 0.0
      %7451 = vadd.xlane.f32.xlu0 %v7450
      %v7452 = vpop.xlane.xlu0 %7451
      %v7453 = vsel %vm1008, %v7435, 0.0
      %7454 = vadd.xlane.f32.xlu0 %v7453
      %v7455 = vpop.xlane.xlu0 %7454
      %v7456 = vsel %vm1027, %v7437, 0.0
      %7457 = vadd.xlane.f32.xlu0 %v7456
      %v7458 = vpop.xlane.xlu0 %7457
      %v7459 = vrcp.pop %v7440
      %v7460 = vrcp.pop %v7443
      %v7461 = vrcp.pop %v7446
      %v7462 = vrcp.pop %v7449
      %v7463 = vrcp.pop %v7452
      %v7464 = vrcp.pop %v7455
      %v7465 = vrcp.pop %v7458
      %v7466 = vmul.f32 %v7425, %v7459
      %v7467 = vmul.f32 %v7427, %v7460
      %v7468 = vmul.f32 %v7429, %v7461
      %v7469 = vmul.f32 %v7431, %v7462
      %v7470 = vmul.f32 %v7433, %v7463
      %v7471 = vmul.f32 %v7435, %v7464
      %v7472 = vmul.f32 %v7437, %v7465
      %s7473 = scalar_lea.vmem %s269, 840
      %7474 = vst.msk [vmem:[%s7473] sm:$0xff] %vm1008, %v7466
      %7475 = vst.msk [vmem:[%s7473 + $0x8] sm:$0xff] %vm1008, %v7467
      %7476 = vst.msk [vmem:[%s7473 + $0x10] sm:$0xff] %vm1008, %v7468
      %7477 = vst.msk [vmem:[%s7473 + $0x18] sm:$0xff] %vm1008, %v7469
      %7478 = vst.msk [vmem:[%s7473 + $0x20] sm:$0xff] %vm1008, %v7470
      %7479 = vst.msk [vmem:[%s7473 + $0x28] sm:$0xff] %vm1008, %v7471
      %7480 = vst.msk [vmem:[%s7473 + $0x30] sm:$0x1] %vm1027, %v7472
      %7481 = vrot.lane.b32.xlu0 %v7212, 88
      %v7482 = vpop.permute.xlu0 %7481
      %7483 = vrot.lane.b32.xlu0 %v7213, 88
      %v7484 = vpop.permute.xlu0 %7483
      %7485 = vrot.lane.b32.xlu0 %v7214, 88
      %v7486 = vpop.permute.xlu0 %7485
      %7487 = vrot.lane.b32.xlu0 %v7215, 88
      %v7488 = vpop.permute.xlu0 %7487
      %7489 = vrot.lane.b32.xlu0 %v7216, 88
      %v7490 = vpop.permute.xlu0 %7489
      %7491 = vrot.lane.b32.xlu0 %v7217, 88
      %v7492 = vpop.permute.xlu0 %7491
      %7493 = vrot.lane.b32.xlu0 %v7218, 88
      %v7494 = vpop.permute.xlu0 %7493
      %v7502 = vsel %vm1008, %v7466, 0
      %v7505 = vsel %vm1008, %v7467, 0
      %v7508 = vsel %vm1008, %v7468, 0
      %v7511 = vsel %vm1008, %v7469, 0
      %v7514 = vsel %vm1008, %v7470, 0
      %v7517 = vsel %vm1008, %v7471, 0
      %v7520 = vsel %vm1008, %v7472, 0
      %v7522 = vsel %vm1135, %v7494, 0
      %7524 = vmatprep.subr.mxu0 0.0
      %7525 = vmatpush1.msra.mxu0 0.0
      %7526 = vmatprep.subr.mxu0 0.0
      %7527 = vmatpush1.msra.mxu0 0.0
      %7528 = vmatprep.subr.mxu0 0.0
      %7529 = vmatpush1.msra.mxu0 0.0
      %7530 = vmatprep.subr.mxu0 0.0
      %7531 = vmatpush1.msra.mxu0 0.0
      %7532 = vmatprep.subr.mxu0 0.0
      %7533 = vmatpush1.msra.mxu0 0.0
      %7534 = vmatprep.subr.mxu0 0.0
      %7535 = vmatpush1.msra.mxu0 0.0
      %7536 = vmatprep.subr.mxu0 0.0
      %7537 = vmatpush1.msra.mxu0 0.0
      %7538 = vmatprep.subr.mxu0 0.0
      %7539 = vmatpush1.msra.mxu0 0.0
      %7540 = vmatprep.subr.mxu0 0.0
      %7541 = vmatpush1.msra.mxu0 0.0
      %7542 = vmatprep.subr.mxu0 0.0
      %7543 = vmatpush1.msra.mxu0 %v7522
      %7544 = vmatprep.subr.mxu0 0.0
      %7545 = vmatpush1.msra.mxu0 %v7492
      %7546 = vmatprep.subr.mxu0 0.0
      %7547 = vmatpush1.msra.mxu0 %v7490
      %7548 = vmatprep.subr.mxu0 0.0
      %7549 = vmatpush1.msra.mxu0 %v7488
      %7550 = vmatprep.subr.mxu0 0.0
      %7551 = vmatpush1.msra.mxu0 %v7486
      %7552 = vmatprep.subr.mxu0 0.0
      %7553 = vmatpush1.msra.mxu0 %v7484
      %7554 = vmatprep.subr.mxu0 0.0
      %7555 = vmatpush1.msra.mxu0 %v7482
      %7556 = vmatprep.subr.mxu0 0.0
      %7557 = vmatpush2.msra.mxu0 0.0
      %7558 = vmatprep.subr.mxu0 0.0
      %7559 = vmatpush2.msra.mxu0 0.0
      %7560 = vmatprep.subr.mxu0 0.0
      %7561 = vmatpush2.msra.mxu0 0.0
      %7562 = vmatprep.subr.mxu0 0.0
      %7563 = vmatpush2.msra.mxu0 0.0
      %7564 = vmatprep.subr.mxu0 0.0
      %7565 = vmatpush2.msra.mxu0 0.0
      %7566 = vmatprep.subr.mxu0 0.0
      %7567 = vmatpush2.msra.mxu0 0.0
      %7568 = vmatprep.subr.mxu0 0.0
      %7569 = vmatpush2.msra.mxu0 0.0
      %7570 = vmatprep.subr.mxu0 0.0
      %7571 = vmatpush2.msra.mxu0 0.0
      %7572 = vmatprep.subr.mxu0 0.0
      %7573 = vmatpush2.msra.mxu0 0.0
      %7574 = vmatprep.subr.mxu0 0.0
      %7575 = vmatpush2.msra.mxu0 0.0
      %7576 = vmatprep.subr.mxu0 0.0
      %7577 = vmatpush2.msra.mxu0 0.0
      %7578 = vmatprep.subr.mxu0 0.0
      %7579 = vmatpush2.msra.mxu0 0.0
      %7580 = vmatprep.subr.mxu0 0.0
      %7581 = vmatpush2.msra.mxu0 0.0
      %7582 = vmatprep.subr.mxu0 0.0
      %7583 = vmatpush2.msra.mxu0 0.0
      %7584 = vmatprep.subr.mxu0 0.0
      %7585 = vmatpush2.msra.mxu0 0.0
      %7586 = vmatprep.subr.mxu0 0.0
      %7587 = vmatpush2.msra.mxu0 0.0
      %7588 = vmatprep.mubr.f32.mxu0 0.0
      %7589 = vmatmul.mubr.f32.gmra.mxu0 %v7502
      %v7590 = vpop.f32.mrf.mxu0
      %v7591 = vadd.f32 0.0, %v7590
      %v7592 = vpop.f32.mrf.mxu0
      %7593 = vmatprep.mubr.f32.mxu0 0.0
      %7594 = vmatmul.mubr.f32.gmra.mxu0 %v7505
      %v7595 = vpop.f32.mrf.mxu0
      %v7596 = vadd.f32 0.0, %v7595
      %v7597 = vpop.f32.mrf.mxu0
      %7598 = vmatprep.mubr.f32.mxu0 0.0
      %7599 = vmatmul.mubr.f32.gmra.mxu0 %v7508
      %v7600 = vpop.f32.mrf.mxu0
      %v7601 = vadd.f32 0.0, %v7600
      %v7602 = vpop.f32.mrf.mxu0
      %7603 = vmatprep.mubr.f32.mxu0 0.0
      %7604 = vmatmul.mubr.f32.gmra.mxu0 %v7511
      %v7605 = vpop.f32.mrf.mxu0
      %v7606 = vadd.f32 0.0, %v7605
      %v7607 = vpop.f32.mrf.mxu0
      %7608 = vmatprep.mubr.f32.mxu0 0.0
      %7609 = vmatmul.mubr.f32.gmra.mxu0 %v7514
      %v7610 = vpop.f32.mrf.mxu0
      %v7611 = vadd.f32 0.0, %v7610
      %v7612 = vpop.f32.mrf.mxu0
      %7613 = vmatprep.mubr.f32.mxu0 0.0
      %7614 = vmatmul.mubr.f32.gmra.mxu0 %v7517
      %v7615 = vpop.f32.mrf.mxu0
      %v7616 = vadd.f32 0.0, %v7615
      %v7617 = vpop.f32.mrf.mxu0
      %7618 = vmatprep.mubr.f32.mxu0 0.0
      %7619 = vmatmul.mubr.f32.gmra.mxu0 %v7520
      %v7620 = vpop.f32.mrf.mxu0
      %v7621 = vadd.f32 0.0, %v7620
      %v7622 = vpop.f32.mrf.mxu0
      %7623 = vdwg.mxu0
      %7631 = vrot.lane.b32.xlu0 %v7591, 8
      %v7632 = vpop.permute.xlu0 %7631
      %7633 = vrot.lane.b32.xlu0 %v7596, 8
      %v7634 = vpop.permute.xlu0 %7633
      %7635 = vrot.lane.b32.xlu0 %v7601, 8
      %v7636 = vpop.permute.xlu0 %7635
      %7637 = vrot.lane.b32.xlu0 %v7606, 8
      %v7638 = vpop.permute.xlu0 %7637
      %7639 = vrot.lane.b32.xlu0 %v7611, 8
      %v7640 = vpop.permute.xlu0 %7639
      %7641 = vrot.lane.b32.xlu0 %v7616, 8
      %v7642 = vpop.permute.xlu0 %7641
      %7643 = vrot.lane.b32.xlu0 %v7621, 8
      %v7644 = vpop.permute.xlu0 %7643
      %7652 = vst.msk [vmem:[#allocation3 + $0x157] sm:$0xff] %vm1686, %v7632
      %7653 = vst.msk [vmem:[#allocation3 + $0x15f] sm:$0xff] %vm1686, %v7634
      %7654 = vst.msk [vmem:[#allocation3 + $0x167] sm:$0xff] %vm1686, %v7636
      %7655 = vst.msk [vmem:[#allocation3 + $0x16f] sm:$0xff] %vm1686, %v7638
      %7656 = vst.msk [vmem:[#allocation3 + $0x177] sm:$0xff] %vm1686, %v7640
      %7657 = vst.msk [vmem:[#allocation3 + $0x17f] sm:$0xff] %vm1686, %v7642
      %7658 = vst.msk [vmem:[#allocation3 + $0x187] sm:$0x1] %vm1693, %v7644
      %v7659 = vld [vmem:[#allocation3] sm:$0xff]
      %v7660 = vld [vmem:[#allocation3 + $0x8] sm:$0xff]
      %v7661 = vld [vmem:[#allocation3 + $0x10] sm:$0xff]
      %v7662 = vld [vmem:[#allocation3 + $0x18] sm:$0xff]
      %v7663 = vld [vmem:[#allocation3 + $0x20] sm:$0xff]
      %v7664 = vld [vmem:[#allocation3 + $0x28] sm:$0xff]
      %v7665 = vld [vmem:[#allocation3 + $0x30] sm:$0xff]
      %v7666 = vld [vmem:[#allocation3 + $0x38] sm:$0xff]
      %v7667 = vld [vmem:[#allocation3 + $0x40] sm:$0xff]
      %v7668 = vld [vmem:[#allocation3 + $0x48] sm:$0xff]
      %v7669 = vld [vmem:[#allocation3 + $0x50] sm:$0xff]
      %v7670 = vld [vmem:[#allocation3 + $0x58] sm:$0xff]
      %v7671 = vld [vmem:[#allocation3 + $0x60] sm:$0xff]
      %v7672 = vld [vmem:[#allocation3 + $0x68] sm:$0xff]
      %v7673 = vld [vmem:[#allocation3 + $0x70] sm:$0xff]
      %v7674 = vld [vmem:[#allocation3 + $0x78] sm:$0xff]
      %v7675 = vld [vmem:[#allocation3 + $0x80] sm:$0xff]
      %v7676 = vld [vmem:[#allocation3 + $0x88] sm:$0xff]
      %v7677 = vld [vmem:[#allocation3 + $0x90] sm:$0xff]
      %v7678 = vld [vmem:[#allocation3 + $0x98] sm:$0xff]
      %v7679 = vld [vmem:[#allocation3 + $0xa0] sm:$0xff]
      %v7680 = vld [vmem:[#allocation3 + $0xa8] sm:$0xff]
      %v7681 = vld [vmem:[#allocation3 + $0xb0] sm:$0xff]
      %v7682 = vld [vmem:[#allocation3 + $0xb8] sm:$0xff]
      %v7683 = vld [vmem:[#allocation3 + $0xc0] sm:$0xff]
      %v7684 = vld [vmem:[#allocation3 + $0xc8] sm:$0xff]
      %v7685 = vld [vmem:[#allocation3 + $0xd0] sm:$0xff]
      %v7686 = vld [vmem:[#allocation3 + $0xd8] sm:$0xff]
      %v7687 = vld [vmem:[#allocation3 + $0xe0] sm:$0xff]
      %v7688 = vld [vmem:[#allocation3 + $0xe8] sm:$0xff]
      %v7689 = vld [vmem:[#allocation3 + $0xf0] sm:$0xff]
      %v7690 = vld [vmem:[#allocation3 + $0xf8] sm:$0xff]
      %v7691 = vld [vmem:[#allocation3 + $0x100] sm:$0xff]
      %v7692 = vld [vmem:[#allocation3 + $0x108] sm:$0xff]
      %v7693 = vld [vmem:[#allocation3 + $0x110] sm:$0xff]
      %v7694 = vld [vmem:[#allocation3 + $0x118] sm:$0xff]
      %v7695 = vld [vmem:[#allocation3 + $0x120] sm:$0xff]
      %v7696 = vld [vmem:[#allocation3 + $0x128] sm:$0xff]
      %v7697 = vld [vmem:[#allocation3 + $0x130] sm:$0xff]
      %v7698 = vld [vmem:[#allocation3 + $0x138] sm:$0xff]
      %v7699 = vld [vmem:[#allocation3 + $0x140] sm:$0xff]
      %v7700 = vld [vmem:[#allocation3 + $0x148] sm:$0xff]
      %v7701 = vld [vmem:[#allocation3 + $0x150] sm:$0xff]
      %v7702 = vld [vmem:[#allocation3 + $0x158] sm:$0xff]
      %v7703 = vld [vmem:[#allocation3 + $0x160] sm:$0xff]
      %v7704 = vld [vmem:[#allocation3 + $0x168] sm:$0xff]
      %v7705 = vld [vmem:[#allocation3 + $0x170] sm:$0xff]
      %v7706 = vld [vmem:[#allocation3 + $0x178] sm:$0xff]
      %v7707 = vld [vmem:[#allocation3 + $0x180] sm:$0xff]
      %v7708 = vld [vmem:[%s2] sm:$0xff]
      %v7709 = vld [vmem:[%s2 + $0x8] sm:$0xff]
      %v7710 = vld [vmem:[%s3] sm:$0x1]
      %v7712 = vlaneseq
      %v7713 = vshrl.u32 %v7712, 7
      %v7714 = vsub.s32 0, %v7713
      %v7715 = vrot.slane %v7710, %v7714
      %v7718 = vsel %vm322, %v7659, 0
      %v7721 = vsel %vm322, %v7660, 0
      %v7724 = vsel %vm322, %v7661, 0
      %v7727 = vsel %vm322, %v7662, 0
      %v7730 = vsel %vm322, %v7663, 0
      %v7733 = vsel %vm322, %v7664, 0
      %v7736 = vsel %vm322, %v7665, 0
      %v7739 = vsel %vm322, %v7666, 0
      %v7742 = vsel %vm322, %v7667, 0
      %v7745 = vsel %vm322, %v7668, 0
      %v7748 = vsel %vm322, %v7669, 0
      %v7751 = vsel %vm322, %v7670, 0
      %v7754 = vsel %vm322, %v7671, 0
      %v7757 = vsel %vm322, %v7672, 0
      %v7760 = vsel %vm322, %v7673, 0
      %v7763 = vsel %vm322, %v7674, 0
      %v7766 = vsel %vm322, %v7675, 0
      %v7769 = vsel %vm322, %v7676, 0
      %v7772 = vsel %vm322, %v7677, 0
      %v7775 = vsel %vm322, %v7678, 0
      %v7778 = vsel %vm322, %v7679, 0
      %v7781 = vsel %vm322, %v7680, 0
      %v7784 = vsel %vm322, %v7681, 0
      %v7787 = vsel %vm322, %v7682, 0
      %v7790 = vsel %vm322, %v7683, 0
      %v7793 = vsel %vm322, %v7684, 0
      %v7796 = vsel %vm322, %v7685, 0
      %v7799 = vsel %vm322, %v7686, 0
      %v7802 = vsel %vm322, %v7687, 0
      %v7805 = vsel %vm322, %v7688, 0
      %v7808 = vsel %vm322, %v7689, 0
      %v7811 = vsel %vm322, %v7690, 0
      %v7814 = vsel %vm322, %v7691, 0
      %v7817 = vsel %vm322, %v7692, 0
      %v7820 = vsel %vm322, %v7693, 0
      %v7823 = vsel %vm322, %v7694, 0
      %v7826 = vsel %vm322, %v7695, 0
      %v7829 = vsel %vm322, %v7696, 0
      %v7832 = vsel %vm322, %v7697, 0
      %v7835 = vsel %vm322, %v7698, 0
      %v7838 = vsel %vm322, %v7699, 0
      %v7841 = vsel %vm322, %v7700, 0
      %v7844 = vsel %vm322, %v7701, 0
      %v7847 = vsel %vm322, %v7702, 0
      %v7850 = vsel %vm322, %v7703, 0
      %v7853 = vsel %vm322, %v7704, 0
      %v7856 = vsel %vm322, %v7705, 0
      %v7859 = vsel %vm322, %v7706, 0
      %v7862 = vsel %vm322, %v7707, 0
      %7864 = vmatprep.subr.mxu0 0.0
      %7865 = vmatpush1.msra.mxu0 0.0
      %7866 = vmatprep.subr.mxu0 0.0
      %7867 = vmatpush1.msra.mxu0 0.0
      %7868 = vmatprep.subr.mxu0 0.0
      %7869 = vmatpush1.msra.mxu0 0.0
      %7870 = vmatprep.subr.mxu0 0.0
      %7871 = vmatpush1.msra.mxu0 0.0
      %7872 = vmatprep.subr.mxu0 0.0
      %7873 = vmatpush1.msra.mxu0 0.0
      %7874 = vmatprep.subr.mxu0 0.0
      %7875 = vmatpush1.msra.mxu0 0.0
      %7876 = vmatprep.subr.mxu0 0.0
      %7877 = vmatpush1.msra.mxu0 0.0
      %7878 = vmatprep.subr.mxu0 0.0
      %7879 = vmatpush1.msra.mxu0 0.0
      %7880 = vmatprep.subr.mxu0 0.0
      %7881 = vmatpush1.msra.mxu0 0.0
      %7882 = vmatprep.subr.mxu0 0.0
      %7883 = vmatpush1.msra.mxu0 0.0
      %7884 = vmatprep.subr.mxu0 0.0
      %7885 = vmatpush1.msra.mxu0 0.0
      %7886 = vmatprep.subr.mxu0 0.0
      %7887 = vmatpush1.msra.mxu0 0.0
      %7888 = vmatprep.subr.mxu0 0.0
      %7889 = vmatpush1.msra.mxu0 0.0
      %7890 = vmatprep.subr.mxu0 0.0
      %7891 = vmatpush1.msra.mxu0 0.0
      %7892 = vmatprep.subr.mxu0 0.0
      %7893 = vmatpush1.msra.mxu0 %v7709
      %7894 = vmatprep.subr.mxu0 0.0
      %7895 = vmatpush1.msra.mxu0 %v7708
      %7896 = vmatprep.subr.mxu0 0.0
      %7897 = vmatpush2.msra.mxu0 0.0
      %7898 = vmatprep.subr.mxu0 0.0
      %7899 = vmatpush2.msra.mxu0 0.0
      %7900 = vmatprep.subr.mxu0 0.0
      %7901 = vmatpush2.msra.mxu0 0.0
      %7902 = vmatprep.subr.mxu0 0.0
      %7903 = vmatpush2.msra.mxu0 0.0
      %7904 = vmatprep.subr.mxu0 0.0
      %7905 = vmatpush2.msra.mxu0 0.0
      %7906 = vmatprep.subr.mxu0 0.0
      %7907 = vmatpush2.msra.mxu0 0.0
      %7908 = vmatprep.subr.mxu0 0.0
      %7909 = vmatpush2.msra.mxu0 0.0
      %7910 = vmatprep.subr.mxu0 0.0
      %7911 = vmatpush2.msra.mxu0 0.0
      %7912 = vmatprep.subr.mxu0 0.0
      %7913 = vmatpush2.msra.mxu0 0.0
      %7914 = vmatprep.subr.mxu0 0.0
      %7915 = vmatpush2.msra.mxu0 0.0
      %7916 = vmatprep.subr.mxu0 0.0
      %7917 = vmatpush2.msra.mxu0 0.0
      %7918 = vmatprep.subr.mxu0 0.0
      %7919 = vmatpush2.msra.mxu0 0.0
      %7920 = vmatprep.subr.mxu0 0.0
      %7921 = vmatpush2.msra.mxu0 0.0
      %7922 = vmatprep.subr.mxu0 0.0
      %7923 = vmatpush2.msra.mxu0 0.0
      %7924 = vmatprep.subr.mxu0 0.0
      %7925 = vmatpush2.msra.mxu0 0.0
      %7926 = vmatprep.subr.mxu0 0.0
      %7927 = vmatpush2.msra.mxu0 0.0
      %7928 = vmatprep.mubr.f32.mxu0 0.0
      %7929 = vmatmul.mubr.f32.gmra.mxu0 %v7718
      %v7930 = vpop.f32.mrf.mxu0
      %v7931 = vadd.f32 %v7715, %v7930
      %v7932 = vpop.f32.mrf.mxu0
      %7933 = vmatprep.mubr.f32.mxu0 0.0
      %7934 = vmatmul.mubr.f32.gmra.mxu0 %v7721
      %v7935 = vpop.f32.mrf.mxu0
      %v7936 = vadd.f32 %v7715, %v7935
      %v7937 = vpop.f32.mrf.mxu0
      %7938 = vmatprep.mubr.f32.mxu0 0.0
      %7939 = vmatmul.mubr.f32.gmra.mxu0 %v7724
      %v7940 = vpop.f32.mrf.mxu0
      %v7941 = vadd.f32 %v7715, %v7940
      %v7942 = vpop.f32.mrf.mxu0
      %7943 = vmatprep.mubr.f32.mxu0 0.0
      %7944 = vmatmul.mubr.f32.gmra.mxu0 %v7727
      %v7945 = vpop.f32.mrf.mxu0
      %v7946 = vadd.f32 %v7715, %v7945
      %v7947 = vpop.f32.mrf.mxu0
      %7948 = vmatprep.mubr.f32.mxu0 0.0
      %7949 = vmatmul.mubr.f32.gmra.mxu0 %v7730
      %v7950 = vpop.f32.mrf.mxu0
      %v7951 = vadd.f32 %v7715, %v7950
      %v7952 = vpop.f32.mrf.mxu0
      %7953 = vmatprep.mubr.f32.mxu0 0.0
      %7954 = vmatmul.mubr.f32.gmra.mxu0 %v7733
      %v7955 = vpop.f32.mrf.mxu0
      %v7956 = vadd.f32 %v7715, %v7955
      %v7957 = vpop.f32.mrf.mxu0
      %7958 = vmatprep.mubr.f32.mxu0 0.0
      %7959 = vmatmul.mubr.f32.gmra.mxu0 %v7736
      %v7960 = vpop.f32.mrf.mxu0
      %v7961 = vadd.f32 %v7715, %v7960
      %v7962 = vpop.f32.mrf.mxu0
      %7963 = vmatprep.mubr.f32.mxu0 0.0
      %7964 = vmatmul.mubr.f32.gmra.mxu0 %v7739
      %v7965 = vpop.f32.mrf.mxu0
      %v7966 = vadd.f32 %v7715, %v7965
      %v7967 = vpop.f32.mrf.mxu0
      %7968 = vmatprep.mubr.f32.mxu0 0.0
      %7969 = vmatmul.mubr.f32.gmra.mxu0 %v7742
      %v7970 = vpop.f32.mrf.mxu0
      %v7971 = vadd.f32 %v7715, %v7970
      %v7972 = vpop.f32.mrf.mxu0
      %7973 = vmatprep.mubr.f32.mxu0 0.0
      %7974 = vmatmul.mubr.f32.gmra.mxu0 %v7745
      %v7975 = vpop.f32.mrf.mxu0
      %v7976 = vadd.f32 %v7715, %v7975
      %v7977 = vpop.f32.mrf.mxu0
      %7978 = vmatprep.mubr.f32.mxu0 0.0
      %7979 = vmatmul.mubr.f32.gmra.mxu0 %v7748
      %v7980 = vpop.f32.mrf.mxu0
      %v7981 = vadd.f32 %v7715, %v7980
      %v7982 = vpop.f32.mrf.mxu0
      %7983 = vmatprep.mubr.f32.mxu0 0.0
      %7984 = vmatmul.mubr.f32.gmra.mxu0 %v7751
      %v7985 = vpop.f32.mrf.mxu0
      %v7986 = vadd.f32 %v7715, %v7985
      %v7987 = vpop.f32.mrf.mxu0
      %7988 = vmatprep.mubr.f32.mxu0 0.0
      %7989 = vmatmul.mubr.f32.gmra.mxu0 %v7754
      %v7990 = vpop.f32.mrf.mxu0
      %v7991 = vadd.f32 %v7715, %v7990
      %v7992 = vpop.f32.mrf.mxu0
      %7993 = vmatprep.mubr.f32.mxu0 0.0
      %7994 = vmatmul.mubr.f32.gmra.mxu0 %v7757
      %v7995 = vpop.f32.mrf.mxu0
      %v7996 = vadd.f32 %v7715, %v7995
      %v7997 = vpop.f32.mrf.mxu0
      %7998 = vmatprep.mubr.f32.mxu0 0.0
      %7999 = vmatmul.mubr.f32.gmra.mxu0 %v7760
      %v8000 = vpop.f32.mrf.mxu0
      %v8001 = vadd.f32 %v7715, %v8000
      %v8002 = vpop.f32.mrf.mxu0
      %8003 = vmatprep.mubr.f32.mxu0 0.0
      %8004 = vmatmul.mubr.f32.gmra.mxu0 %v7763
      %v8005 = vpop.f32.mrf.mxu0
      %v8006 = vadd.f32 %v7715, %v8005
      %v8007 = vpop.f32.mrf.mxu0
      %8008 = vmatprep.mubr.f32.mxu0 0.0
      %8009 = vmatmul.mubr.f32.gmra.mxu0 %v7766
      %v8010 = vpop.f32.mrf.mxu0
      %v8011 = vadd.f32 %v7715, %v8010
      %v8012 = vpop.f32.mrf.mxu0
      %8013 = vmatprep.mubr.f32.mxu0 0.0
      %8014 = vmatmul.mubr.f32.gmra.mxu0 %v7769
      %v8015 = vpop.f32.mrf.mxu0
      %v8016 = vadd.f32 %v7715, %v8015
      %v8017 = vpop.f32.mrf.mxu0
      %8018 = vmatprep.mubr.f32.mxu0 0.0
      %8019 = vmatmul.mubr.f32.gmra.mxu0 %v7772
      %v8020 = vpop.f32.mrf.mxu0
      %v8021 = vadd.f32 %v7715, %v8020
      %v8022 = vpop.f32.mrf.mxu0
      %8023 = vmatprep.mubr.f32.mxu0 0.0
      %8024 = vmatmul.mubr.f32.gmra.mxu0 %v7775
      %v8025 = vpop.f32.mrf.mxu0
      %v8026 = vadd.f32 %v7715, %v8025
      %v8027 = vpop.f32.mrf.mxu0
      %8028 = vmatprep.mubr.f32.mxu0 0.0
      %8029 = vmatmul.mubr.f32.gmra.mxu0 %v7778
      %v8030 = vpop.f32.mrf.mxu0
      %v8031 = vadd.f32 %v7715, %v8030
      %v8032 = vpop.f32.mrf.mxu0
      %8033 = vmatprep.mubr.f32.mxu0 0.0
      %8034 = vmatmul.mubr.f32.gmra.mxu0 %v7781
      %v8035 = vpop.f32.mrf.mxu0
      %v8036 = vadd.f32 %v7715, %v8035
      %v8037 = vpop.f32.mrf.mxu0
      %8038 = vmatprep.mubr.f32.mxu0 0.0
      %8039 = vmatmul.mubr.f32.gmra.mxu0 %v7784
      %v8040 = vpop.f32.mrf.mxu0
      %v8041 = vadd.f32 %v7715, %v8040
      %v8042 = vpop.f32.mrf.mxu0
      %8043 = vmatprep.mubr.f32.mxu0 0.0
      %8044 = vmatmul.mubr.f32.gmra.mxu0 %v7787
      %v8045 = vpop.f32.mrf.mxu0
      %v8046 = vadd.f32 %v7715, %v8045
      %v8047 = vpop.f32.mrf.mxu0
      %8048 = vmatprep.mubr.f32.mxu0 0.0
      %8049 = vmatmul.mubr.f32.gmra.mxu0 %v7790
      %v8050 = vpop.f32.mrf.mxu0
      %v8051 = vadd.f32 %v7715, %v8050
      %v8052 = vpop.f32.mrf.mxu0
      %8053 = vmatprep.mubr.f32.mxu0 0.0
      %8054 = vmatmul.mubr.f32.gmra.mxu0 %v7793
      %v8055 = vpop.f32.mrf.mxu0
      %v8056 = vadd.f32 %v7715, %v8055
      %v8057 = vpop.f32.mrf.mxu0
      %8058 = vmatprep.mubr.f32.mxu0 0.0
      %8059 = vmatmul.mubr.f32.gmra.mxu0 %v7796
      %v8060 = vpop.f32.mrf.mxu0
      %v8061 = vadd.f32 %v7715, %v8060
      %v8062 = vpop.f32.mrf.mxu0
      %8063 = vmatprep.mubr.f32.mxu0 0.0
      %8064 = vmatmul.mubr.f32.gmra.mxu0 %v7799
      %v8065 = vpop.f32.mrf.mxu0
      %v8066 = vadd.f32 %v7715, %v8065
      %v8067 = vpop.f32.mrf.mxu0
      %8068 = vmatprep.mubr.f32.mxu0 0.0
      %8069 = vmatmul.mubr.f32.gmra.mxu0 %v7802
      %v8070 = vpop.f32.mrf.mxu0
      %v8071 = vadd.f32 %v7715, %v8070
      %v8072 = vpop.f32.mrf.mxu0
      %8073 = vmatprep.mubr.f32.mxu0 0.0
      %8074 = vmatmul.mubr.f32.gmra.mxu0 %v7805
      %v8075 = vpop.f32.mrf.mxu0
      %v8076 = vadd.f32 %v7715, %v8075
      %v8077 = vpop.f32.mrf.mxu0
      %8078 = vmatprep.mubr.f32.mxu0 0.0
      %8079 = vmatmul.mubr.f32.gmra.mxu0 %v7808
      %v8080 = vpop.f32.mrf.mxu0
      %v8081 = vadd.f32 %v7715, %v8080
      %v8082 = vpop.f32.mrf.mxu0
      %8083 = vmatprep.mubr.f32.mxu0 0.0
      %8084 = vmatmul.mubr.f32.gmra.mxu0 %v7811
      %v8085 = vpop.f32.mrf.mxu0
      %v8086 = vadd.f32 %v7715, %v8085
      %v8087 = vpop.f32.mrf.mxu0
      %8088 = vmatprep.mubr.f32.mxu0 0.0
      %8089 = vmatmul.mubr.f32.gmra.mxu0 %v7814
      %v8090 = vpop.f32.mrf.mxu0
      %v8091 = vadd.f32 %v7715, %v8090
      %v8092 = vpop.f32.mrf.mxu0
      %8093 = vmatprep.mubr.f32.mxu0 0.0
      %8094 = vmatmul.mubr.f32.gmra.mxu0 %v7817
      %v8095 = vpop.f32.mrf.mxu0
      %v8096 = vadd.f32 %v7715, %v8095
      %v8097 = vpop.f32.mrf.mxu0
      %8098 = vmatprep.mubr.f32.mxu0 0.0
      %8099 = vmatmul.mubr.f32.gmra.mxu0 %v7820
      %v8100 = vpop.f32.mrf.mxu0
      %v8101 = vadd.f32 %v7715, %v8100
      %v8102 = vpop.f32.mrf.mxu0
      %8103 = vmatprep.mubr.f32.mxu0 0.0
      %8104 = vmatmul.mubr.f32.gmra.mxu0 %v7823
      %v8105 = vpop.f32.mrf.mxu0
      %v8106 = vadd.f32 %v7715, %v8105
      %v8107 = vpop.f32.mrf.mxu0
      %8108 = vmatprep.mubr.f32.mxu0 0.0
      %8109 = vmatmul.mubr.f32.gmra.mxu0 %v7826
      %v8110 = vpop.f32.mrf.mxu0
      %v8111 = vadd.f32 %v7715, %v8110
      %v8112 = vpop.f32.mrf.mxu0
      %8113 = vmatprep.mubr.f32.mxu0 0.0
      %8114 = vmatmul.mubr.f32.gmra.mxu0 %v7829
      %v8115 = vpop.f32.mrf.mxu0
      %v8116 = vadd.f32 %v7715, %v8115
      %v8117 = vpop.f32.mrf.mxu0
      %8118 = vmatprep.mubr.f32.mxu0 0.0
      %8119 = vmatmul.mubr.f32.gmra.mxu0 %v7832
      %v8120 = vpop.f32.mrf.mxu0
      %v8121 = vadd.f32 %v7715, %v8120
      %v8122 = vpop.f32.mrf.mxu0
      %8123 = vmatprep.mubr.f32.mxu0 0.0
      %8124 = vmatmul.mubr.f32.gmra.mxu0 %v7835
      %v8125 = vpop.f32.mrf.mxu0
      %v8126 = vadd.f32 %v7715, %v8125
      %v8127 = vpop.f32.mrf.mxu0
      %8128 = vmatprep.mubr.f32.mxu0 0.0
      %8129 = vmatmul.mubr.f32.gmra.mxu0 %v7838
      %v8130 = vpop.f32.mrf.mxu0
      %v8131 = vadd.f32 %v7715, %v8130
      %v8132 = vpop.f32.mrf.mxu0
      %8133 = vmatprep.mubr.f32.mxu0 0.0
      %8134 = vmatmul.mubr.f32.gmra.mxu0 %v7841
      %v8135 = vpop.f32.mrf.mxu0
      %v8136 = vadd.f32 %v7715, %v8135
      %v8137 = vpop.f32.mrf.mxu0
      %8138 = vmatprep.mubr.f32.mxu0 0.0
      %8139 = vmatmul.mubr.f32.gmra.mxu0 %v7844
      %v8140 = vpop.f32.mrf.mxu0
      %v8141 = vadd.f32 %v7715, %v8140
      %v8142 = vpop.f32.mrf.mxu0
      %8143 = vmatprep.mubr.f32.mxu0 0.0
      %8144 = vmatmul.mubr.f32.gmra.mxu0 %v7847
      %v8145 = vpop.f32.mrf.mxu0
      %v8146 = vadd.f32 %v7715, %v8145
      %v8147 = vpop.f32.mrf.mxu0
      %8148 = vmatprep.mubr.f32.mxu0 0.0
      %8149 = vmatmul.mubr.f32.gmra.mxu0 %v7850
      %v8150 = vpop.f32.mrf.mxu0
      %v8151 = vadd.f32 %v7715, %v8150
      %v8152 = vpop.f32.mrf.mxu0
      %8153 = vmatprep.mubr.f32.mxu0 0.0
      %8154 = vmatmul.mubr.f32.gmra.mxu0 %v7853
      %v8155 = vpop.f32.mrf.mxu0
      %v8156 = vadd.f32 %v7715, %v8155
      %v8157 = vpop.f32.mrf.mxu0
      %8158 = vmatprep.mubr.f32.mxu0 0.0
      %8159 = vmatmul.mubr.f32.gmra.mxu0 %v7856
      %v8160 = vpop.f32.mrf.mxu0
      %v8161 = vadd.f32 %v7715, %v8160
      %v8162 = vpop.f32.mrf.mxu0
      %8163 = vmatprep.mubr.f32.mxu0 0.0
      %8164 = vmatmul.mubr.f32.gmra.mxu0 %v7859
      %v8165 = vpop.f32.mrf.mxu0
      %v8166 = vadd.f32 %v7715, %v8165
      %v8167 = vpop.f32.mrf.mxu0
      %8168 = vmatprep.mubr.f32.mxu0 0.0
      %8169 = vmatmul.mubr.f32.gmra.mxu0 %v7862
      %v8170 = vpop.f32.mrf.mxu0
      %v8171 = vadd.f32 %v7715, %v8170
      %v8172 = vpop.f32.mrf.mxu0
      %8173 = vdwg.mxu0
      %8174 = vst.msk [vmem:[%s262] sm:$0xff] %vm322, %v7931
      %8175 = vst.msk [vmem:[%s262 + $0x8] sm:$0xff] %vm322, %v7936
      %8176 = vst.msk [vmem:[%s262 + $0x10] sm:$0xff] %vm322, %v7941
      %8177 = vst.msk [vmem:[%s262 + $0x18] sm:$0xff] %vm322, %v7946
      %8178 = vst.msk [vmem:[%s262 + $0x20] sm:$0xff] %vm322, %v7951
      %8179 = vst.msk [vmem:[%s262 + $0x28] sm:$0xff] %vm322, %v7956
      %8180 = vst.msk [vmem:[%s262 + $0x30] sm:$0xff] %vm322, %v7961
      %8181 = vst.msk [vmem:[%s262 + $0x38] sm:$0xff] %vm322, %v7966
      %8182 = vst.msk [vmem:[%s262 + $0x40] sm:$0xff] %vm322, %v7971
      %8183 = vst.msk [vmem:[%s262 + $0x48] sm:$0xff] %vm322, %v7976
      %8184 = vst.msk [vmem:[%s262 + $0x50] sm:$0xff] %vm322, %v7981
      %8185 = vst.msk [vmem:[%s262 + $0x58] sm:$0xff] %vm322, %v7986
      %8186 = vst.msk [vmem:[%s262 + $0x60] sm:$0xff] %vm322, %v7991
      %8187 = vst.msk [vmem:[%s262 + $0x68] sm:$0xff] %vm322, %v7996
      %8188 = vst.msk [vmem:[%s262 + $0x70] sm:$0xff] %vm322, %v8001
      %8189 = vst.msk [vmem:[%s262 + $0x78] sm:$0xff] %vm322, %v8006
      %8190 = vst.msk [vmem:[%s262 + $0x80] sm:$0xff] %vm322, %v8011
      %8191 = vst.msk [vmem:[%s262 + $0x88] sm:$0xff] %vm322, %v8016
      %8192 = vst.msk [vmem:[%s262 + $0x90] sm:$0xff] %vm322, %v8021
      %8193 = vst.msk [vmem:[%s262 + $0x98] sm:$0xff] %vm322, %v8026
      %8194 = vst.msk [vmem:[%s262 + $0xa0] sm:$0xff] %vm322, %v8031
      %8195 = vst.msk [vmem:[%s262 + $0xa8] sm:$0xff] %vm322, %v8036
      %8196 = vst.msk [vmem:[%s262 + $0xb0] sm:$0xff] %vm322, %v8041
      %8197 = vst.msk [vmem:[%s262 + $0xb8] sm:$0xff] %vm322, %v8046
      %8198 = vst.msk [vmem:[%s262 + $0xc0] sm:$0xff] %vm322, %v8051
      %8199 = vst.msk [vmem:[%s262 + $0xc8] sm:$0xff] %vm322, %v8056
      %8200 = vst.msk [vmem:[%s262 + $0xd0] sm:$0xff] %vm322, %v8061
      %8201 = vst.msk [vmem:[%s262 + $0xd8] sm:$0xff] %vm322, %v8066
      %8202 = vst.msk [vmem:[%s262 + $0xe0] sm:$0xff] %vm322, %v8071
      %8203 = vst.msk [vmem:[%s262 + $0xe8] sm:$0xff] %vm322, %v8076
      %8204 = vst.msk [vmem:[%s262 + $0xf0] sm:$0xff] %vm322, %v8081
      %8205 = vst.msk [vmem:[%s262 + $0xf8] sm:$0xff] %vm322, %v8086
      %8206 = vst.msk [vmem:[%s262 + $0x100] sm:$0xff] %vm322, %v8091
      %8207 = vst.msk [vmem:[%s262 + $0x108] sm:$0xff] %vm322, %v8096
      %8208 = vst.msk [vmem:[%s262 + $0x110] sm:$0xff] %vm322, %v8101
      %8209 = vst.msk [vmem:[%s262 + $0x118] sm:$0xff] %vm322, %v8106
      %8210 = vst.msk [vmem:[%s262 + $0x120] sm:$0xff] %vm322, %v8111
      %8211 = vst.msk [vmem:[%s262 + $0x128] sm:$0xff] %vm322, %v8116
      %8212 = vst.msk [vmem:[%s262 + $0x130] sm:$0xff] %vm322, %v8121
      %8213 = vst.msk [vmem:[%s262 + $0x138] sm:$0xff] %vm322, %v8126
      %8214 = vst.msk [vmem:[%s262 + $0x140] sm:$0xff] %vm322, %v8131
      %8215 = vst.msk [vmem:[%s262 + $0x148] sm:$0xff] %vm322, %v8136
      %8216 = vst.msk [vmem:[%s262 + $0x150] sm:$0xff] %vm322, %v8141
      %8217 = vst.msk [vmem:[%s262 + $0x158] sm:$0xff] %vm322, %v8146
      %8218 = vst.msk [vmem:[%s262 + $0x160] sm:$0xff] %vm322, %v8151
      %8219 = vst.msk [vmem:[%s262 + $0x168] sm:$0xff] %vm322, %v8156
      %8220 = vst.msk [vmem:[%s262 + $0x170] sm:$0xff] %vm322, %v8161
      %8221 = vst.msk [vmem:[%s262 + $0x178] sm:$0xff] %vm322, %v8166
      %8222 = vst.msk [vmem:[%s262 + $0x180] sm:$0xff] %vm322, %v8171
      %s8223 = smul.u32 49, %s18
      %p8224 = scmp.lt.s32.totalorder %s8223, 195
      %s8225 = scalar_select %p8224, %s8223, 195
      %s8226 = smul.addr %s8225, 8
      %s8227 = scalar_lea.vmem %s5, %s8226
      %s8228 = smul.u32 8, %s18
      %p8229 = scmp.lt.s32.totalorder %s8228, 31
      %s8230 = scalar_select %p8229, %s8228, 31
      %s8231 = smul.addr %s8230, 14
      %s8232 = smul.addr %s8231, 8
      %s8233 = scalar_lea.vmem %s6, %s8232
      // Predicated region
      $region41: #{window_attention_forward.1} parent=39 // pred_check
        %p8234 = pneg %p146
      $region42: #{window_attention_forward.1} parent=39 // pred_check_branch
        %8236 = sbr.rel (%p8234) target = $region44
      $region43: #{window_attention_forward.1} parent=39 // pred_region
        %s8237 = smul.u32 49, %s18
      $region44: #{window_attention_forward.1} parent=39 // pred_fallthru
        _
      // Predicated region
      $region45: #{window_attention_forward.1} parent=39 // pred_check
        %p8238 = pneg %p172
      $region46: #{window_attention_forward.1} parent=39 // pred_check_branch
        %8240 = sbr.rel (%p8238) target = $region48
      $region47: #{window_attention_forward.1} parent=39 // pred_region
        %s8241 = smul.u32 8, %s18
      $region48: #{window_attention_forward.1} parent=39 // pred_fallthru
        _
    $region40: #{window_attention_forward.1} parent=5 // pred_fallthru
      _
    %p8242 = scmp.le.s32.totalorder 2, %s13
    // Predicated region
    $region49: #{window_attention_forward.1} parent=5 // pred_check
      %p8243 = pneg %p8242
    $region50: #{window_attention_forward.1} parent=5 // pred_check_branch
      %8245 = sbr.rel (%p8243) target = $region52
    $region51: #{window_attention_forward.1} parent=5 // pred_region
      %s8246 = ssub.s32 %s13, 2
      // Predicated region
      $region53: #{window_attention_forward.1} parent=51 // pred_check
        %p8247 = pneg %p152
      $region54: #{window_attention_forward.1} parent=51 // pred_check_branch
        %8249 = sbr.rel (%p8247) target = $region56
      $region55: #{window_attention_forward.1} parent=51 // pred_region
        %s8250 = smul.u32 49, %s19
        %p8251 = scmp.lt.s32.totalorder %s8250, 195
        %s8252 = scalar_select %p8251, %s8250, 195
        %s8253 = smul.addr %s8252, 8
        %s8254 = scalar_lea.vmem %s5, %s8253
      $region56: #{window_attention_forward.1} parent=51 // pred_fallthru
        _
      // Predicated region
      $region57: #{window_attention_forward.1} parent=51 // pred_check
        %p8255 = pneg %p178
      $region58: #{window_attention_forward.1} parent=51 // pred_check_branch
        %8257 = sbr.rel (%p8255) target = $region60
      $region59: #{window_attention_forward.1} parent=51 // pred_region
        %s8258 = smul.u32 8, %s19
        %p8259 = scmp.lt.s32.totalorder %s8258, 31
        %s8260 = scalar_select %p8259, %s8258, 31
        %s8261 = smul.addr %s8260, 14
        %s8262 = smul.addr %s8261, 8
        %s8263 = scalar_lea.vmem %s6, %s8262
      $region60: #{window_attention_forward.1} parent=51 // pred_fallthru
        _
    $region52: #{window_attention_forward.1} parent=5 // pred_fallthru
      _
  $region6: #{window_attention_forward.1} parent=0 // loop_footer
    %s17 = sadd.s32 1, %s13
  $region7: #{window_attention_forward.1} parent=0 // loop_footer_branch
    %12 = sbr.rel target = $region3
  $region8: #{window_attention_forward.1} parent=0 // loop_exit
    _

</llo_original>
